<compile_context>
chip_gen: v7x
topology: tpu7x:2x2x1
jax: 0.10.0
libtpu: 0.0.40
codegen_flags: <defaults>
</compile_context>

<pallas_src>
import jax
import jax.numpy as jnp
from jax import lax
from jax.experimental import pallas as pl
from jax.experimental.pallas import tpu as pltpu

# ---------------- model hyper-parameters -------------------------------------
E = 50        # embedding_dimension  (module fixes 50)
Ep = 128      # embedding padded to a full lane tile
H = 100       # hidden_dimension     (module fixes 100)
Hp = 128      # hidden padded to a full lane tile
C = 3         # num_classes
Cp = 128      # class axis padded to a full lane tile (unmasked output stores)
B = 2         # batch
S = 8         # sequence length
VOCAB = 1000  # synthetic vocab (module uses 400000; shrunk, self-contained demo)

# fused gate-column blocks (each Hp wide):
#   0:i_f  1:i_b  2:f_f  3:f_b  4:o_f  5:o_b  6:g_f  7:g_b
_FWD_BLOCKS = (0, 2, 4, 6)
_BWD_BLOCKS = (1, 3, 5, 7)


def _bilstm_kernel(x_ref,                       # (S*B, 2*Ep)  [x(s) | x(S-1-s)]
                   wih_ref, bih_ref,            # (2*Ep, 8*Hp), (1, 8*Hp)
                   whh_ref,                     # (2*Hp, 8*Hp) block-diag fwd/bwd
                   wlin_ref, blin_ref,          # (2*Hp, Cp), (1, Cp)
                   out_ref,                     # (S, B, Cp)
                   h_ref):                      # (S*B, 2*Hp) VMEM scratch
    # ---- prologue: ONE K=256 MXU matmul = input gates, both dirs, all steps --
    xg = jnp.dot(x_ref[...], wih_ref[...],
                 preferred_element_type=jnp.float32) + bih_ref[...]   # (S*B, 8*Hp)

    hcat = jnp.zeros((B, 2 * Hp), jnp.float32)   # [h_f | h_b]
    ccat = jnp.zeros((B, 2 * Hp), jnp.float32)   # [c_f | c_b]

    # ---- recurrence: fwd & bwd fused, fully unrolled (S small, static) -------
    for t in range(S):
        tb = S - 1 - t
        pre = xg[t * B:(t + 1) * B, :] + jnp.dot(
            hcat, whh_ref[...], preferred_element_type=jnp.float32)   # (B, 8*Hp)
        sig = jax.nn.sigmoid(pre[:, :6 * Hp])     # one EUP slab: i|f|o, both dirs
        g_cat = jnp.tanh(pre[:, 6 * Hp:])         # one EUP slab: g, both dirs
        i_cat = sig[:, 0 * Hp:2 * Hp]
        f_cat = sig[:, 2 * Hp:4 * Hp]
        o_cat = sig[:, 4 * Hp:6 * Hp]
        ccat = f_cat * ccat + i_cat * g_cat
        hcat = o_cat * jnp.tanh(ccat)             # one tanh for both directions
        # park hidden states at their ORIGINAL time positions (off critical path)
        h_ref[pl.ds(t * B, B), pl.ds(0, Hp)] = hcat[:, :Hp]
        h_ref[pl.ds(tb * B, B), pl.ds(Hp, Hp)] = hcat[:, Hp:]

    # ---- fused epilogue: one matmul + one batched softmax over the seq axis --
    logits = (jnp.dot(h_ref[...], wlin_ref[...],
                      preferred_element_type=jnp.float32) + blin_ref[...])  # (S*B, Cp)
    logits = logits.reshape(S, B, Cp)
    m = jnp.max(logits, axis=0, keepdims=True)
    e = jnp.exp(logits - m)
    inv = pl.reciprocal(jnp.sum(e, axis=0, keepdims=True), approx=True)
    out_ref[...] = e * inv


# ---------------- one-time weight packing (hoisted out of per-call path) ------
def pack_params(p):
    def gates(w):  # (..., 4H) in PyTorch gate order [i | f | g | o]
        i, f, g, o = jnp.split(w, 4, axis=-1)
        return i, f, o, g            # reorder to match block order (i, f, o, g)

    def place(dst, row_off, blocks, w4h):
        for blk, w in zip(blocks, gates(w4h)):
            dst = dst.at[row_off:row_off + w.shape[0],
                         blk * Hp:blk * Hp + w.shape[1]].set(w)
        return dst

    wih = jnp.zeros((2 * Ep, 8 * Hp), jnp.float32)
    wih = place(wih, 0, _FWD_BLOCKS, p["wih_f"])      # rows 0:E   -> x(s)
    wih = place(wih, Ep, _BWD_BLOCKS, p["wih_b"])     # rows Ep:Ep+E -> x(S-1-s)

    bih = jnp.zeros((1, 8 * Hp), jnp.float32)
    bih = place(bih, 0, _FWD_BLOCKS, p["b_f"])
    bih = place(bih, 0, _BWD_BLOCKS, p["b_b"])

    whh = jnp.zeros((2 * Hp, 8 * Hp), jnp.float32)    # block-diag per direction
    whh = place(whh, 0, _FWD_BLOCKS, p["whh_f"])
    whh = place(whh, Hp, _BWD_BLOCKS, p["whh_b"])

    wlin = jnp.zeros((2 * Hp, Cp), jnp.float32)
    wlin = wlin.at[0:H, 0:C].set(p["wlin_f"])
    wlin = wlin.at[Hp:Hp + H, 0:C].set(p["wlin_b"])
    blin = jnp.zeros((1, Cp), jnp.float32).at[:, 0:C].set(p["blin"])
    return wih, bih, whh, wlin, blin


# ---------------- forward pass -------------------------------------------------
@jax.jit
def bilstm_classifier_forward(token_ids, emb_table, packed):
    wih, bih, whh, wlin, blin = packed
    word = jnp.take(emb_table, token_ids, axis=0)             # (B, S, E) glue
    xsb = jnp.transpose(word, (1, 0, 2))                      # (S, B, E)
    xsb = jnp.pad(xsb, ((0, 0), (0, 0), (0, Ep - E)))         # lane-pad 50 -> 128
    x_cat = jnp.concatenate([xsb, xsb[::-1]], axis=-1)        # [x(s) | x(S-1-s)]
    x_cat = x_cat.reshape(S * B, 2 * Ep)                      # rows ordered (s, b)

    vmem = lambda: pl.BlockSpec(memory_space=pltpu.MemorySpace.VMEM)
    out = pl.pallas_call(
        _bilstm_kernel,
        out_shape=jax.ShapeDtypeStruct((S, B, Cp), jnp.float32),
        in_specs=[vmem() for _ in range(6)],
        out_specs=vmem(),
        scratch_shapes=[pltpu.VMEM((S * B, 2 * Hp), jnp.float32)],
    )(x_cat, wih, bih, whh, wlin, blin)
    return jnp.transpose(out, (1, 0, 2))[:, :, :C]            # (B, S, C)


# ---------------- pure-JAX reference (unpadded params) ------------------------
def reference_forward(token_ids, params):
    """nn.Embedding + nn.LSTM(bidirectional, batch_first) + Linear + softmax(dim=1)."""
    emb = jnp.take(params["emb"], token_ids, axis=0)  # (B, S, E)

    def one(x):  # x: (S, E)
        def run(wih_t, whh_t, b, reverse):
            xg = x @ wih_t + b[0]  # (S, 4H)

            def cell(carry, g_x):
                h, c = carry
                gates = g_x + h @ whh_t
                i = jax.nn.sigmoid(gates[:H])
                f = jax.nn.sigmoid(gates[H:2 * H])
                g = jnp.tanh(gates[2 * H:3 * H])
                o = jax.nn.sigmoid(gates[3 * H:4 * H])
                c = f * c + i * g
                h = o * jnp.tanh(c)
                return (h, c), h

            init = (jnp.zeros(H, jnp.float32), jnp.zeros(H, jnp.float32))
            _, hs = lax.scan(cell, init, xg, reverse=reverse)
            return hs  # (S, H), aligned with original time order

        hf = run(params["wih_f"], params["whh_f"], params["b_f"], False)
        hb = run(params["wih_b"], params["whh_b"], params["b_b"], True)
        logits = hf @ params["wlin_f"] + hb @ params["wlin_b"] + params["blin"][0]
        return jax.nn.softmax(logits, axis=0)   # softmax over the sequence axis

    return jax.vmap(one)(emb)


def init_params(key):
    ks = jax.random.split(key, 10)
    scale = 0.1
    return {
        # frozen embedding table (synthetic "ukp_embeddings")
        "emb": jax.random.normal(ks[0], (VOCAB, E), jnp.float32),
        # forward-direction LSTM (PyTorch gate order i,f,g,o; stored transposed)
        "wih_f": scale * jax.random.normal(ks[1], (E, 4 * H), jnp.float32),
        "whh_f": scale * jax.random.normal(ks[2], (H, 4 * H), jnp.float32),
        "b_f": scale * jax.random.normal(ks[3], (1, 4 * H), jnp.float32),  # b_ih + b_hh
        # backward-direction LSTM
        "wih_b": scale * jax.random.normal(ks[4], (E, 4 * H), jnp.float32),
        "whh_b": scale * jax.random.normal(ks[5], (H, 4 * H), jnp.float32),
        "b_b": scale * jax.random.normal(ks[6], (1, 4 * H), jnp.float32),
        # Linear(2H -> C), split into forward-half / backward-half of the weight
        "wlin_f": scale * jax.random.normal(ks[7], (H, C), jnp.float32),
        "wlin_b": scale * jax.random.normal(ks[8], (H, C), jnp.float32),
        "blin": scale * jax.random.normal(ks[9], (1, C), jnp.float32),
    }


if __name__ == "__main__":
    key = jax.random.PRNGKey(0)
    k_par, k_tok = jax.random.split(key)
    params = init_params(k_par)
    token_ids = jax.random.randint(k_tok, (B, S), 0, VOCAB, dtype=jnp.int32)

    packed = pack_params(params)   # one-time packing, outside the hot path

    out = bilstm_classifier_forward(token_ids, params["emb"], packed)
    out = jax.block_until_ready(out)

    ref = jax.block_until_ready(reference_forward(token_ids, params))
    assert out.shape == (B, S, C)
    # Tolerance accounts for the EUP approximate reciprocal in the softmax.
    assert jnp.allclose(out, ref, rtol=2e-3, atol=1e-3), float(jnp.max(jnp.abs(out - ref)))

    print("KERNEL_OK")
</pallas_src>

<mosaic_0001>
module attributes {stable_mosaic.version = 11 : i64} {
  func.func @_bilstm_kernel(%arg0: memref<16x256xf32, #tpu.memory_space<vmem>>, %arg1: memref<256x1024xf32, #tpu.memory_space<vmem>>, %arg2: memref<1x1024xf32, #tpu.memory_space<vmem>>, %arg3: memref<256x1024xf32, #tpu.memory_space<vmem>>, %arg4: memref<256x128xf32, #tpu.memory_space<vmem>>, %arg5: memref<1x128xf32, #tpu.memory_space<vmem>>, %arg6: memref<8x2x128xf32, #tpu.memory_space<vmem>>, %arg7: memref<16x256xf32, #tpu.memory_space<vmem>>) attributes {dimension_semantics = [], scalar_prefetch = 0 : i64, scratch_operands = 1 : i64, tpu.core_type = #tpu.core_type<tc>} {
    %c0 = arith.constant 0 : index
    %c0_0 = arith.constant 0 : index
    %0 = vector.load %arg0[%c0, %c0_0] : memref<16x256xf32, #tpu.memory_space<vmem>>, vector<16x256xf32>
    %c0_1 = arith.constant 0 : index
    %c0_2 = arith.constant 0 : index
    %1 = vector.load %arg1[%c0_1, %c0_2] : memref<256x1024xf32, #tpu.memory_space<vmem>>, vector<256x1024xf32>
    %cst = arith.constant dense<0.000000e+00> : vector<16x1024xf32>
    %2 = tpu.matmul %0, %1, %cst {dimension_numbers = #tpu.dot_dimension_numbers<[1], [0], [0], [1], [0, 0, 1, 1], [], []>} : vector<16x256xf32>, vector<256x1024xf32>, vector<16x1024xf32> -> vector<16x1024xf32>
    %c0_3 = arith.constant 0 : index
    %c0_4 = arith.constant 0 : index
    %3 = vector.load %arg2[%c0_3, %c0_4] : memref<1x1024xf32, #tpu.memory_space<vmem>>, vector<1x1024xf32>
    %4 = vector.broadcast %3 : vector<1x1024xf32> to vector<16x1024xf32>
    %5 = arith.addf %2, %4 : vector<16x1024xf32>
    %cst_5 = arith.constant 0.000000e+00 : f32
    %6 = vector.broadcast %cst_5 : f32 to vector<2x256xf32>
    %cst_6 = arith.constant 0.000000e+00 : f32
    %7 = vector.broadcast %cst_6 : f32 to vector<2x256xf32>
    %8 = vector.extract_strided_slice %5 {offsets = [0, 0], sizes = [2, 1024], strides = [1, 1]} : vector<16x1024xf32> to vector<2x1024xf32>
    %c0_7 = arith.constant 0 : index
    %c0_8 = arith.constant 0 : index
    %9 = vector.load %arg3[%c0_7, %c0_8] : memref<256x1024xf32, #tpu.memory_space<vmem>>, vector<256x1024xf32>
    %cst_9 = arith.constant dense<0.000000e+00> : vector<2x1024xf32>
    %10 = tpu.matmul %6, %9, %cst_9 {dimension_numbers = #tpu.dot_dimension_numbers<[1], [0], [0], [1], [0, 0, 1, 1], [], []>} : vector<2x256xf32>, vector<256x1024xf32>, vector<2x1024xf32> -> vector<2x1024xf32>
    %11 = arith.addf %8, %10 : vector<2x1024xf32>
    %12 = vector.extract_strided_slice %11 {offsets = [0, 0], sizes = [2, 768], strides = [1, 1]} : vector<2x1024xf32> to vector<2x768xf32>
    %13 = arith.negf %12 : vector<2x768xf32>
    %14 = math.exp %13 : vector<2x768xf32>
    %cst_10 = arith.constant 1.000000e+00 : f32
    %15 = vector.broadcast %cst_10 : f32 to vector<2x768xf32>
    %16 = arith.addf %15, %14 : vector<2x768xf32>
    %17 = arith.divf %15, %16 : vector<2x768xf32>
    %18 = vector.extract_strided_slice %11 {offsets = [0, 768], sizes = [2, 256], strides = [1, 1]} : vector<2x1024xf32> to vector<2x256xf32>
    %19 = math.tanh %18 : vector<2x256xf32>
    %20 = vector.extract_strided_slice %17 {offsets = [0, 0], sizes = [2, 256], strides = [1, 1]} : vector<2x768xf32> to vector<2x256xf32>
    %21 = vector.extract_strided_slice %17 {offsets = [0, 256], sizes = [2, 256], strides = [1, 1]} : vector<2x768xf32> to vector<2x256xf32>
    %22 = vector.extract_strided_slice %17 {offsets = [0, 512], sizes = [2, 256], strides = [1, 1]} : vector<2x768xf32> to vector<2x256xf32>
    %23 = arith.mulf %21, %7 : vector<2x256xf32>
    %24 = arith.mulf %20, %19 : vector<2x256xf32>
    %25 = arith.addf %23, %24 : vector<2x256xf32>
    %26 = math.tanh %25 : vector<2x256xf32>
    %27 = arith.mulf %22, %26 : vector<2x256xf32>
    %28 = vector.extract_strided_slice %27 {offsets = [0, 0], sizes = [2, 128], strides = [1, 1]} : vector<2x256xf32> to vector<2x128xf32>
    %c0_11 = arith.constant 0 : index
    %c0_12 = arith.constant 0 : index
    %29 = vector.load %arg7[%c0_11, %c0_12] : memref<16x256xf32, #tpu.memory_space<vmem>>, vector<2x128xf32>
    tpu.vector_store %arg7[%c0_11, %c0_12], %28 {strides = array<i32>} : memref<16x256xf32, #tpu.memory_space<vmem>>, vector<2x128xf32>,
    %30 = vector.extract_strided_slice %27 {offsets = [0, 128], sizes = [2, 128], strides = [1, 1]} : vector<2x256xf32> to vector<2x128xf32>
    %c14 = arith.constant 14 : index
    %c128 = arith.constant 128 : index
    %31 = vector.load %arg7[%c14, %c128] : memref<16x256xf32, #tpu.memory_space<vmem>>, vector<2x128xf32>
    tpu.vector_store %arg7[%c14, %c128], %30 {strides = array<i32>} : memref<16x256xf32, #tpu.memory_space<vmem>>, vector<2x128xf32>,
    %32 = vector.extract_strided_slice %5 {offsets = [2, 0], sizes = [2, 1024], strides = [1, 1]} : vector<16x1024xf32> to vector<2x1024xf32>
    %c0_13 = arith.constant 0 : index
    %c0_14 = arith.constant 0 : index
    %33 = vector.load %arg3[%c0_13, %c0_14] : memref<256x1024xf32, #tpu.memory_space<vmem>>, vector<256x1024xf32>
    %cst_15 = arith.constant dense<0.000000e+00> : vector<2x1024xf32>
    %34 = tpu.matmul %27, %33, %cst_15 {dimension_numbers = #tpu.dot_dimension_numbers<[1], [0], [0], [1], [0, 0, 1, 1], [], []>} : vector<2x256xf32>, vector<256x1024xf32>, vector<2x1024xf32> -> vector<2x1024xf32>
    %35 = arith.addf %32, %34 : vector<2x1024xf32>
    %36 = vector.extract_strided_slice %35 {offsets = [0, 0], sizes = [2, 768], strides = [1, 1]} : vector<2x1024xf32> to vector<2x768xf32>
    %37 = arith.negf %36 : vector<2x768xf32>
    %38 = math.exp %37 : vector<2x768xf32>
    %cst_16 = arith.constant 1.000000e+00 : f32
    %39 = vector.broadcast %cst_16 : f32 to vector<2x768xf32>
    %40 = arith.addf %39, %38 : vector<2x768xf32>
    %41 = arith.divf %39, %40 : vector<2x768xf32>
    %42 = vector.extract_strided_slice %35 {offsets = [0, 768], sizes = [2, 256], strides = [1, 1]} : vector<2x1024xf32> to vector<2x256xf32>
    %43 = math.tanh %42 : vector<2x256xf32>
    %44 = vector.extract_strided_slice %41 {offsets = [0, 0], sizes = [2, 256], strides = [1, 1]} : vector<2x768xf32> to vector<2x256xf32>
    %45 = vector.extract_strided_slice %41 {offsets = [0, 256], sizes = [2, 256], strides = [1, 1]} : vector<2x768xf32> to vector<2x256xf32>
    %46 = vector.extract_strided_slice %41 {offsets = [0, 512], sizes = [2, 256], strides = [1, 1]} : vector<2x768xf32> to vector<2x256xf32>
    %47 = arith.mulf %45, %25 : vector<2x256xf32>
    %48 = arith.mulf %44, %43 : vector<2x256xf32>
    %49 = arith.addf %47, %48 : vector<2x256xf32>
    %50 = math.tanh %49 : vector<2x256xf32>
    %51 = arith.mulf %46, %50 : vector<2x256xf32>
    %52 = vector.extract_strided_slice %51 {offsets = [0, 0], sizes = [2, 128], strides = [1, 1]} : vector<2x256xf32> to vector<2x128xf32>
    %c2 = arith.constant 2 : index
    %c0_17 = arith.constant 0 : index
    %53 = vector.load %arg7[%c2, %c0_17] : memref<16x256xf32, #tpu.memory_space<vmem>>, vector<2x128xf32>
    tpu.vector_store %arg7[%c2, %c0_17], %52 {strides = array<i32>} : memref<16x256xf32, #tpu.memory_space<vmem>>, vector<2x128xf32>,
    %54 = vector.extract_strided_slice %51 {offsets = [0, 128], sizes = [2, 128], strides = [1, 1]} : vector<2x256xf32> to vector<2x128xf32>
    %c12 = arith.constant 12 : index
    %c128_18 = arith.constant 128 : index
    %55 = vector.load %arg7[%c12, %c128_18] : memref<16x256xf32, #tpu.memory_space<vmem>>, vector<2x128xf32>
    tpu.vector_store %arg7[%c12, %c128_18], %54 {strides = array<i32>} : memref<16x256xf32, #tpu.memory_space<vmem>>, vector<2x128xf32>,
    %56 = vector.extract_strided_slice %5 {offsets = [4, 0], sizes = [2, 1024], strides = [1, 1]} : vector<16x1024xf32> to vector<2x1024xf32>
    %c0_19 = arith.constant 0 : index
    %c0_20 = arith.constant 0 : index
    %57 = vector.load %arg3[%c0_19, %c0_20] : memref<256x1024xf32, #tpu.memory_space<vmem>>, vector<256x1024xf32>
    %cst_21 = arith.constant dense<0.000000e+00> : vector<2x1024xf32>
    %58 = tpu.matmul %51, %57, %cst_21 {dimension_numbers = #tpu.dot_dimension_numbers<[1], [0], [0], [1], [0, 0, 1, 1], [], []>} : vector<2x256xf32>, vector<256x1024xf32>, vector<2x1024xf32> -> vector<2x1024xf32>
    %59 = arith.addf %56, %58 : vector<2x1024xf32>
    %60 = vector.extract_strided_slice %59 {offsets = [0, 0], sizes = [2, 768], strides = [1, 1]} : vector<2x1024xf32> to vector<2x768xf32>
    %61 = arith.negf %60 : vector<2x768xf32>
    %62 = math.exp %61 : vector<2x768xf32>
    %cst_22 = arith.constant 1.000000e+00 : f32
    %63 = vector.broadcast %cst_22 : f32 to vector<2x768xf32>
    %64 = arith.addf %63, %62 : vector<2x768xf32>
    %65 = arith.divf %63, %64 : vector<2x768xf32>
    %66 = vector.extract_strided_slice %59 {offsets = [0, 768], sizes = [2, 256], strides = [1, 1]} : vector<2x1024xf32> to vector<2x256xf32>
    %67 = math.tanh %66 : vector<2x256xf32>
    %68 = vector.extract_strided_slice %65 {offsets = [0, 0], sizes = [2, 256], strides = [1, 1]} : vector<2x768xf32> to vector<2x256xf32>
    %69 = vector.extract_strided_slice %65 {offsets = [0, 256], sizes = [2, 256], strides = [1, 1]} : vector<2x768xf32> to vector<2x256xf32>
    %70 = vector.extract_strided_slice %65 {offsets = [0, 512], sizes = [2, 256], strides = [1, 1]} : vector<2x768xf32> to vector<2x256xf32>
    %71 = arith.mulf %69, %49 : vector<2x256xf32>
    %72 = arith.mulf %68, %67 : vector<2x256xf32>
    %73 = arith.addf %71, %72 : vector<2x256xf32>
    %74 = math.tanh %73 : vector<2x256xf32>
    %75 = arith.mulf %70, %74 : vector<2x256xf32>
    %76 = vector.extract_strided_slice %75 {offsets = [0, 0], sizes = [2, 128], strides = [1, 1]} : vector<2x256xf32> to vector<2x128xf32>
    %c4 = arith.constant 4 : index
    %c0_23 = arith.constant 0 : index
    %77 = vector.load %arg7[%c4, %c0_23] : memref<16x256xf32, #tpu.memory_space<vmem>>, vector<2x128xf32>
    tpu.vector_store %arg7[%c4, %c0_23], %76 {strides = array<i32>} : memref<16x256xf32, #tpu.memory_space<vmem>>, vector<2x128xf32>,
    %78 = vector.extract_strided_slice %75 {offsets = [0, 128], sizes = [2, 128], strides = [1, 1]} : vector<2x256xf32> to vector<2x128xf32>
    %c10 = arith.constant 10 : index
    %c128_24 = arith.constant 128 : index
    %79 = vector.load %arg7[%c10, %c128_24] : memref<16x256xf32, #tpu.memory_space<vmem>>, vector<2x128xf32>
    tpu.vector_store %arg7[%c10, %c128_24], %78 {strides = array<i32>} : memref<16x256xf32, #tpu.memory_space<vmem>>, vector<2x128xf32>,
    %80 = vector.extract_strided_slice %5 {offsets = [6, 0], sizes = [2, 1024], strides = [1, 1]} : vector<16x1024xf32> to vector<2x1024xf32>
    %c0_25 = arith.constant 0 : index
    %c0_26 = arith.constant 0 : index
    %81 = vector.load %arg3[%c0_25, %c0_26] : memref<256x1024xf32, #tpu.memory_space<vmem>>, vector<256x1024xf32>
    %cst_27 = arith.constant dense<0.000000e+00> : vector<2x1024xf32>
    %82 = tpu.matmul %75, %81, %cst_27 {dimension_numbers = #tpu.dot_dimension_numbers<[1], [0], [0], [1], [0, 0, 1, 1], [], []>} : vector<2x256xf32>, vector<256x1024xf32>, vector<2x1024xf32> -> vector<2x1024xf32>
    %83 = arith.addf %80, %82 : vector<2x1024xf32>
    %84 = vector.extract_strided_slice %83 {offsets = [0, 0], sizes = [2, 768], strides = [1, 1]} : vector<2x1024xf32> to vector<2x768xf32>
    %85 = arith.negf %84 : vector<2x768xf32>
    %86 = math.exp %85 : vector<2x768xf32>
    %cst_28 = arith.constant 1.000000e+00 : f32
    %87 = vector.broadcast %cst_28 : f32 to vector<2x768xf32>
    %88 = arith.addf %87, %86 : vector<2x768xf32>
    %89 = arith.divf %87, %88 : vector<2x768xf32>
    %90 = vector.extract_strided_slice %83 {offsets = [0, 768], sizes = [2, 256], strides = [1, 1]} : vector<2x1024xf32> to vector<2x256xf32>
    %91 = math.tanh %90 : vector<2x256xf32>
    %92 = vector.extract_strided_slice %89 {offsets = [0, 0], sizes = [2, 256], strides = [1, 1]} : vector<2x768xf32> to vector<2x256xf32>
    %93 = vector.extract_strided_slice %89 {offsets = [0, 256], sizes = [2, 256], strides = [1, 1]} : vector<2x768xf32> to vector<2x256xf32>
    %94 = vector.extract_strided_slice %89 {offsets = [0, 512], sizes = [2, 256], strides = [1, 1]} : vector<2x768xf32> to vector<2x256xf32>
    %95 = arith.mulf %93, %73 : vector<2x256xf32>
    %96 = arith.mulf %92, %91 : vector<2x256xf32>
    %97 = arith.addf %95, %96 : vector<2x256xf32>
    %98 = math.tanh %97 : vector<2x256xf32>
    %99 = arith.mulf %94, %98 : vector<2x256xf32>
    %100 = vector.extract_strided_slice %99 {offsets = [0, 0], sizes = [2, 128], strides = [1, 1]} : vector<2x256xf32> to vector<2x128xf32>
    %c6 = arith.constant 6 : index
    %c0_29 = arith.constant 0 : index
    %101 = vector.load %arg7[%c6, %c0_29] : memref<16x256xf32, #tpu.memory_space<vmem>>, vector<2x128xf32>
    tpu.vector_store %arg7[%c6, %c0_29], %100 {strides = array<i32>} : memref<16x256xf32, #tpu.memory_space<vmem>>, vector<2x128xf32>,
    %102 = vector.extract_strided_slice %99 {offsets = [0, 128], sizes = [2, 128], strides = [1, 1]} : vector<2x256xf32> to vector<2x128xf32>
    %c8 = arith.constant 8 : index
    %c128_30 = arith.constant 128 : index
    %103 = vector.load %arg7[%c8, %c128_30] : memref<16x256xf32, #tpu.memory_space<vmem>>, vector<2x128xf32>
    tpu.vector_store %arg7[%c8, %c128_30], %102 {strides = array<i32>} : memref<16x256xf32, #tpu.memory_space<vmem>>, vector<2x128xf32>,
    %104 = vector.extract_strided_slice %5 {offsets = [8, 0], sizes = [2, 1024], strides = [1, 1]} : vector<16x1024xf32> to vector<2x1024xf32>
    %c0_31 = arith.constant 0 : index
    %c0_32 = arith.constant 0 : index
    %105 = vector.load %arg3[%c0_31, %c0_32] : memref<256x1024xf32, #tpu.memory_space<vmem>>, vector<256x1024xf32>
    %cst_33 = arith.constant dense<0.000000e+00> : vector<2x1024xf32>
    %106 = tpu.matmul %99, %105, %cst_33 {dimension_numbers = #tpu.dot_dimension_numbers<[1], [0], [0], [1], [0, 0, 1, 1], [], []>} : vector<2x256xf32>, vector<256x1024xf32>, vector<2x1024xf32> -> vector<2x1024xf32>
    %107 = arith.addf %104, %106 : vector<2x1024xf32>
    %108 = vector.extract_strided_slice %107 {offsets = [0, 0], sizes = [2, 768], strides = [1, 1]} : vector<2x1024xf32> to vector<2x768xf32>
    %109 = arith.negf %108 : vector<2x768xf32>
    %110 = math.exp %109 : vector<2x768xf32>
    %cst_34 = arith.constant 1.000000e+00 : f32
    %111 = vector.broadcast %cst_34 : f32 to vector<2x768xf32>
    %112 = arith.addf %111, %110 : vector<2x768xf32>
    %113 = arith.divf %111, %112 : vector<2x768xf32>
    %114 = vector.extract_strided_slice %107 {offsets = [0, 768], sizes = [2, 256], strides = [1, 1]} : vector<2x1024xf32> to vector<2x256xf32>
    %115 = math.tanh %114 : vector<2x256xf32>
    %116 = vector.extract_strided_slice %113 {offsets = [0, 0], sizes = [2, 256], strides = [1, 1]} : vector<2x768xf32> to vector<2x256xf32>
    %117 = vector.extract_strided_slice %113 {offsets = [0, 256], sizes = [2, 256], strides = [1, 1]} : vector<2x768xf32> to vector<2x256xf32>
    %118 = vector.extract_strided_slice %113 {offsets = [0, 512], sizes = [2, 256], strides = [1, 1]} : vector<2x768xf32> to vector<2x256xf32>
    %119 = arith.mulf %117, %97 : vector<2x256xf32>
    %120 = arith.mulf %116, %115 : vector<2x256xf32>
    %121 = arith.addf %119, %120 : vector<2x256xf32>
    %122 = math.tanh %121 : vector<2x256xf32>
    %123 = arith.mulf %118, %122 : vector<2x256xf32>
    %124 = vector.extract_strided_slice %123 {offsets = [0, 0], sizes = [2, 128], strides = [1, 1]} : vector<2x256xf32> to vector<2x128xf32>
    %c8_35 = arith.constant 8 : index
    %c0_36 = arith.constant 0 : index
    %125 = vector.load %arg7[%c8_35, %c0_36] : memref<16x256xf32, #tpu.memory_space<vmem>>, vector<2x128xf32>
    tpu.vector_store %arg7[%c8_35, %c0_36], %124 {strides = array<i32>} : memref<16x256xf32, #tpu.memory_space<vmem>>, vector<2x128xf32>,
    %126 = vector.extract_strided_slice %123 {offsets = [0, 128], sizes = [2, 128], strides = [1, 1]} : vector<2x256xf32> to vector<2x128xf32>
    %c6_37 = arith.constant 6 : index
    %c128_38 = arith.constant 128 : index
    %127 = vector.load %arg7[%c6_37, %c128_38] : memref<16x256xf32, #tpu.memory_space<vmem>>, vector<2x128xf32>
    tpu.vector_store %arg7[%c6_37, %c128_38], %126 {strides = array<i32>} : memref<16x256xf32, #tpu.memory_space<vmem>>, vector<2x128xf32>,
    %128 = vector.extract_strided_slice %5 {offsets = [10, 0], sizes = [2, 1024], strides = [1, 1]} : vector<16x1024xf32> to vector<2x1024xf32>
    %c0_39 = arith.constant 0 : index
    %c0_40 = arith.constant 0 : index
    %129 = vector.load %arg3[%c0_39, %c0_40] : memref<256x1024xf32, #tpu.memory_space<vmem>>, vector<256x1024xf32>
    %cst_41 = arith.constant dense<0.000000e+00> : vector<2x1024xf32>
    %130 = tpu.matmul %123, %129, %cst_41 {dimension_numbers = #tpu.dot_dimension_numbers<[1], [0], [0], [1], [0, 0, 1, 1], [], []>} : vector<2x256xf32>, vector<256x1024xf32>, vector<2x1024xf32> -> vector<2x1024xf32>
    %131 = arith.addf %128, %130 : vector<2x1024xf32>
    %132 = vector.extract_strided_slice %131 {offsets = [0, 0], sizes = [2, 768], strides = [1, 1]} : vector<2x1024xf32> to vector<2x768xf32>
    %133 = arith.negf %132 : vector<2x768xf32>
    %134 = math.exp %133 : vector<2x768xf32>
    %cst_42 = arith.constant 1.000000e+00 : f32
    %135 = vector.broadcast %cst_42 : f32 to vector<2x768xf32>
    %136 = arith.addf %135, %134 : vector<2x768xf32>
    %137 = arith.divf %135, %136 : vector<2x768xf32>
    %138 = vector.extract_strided_slice %131 {offsets = [0, 768], sizes = [2, 256], strides = [1, 1]} : vector<2x1024xf32> to vector<2x256xf32>
    %139 = math.tanh %138 : vector<2x256xf32>
    %140 = vector.extract_strided_slice %137 {offsets = [0, 0], sizes = [2, 256], strides = [1, 1]} : vector<2x768xf32> to vector<2x256xf32>
    %141 = vector.extract_strided_slice %137 {offsets = [0, 256], sizes = [2, 256], strides = [1, 1]} : vector<2x768xf32> to vector<2x256xf32>
    %142 = vector.extract_strided_slice %137 {offsets = [0, 512], sizes = [2, 256], strides = [1, 1]} : vector<2x768xf32> to vector<2x256xf32>
    %143 = arith.mulf %141, %121 : vector<2x256xf32>
    %144 = arith.mulf %140, %139 : vector<2x256xf32>
    %145 = arith.addf %143, %144 : vector<2x256xf32>
    %146 = math.tanh %145 : vector<2x256xf32>
    %147 = arith.mulf %142, %146 : vector<2x256xf32>
    %148 = vector.extract_strided_slice %147 {offsets = [0, 0], sizes = [2, 128], strides = [1, 1]} : vector<2x256xf32> to vector<2x128xf32>
    %c10_43 = arith.constant 10 : index
    %c0_44 = arith.constant 0 : index
    %149 = vector.load %arg7[%c10_43, %c0_44] : memref<16x256xf32, #tpu.memory_space<vmem>>, vector<2x128xf32>
    tpu.vector_store %arg7[%c10_43, %c0_44], %148 {strides = array<i32>} : memref<16x256xf32, #tpu.memory_space<vmem>>, vector<2x128xf32>,
    %150 = vector.extract_strided_slice %147 {offsets = [0, 128], sizes = [2, 128], strides = [1, 1]} : vector<2x256xf32> to vector<2x128xf32>
    %c4_45 = arith.constant 4 : index
    %c128_46 = arith.constant 128 : index
    %151 = vector.load %arg7[%c4_45, %c128_46] : memref<16x256xf32, #tpu.memory_space<vmem>>, vector<2x128xf32>
    tpu.vector_store %arg7[%c4_45, %c128_46], %150 {strides = array<i32>} : memref<16x256xf32, #tpu.memory_space<vmem>>, vector<2x128xf32>,
    %152 = vector.extract_strided_slice %5 {offsets = [12, 0], sizes = [2, 1024], strides = [1, 1]} : vector<16x1024xf32> to vector<2x1024xf32>
    %c0_47 = arith.constant 0 : index
    %c0_48 = arith.constant 0 : index
    %153 = vector.load %arg3[%c0_47, %c0_48] : memref<256x1024xf32, #tpu.memory_space<vmem>>, vector<256x1024xf32>
    %cst_49 = arith.constant dense<0.000000e+00> : vector<2x1024xf32>
    %154 = tpu.matmul %147, %153, %cst_49 {dimension_numbers = #tpu.dot_dimension_numbers<[1], [0], [0], [1], [0, 0, 1, 1], [], []>} : vector<2x256xf32>, vector<256x1024xf32>, vector<2x1024xf32> -> vector<2x1024xf32>
    %155 = arith.addf %152, %154 : vector<2x1024xf32>
    %156 = vector.extract_strided_slice %155 {offsets = [0, 0], sizes = [2, 768], strides = [1, 1]} : vector<2x1024xf32> to vector<2x768xf32>
    %157 = arith.negf %156 : vector<2x768xf32>
    %158 = math.exp %157 : vector<2x768xf32>
    %cst_50 = arith.constant 1.000000e+00 : f32
    %159 = vector.broadcast %cst_50 : f32 to vector<2x768xf32>
    %160 = arith.addf %159, %158 : vector<2x768xf32>
    %161 = arith.divf %159, %160 : vector<2x768xf32>
    %162 = vector.extract_strided_slice %155 {offsets = [0, 768], sizes = [2, 256], strides = [1, 1]} : vector<2x1024xf32> to vector<2x256xf32>
    %163 = math.tanh %162 : vector<2x256xf32>
    %164 = vector.extract_strided_slice %161 {offsets = [0, 0], sizes = [2, 256], strides = [1, 1]} : vector<2x768xf32> to vector<2x256xf32>
    %165 = vector.extract_strided_slice %161 {offsets = [0, 256], sizes = [2, 256], strides = [1, 1]} : vector<2x768xf32> to vector<2x256xf32>
    %166 = vector.extract_strided_slice %161 {offsets = [0, 512], sizes = [2, 256], strides = [1, 1]} : vector<2x768xf32> to vector<2x256xf32>
    %167 = arith.mulf %165, %145 : vector<2x256xf32>
    %168 = arith.mulf %164, %163 : vector<2x256xf32>
    %169 = arith.addf %167, %168 : vector<2x256xf32>
    %170 = math.tanh %169 : vector<2x256xf32>
    %171 = arith.mulf %166, %170 : vector<2x256xf32>
    %172 = vector.extract_strided_slice %171 {offsets = [0, 0], sizes = [2, 128], strides = [1, 1]} : vector<2x256xf32> to vector<2x128xf32>
    %c12_51 = arith.constant 12 : index
    %c0_52 = arith.constant 0 : index
    %173 = vector.load %arg7[%c12_51, %c0_52] : memref<16x256xf32, #tpu.memory_space<vmem>>, vector<2x128xf32>
    tpu.vector_store %arg7[%c12_51, %c0_52], %172 {strides = array<i32>} : memref<16x256xf32, #tpu.memory_space<vmem>>, vector<2x128xf32>,
    %174 = vector.extract_strided_slice %171 {offsets = [0, 128], sizes = [2, 128], strides = [1, 1]} : vector<2x256xf32> to vector<2x128xf32>
    %c2_53 = arith.constant 2 : index
    %c128_54 = arith.constant 128 : index
    %175 = vector.load %arg7[%c2_53, %c128_54] : memref<16x256xf32, #tpu.memory_space<vmem>>, vector<2x128xf32>
    tpu.vector_store %arg7[%c2_53, %c128_54], %174 {strides = array<i32>} : memref<16x256xf32, #tpu.memory_space<vmem>>, vector<2x128xf32>,
    %176 = vector.extract_strided_slice %5 {offsets = [14, 0], sizes = [2, 1024], strides = [1, 1]} : vector<16x1024xf32> to vector<2x1024xf32>
    %c0_55 = arith.constant 0 : index
    %c0_56 = arith.constant 0 : index
    %177 = vector.load %arg3[%c0_55, %c0_56] : memref<256x1024xf32, #tpu.memory_space<vmem>>, vector<256x1024xf32>
    %cst_57 = arith.constant dense<0.000000e+00> : vector<2x1024xf32>
    %178 = tpu.matmul %171, %177, %cst_57 {dimension_numbers = #tpu.dot_dimension_numbers<[1], [0], [0], [1], [0, 0, 1, 1], [], []>} : vector<2x256xf32>, vector<256x1024xf32>, vector<2x1024xf32> -> vector<2x1024xf32>
    %179 = arith.addf %176, %178 : vector<2x1024xf32>
    %180 = vector.extract_strided_slice %179 {offsets = [0, 0], sizes = [2, 768], strides = [1, 1]} : vector<2x1024xf32> to vector<2x768xf32>
    %181 = arith.negf %180 : vector<2x768xf32>
    %182 = math.exp %181 : vector<2x768xf32>
    %cst_58 = arith.constant 1.000000e+00 : f32
    %183 = vector.broadcast %cst_58 : f32 to vector<2x768xf32>
    %184 = arith.addf %183, %182 : vector<2x768xf32>
    %185 = arith.divf %183, %184 : vector<2x768xf32>
    %186 = vector.extract_strided_slice %179 {offsets = [0, 768], sizes = [2, 256], strides = [1, 1]} : vector<2x1024xf32> to vector<2x256xf32>
    %187 = math.tanh %186 : vector<2x256xf32>
    %188 = vector.extract_strided_slice %185 {offsets = [0, 0], sizes = [2, 256], strides = [1, 1]} : vector<2x768xf32> to vector<2x256xf32>
    %189 = vector.extract_strided_slice %185 {offsets = [0, 256], sizes = [2, 256], strides = [1, 1]} : vector<2x768xf32> to vector<2x256xf32>
    %190 = vector.extract_strided_slice %185 {offsets = [0, 512], sizes = [2, 256], strides = [1, 1]} : vector<2x768xf32> to vector<2x256xf32>
    %191 = arith.mulf %189, %169 : vector<2x256xf32>
    %192 = arith.mulf %188, %187 : vector<2x256xf32>
    %193 = arith.addf %191, %192 : vector<2x256xf32>
    %194 = math.tanh %193 : vector<2x256xf32>
    %195 = arith.mulf %190, %194 : vector<2x256xf32>
    %196 = vector.extract_strided_slice %195 {offsets = [0, 0], sizes = [2, 128], strides = [1, 1]} : vector<2x256xf32> to vector<2x128xf32>
    %c14_59 = arith.constant 14 : index
    %c0_60 = arith.constant 0 : index
    %197 = vector.load %arg7[%c14_59, %c0_60] : memref<16x256xf32, #tpu.memory_space<vmem>>, vector<2x128xf32>
    tpu.vector_store %arg7[%c14_59, %c0_60], %196 {strides = array<i32>} : memref<16x256xf32, #tpu.memory_space<vmem>>, vector<2x128xf32>,
    %198 = vector.extract_strided_slice %195 {offsets = [0, 128], sizes = [2, 128], strides = [1, 1]} : vector<2x256xf32> to vector<2x128xf32>
    %c0_61 = arith.constant 0 : index
    %c128_62 = arith.constant 128 : index
    %199 = vector.load %arg7[%c0_61, %c128_62] : memref<16x256xf32, #tpu.memory_space<vmem>>, vector<2x128xf32>
    tpu.vector_store %arg7[%c0_61, %c128_62], %198 {strides = array<i32>} : memref<16x256xf32, #tpu.memory_space<vmem>>, vector<2x128xf32>,
    %c0_63 = arith.constant 0 : index
    %c0_64 = arith.constant 0 : index
    %200 = vector.load %arg7[%c0_63, %c0_64] : memref<16x256xf32, #tpu.memory_space<vmem>>, vector<16x256xf32>
    %c0_65 = arith.constant 0 : index
    %c0_66 = arith.constant 0 : index
    %201 = vector.load %arg4[%c0_65, %c0_66] : memref<256x128xf32, #tpu.memory_space<vmem>>, vector<256x128xf32>
    %cst_67 = arith.constant dense<0.000000e+00> : vector<16x128xf32>
    %202 = tpu.matmul %200, %201, %cst_67 {dimension_numbers = #tpu.dot_dimension_numbers<[1], [0], [0], [1], [0, 0, 1, 1], [], []>} : vector<16x256xf32>, vector<256x128xf32>, vector<16x128xf32> -> vector<16x128xf32>
    %c0_68 = arith.constant 0 : index
    %c0_69 = arith.constant 0 : index
    %203 = vector.load %arg5[%c0_68, %c0_69] : memref<1x128xf32, #tpu.memory_space<vmem>>, vector<1x128xf32>
    %204 = vector.broadcast %203 : vector<1x128xf32> to vector<16x128xf32>
    %205 = arith.addf %202, %204 : vector<16x128xf32>
    %206 = vector.shape_cast %205 : vector<16x128xf32> to vector<8x2x128xf32>
    %cst_70 = arith.constant dense<0xFF800000> : vector<2x128xf32>
    %207 = vector.multi_reduction <maximumf>, %206, %cst_70 [0] : vector<8x2x128xf32> to vector<2x128xf32>
    %208 = vector.shape_cast %207 : vector<2x128xf32> to vector<1x2x128xf32>
    %209 = vector.broadcast %208 : vector<1x2x128xf32> to vector<8x2x128xf32>
    %210 = arith.subf %206, %209 : vector<8x2x128xf32>
    %211 = math.exp %210 : vector<8x2x128xf32>
    %cst_71 = arith.constant dense<0.000000e+00> : vector<2x128xf32>
    %212 = vector.multi_reduction <add>, %211, %cst_71 [0] : vector<8x2x128xf32> to vector<2x128xf32>
    %213 = vector.shape_cast %212 : vector<2x128xf32> to vector<1x2x128xf32>
    %214 = tpu.reciprocal %213 {approx = true} : vector<1x2x128xf32> -> vector<1x2x128xf32>
    %215 = vector.broadcast %214 : vector<1x2x128xf32> to vector<8x2x128xf32>
    %216 = arith.mulf %211, %215 : vector<8x2x128xf32>
    %c0_72 = arith.constant 0 : index
    %c0_73 = arith.constant 0 : index
    %c0_74 = arith.constant 0 : index
    %217 = vector.load %arg6[%c0_72, %c0_73, %c0_74] : memref<8x2x128xf32, #tpu.memory_space<vmem>>, vector<8x2x128xf32>
    tpu.vector_store %arg6[%c0_72, %c0_73, %c0_74], %216 {strides = array<i32>} : memref<8x2x128xf32, #tpu.memory_space<vmem>>, vector<8x2x128xf32>,
    return
  }
}

</mosaic_0001>

<llo_original>
// kernel: bilstm_classifier_forward.1
$region0: #{bilstm_classifier_forward.1}
  #allocation0 [shape = 'u32[]', space=smem, size = 0x4, offset = 0x4, fixed_abs, tag = 'smem constant byte address 0x4 - core index']
  #allocation1 [shape = 'u32[144,128]{1,0:T(1,128)}', space=vmem, size = 0x12000, scoped, tag = 'internal scratch']
  #allocation2 [shape = 'f32[16,256]{1,0:T(8,128)}', space=vmem, size = 0x4000, scoped, tag = 'scratch operand']
  %s0 = inlined_call_operand.vmem [shape: f32[16,256], index: 0, kind: input, shape index: {}]
  %s1 = inlined_call_operand.hbm [shape: f32[256,1024], index: 1, kind: input, shape index: {}]
  %s2 = inlined_call_operand.vmem [shape: f32[1,1024], index: 2, kind: input, shape index: {}]
  %s3 = inlined_call_operand.hbm [shape: f32[256,1024], index: 3, kind: input, shape index: {}]
  %s4 = inlined_call_operand.vmem [shape: f32[256,128], index: 4, kind: input, shape index: {}]
  %s5 = inlined_call_operand.vmem [shape: f32[1,128], index: 5, kind: input, shape index: {}]
  %s6 = inlined_call_operand.vmem [shape: f32[8,2,128], index: 6, kind: output, shape index: {}]
  %s7 = sld [smem:[#allocation0]]
  $region42: #{bilstm_classifier_forward.1} parent=0
    _
  %s9 = ssub.s32 1, %s7
  %s10 = scalar_select 0, %s9, %s7
  $region1: #{bilstm_classifier_forward.1} parent=0
    #allocation3 [shape = 'u8[1048576]{0}', space=vmem, size = 0x100000, scoped, tag = 'input window, operand 1, single buffered']
    #allocation4 [shape = 's32[1]{0}', space=sflag, size = 0x4, scoped, tag = 'scoped memory for bilstm_classifier_forward.1']
    #allocation5 [shape = 'u8[1048576]{0}', space=vmem, size = 0x100000, scoped, tag = 'input window, operand 3, single buffered']
    #allocation6 [shape = 's32[1]{0}', space=sflag, size = 0x4, scoped, tag = 'scoped memory for bilstm_classifier_forward.1']
    %11 = vsyncpa [#allocation4], 0
    %12 = vsyncpa [#allocation6], 0
    // Predicated region
    $region2: #{bilstm_classifier_forward.1} parent=1 // pred_check
      _
    $region3: #{bilstm_classifier_forward.1} parent=1 // pred_check_branch
      %14 = sbr.rel (0) target = $region5
    $region4: #{bilstm_classifier_forward.1} parent=1 // pred_region
      _
    $region5: #{bilstm_classifier_forward.1} parent=1 // pred_fallthru
      _
    // Predicated region
    $region6: #{bilstm_classifier_forward.1} parent=1 // pred_check
      _
    $region7: #{bilstm_classifier_forward.1} parent=1 // pred_check_branch
      %16 = sbr.rel (0) target = $region9
    $region8: #{bilstm_classifier_forward.1} parent=1 // pred_region
      %s18 = ssub.s32 32768, 32768
      %19 = vsyncadd [#allocation4], %s18
      %s20 = sshll.u32 [#allocation3], 4
      %s21 = int_to_ptr.vmem [resolvable:$true] %s20
      %26 = dma.hbm_to_vmem [thread:$0]  %s1, 32768, %s21, [#allocation4], 1024, 1024, 64
    $region9: #{bilstm_classifier_forward.1} parent=1 // pred_fallthru
      _
    // Predicated region
    $region10: #{bilstm_classifier_forward.1} parent=1 // pred_check
      _
    $region11: #{bilstm_classifier_forward.1} parent=1 // pred_check_branch
      %28 = sbr.rel (0) target = $region13
    $region12: #{bilstm_classifier_forward.1} parent=1 // pred_region
      _
    $region13: #{bilstm_classifier_forward.1} parent=1 // pred_fallthru
      _
    // Predicated region
    $region14: #{bilstm_classifier_forward.1} parent=1 // pred_check
      _
    $region15: #{bilstm_classifier_forward.1} parent=1 // pred_check_branch
      %30 = sbr.rel (0) target = $region17
    $region16: #{bilstm_classifier_forward.1} parent=1 // pred_region
      %s32 = ssub.s32 32768, 32768
      %33 = vsyncadd [#allocation6], %s32
      %s34 = sshll.u32 [#allocation5], 4
      %s35 = int_to_ptr.vmem [resolvable:$true] %s34
      %40 = dma.hbm_to_vmem [thread:$0]  %s3, 32768, %s35, [#allocation6], 1024, 1024, 64
    $region17: #{bilstm_classifier_forward.1} parent=1 // pred_fallthru
      _
    // Predicated region
    $region18: #{bilstm_classifier_forward.1} parent=1 // pred_check
      _
    $region19: #{bilstm_classifier_forward.1} parent=1 // pred_check_branch
      %42 = sbr.rel (0) target = $region21
    $region20: #{bilstm_classifier_forward.1} parent=1 // pred_region
      _
    $region21: #{bilstm_classifier_forward.1} parent=1 // pred_fallthru
      _
    // Predicated region
    $region22: #{bilstm_classifier_forward.1} parent=1 // pred_check
      _
    $region23: #{bilstm_classifier_forward.1} parent=1 // pred_check_branch
      %44 = sbr.rel (0) target = $region25
    $region24: #{bilstm_classifier_forward.1} parent=1 // pred_region
      _
    $region25: #{bilstm_classifier_forward.1} parent=1 // pred_fallthru
      _
    // Predicated region
    $region26: #{bilstm_classifier_forward.1} parent=1 // pred_check
      _
    $region27: #{bilstm_classifier_forward.1} parent=1 // pred_check_branch
      %46 = sbr.rel (0) target = $region29
    $region28: #{bilstm_classifier_forward.1} parent=1 // pred_region
      %47 = dma.done [#allocation4], 32768
    $region29: #{bilstm_classifier_forward.1} parent=1 // pred_fallthru
      _
    // Predicated region
    $region30: #{bilstm_classifier_forward.1} parent=1 // pred_check
      _
    $region31: #{bilstm_classifier_forward.1} parent=1 // pred_check_branch
      %49 = sbr.rel (0) target = $region33
    $region32: #{bilstm_classifier_forward.1} parent=1 // pred_region
      %50 = dma.done [#allocation6], 32768
    $region33: #{bilstm_classifier_forward.1} parent=1 // pred_fallthru
      _
    %v51 = vld [vmem:[%s0] sm:$0xff]
    %v52 = vld [vmem:[%s0 + $0x8] sm:$0xff]
    %v53 = vld [vmem:[%s0 + $0x10] sm:$0xff]
    %v54 = vld [vmem:[%s0 + $0x18] sm:$0xff]
    %v55 = vld [vmem:[#allocation3] sm:$0xff]
    %v56 = vld [vmem:[#allocation3 + $0x8] sm:$0xff]
    %v57 = vld [vmem:[#allocation3 + $0x10] sm:$0xff]
    %v58 = vld [vmem:[#allocation3 + $0x18] sm:$0xff]
    %v59 = vld [vmem:[#allocation3 + $0x20] sm:$0xff]
    %v60 = vld [vmem:[#allocation3 + $0x28] sm:$0xff]
    %v61 = vld [vmem:[#allocation3 + $0x30] sm:$0xff]
    %v62 = vld [vmem:[#allocation3 + $0x38] sm:$0xff]
    %v63 = vld [vmem:[#allocation3 + $0x40] sm:$0xff]
    %v64 = vld [vmem:[#allocation3 + $0x48] sm:$0xff]
    %v65 = vld [vmem:[#allocation3 + $0x50] sm:$0xff]
    %v66 = vld [vmem:[#allocation3 + $0x58] sm:$0xff]
    %v67 = vld [vmem:[#allocation3 + $0x60] sm:$0xff]
    %v68 = vld [vmem:[#allocation3 + $0x68] sm:$0xff]
    %v69 = vld [vmem:[#allocation3 + $0x70] sm:$0xff]
    %v70 = vld [vmem:[#allocation3 + $0x78] sm:$0xff]
    %v71 = vld [vmem:[#allocation3 + $0x80] sm:$0xff]
    %v72 = vld [vmem:[#allocation3 + $0x88] sm:$0xff]
    %v73 = vld [vmem:[#allocation3 + $0x90] sm:$0xff]
    %v74 = vld [vmem:[#allocation3 + $0x98] sm:$0xff]
    %v75 = vld [vmem:[#allocation3 + $0xa0] sm:$0xff]
    %v76 = vld [vmem:[#allocation3 + $0xa8] sm:$0xff]
    %v77 = vld [vmem:[#allocation3 + $0xb0] sm:$0xff]
    %v78 = vld [vmem:[#allocation3 + $0xb8] sm:$0xff]
    %v79 = vld [vmem:[#allocation3 + $0xc0] sm:$0xff]
    %v80 = vld [vmem:[#allocation3 + $0xc8] sm:$0xff]
    %v81 = vld [vmem:[#allocation3 + $0xd0] sm:$0xff]
    %v82 = vld [vmem:[#allocation3 + $0xd8] sm:$0xff]
    %v83 = vld [vmem:[#allocation3 + $0xe0] sm:$0xff]
    %v84 = vld [vmem:[#allocation3 + $0xe8] sm:$0xff]
    %v85 = vld [vmem:[#allocation3 + $0xf0] sm:$0xff]
    %v86 = vld [vmem:[#allocation3 + $0xf8] sm:$0xff]
    %v87 = vld [vmem:[#allocation3 + $0x100] sm:$0xff]
    %v88 = vld [vmem:[#allocation3 + $0x108] sm:$0xff]
    %v89 = vld [vmem:[#allocation3 + $0x110] sm:$0xff]
    %v90 = vld [vmem:[#allocation3 + $0x118] sm:$0xff]
    %v91 = vld [vmem:[#allocation3 + $0x120] sm:$0xff]
    %v92 = vld [vmem:[#allocation3 + $0x128] sm:$0xff]
    %v93 = vld [vmem:[#allocation3 + $0x130] sm:$0xff]
    %v94 = vld [vmem:[#allocation3 + $0x138] sm:$0xff]
    %v95 = vld [vmem:[#allocation3 + $0x140] sm:$0xff]
    %v96 = vld [vmem:[#allocation3 + $0x148] sm:$0xff]
    %v97 = vld [vmem:[#allocation3 + $0x150] sm:$0xff]
    %v98 = vld [vmem:[#allocation3 + $0x158] sm:$0xff]
    %v99 = vld [vmem:[#allocation3 + $0x160] sm:$0xff]
    %v100 = vld [vmem:[#allocation3 + $0x168] sm:$0xff]
    %v101 = vld [vmem:[#allocation3 + $0x170] sm:$0xff]
    %v102 = vld [vmem:[#allocation3 + $0x178] sm:$0xff]
    %v103 = vld [vmem:[#allocation3 + $0x180] sm:$0xff]
    %v104 = vld [vmem:[#allocation3 + $0x188] sm:$0xff]
    %v105 = vld [vmem:[#allocation3 + $0x190] sm:$0xff]
    %v106 = vld [vmem:[#allocation3 + $0x198] sm:$0xff]
    %v107 = vld [vmem:[#allocation3 + $0x1a0] sm:$0xff]
    %v108 = vld [vmem:[#allocation3 + $0x1a8] sm:$0xff]
    %v109 = vld [vmem:[#allocation3 + $0x1b0] sm:$0xff]
    %v110 = vld [vmem:[#allocation3 + $0x1b8] sm:$0xff]
    %v111 = vld [vmem:[#allocation3 + $0x1c0] sm:$0xff]
    %v112 = vld [vmem:[#allocation3 + $0x1c8] sm:$0xff]
    %v113 = vld [vmem:[#allocation3 + $0x1d0] sm:$0xff]
    %v114 = vld [vmem:[#allocation3 + $0x1d8] sm:$0xff]
    %v115 = vld [vmem:[#allocation3 + $0x1e0] sm:$0xff]
    %v116 = vld [vmem:[#allocation3 + $0x1e8] sm:$0xff]
    %v117 = vld [vmem:[#allocation3 + $0x1f0] sm:$0xff]
    %v118 = vld [vmem:[#allocation3 + $0x1f8] sm:$0xff]
    %v119 = vld [vmem:[#allocation3 + $0x200] sm:$0xff]
    %v120 = vld [vmem:[#allocation3 + $0x208] sm:$0xff]
    %v121 = vld [vmem:[#allocation3 + $0x210] sm:$0xff]
    %v122 = vld [vmem:[#allocation3 + $0x218] sm:$0xff]
    %v123 = vld [vmem:[#allocation3 + $0x220] sm:$0xff]
    %v124 = vld [vmem:[#allocation3 + $0x228] sm:$0xff]
    %v125 = vld [vmem:[#allocation3 + $0x230] sm:$0xff]
    %v126 = vld [vmem:[#allocation3 + $0x238] sm:$0xff]
    %v127 = vld [vmem:[#allocation3 + $0x240] sm:$0xff]
    %v128 = vld [vmem:[#allocation3 + $0x248] sm:$0xff]
    %v129 = vld [vmem:[#allocation3 + $0x250] sm:$0xff]
    %v130 = vld [vmem:[#allocation3 + $0x258] sm:$0xff]
    %v131 = vld [vmem:[#allocation3 + $0x260] sm:$0xff]
    %v132 = vld [vmem:[#allocation3 + $0x268] sm:$0xff]
    %v133 = vld [vmem:[#allocation3 + $0x270] sm:$0xff]
    %v134 = vld [vmem:[#allocation3 + $0x278] sm:$0xff]
    %v135 = vld [vmem:[#allocation3 + $0x280] sm:$0xff]
    %v136 = vld [vmem:[#allocation3 + $0x288] sm:$0xff]
    %v137 = vld [vmem:[#allocation3 + $0x290] sm:$0xff]
    %v138 = vld [vmem:[#allocation3 + $0x298] sm:$0xff]
    %v139 = vld [vmem:[#allocation3 + $0x2a0] sm:$0xff]
    %v140 = vld [vmem:[#allocation3 + $0x2a8] sm:$0xff]
    %v141 = vld [vmem:[#allocation3 + $0x2b0] sm:$0xff]
    %v142 = vld [vmem:[#allocation3 + $0x2b8] sm:$0xff]
    %v143 = vld [vmem:[#allocation3 + $0x2c0] sm:$0xff]
    %v144 = vld [vmem:[#allocation3 + $0x2c8] sm:$0xff]
    %v145 = vld [vmem:[#allocation3 + $0x2d0] sm:$0xff]
    %v146 = vld [vmem:[#allocation3 + $0x2d8] sm:$0xff]
    %v147 = vld [vmem:[#allocation3 + $0x2e0] sm:$0xff]
    %v148 = vld [vmem:[#allocation3 + $0x2e8] sm:$0xff]
    %v149 = vld [vmem:[#allocation3 + $0x2f0] sm:$0xff]
    %v150 = vld [vmem:[#allocation3 + $0x2f8] sm:$0xff]
    %v151 = vld [vmem:[#allocation3 + $0x300] sm:$0xff]
    %v152 = vld [vmem:[#allocation3 + $0x308] sm:$0xff]
    %v153 = vld [vmem:[#allocation3 + $0x310] sm:$0xff]
    %v154 = vld [vmem:[#allocation3 + $0x318] sm:$0xff]
    %v155 = vld [vmem:[#allocation3 + $0x320] sm:$0xff]
    %v156 = vld [vmem:[#allocation3 + $0x328] sm:$0xff]
    %v157 = vld [vmem:[#allocation3 + $0x330] sm:$0xff]
    %v158 = vld [vmem:[#allocation3 + $0x338] sm:$0xff]
    %v159 = vld [vmem:[#allocation3 + $0x340] sm:$0xff]
    %v160 = vld [vmem:[#allocation3 + $0x348] sm:$0xff]
    %v161 = vld [vmem:[#allocation3 + $0x350] sm:$0xff]
    %v162 = vld [vmem:[#allocation3 + $0x358] sm:$0xff]
    %v163 = vld [vmem:[#allocation3 + $0x360] sm:$0xff]
    %v164 = vld [vmem:[#allocation3 + $0x368] sm:$0xff]
    %v165 = vld [vmem:[#allocation3 + $0x370] sm:$0xff]
    %v166 = vld [vmem:[#allocation3 + $0x378] sm:$0xff]
    %v167 = vld [vmem:[#allocation3 + $0x380] sm:$0xff]
    %v168 = vld [vmem:[#allocation3 + $0x388] sm:$0xff]
    %v169 = vld [vmem:[#allocation3 + $0x390] sm:$0xff]
    %v170 = vld [vmem:[#allocation3 + $0x398] sm:$0xff]
    %v171 = vld [vmem:[#allocation3 + $0x3a0] sm:$0xff]
    %v172 = vld [vmem:[#allocation3 + $0x3a8] sm:$0xff]
    %v173 = vld [vmem:[#allocation3 + $0x3b0] sm:$0xff]
    %v174 = vld [vmem:[#allocation3 + $0x3b8] sm:$0xff]
    %v175 = vld [vmem:[#allocation3 + $0x3c0] sm:$0xff]
    %v176 = vld [vmem:[#allocation3 + $0x3c8] sm:$0xff]
    %v177 = vld [vmem:[#allocation3 + $0x3d0] sm:$0xff]
    %v178 = vld [vmem:[#allocation3 + $0x3d8] sm:$0xff]
    %v179 = vld [vmem:[#allocation3 + $0x3e0] sm:$0xff]
    %v180 = vld [vmem:[#allocation3 + $0x3e8] sm:$0xff]
    %v181 = vld [vmem:[#allocation3 + $0x3f0] sm:$0xff]
    %v182 = vld [vmem:[#allocation3 + $0x3f8] sm:$0xff]
    %v183 = vld [vmem:[#allocation3 + $0x400] sm:$0xff]
    %v184 = vld [vmem:[#allocation3 + $0x408] sm:$0xff]
    %v185 = vld [vmem:[#allocation3 + $0x410] sm:$0xff]
    %v186 = vld [vmem:[#allocation3 + $0x418] sm:$0xff]
    %v187 = vld [vmem:[#allocation3 + $0x420] sm:$0xff]
    %v188 = vld [vmem:[#allocation3 + $0x428] sm:$0xff]
    %v189 = vld [vmem:[#allocation3 + $0x430] sm:$0xff]
    %v190 = vld [vmem:[#allocation3 + $0x438] sm:$0xff]
    %v191 = vld [vmem:[#allocation3 + $0x440] sm:$0xff]
    %v192 = vld [vmem:[#allocation3 + $0x448] sm:$0xff]
    %v193 = vld [vmem:[#allocation3 + $0x450] sm:$0xff]
    %v194 = vld [vmem:[#allocation3 + $0x458] sm:$0xff]
    %v195 = vld [vmem:[#allocation3 + $0x460] sm:$0xff]
    %v196 = vld [vmem:[#allocation3 + $0x468] sm:$0xff]
    %v197 = vld [vmem:[#allocation3 + $0x470] sm:$0xff]
    %v198 = vld [vmem:[#allocation3 + $0x478] sm:$0xff]
    %v199 = vld [vmem:[#allocation3 + $0x480] sm:$0xff]
    %v200 = vld [vmem:[#allocation3 + $0x488] sm:$0xff]
    %v201 = vld [vmem:[#allocation3 + $0x490] sm:$0xff]
    %v202 = vld [vmem:[#allocation3 + $0x498] sm:$0xff]
    %v203 = vld [vmem:[#allocation3 + $0x4a0] sm:$0xff]
    %v204 = vld [vmem:[#allocation3 + $0x4a8] sm:$0xff]
    %v205 = vld [vmem:[#allocation3 + $0x4b0] sm:$0xff]
    %v206 = vld [vmem:[#allocation3 + $0x4b8] sm:$0xff]
    %v207 = vld [vmem:[#allocation3 + $0x4c0] sm:$0xff]
    %v208 = vld [vmem:[#allocation3 + $0x4c8] sm:$0xff]
    %v209 = vld [vmem:[#allocation3 + $0x4d0] sm:$0xff]
    %v210 = vld [vmem:[#allocation3 + $0x4d8] sm:$0xff]
    %v211 = vld [vmem:[#allocation3 + $0x4e0] sm:$0xff]
    %v212 = vld [vmem:[#allocation3 + $0x4e8] sm:$0xff]
    %v213 = vld [vmem:[#allocation3 + $0x4f0] sm:$0xff]
    %v214 = vld [vmem:[#allocation3 + $0x4f8] sm:$0xff]
    %v215 = vld [vmem:[#allocation3 + $0x500] sm:$0xff]
    %v216 = vld [vmem:[#allocation3 + $0x508] sm:$0xff]
    %v217 = vld [vmem:[#allocation3 + $0x510] sm:$0xff]
    %v218 = vld [vmem:[#allocation3 + $0x518] sm:$0xff]
    %v219 = vld [vmem:[#allocation3 + $0x520] sm:$0xff]
    %v220 = vld [vmem:[#allocation3 + $0x528] sm:$0xff]
    %v221 = vld [vmem:[#allocation3 + $0x530] sm:$0xff]
    %v222 = vld [vmem:[#allocation3 + $0x538] sm:$0xff]
    %v223 = vld [vmem:[#allocation3 + $0x540] sm:$0xff]
    %v224 = vld [vmem:[#allocation3 + $0x548] sm:$0xff]
    %v225 = vld [vmem:[#allocation3 + $0x550] sm:$0xff]
    %v226 = vld [vmem:[#allocation3 + $0x558] sm:$0xff]
    %v227 = vld [vmem:[#allocation3 + $0x560] sm:$0xff]
    %v228 = vld [vmem:[#allocation3 + $0x568] sm:$0xff]
    %v229 = vld [vmem:[#allocation3 + $0x570] sm:$0xff]
    %v230 = vld [vmem:[#allocation3 + $0x578] sm:$0xff]
    %v231 = vld [vmem:[#allocation3 + $0x580] sm:$0xff]
    %v232 = vld [vmem:[#allocation3 + $0x588] sm:$0xff]
    %v233 = vld [vmem:[#allocation3 + $0x590] sm:$0xff]
    %v234 = vld [vmem:[#allocation3 + $0x598] sm:$0xff]
    %v235 = vld [vmem:[#allocation3 + $0x5a0] sm:$0xff]
    %v236 = vld [vmem:[#allocation3 + $0x5a8] sm:$0xff]
    %v237 = vld [vmem:[#allocation3 + $0x5b0] sm:$0xff]
    %v238 = vld [vmem:[#allocation3 + $0x5b8] sm:$0xff]
    %v239 = vld [vmem:[#allocation3 + $0x5c0] sm:$0xff]
    %v240 = vld [vmem:[#allocation3 + $0x5c8] sm:$0xff]
    %v241 = vld [vmem:[#allocation3 + $0x5d0] sm:$0xff]
    %v242 = vld [vmem:[#allocation3 + $0x5d8] sm:$0xff]
    %v243 = vld [vmem:[#allocation3 + $0x5e0] sm:$0xff]
    %v244 = vld [vmem:[#allocation3 + $0x5e8] sm:$0xff]
    %v245 = vld [vmem:[#allocation3 + $0x5f0] sm:$0xff]
    %v246 = vld [vmem:[#allocation3 + $0x5f8] sm:$0xff]
    %v247 = vld [vmem:[#allocation3 + $0x600] sm:$0xff]
    %v248 = vld [vmem:[#allocation3 + $0x608] sm:$0xff]
    %v249 = vld [vmem:[#allocation3 + $0x610] sm:$0xff]
    %v250 = vld [vmem:[#allocation3 + $0x618] sm:$0xff]
    %v251 = vld [vmem:[#allocation3 + $0x620] sm:$0xff]
    %v252 = vld [vmem:[#allocation3 + $0x628] sm:$0xff]
    %v253 = vld [vmem:[#allocation3 + $0x630] sm:$0xff]
    %v254 = vld [vmem:[#allocation3 + $0x638] sm:$0xff]
    %v255 = vld [vmem:[#allocation3 + $0x640] sm:$0xff]
    %v256 = vld [vmem:[#allocation3 + $0x648] sm:$0xff]
    %v257 = vld [vmem:[#allocation3 + $0x650] sm:$0xff]
    %v258 = vld [vmem:[#allocation3 + $0x658] sm:$0xff]
    %v259 = vld [vmem:[#allocation3 + $0x660] sm:$0xff]
    %v260 = vld [vmem:[#allocation3 + $0x668] sm:$0xff]
    %v261 = vld [vmem:[#allocation3 + $0x670] sm:$0xff]
    %v262 = vld [vmem:[#allocation3 + $0x678] sm:$0xff]
    %v263 = vld [vmem:[#allocation3 + $0x680] sm:$0xff]
    %v264 = vld [vmem:[#allocation3 + $0x688] sm:$0xff]
    %v265 = vld [vmem:[#allocation3 + $0x690] sm:$0xff]
    %v266 = vld [vmem:[#allocation3 + $0x698] sm:$0xff]
    %v267 = vld [vmem:[#allocation3 + $0x6a0] sm:$0xff]
    %v268 = vld [vmem:[#allocation3 + $0x6a8] sm:$0xff]
    %v269 = vld [vmem:[#allocation3 + $0x6b0] sm:$0xff]
    %v270 = vld [vmem:[#allocation3 + $0x6b8] sm:$0xff]
    %v271 = vld [vmem:[#allocation3 + $0x6c0] sm:$0xff]
    %v272 = vld [vmem:[#allocation3 + $0x6c8] sm:$0xff]
    %v273 = vld [vmem:[#allocation3 + $0x6d0] sm:$0xff]
    %v274 = vld [vmem:[#allocation3 + $0x6d8] sm:$0xff]
    %v275 = vld [vmem:[#allocation3 + $0x6e0] sm:$0xff]
    %v276 = vld [vmem:[#allocation3 + $0x6e8] sm:$0xff]
    %v277 = vld [vmem:[#allocation3 + $0x6f0] sm:$0xff]
    %v278 = vld [vmem:[#allocation3 + $0x6f8] sm:$0xff]
    %v279 = vld [vmem:[#allocation3 + $0x700] sm:$0xff]
    %v280 = vld [vmem:[#allocation3 + $0x708] sm:$0xff]
    %v281 = vld [vmem:[#allocation3 + $0x710] sm:$0xff]
    %v282 = vld [vmem:[#allocation3 + $0x718] sm:$0xff]
    %v283 = vld [vmem:[#allocation3 + $0x720] sm:$0xff]
    %v284 = vld [vmem:[#allocation3 + $0x728] sm:$0xff]
    %v285 = vld [vmem:[#allocation3 + $0x730] sm:$0xff]
    %v286 = vld [vmem:[#allocation3 + $0x738] sm:$0xff]
    %v287 = vld [vmem:[#allocation3 + $0x740] sm:$0xff]
    %v288 = vld [vmem:[#allocation3 + $0x748] sm:$0xff]
    %v289 = vld [vmem:[#allocation3 + $0x750] sm:$0xff]
    %v290 = vld [vmem:[#allocation3 + $0x758] sm:$0xff]
    %v291 = vld [vmem:[#allocation3 + $0x760] sm:$0xff]
    %v292 = vld [vmem:[#allocation3 + $0x768] sm:$0xff]
    %v293 = vld [vmem:[#allocation3 + $0x770] sm:$0xff]
    %v294 = vld [vmem:[#allocation3 + $0x778] sm:$0xff]
    %v295 = vld [vmem:[#allocation3 + $0x780] sm:$0xff]
    %v296 = vld [vmem:[#allocation3 + $0x788] sm:$0xff]
    %v297 = vld [vmem:[#allocation3 + $0x790] sm:$0xff]
    %v298 = vld [vmem:[#allocation3 + $0x798] sm:$0xff]
    %v299 = vld [vmem:[#allocation3 + $0x7a0] sm:$0xff]
    %v300 = vld [vmem:[#allocation3 + $0x7a8] sm:$0xff]
    %v301 = vld [vmem:[#allocation3 + $0x7b0] sm:$0xff]
    %v302 = vld [vmem:[#allocation3 + $0x7b8] sm:$0xff]
    %v303 = vld [vmem:[#allocation3 + $0x7c0] sm:$0xff]
    %v304 = vld [vmem:[#allocation3 + $0x7c8] sm:$0xff]
    %v305 = vld [vmem:[#allocation3 + $0x7d0] sm:$0xff]
    %v306 = vld [vmem:[#allocation3 + $0x7d8] sm:$0xff]
    %v307 = vld [vmem:[#allocation3 + $0x7e0] sm:$0xff]
    %v308 = vld [vmem:[#allocation3 + $0x7e8] sm:$0xff]
    %v309 = vld [vmem:[#allocation3 + $0x7f0] sm:$0xff]
    %v310 = vld [vmem:[#allocation3 + $0x7f8] sm:$0xff]
    %v311 = vld [vmem:[%s2] sm:$0xff]
    %v313 = vlaneseq
    %v314 = vshrl.u32 %v313, 7
    %v315 = vsub.s32 0, %v314
    %v316 = vrot.slane %v311, %v315
    %v317 = vlaneseq
    %v318 = vshrl.u32 %v317, 7
    %v319 = vsub.s32 1, %v318
    %v320 = vrot.slane %v311, %v319
    %v321 = vlaneseq
    %v322 = vshrl.u32 %v321, 7
    %v323 = vsub.s32 2, %v322
    %v324 = vrot.slane %v311, %v323
    %v325 = vlaneseq
    %v326 = vshrl.u32 %v325, 7
    %v327 = vsub.s32 3, %v326
    %v328 = vrot.slane %v311, %v327
    %v329 = vlaneseq
    %v330 = vshrl.u32 %v329, 7
    %v331 = vsub.s32 4, %v330
    %v332 = vrot.slane %v311, %v331
    %v333 = vlaneseq
    %v334 = vshrl.u32 %v333, 7
    %v335 = vsub.s32 5, %v334
    %v336 = vrot.slane %v311, %v335
    %v337 = vlaneseq
    %v338 = vshrl.u32 %v337, 7
    %v339 = vsub.s32 6, %v338
    %v340 = vrot.slane %v311, %v339
    %v341 = vlaneseq
    %v342 = vshrl.u32 %v341, 7
    %v343 = vsub.s32 7, %v342
    %v344 = vrot.slane %v311, %v343
    %353 = vmatprep.subr.mxu0 %v56
    %354 = vmatpush1.msra.mxu0 %v55
    %355 = vmatprep.subr.mxu0 %v64
    %356 = vmatpush1.msra.mxu0 %v63
    %357 = vmatprep.subr.mxu0 %v72
    %358 = vmatpush1.msra.mxu0 %v71
    %359 = vmatprep.subr.mxu0 %v80
    %360 = vmatpush1.msra.mxu0 %v79
    %361 = vmatprep.subr.mxu0 %v88
    %362 = vmatpush1.msra.mxu0 %v87
    %363 = vmatprep.subr.mxu0 %v96
    %364 = vmatpush1.msra.mxu0 %v95
    %365 = vmatprep.subr.mxu0 %v104
    %366 = vmatpush1.msra.mxu0 %v103
    %367 = vmatprep.subr.mxu0 %v112
    %368 = vmatpush1.msra.mxu0 %v111
    %369 = vmatprep.subr.mxu0 %v120
    %370 = vmatpush1.msra.mxu0 %v119
    %371 = vmatprep.subr.mxu0 %v128
    %372 = vmatpush1.msra.mxu0 %v127
    %373 = vmatprep.subr.mxu0 %v136
    %374 = vmatpush1.msra.mxu0 %v135
    %375 = vmatprep.subr.mxu0 %v144
    %376 = vmatpush1.msra.mxu0 %v143
    %377 = vmatprep.subr.mxu0 %v152
    %378 = vmatpush1.msra.mxu0 %v151
    %379 = vmatprep.subr.mxu0 %v160
    %380 = vmatpush1.msra.mxu0 %v159
    %381 = vmatprep.subr.mxu0 %v168
    %382 = vmatpush1.msra.mxu0 %v167
    %383 = vmatprep.subr.mxu0 %v176
    %384 = vmatpush1.msra.mxu0 %v175
    %385 = vmatprep.subr.mxu0 %v184
    %386 = vmatpush1.msra.mxu0 %v183
    %387 = vmatprep.subr.mxu0 %v192
    %388 = vmatpush1.msra.mxu0 %v191
    %389 = vmatprep.subr.mxu0 %v200
    %390 = vmatpush1.msra.mxu0 %v199
    %391 = vmatprep.subr.mxu0 %v208
    %392 = vmatpush1.msra.mxu0 %v207
    %393 = vmatprep.subr.mxu0 %v216
    %394 = vmatpush1.msra.mxu0 %v215
    %395 = vmatprep.subr.mxu0 %v224
    %396 = vmatpush1.msra.mxu0 %v223
    %397 = vmatprep.subr.mxu0 %v232
    %398 = vmatpush1.msra.mxu0 %v231
    %399 = vmatprep.subr.mxu0 %v240
    %400 = vmatpush1.msra.mxu0 %v239
    %401 = vmatprep.subr.mxu0 %v248
    %402 = vmatpush1.msra.mxu0 %v247
    %403 = vmatprep.subr.mxu0 %v256
    %404 = vmatpush1.msra.mxu0 %v255
    %405 = vmatprep.subr.mxu0 %v264
    %406 = vmatpush1.msra.mxu0 %v263
    %407 = vmatprep.subr.mxu0 %v272
    %408 = vmatpush1.msra.mxu0 %v271
    %409 = vmatprep.subr.mxu0 %v280
    %410 = vmatpush1.msra.mxu0 %v279
    %411 = vmatprep.subr.mxu0 %v288
    %412 = vmatpush1.msra.mxu0 %v287
    %413 = vmatprep.subr.mxu0 %v296
    %414 = vmatpush1.msra.mxu0 %v295
    %415 = vmatprep.subr.mxu0 %v304
    %416 = vmatpush1.msra.mxu0 %v303
    %417 = vmatprep.mubr.f32.mxu0 %v52
    %418 = vmatmul.mubr.f32.gmra.mrb[0].mxu0 %v51
    %v419 = vpop.f32.mrb[0].mxu0
    %v420 = vadd.f32 %v316, %v419
    %v421 = vpop.f32.mrb[0].mxu0
    %v422 = vadd.f32 %v320, %v421
    %423 = vmatprep.mubr.f32.mxu0 %v54
    %424 = vmatmul.mubr.f32.gmra.mrb[0].mxu0 %v53
    %v425 = vpop.f32.mrb[0].mxu0
    %v426 = vadd.f32 %v316, %v425
    %v427 = vpop.f32.mrb[0].mxu0
    %v428 = vadd.f32 %v320, %v427
    %429 = vdwg.mxu0
    %430 = vmatprep.subr.mxu0 %v58
    %431 = vmatpush1.msra.mxu0 %v57
    %432 = vmatprep.subr.mxu0 %v66
    %433 = vmatpush1.msra.mxu0 %v65
    %434 = vmatprep.subr.mxu0 %v74
    %435 = vmatpush1.msra.mxu0 %v73
    %436 = vmatprep.subr.mxu0 %v82
    %437 = vmatpush1.msra.mxu0 %v81
    %438 = vmatprep.subr.mxu0 %v90
    %439 = vmatpush1.msra.mxu0 %v89
    %440 = vmatprep.subr.mxu0 %v98
    %441 = vmatpush1.msra.mxu0 %v97
    %442 = vmatprep.subr.mxu0 %v106
    %443 = vmatpush1.msra.mxu0 %v105
    %444 = vmatprep.subr.mxu0 %v114
    %445 = vmatpush1.msra.mxu0 %v113
    %446 = vmatprep.subr.mxu0 %v122
    %447 = vmatpush1.msra.mxu0 %v121
    %448 = vmatprep.subr.mxu0 %v130
    %449 = vmatpush1.msra.mxu0 %v129
    %450 = vmatprep.subr.mxu0 %v138
    %451 = vmatpush1.msra.mxu0 %v137
    %452 = vmatprep.subr.mxu0 %v146
    %453 = vmatpush1.msra.mxu0 %v145
    %454 = vmatprep.subr.mxu0 %v154
    %455 = vmatpush1.msra.mxu0 %v153
    %456 = vmatprep.subr.mxu0 %v162
    %457 = vmatpush1.msra.mxu0 %v161
    %458 = vmatprep.subr.mxu0 %v170
    %459 = vmatpush1.msra.mxu0 %v169
    %460 = vmatprep.subr.mxu0 %v178
    %461 = vmatpush1.msra.mxu0 %v177
    %462 = vmatprep.subr.mxu0 %v186
    %463 = vmatpush1.msra.mxu0 %v185
    %464 = vmatprep.subr.mxu0 %v194
    %465 = vmatpush1.msra.mxu0 %v193
    %466 = vmatprep.subr.mxu0 %v202
    %467 = vmatpush1.msra.mxu0 %v201
    %468 = vmatprep.subr.mxu0 %v210
    %469 = vmatpush1.msra.mxu0 %v209
    %470 = vmatprep.subr.mxu0 %v218
    %471 = vmatpush1.msra.mxu0 %v217
    %472 = vmatprep.subr.mxu0 %v226
    %473 = vmatpush1.msra.mxu0 %v225
    %474 = vmatprep.subr.mxu0 %v234
    %475 = vmatpush1.msra.mxu0 %v233
    %476 = vmatprep.subr.mxu0 %v242
    %477 = vmatpush1.msra.mxu0 %v241
    %478 = vmatprep.subr.mxu0 %v250
    %479 = vmatpush1.msra.mxu0 %v249
    %480 = vmatprep.subr.mxu0 %v258
    %481 = vmatpush1.msra.mxu0 %v257
    %482 = vmatprep.subr.mxu0 %v266
    %483 = vmatpush1.msra.mxu0 %v265
    %484 = vmatprep.subr.mxu0 %v274
    %485 = vmatpush1.msra.mxu0 %v273
    %486 = vmatprep.subr.mxu0 %v282
    %487 = vmatpush1.msra.mxu0 %v281
    %488 = vmatprep.subr.mxu0 %v290
    %489 = vmatpush1.msra.mxu0 %v289
    %490 = vmatprep.subr.mxu0 %v298
    %491 = vmatpush1.msra.mxu0 %v297
    %492 = vmatprep.subr.mxu0 %v306
    %493 = vmatpush1.msra.mxu0 %v305
    %494 = vmatprep.mubr.f32.mxu0 %v52
    %495 = vmatmul.mubr.f32.gmra.mrb[0].mxu0 %v51
    %v496 = vpop.f32.mrb[0].mxu0
    %v497 = vadd.f32 %v324, %v496
    %v498 = vpop.f32.mrb[0].mxu0
    %v499 = vadd.f32 %v328, %v498
    %500 = vmatprep.mubr.f32.mxu0 %v54
    %501 = vmatmul.mubr.f32.gmra.mrb[0].mxu0 %v53
    %v502 = vpop.f32.mrb[0].mxu0
    %v503 = vadd.f32 %v324, %v502
    %v504 = vpop.f32.mrb[0].mxu0
    %v505 = vadd.f32 %v328, %v504
    %506 = vdwg.mxu0
    %507 = vmatprep.subr.mxu0 %v60
    %508 = vmatpush1.msra.mxu0 %v59
    %509 = vmatprep.subr.mxu0 %v68
    %510 = vmatpush1.msra.mxu0 %v67
    %511 = vmatprep.subr.mxu0 %v76
    %512 = vmatpush1.msra.mxu0 %v75
    %513 = vmatprep.subr.mxu0 %v84
    %514 = vmatpush1.msra.mxu0 %v83
    %515 = vmatprep.subr.mxu0 %v92
    %516 = vmatpush1.msra.mxu0 %v91
    %517 = vmatprep.subr.mxu0 %v100
    %518 = vmatpush1.msra.mxu0 %v99
    %519 = vmatprep.subr.mxu0 %v108
    %520 = vmatpush1.msra.mxu0 %v107
    %521 = vmatprep.subr.mxu0 %v116
    %522 = vmatpush1.msra.mxu0 %v115
    %523 = vmatprep.subr.mxu0 %v124
    %524 = vmatpush1.msra.mxu0 %v123
    %525 = vmatprep.subr.mxu0 %v132
    %526 = vmatpush1.msra.mxu0 %v131
    %527 = vmatprep.subr.mxu0 %v140
    %528 = vmatpush1.msra.mxu0 %v139
    %529 = vmatprep.subr.mxu0 %v148
    %530 = vmatpush1.msra.mxu0 %v147
    %531 = vmatprep.subr.mxu0 %v156
    %532 = vmatpush1.msra.mxu0 %v155
    %533 = vmatprep.subr.mxu0 %v164
    %534 = vmatpush1.msra.mxu0 %v163
    %535 = vmatprep.subr.mxu0 %v172
    %536 = vmatpush1.msra.mxu0 %v171
    %537 = vmatprep.subr.mxu0 %v180
    %538 = vmatpush1.msra.mxu0 %v179
    %539 = vmatprep.subr.mxu0 %v188
    %540 = vmatpush1.msra.mxu0 %v187
    %541 = vmatprep.subr.mxu0 %v196
    %542 = vmatpush1.msra.mxu0 %v195
    %543 = vmatprep.subr.mxu0 %v204
    %544 = vmatpush1.msra.mxu0 %v203
    %545 = vmatprep.subr.mxu0 %v212
    %546 = vmatpush1.msra.mxu0 %v211
    %547 = vmatprep.subr.mxu0 %v220
    %548 = vmatpush1.msra.mxu0 %v219
    %549 = vmatprep.subr.mxu0 %v228
    %550 = vmatpush1.msra.mxu0 %v227
    %551 = vmatprep.subr.mxu0 %v236
    %552 = vmatpush1.msra.mxu0 %v235
    %553 = vmatprep.subr.mxu0 %v244
    %554 = vmatpush1.msra.mxu0 %v243
    %555 = vmatprep.subr.mxu0 %v252
    %556 = vmatpush1.msra.mxu0 %v251
    %557 = vmatprep.subr.mxu0 %v260
    %558 = vmatpush1.msra.mxu0 %v259
    %559 = vmatprep.subr.mxu0 %v268
    %560 = vmatpush1.msra.mxu0 %v267
    %561 = vmatprep.subr.mxu0 %v276
    %562 = vmatpush1.msra.mxu0 %v275
    %563 = vmatprep.subr.mxu0 %v284
    %564 = vmatpush1.msra.mxu0 %v283
    %565 = vmatprep.subr.mxu0 %v292
    %566 = vmatpush1.msra.mxu0 %v291
    %567 = vmatprep.subr.mxu0 %v300
    %568 = vmatpush1.msra.mxu0 %v299
    %569 = vmatprep.subr.mxu0 %v308
    %570 = vmatpush1.msra.mxu0 %v307
    %571 = vmatprep.mubr.f32.mxu0 %v52
    %572 = vmatmul.mubr.f32.gmra.mrb[0].mxu0 %v51
    %v573 = vpop.f32.mrb[0].mxu0
    %v574 = vadd.f32 %v332, %v573
    %v575 = vpop.f32.mrb[0].mxu0
    %v576 = vadd.f32 %v336, %v575
    %577 = vmatprep.mubr.f32.mxu0 %v54
    %578 = vmatmul.mubr.f32.gmra.mrb[0].mxu0 %v53
    %v579 = vpop.f32.mrb[0].mxu0
    %v580 = vadd.f32 %v332, %v579
    %v581 = vpop.f32.mrb[0].mxu0
    %v582 = vadd.f32 %v336, %v581
    %583 = vdwg.mxu0
    %584 = vmatprep.subr.mxu0 %v62
    %585 = vmatpush1.msra.mxu0 %v61
    %586 = vmatprep.subr.mxu0 %v70
    %587 = vmatpush1.msra.mxu0 %v69
    %588 = vmatprep.subr.mxu0 %v78
    %589 = vmatpush1.msra.mxu0 %v77
    %590 = vmatprep.subr.mxu0 %v86
    %591 = vmatpush1.msra.mxu0 %v85
    %592 = vmatprep.subr.mxu0 %v94
    %593 = vmatpush1.msra.mxu0 %v93
    %594 = vmatprep.subr.mxu0 %v102
    %595 = vmatpush1.msra.mxu0 %v101
    %596 = vmatprep.subr.mxu0 %v110
    %597 = vmatpush1.msra.mxu0 %v109
    %598 = vmatprep.subr.mxu0 %v118
    %599 = vmatpush1.msra.mxu0 %v117
    %600 = vmatprep.subr.mxu0 %v126
    %601 = vmatpush1.msra.mxu0 %v125
    %602 = vmatprep.subr.mxu0 %v134
    %603 = vmatpush1.msra.mxu0 %v133
    %604 = vmatprep.subr.mxu0 %v142
    %605 = vmatpush1.msra.mxu0 %v141
    %606 = vmatprep.subr.mxu0 %v150
    %607 = vmatpush1.msra.mxu0 %v149
    %608 = vmatprep.subr.mxu0 %v158
    %609 = vmatpush1.msra.mxu0 %v157
    %610 = vmatprep.subr.mxu0 %v166
    %611 = vmatpush1.msra.mxu0 %v165
    %612 = vmatprep.subr.mxu0 %v174
    %613 = vmatpush1.msra.mxu0 %v173
    %614 = vmatprep.subr.mxu0 %v182
    %615 = vmatpush1.msra.mxu0 %v181
    %616 = vmatprep.subr.mxu0 %v190
    %617 = vmatpush1.msra.mxu0 %v189
    %618 = vmatprep.subr.mxu0 %v198
    %619 = vmatpush1.msra.mxu0 %v197
    %620 = vmatprep.subr.mxu0 %v206
    %621 = vmatpush1.msra.mxu0 %v205
    %622 = vmatprep.subr.mxu0 %v214
    %623 = vmatpush1.msra.mxu0 %v213
    %624 = vmatprep.subr.mxu0 %v222
    %625 = vmatpush1.msra.mxu0 %v221
    %626 = vmatprep.subr.mxu0 %v230
    %627 = vmatpush1.msra.mxu0 %v229
    %628 = vmatprep.subr.mxu0 %v238
    %629 = vmatpush1.msra.mxu0 %v237
    %630 = vmatprep.subr.mxu0 %v246
    %631 = vmatpush1.msra.mxu0 %v245
    %632 = vmatprep.subr.mxu0 %v254
    %633 = vmatpush1.msra.mxu0 %v253
    %634 = vmatprep.subr.mxu0 %v262
    %635 = vmatpush1.msra.mxu0 %v261
    %636 = vmatprep.subr.mxu0 %v270
    %637 = vmatpush1.msra.mxu0 %v269
    %638 = vmatprep.subr.mxu0 %v278
    %639 = vmatpush1.msra.mxu0 %v277
    %640 = vmatprep.subr.mxu0 %v286
    %641 = vmatpush1.msra.mxu0 %v285
    %642 = vmatprep.subr.mxu0 %v294
    %643 = vmatpush1.msra.mxu0 %v293
    %644 = vmatprep.subr.mxu0 %v302
    %645 = vmatpush1.msra.mxu0 %v301
    %646 = vmatprep.subr.mxu0 %v310
    %647 = vmatpush1.msra.mxu0 %v309
    %648 = vmatprep.mubr.f32.mxu0 %v52
    %649 = vmatmul.mubr.f32.gmra.mrb[0].mxu0 %v51
    %v650 = vpop.f32.mrb[0].mxu0
    %v651 = vadd.f32 %v340, %v650
    %v652 = vpop.f32.mrb[0].mxu0
    %v653 = vadd.f32 %v344, %v652
    %654 = vmatprep.mubr.f32.mxu0 %v54
    %655 = vmatmul.mubr.f32.gmra.mrb[0].mxu0 %v53
    %v656 = vpop.f32.mrb[0].mxu0
    %v657 = vadd.f32 %v340, %v656
    %v658 = vpop.f32.mrb[0].mxu0
    %v659 = vadd.f32 %v344, %v658
    %660 = vdwg.mxu0
    %v661 = vld [vmem:[#allocation5] sm:$0xff]
    %v662 = vld [vmem:[#allocation5 + $0x8] sm:$0xff]
    %v663 = vld [vmem:[#allocation5 + $0x10] sm:$0xff]
    %v664 = vld [vmem:[#allocation5 + $0x18] sm:$0xff]
    %v665 = vld [vmem:[#allocation5 + $0x20] sm:$0xff]
    %v666 = vld [vmem:[#allocation5 + $0x28] sm:$0xff]
    %v667 = vld [vmem:[#allocation5 + $0x30] sm:$0xff]
    %v668 = vld [vmem:[#allocation5 + $0x38] sm:$0xff]
    %v669 = vld [vmem:[#allocation5 + $0x40] sm:$0xff]
    %v670 = vld [vmem:[#allocation5 + $0x48] sm:$0xff]
    %v671 = vld [vmem:[#allocation5 + $0x50] sm:$0xff]
    %v672 = vld [vmem:[#allocation5 + $0x58] sm:$0xff]
    %v673 = vld [vmem:[#allocation5 + $0x60] sm:$0xff]
    %v674 = vld [vmem:[#allocation5 + $0x68] sm:$0xff]
    %v675 = vld [vmem:[#allocation5 + $0x70] sm:$0xff]
    %v676 = vld [vmem:[#allocation5 + $0x78] sm:$0xff]
    %v677 = vld [vmem:[#allocation5 + $0x80] sm:$0xff]
    %v678 = vld [vmem:[#allocation5 + $0x88] sm:$0xff]
    %v679 = vld [vmem:[#allocation5 + $0x90] sm:$0xff]
    %v680 = vld [vmem:[#allocation5 + $0x98] sm:$0xff]
    %v681 = vld [vmem:[#allocation5 + $0xa0] sm:$0xff]
    %v682 = vld [vmem:[#allocation5 + $0xa8] sm:$0xff]
    %v683 = vld [vmem:[#allocation5 + $0xb0] sm:$0xff]
    %v684 = vld [vmem:[#allocation5 + $0xb8] sm:$0xff]
    %v685 = vld [vmem:[#allocation5 + $0xc0] sm:$0xff]
    %v686 = vld [vmem:[#allocation5 + $0xc8] sm:$0xff]
    %v687 = vld [vmem:[#allocation5 + $0xd0] sm:$0xff]
    %v688 = vld [vmem:[#allocation5 + $0xd8] sm:$0xff]
    %v689 = vld [vmem:[#allocation5 + $0xe0] sm:$0xff]
    %v690 = vld [vmem:[#allocation5 + $0xe8] sm:$0xff]
    %v691 = vld [vmem:[#allocation5 + $0xf0] sm:$0xff]
    %v692 = vld [vmem:[#allocation5 + $0xf8] sm:$0xff]
    %v693 = vld [vmem:[#allocation5 + $0x100] sm:$0xff]
    %v694 = vld [vmem:[#allocation5 + $0x108] sm:$0xff]
    %v695 = vld [vmem:[#allocation5 + $0x110] sm:$0xff]
    %v696 = vld [vmem:[#allocation5 + $0x118] sm:$0xff]
    %v697 = vld [vmem:[#allocation5 + $0x120] sm:$0xff]
    %v698 = vld [vmem:[#allocation5 + $0x128] sm:$0xff]
    %v699 = vld [vmem:[#allocation5 + $0x130] sm:$0xff]
    %v700 = vld [vmem:[#allocation5 + $0x138] sm:$0xff]
    %v701 = vld [vmem:[#allocation5 + $0x140] sm:$0xff]
    %v702 = vld [vmem:[#allocation5 + $0x148] sm:$0xff]
    %v703 = vld [vmem:[#allocation5 + $0x150] sm:$0xff]
    %v704 = vld [vmem:[#allocation5 + $0x158] sm:$0xff]
    %v705 = vld [vmem:[#allocation5 + $0x160] sm:$0xff]
    %v706 = vld [vmem:[#allocation5 + $0x168] sm:$0xff]
    %v707 = vld [vmem:[#allocation5 + $0x170] sm:$0xff]
    %v708 = vld [vmem:[#allocation5 + $0x178] sm:$0xff]
    %v709 = vld [vmem:[#allocation5 + $0x180] sm:$0xff]
    %v710 = vld [vmem:[#allocation5 + $0x188] sm:$0xff]
    %v711 = vld [vmem:[#allocation5 + $0x190] sm:$0xff]
    %v712 = vld [vmem:[#allocation5 + $0x198] sm:$0xff]
    %v713 = vld [vmem:[#allocation5 + $0x1a0] sm:$0xff]
    %v714 = vld [vmem:[#allocation5 + $0x1a8] sm:$0xff]
    %v715 = vld [vmem:[#allocation5 + $0x1b0] sm:$0xff]
    %v716 = vld [vmem:[#allocation5 + $0x1b8] sm:$0xff]
    %v717 = vld [vmem:[#allocation5 + $0x1c0] sm:$0xff]
    %v718 = vld [vmem:[#allocation5 + $0x1c8] sm:$0xff]
    %v719 = vld [vmem:[#allocation5 + $0x1d0] sm:$0xff]
    %v720 = vld [vmem:[#allocation5 + $0x1d8] sm:$0xff]
    %v721 = vld [vmem:[#allocation5 + $0x1e0] sm:$0xff]
    %v722 = vld [vmem:[#allocation5 + $0x1e8] sm:$0xff]
    %v723 = vld [vmem:[#allocation5 + $0x1f0] sm:$0xff]
    %v724 = vld [vmem:[#allocation5 + $0x1f8] sm:$0xff]
    %v725 = vld [vmem:[#allocation5 + $0x200] sm:$0xff]
    %v726 = vld [vmem:[#allocation5 + $0x208] sm:$0xff]
    %v727 = vld [vmem:[#allocation5 + $0x210] sm:$0xff]
    %v728 = vld [vmem:[#allocation5 + $0x218] sm:$0xff]
    %v729 = vld [vmem:[#allocation5 + $0x220] sm:$0xff]
    %v730 = vld [vmem:[#allocation5 + $0x228] sm:$0xff]
    %v731 = vld [vmem:[#allocation5 + $0x230] sm:$0xff]
    %v732 = vld [vmem:[#allocation5 + $0x238] sm:$0xff]
    %v733 = vld [vmem:[#allocation5 + $0x240] sm:$0xff]
    %v734 = vld [vmem:[#allocation5 + $0x248] sm:$0xff]
    %v735 = vld [vmem:[#allocation5 + $0x250] sm:$0xff]
    %v736 = vld [vmem:[#allocation5 + $0x258] sm:$0xff]
    %v737 = vld [vmem:[#allocation5 + $0x260] sm:$0xff]
    %v738 = vld [vmem:[#allocation5 + $0x268] sm:$0xff]
    %v739 = vld [vmem:[#allocation5 + $0x270] sm:$0xff]
    %v740 = vld [vmem:[#allocation5 + $0x278] sm:$0xff]
    %v741 = vld [vmem:[#allocation5 + $0x280] sm:$0xff]
    %v742 = vld [vmem:[#allocation5 + $0x288] sm:$0xff]
    %v743 = vld [vmem:[#allocation5 + $0x290] sm:$0xff]
    %v744 = vld [vmem:[#allocation5 + $0x298] sm:$0xff]
    %v745 = vld [vmem:[#allocation5 + $0x2a0] sm:$0xff]
    %v746 = vld [vmem:[#allocation5 + $0x2a8] sm:$0xff]
    %v747 = vld [vmem:[#allocation5 + $0x2b0] sm:$0xff]
    %v748 = vld [vmem:[#allocation5 + $0x2b8] sm:$0xff]
    %v749 = vld [vmem:[#allocation5 + $0x2c0] sm:$0xff]
    %v750 = vld [vmem:[#allocation5 + $0x2c8] sm:$0xff]
    %v751 = vld [vmem:[#allocation5 + $0x2d0] sm:$0xff]
    %v752 = vld [vmem:[#allocation5 + $0x2d8] sm:$0xff]
    %v753 = vld [vmem:[#allocation5 + $0x2e0] sm:$0xff]
    %v754 = vld [vmem:[#allocation5 + $0x2e8] sm:$0xff]
    %v755 = vld [vmem:[#allocation5 + $0x2f0] sm:$0xff]
    %v756 = vld [vmem:[#allocation5 + $0x2f8] sm:$0xff]
    %v757 = vld [vmem:[#allocation5 + $0x300] sm:$0xff]
    %v758 = vld [vmem:[#allocation5 + $0x308] sm:$0xff]
    %v759 = vld [vmem:[#allocation5 + $0x310] sm:$0xff]
    %v760 = vld [vmem:[#allocation5 + $0x318] sm:$0xff]
    %v761 = vld [vmem:[#allocation5 + $0x320] sm:$0xff]
    %v762 = vld [vmem:[#allocation5 + $0x328] sm:$0xff]
    %v763 = vld [vmem:[#allocation5 + $0x330] sm:$0xff]
    %v764 = vld [vmem:[#allocation5 + $0x338] sm:$0xff]
    %v765 = vld [vmem:[#allocation5 + $0x340] sm:$0xff]
    %v766 = vld [vmem:[#allocation5 + $0x348] sm:$0xff]
    %v767 = vld [vmem:[#allocation5 + $0x350] sm:$0xff]
    %v768 = vld [vmem:[#allocation5 + $0x358] sm:$0xff]
    %v769 = vld [vmem:[#allocation5 + $0x360] sm:$0xff]
    %v770 = vld [vmem:[#allocation5 + $0x368] sm:$0xff]
    %v771 = vld [vmem:[#allocation5 + $0x370] sm:$0xff]
    %v772 = vld [vmem:[#allocation5 + $0x378] sm:$0xff]
    %v773 = vld [vmem:[#allocation5 + $0x380] sm:$0xff]
    %v774 = vld [vmem:[#allocation5 + $0x388] sm:$0xff]
    %v775 = vld [vmem:[#allocation5 + $0x390] sm:$0xff]
    %v776 = vld [vmem:[#allocation5 + $0x398] sm:$0xff]
    %v777 = vld [vmem:[#allocation5 + $0x3a0] sm:$0xff]
    %v778 = vld [vmem:[#allocation5 + $0x3a8] sm:$0xff]
    %v779 = vld [vmem:[#allocation5 + $0x3b0] sm:$0xff]
    %v780 = vld [vmem:[#allocation5 + $0x3b8] sm:$0xff]
    %v781 = vld [vmem:[#allocation5 + $0x3c0] sm:$0xff]
    %v782 = vld [vmem:[#allocation5 + $0x3c8] sm:$0xff]
    %v783 = vld [vmem:[#allocation5 + $0x3d0] sm:$0xff]
    %v784 = vld [vmem:[#allocation5 + $0x3d8] sm:$0xff]
    %v785 = vld [vmem:[#allocation5 + $0x3e0] sm:$0xff]
    %v786 = vld [vmem:[#allocation5 + $0x3e8] sm:$0xff]
    %v787 = vld [vmem:[#allocation5 + $0x3f0] sm:$0xff]
    %v788 = vld [vmem:[#allocation5 + $0x3f8] sm:$0xff]
    %v789 = vld [vmem:[#allocation5 + $0x400] sm:$0xff]
    %v790 = vld [vmem:[#allocation5 + $0x408] sm:$0xff]
    %v791 = vld [vmem:[#allocation5 + $0x410] sm:$0xff]
    %v792 = vld [vmem:[#allocation5 + $0x418] sm:$0xff]
    %v793 = vld [vmem:[#allocation5 + $0x420] sm:$0xff]
    %v794 = vld [vmem:[#allocation5 + $0x428] sm:$0xff]
    %v795 = vld [vmem:[#allocation5 + $0x430] sm:$0xff]
    %v796 = vld [vmem:[#allocation5 + $0x438] sm:$0xff]
    %v797 = vld [vmem:[#allocation5 + $0x440] sm:$0xff]
    %v798 = vld [vmem:[#allocation5 + $0x448] sm:$0xff]
    %v799 = vld [vmem:[#allocation5 + $0x450] sm:$0xff]
    %v800 = vld [vmem:[#allocation5 + $0x458] sm:$0xff]
    %v801 = vld [vmem:[#allocation5 + $0x460] sm:$0xff]
    %v802 = vld [vmem:[#allocation5 + $0x468] sm:$0xff]
    %v803 = vld [vmem:[#allocation5 + $0x470] sm:$0xff]
    %v804 = vld [vmem:[#allocation5 + $0x478] sm:$0xff]
    %v805 = vld [vmem:[#allocation5 + $0x480] sm:$0xff]
    %v806 = vld [vmem:[#allocation5 + $0x488] sm:$0xff]
    %v807 = vld [vmem:[#allocation5 + $0x490] sm:$0xff]
    %v808 = vld [vmem:[#allocation5 + $0x498] sm:$0xff]
    %v809 = vld [vmem:[#allocation5 + $0x4a0] sm:$0xff]
    %v810 = vld [vmem:[#allocation5 + $0x4a8] sm:$0xff]
    %v811 = vld [vmem:[#allocation5 + $0x4b0] sm:$0xff]
    %v812 = vld [vmem:[#allocation5 + $0x4b8] sm:$0xff]
    %v813 = vld [vmem:[#allocation5 + $0x4c0] sm:$0xff]
    %v814 = vld [vmem:[#allocation5 + $0x4c8] sm:$0xff]
    %v815 = vld [vmem:[#allocation5 + $0x4d0] sm:$0xff]
    %v816 = vld [vmem:[#allocation5 + $0x4d8] sm:$0xff]
    %v817 = vld [vmem:[#allocation5 + $0x4e0] sm:$0xff]
    %v818 = vld [vmem:[#allocation5 + $0x4e8] sm:$0xff]
    %v819 = vld [vmem:[#allocation5 + $0x4f0] sm:$0xff]
    %v820 = vld [vmem:[#allocation5 + $0x4f8] sm:$0xff]
    %v821 = vld [vmem:[#allocation5 + $0x500] sm:$0xff]
    %v822 = vld [vmem:[#allocation5 + $0x508] sm:$0xff]
    %v823 = vld [vmem:[#allocation5 + $0x510] sm:$0xff]
    %v824 = vld [vmem:[#allocation5 + $0x518] sm:$0xff]
    %v825 = vld [vmem:[#allocation5 + $0x520] sm:$0xff]
    %v826 = vld [vmem:[#allocation5 + $0x528] sm:$0xff]
    %v827 = vld [vmem:[#allocation5 + $0x530] sm:$0xff]
    %v828 = vld [vmem:[#allocation5 + $0x538] sm:$0xff]
    %v829 = vld [vmem:[#allocation5 + $0x540] sm:$0xff]
    %v830 = vld [vmem:[#allocation5 + $0x548] sm:$0xff]
    %v831 = vld [vmem:[#allocation5 + $0x550] sm:$0xff]
    %v832 = vld [vmem:[#allocation5 + $0x558] sm:$0xff]
    %v833 = vld [vmem:[#allocation5 + $0x560] sm:$0xff]
    %v834 = vld [vmem:[#allocation5 + $0x568] sm:$0xff]
    %v835 = vld [vmem:[#allocation5 + $0x570] sm:$0xff]
    %v836 = vld [vmem:[#allocation5 + $0x578] sm:$0xff]
    %v837 = vld [vmem:[#allocation5 + $0x580] sm:$0xff]
    %v838 = vld [vmem:[#allocation5 + $0x588] sm:$0xff]
    %v839 = vld [vmem:[#allocation5 + $0x590] sm:$0xff]
    %v840 = vld [vmem:[#allocation5 + $0x598] sm:$0xff]
    %v841 = vld [vmem:[#allocation5 + $0x5a0] sm:$0xff]
    %v842 = vld [vmem:[#allocation5 + $0x5a8] sm:$0xff]
    %v843 = vld [vmem:[#allocation5 + $0x5b0] sm:$0xff]
    %v844 = vld [vmem:[#allocation5 + $0x5b8] sm:$0xff]
    %v845 = vld [vmem:[#allocation5 + $0x5c0] sm:$0xff]
    %v846 = vld [vmem:[#allocation5 + $0x5c8] sm:$0xff]
    %v847 = vld [vmem:[#allocation5 + $0x5d0] sm:$0xff]
    %v848 = vld [vmem:[#allocation5 + $0x5d8] sm:$0xff]
    %v849 = vld [vmem:[#allocation5 + $0x5e0] sm:$0xff]
    %v850 = vld [vmem:[#allocation5 + $0x5e8] sm:$0xff]
    %v851 = vld [vmem:[#allocation5 + $0x5f0] sm:$0xff]
    %v852 = vld [vmem:[#allocation5 + $0x5f8] sm:$0xff]
    %v853 = vld [vmem:[#allocation5 + $0x600] sm:$0xff]
    %v854 = vld [vmem:[#allocation5 + $0x608] sm:$0xff]
    %v855 = vld [vmem:[#allocation5 + $0x610] sm:$0xff]
    %v856 = vld [vmem:[#allocation5 + $0x618] sm:$0xff]
    %v857 = vld [vmem:[#allocation5 + $0x620] sm:$0xff]
    %v858 = vld [vmem:[#allocation5 + $0x628] sm:$0xff]
    %v859 = vld [vmem:[#allocation5 + $0x630] sm:$0xff]
    %v860 = vld [vmem:[#allocation5 + $0x638] sm:$0xff]
    %v861 = vld [vmem:[#allocation5 + $0x640] sm:$0xff]
    %v862 = vld [vmem:[#allocation5 + $0x648] sm:$0xff]
    %v863 = vld [vmem:[#allocation5 + $0x650] sm:$0xff]
    %v864 = vld [vmem:[#allocation5 + $0x658] sm:$0xff]
    %v865 = vld [vmem:[#allocation5 + $0x660] sm:$0xff]
    %v866 = vld [vmem:[#allocation5 + $0x668] sm:$0xff]
    %v867 = vld [vmem:[#allocation5 + $0x670] sm:$0xff]
    %v868 = vld [vmem:[#allocation5 + $0x678] sm:$0xff]
    %v869 = vld [vmem:[#allocation5 + $0x680] sm:$0xff]
    %v870 = vld [vmem:[#allocation5 + $0x688] sm:$0xff]
    %v871 = vld [vmem:[#allocation5 + $0x690] sm:$0xff]
    %v872 = vld [vmem:[#allocation5 + $0x698] sm:$0xff]
    %v873 = vld [vmem:[#allocation5 + $0x6a0] sm:$0xff]
    %v874 = vld [vmem:[#allocation5 + $0x6a8] sm:$0xff]
    %v875 = vld [vmem:[#allocation5 + $0x6b0] sm:$0xff]
    %v876 = vld [vmem:[#allocation5 + $0x6b8] sm:$0xff]
    %v877 = vld [vmem:[#allocation5 + $0x6c0] sm:$0xff]
    %v878 = vld [vmem:[#allocation5 + $0x6c8] sm:$0xff]
    %v879 = vld [vmem:[#allocation5 + $0x6d0] sm:$0xff]
    %v880 = vld [vmem:[#allocation5 + $0x6d8] sm:$0xff]
    %v881 = vld [vmem:[#allocation5 + $0x6e0] sm:$0xff]
    %v882 = vld [vmem:[#allocation5 + $0x6e8] sm:$0xff]
    %v883 = vld [vmem:[#allocation5 + $0x6f0] sm:$0xff]
    %v884 = vld [vmem:[#allocation5 + $0x6f8] sm:$0xff]
    %v885 = vld [vmem:[#allocation5 + $0x700] sm:$0xff]
    %v886 = vld [vmem:[#allocation5 + $0x708] sm:$0xff]
    %v887 = vld [vmem:[#allocation5 + $0x710] sm:$0xff]
    %v888 = vld [vmem:[#allocation5 + $0x718] sm:$0xff]
    %v889 = vld [vmem:[#allocation5 + $0x720] sm:$0xff]
    %v890 = vld [vmem:[#allocation5 + $0x728] sm:$0xff]
    %v891 = vld [vmem:[#allocation5 + $0x730] sm:$0xff]
    %v892 = vld [vmem:[#allocation5 + $0x738] sm:$0xff]
    %v893 = vld [vmem:[#allocation5 + $0x740] sm:$0xff]
    %v894 = vld [vmem:[#allocation5 + $0x748] sm:$0xff]
    %v895 = vld [vmem:[#allocation5 + $0x750] sm:$0xff]
    %v896 = vld [vmem:[#allocation5 + $0x758] sm:$0xff]
    %v897 = vld [vmem:[#allocation5 + $0x760] sm:$0xff]
    %v898 = vld [vmem:[#allocation5 + $0x768] sm:$0xff]
    %v899 = vld [vmem:[#allocation5 + $0x770] sm:$0xff]
    %v900 = vld [vmem:[#allocation5 + $0x778] sm:$0xff]
    %v901 = vld [vmem:[#allocation5 + $0x780] sm:$0xff]
    %v902 = vld [vmem:[#allocation5 + $0x788] sm:$0xff]
    %v903 = vld [vmem:[#allocation5 + $0x790] sm:$0xff]
    %v904 = vld [vmem:[#allocation5 + $0x798] sm:$0xff]
    %v905 = vld [vmem:[#allocation5 + $0x7a0] sm:$0xff]
    %v906 = vld [vmem:[#allocation5 + $0x7a8] sm:$0xff]
    %v907 = vld [vmem:[#allocation5 + $0x7b0] sm:$0xff]
    %v908 = vld [vmem:[#allocation5 + $0x7b8] sm:$0xff]
    %v909 = vld [vmem:[#allocation5 + $0x7c0] sm:$0xff]
    %v910 = vld [vmem:[#allocation5 + $0x7c8] sm:$0xff]
    %v911 = vld [vmem:[#allocation5 + $0x7d0] sm:$0xff]
    %v912 = vld [vmem:[#allocation5 + $0x7d8] sm:$0xff]
    %v913 = vld [vmem:[#allocation5 + $0x7e0] sm:$0xff]
    %v914 = vld [vmem:[#allocation5 + $0x7e8] sm:$0xff]
    %v915 = vld [vmem:[#allocation5 + $0x7f0] sm:$0xff]
    %v916 = vld [vmem:[#allocation5 + $0x7f8] sm:$0xff]
    %917 = vmatprep.subr.mxu0 %v662
    %918 = vmatpush1.msra.mxu0 %v661
    %919 = vmatprep.subr.mxu0 %v670
    %920 = vmatpush1.msra.mxu0 %v669
    %921 = vmatprep.subr.mxu0 %v678
    %922 = vmatpush1.msra.mxu0 %v677
    %923 = vmatprep.subr.mxu0 %v686
    %924 = vmatpush1.msra.mxu0 %v685
    %925 = vmatprep.subr.mxu0 %v694
    %926 = vmatpush1.msra.mxu0 %v693
    %927 = vmatprep.subr.mxu0 %v702
    %928 = vmatpush1.msra.mxu0 %v701
    %929 = vmatprep.subr.mxu0 %v710
    %930 = vmatpush1.msra.mxu0 %v709
    %931 = vmatprep.subr.mxu0 %v718
    %932 = vmatpush1.msra.mxu0 %v717
    %933 = vmatprep.subr.mxu0 %v726
    %934 = vmatpush1.msra.mxu0 %v725
    %935 = vmatprep.subr.mxu0 %v734
    %936 = vmatpush1.msra.mxu0 %v733
    %937 = vmatprep.subr.mxu0 %v742
    %938 = vmatpush1.msra.mxu0 %v741
    %939 = vmatprep.subr.mxu0 %v750
    %940 = vmatpush1.msra.mxu0 %v749
    %941 = vmatprep.subr.mxu0 %v758
    %942 = vmatpush1.msra.mxu0 %v757
    %943 = vmatprep.subr.mxu0 %v766
    %944 = vmatpush1.msra.mxu0 %v765
    %945 = vmatprep.subr.mxu0 %v774
    %946 = vmatpush1.msra.mxu0 %v773
    %947 = vmatprep.subr.mxu0 %v782
    %948 = vmatpush1.msra.mxu0 %v781
    %949 = vmatprep.subr.mxu0 %v790
    %950 = vmatpush1.msra.mxu0 %v789
    %951 = vmatprep.subr.mxu0 %v798
    %952 = vmatpush1.msra.mxu0 %v797
    %953 = vmatprep.subr.mxu0 %v806
    %954 = vmatpush1.msra.mxu0 %v805
    %955 = vmatprep.subr.mxu0 %v814
    %956 = vmatpush1.msra.mxu0 %v813
    %957 = vmatprep.subr.mxu0 %v822
    %958 = vmatpush1.msra.mxu0 %v821
    %959 = vmatprep.subr.mxu0 %v830
    %960 = vmatpush1.msra.mxu0 %v829
    %961 = vmatprep.subr.mxu0 %v838
    %962 = vmatpush1.msra.mxu0 %v837
    %963 = vmatprep.subr.mxu0 %v846
    %964 = vmatpush1.msra.mxu0 %v845
    %965 = vmatprep.subr.mxu0 %v854
    %966 = vmatpush1.msra.mxu0 %v853
    %967 = vmatprep.subr.mxu0 %v862
    %968 = vmatpush1.msra.mxu0 %v861
    %969 = vmatprep.subr.mxu0 %v870
    %970 = vmatpush1.msra.mxu0 %v869
    %971 = vmatprep.subr.mxu0 %v878
    %972 = vmatpush1.msra.mxu0 %v877
    %973 = vmatprep.subr.mxu0 %v886
    %974 = vmatpush1.msra.mxu0 %v885
    %975 = vmatprep.subr.mxu0 %v894
    %976 = vmatpush1.msra.mxu0 %v893
    %977 = vmatprep.subr.mxu0 %v902
    %978 = vmatpush1.msra.mxu0 %v901
    %979 = vmatprep.subr.mxu0 %v910
    %980 = vmatpush1.msra.mxu0 %v909
    %981 = vmatprep.mubr.f32.mxu0 0.0
    %982 = vmatmul.mubr.f32.gmra.mrb[0].mxu0 0.0
    %v983 = vpop.f32.mrb[0].mxu0
    %v984 = vadd.f32 0.0, %v983
    %v985 = vpop.f32.mrb[0].mxu0
    %v986 = vadd.f32 0.0, %v985
    %987 = vdwg.mxu0
    %988 = vmatprep.subr.mxu0 %v664
    %989 = vmatpush1.msra.mxu0 %v663
    %990 = vmatprep.subr.mxu0 %v672
    %991 = vmatpush1.msra.mxu0 %v671
    %992 = vmatprep.subr.mxu0 %v680
    %993 = vmatpush1.msra.mxu0 %v679
    %994 = vmatprep.subr.mxu0 %v688
    %995 = vmatpush1.msra.mxu0 %v687
    %996 = vmatprep.subr.mxu0 %v696
    %997 = vmatpush1.msra.mxu0 %v695
    %998 = vmatprep.subr.mxu0 %v704
    %999 = vmatpush1.msra.mxu0 %v703
    %1000 = vmatprep.subr.mxu0 %v712
    %1001 = vmatpush1.msra.mxu0 %v711
    %1002 = vmatprep.subr.mxu0 %v720
    %1003 = vmatpush1.msra.mxu0 %v719
    %1004 = vmatprep.subr.mxu0 %v728
    %1005 = vmatpush1.msra.mxu0 %v727
    %1006 = vmatprep.subr.mxu0 %v736
    %1007 = vmatpush1.msra.mxu0 %v735
    %1008 = vmatprep.subr.mxu0 %v744
    %1009 = vmatpush1.msra.mxu0 %v743
    %1010 = vmatprep.subr.mxu0 %v752
    %1011 = vmatpush1.msra.mxu0 %v751
    %1012 = vmatprep.subr.mxu0 %v760
    %1013 = vmatpush1.msra.mxu0 %v759
    %1014 = vmatprep.subr.mxu0 %v768
    %1015 = vmatpush1.msra.mxu0 %v767
    %1016 = vmatprep.subr.mxu0 %v776
    %1017 = vmatpush1.msra.mxu0 %v775
    %1018 = vmatprep.subr.mxu0 %v784
    %1019 = vmatpush1.msra.mxu0 %v783
    %1020 = vmatprep.subr.mxu0 %v792
    %1021 = vmatpush1.msra.mxu0 %v791
    %1022 = vmatprep.subr.mxu0 %v800
    %1023 = vmatpush1.msra.mxu0 %v799
    %1024 = vmatprep.subr.mxu0 %v808
    %1025 = vmatpush1.msra.mxu0 %v807
    %1026 = vmatprep.subr.mxu0 %v816
    %1027 = vmatpush1.msra.mxu0 %v815
    %1028 = vmatprep.subr.mxu0 %v824
    %1029 = vmatpush1.msra.mxu0 %v823
    %1030 = vmatprep.subr.mxu0 %v832
    %1031 = vmatpush1.msra.mxu0 %v831
    %1032 = vmatprep.subr.mxu0 %v840
    %1033 = vmatpush1.msra.mxu0 %v839
    %1034 = vmatprep.subr.mxu0 %v848
    %1035 = vmatpush1.msra.mxu0 %v847
    %1036 = vmatprep.subr.mxu0 %v856
    %1037 = vmatpush1.msra.mxu0 %v855
    %1038 = vmatprep.subr.mxu0 %v864
    %1039 = vmatpush1.msra.mxu0 %v863
    %1040 = vmatprep.subr.mxu0 %v872
    %1041 = vmatpush1.msra.mxu0 %v871
    %1042 = vmatprep.subr.mxu0 %v880
    %1043 = vmatpush1.msra.mxu0 %v879
    %1044 = vmatprep.subr.mxu0 %v888
    %1045 = vmatpush1.msra.mxu0 %v887
    %1046 = vmatprep.subr.mxu0 %v896
    %1047 = vmatpush1.msra.mxu0 %v895
    %1048 = vmatprep.subr.mxu0 %v904
    %1049 = vmatpush1.msra.mxu0 %v903
    %1050 = vmatprep.subr.mxu0 %v912
    %1051 = vmatpush1.msra.mxu0 %v911
    %1052 = vmatprep.mubr.f32.mxu0 0.0
    %1053 = vmatmul.mubr.f32.gmra.mrb[0].mxu0 0.0
    %v1054 = vpop.f32.mrb[0].mxu0
    %v1055 = vadd.f32 0.0, %v1054
    %v1056 = vpop.f32.mrb[0].mxu0
    %v1057 = vadd.f32 0.0, %v1056
    %1058 = vdwg.mxu0
    %1059 = vmatprep.subr.mxu0 %v666
    %1060 = vmatpush1.msra.mxu0 %v665
    %1061 = vmatprep.subr.mxu0 %v674
    %1062 = vmatpush1.msra.mxu0 %v673
    %1063 = vmatprep.subr.mxu0 %v682
    %1064 = vmatpush1.msra.mxu0 %v681
    %1065 = vmatprep.subr.mxu0 %v690
    %1066 = vmatpush1.msra.mxu0 %v689
    %1067 = vmatprep.subr.mxu0 %v698
    %1068 = vmatpush1.msra.mxu0 %v697
    %1069 = vmatprep.subr.mxu0 %v706
    %1070 = vmatpush1.msra.mxu0 %v705
    %1071 = vmatprep.subr.mxu0 %v714
    %1072 = vmatpush1.msra.mxu0 %v713
    %1073 = vmatprep.subr.mxu0 %v722
    %1074 = vmatpush1.msra.mxu0 %v721
    %1075 = vmatprep.subr.mxu0 %v730
    %1076 = vmatpush1.msra.mxu0 %v729
    %1077 = vmatprep.subr.mxu0 %v738
    %1078 = vmatpush1.msra.mxu0 %v737
    %1079 = vmatprep.subr.mxu0 %v746
    %1080 = vmatpush1.msra.mxu0 %v745
    %1081 = vmatprep.subr.mxu0 %v754
    %1082 = vmatpush1.msra.mxu0 %v753
    %1083 = vmatprep.subr.mxu0 %v762
    %1084 = vmatpush1.msra.mxu0 %v761
    %1085 = vmatprep.subr.mxu0 %v770
    %1086 = vmatpush1.msra.mxu0 %v769
    %1087 = vmatprep.subr.mxu0 %v778
    %1088 = vmatpush1.msra.mxu0 %v777
    %1089 = vmatprep.subr.mxu0 %v786
    %1090 = vmatpush1.msra.mxu0 %v785
    %1091 = vmatprep.subr.mxu0 %v794
    %1092 = vmatpush1.msra.mxu0 %v793
    %1093 = vmatprep.subr.mxu0 %v802
    %1094 = vmatpush1.msra.mxu0 %v801
    %1095 = vmatprep.subr.mxu0 %v810
    %1096 = vmatpush1.msra.mxu0 %v809
    %1097 = vmatprep.subr.mxu0 %v818
    %1098 = vmatpush1.msra.mxu0 %v817
    %1099 = vmatprep.subr.mxu0 %v826
    %1100 = vmatpush1.msra.mxu0 %v825
    %1101 = vmatprep.subr.mxu0 %v834
    %1102 = vmatpush1.msra.mxu0 %v833
    %1103 = vmatprep.subr.mxu0 %v842
    %1104 = vmatpush1.msra.mxu0 %v841
    %1105 = vmatprep.subr.mxu0 %v850
    %1106 = vmatpush1.msra.mxu0 %v849
    %1107 = vmatprep.subr.mxu0 %v858
    %1108 = vmatpush1.msra.mxu0 %v857
    %1109 = vmatprep.subr.mxu0 %v866
    %1110 = vmatpush1.msra.mxu0 %v865
    %1111 = vmatprep.subr.mxu0 %v874
    %1112 = vmatpush1.msra.mxu0 %v873
    %1113 = vmatprep.subr.mxu0 %v882
    %1114 = vmatpush1.msra.mxu0 %v881
    %1115 = vmatprep.subr.mxu0 %v890
    %1116 = vmatpush1.msra.mxu0 %v889
    %1117 = vmatprep.subr.mxu0 %v898
    %1118 = vmatpush1.msra.mxu0 %v897
    %1119 = vmatprep.subr.mxu0 %v906
    %1120 = vmatpush1.msra.mxu0 %v905
    %1121 = vmatprep.subr.mxu0 %v914
    %1122 = vmatpush1.msra.mxu0 %v913
    %1123 = vmatprep.mubr.f32.mxu0 0.0
    %1124 = vmatmul.mubr.f32.gmra.mrb[0].mxu0 0.0
    %v1125 = vpop.f32.mrb[0].mxu0
    %v1126 = vadd.f32 0.0, %v1125
    %v1127 = vpop.f32.mrb[0].mxu0
    %v1128 = vadd.f32 0.0, %v1127
    %1129 = vdwg.mxu0
    %1130 = vmatprep.subr.mxu0 %v668
    %1131 = vmatpush1.msra.mxu0 %v667
    %1132 = vmatprep.subr.mxu0 %v676
    %1133 = vmatpush1.msra.mxu0 %v675
    %1134 = vmatprep.subr.mxu0 %v684
    %1135 = vmatpush1.msra.mxu0 %v683
    %1136 = vmatprep.subr.mxu0 %v692
    %1137 = vmatpush1.msra.mxu0 %v691
    %1138 = vmatprep.subr.mxu0 %v700
    %1139 = vmatpush1.msra.mxu0 %v699
    %1140 = vmatprep.subr.mxu0 %v708
    %1141 = vmatpush1.msra.mxu0 %v707
    %1142 = vmatprep.subr.mxu0 %v716
    %1143 = vmatpush1.msra.mxu0 %v715
    %1144 = vmatprep.subr.mxu0 %v724
    %1145 = vmatpush1.msra.mxu0 %v723
    %1146 = vmatprep.subr.mxu0 %v732
    %1147 = vmatpush1.msra.mxu0 %v731
    %1148 = vmatprep.subr.mxu0 %v740
    %1149 = vmatpush1.msra.mxu0 %v739
    %1150 = vmatprep.subr.mxu0 %v748
    %1151 = vmatpush1.msra.mxu0 %v747
    %1152 = vmatprep.subr.mxu0 %v756
    %1153 = vmatpush1.msra.mxu0 %v755
    %1154 = vmatprep.subr.mxu0 %v764
    %1155 = vmatpush1.msra.mxu0 %v763
    %1156 = vmatprep.subr.mxu0 %v772
    %1157 = vmatpush1.msra.mxu0 %v771
    %1158 = vmatprep.subr.mxu0 %v780
    %1159 = vmatpush1.msra.mxu0 %v779
    %1160 = vmatprep.subr.mxu0 %v788
    %1161 = vmatpush1.msra.mxu0 %v787
    %1162 = vmatprep.subr.mxu0 %v796
    %1163 = vmatpush1.msra.mxu0 %v795
    %1164 = vmatprep.subr.mxu0 %v804
    %1165 = vmatpush1.msra.mxu0 %v803
    %1166 = vmatprep.subr.mxu0 %v812
    %1167 = vmatpush1.msra.mxu0 %v811
    %1168 = vmatprep.subr.mxu0 %v820
    %1169 = vmatpush1.msra.mxu0 %v819
    %1170 = vmatprep.subr.mxu0 %v828
    %1171 = vmatpush1.msra.mxu0 %v827
    %1172 = vmatprep.subr.mxu0 %v836
    %1173 = vmatpush1.msra.mxu0 %v835
    %1174 = vmatprep.subr.mxu0 %v844
    %1175 = vmatpush1.msra.mxu0 %v843
    %1176 = vmatprep.subr.mxu0 %v852
    %1177 = vmatpush1.msra.mxu0 %v851
    %1178 = vmatprep.subr.mxu0 %v860
    %1179 = vmatpush1.msra.mxu0 %v859
    %1180 = vmatprep.subr.mxu0 %v868
    %1181 = vmatpush1.msra.mxu0 %v867
    %1182 = vmatprep.subr.mxu0 %v876
    %1183 = vmatpush1.msra.mxu0 %v875
    %1184 = vmatprep.subr.mxu0 %v884
    %1185 = vmatpush1.msra.mxu0 %v883
    %1186 = vmatprep.subr.mxu0 %v892
    %1187 = vmatpush1.msra.mxu0 %v891
    %1188 = vmatprep.subr.mxu0 %v900
    %1189 = vmatpush1.msra.mxu0 %v899
    %1190 = vmatprep.subr.mxu0 %v908
    %1191 = vmatpush1.msra.mxu0 %v907
    %1192 = vmatprep.subr.mxu0 %v916
    %1193 = vmatpush1.msra.mxu0 %v915
    %1194 = vmatprep.mubr.f32.mxu0 0.0
    %1195 = vmatmul.mubr.f32.gmra.mrb[0].mxu0 0.0
    %v1196 = vpop.f32.mrb[0].mxu0
    %v1197 = vadd.f32 0.0, %v1196
    %v1198 = vpop.f32.mrb[0].mxu0
    %v1199 = vadd.f32 0.0, %v1198
    %1200 = vdwg.mxu0
    %v1201 = vadd.f32 %v420, %v984
    %v1202 = vadd.f32 %v422, %v986
    %v1203 = vadd.f32 %v497, %v1055
    %v1204 = vadd.f32 %v499, %v1057
    %v1205 = vadd.f32 %v574, %v1126
    %v1206 = vadd.f32 %v576, %v1128
    %v1207 = vadd.f32 %v651, %v1197
    %v1208 = vadd.f32 %v653, %v1199
    %v1209 = vxor.u32 %v1201, 2147483648
    %v1210 = vxor.u32 %v1202, 2147483648
    %v1211 = vxor.u32 %v1203, 2147483648
    %v1212 = vxor.u32 %v1204, 2147483648
    %v1213 = vxor.u32 %v1205, 2147483648
    %v1214 = vxor.u32 %v1206, 2147483648
    %v1215 = vmul.f32 %v1209, 1.442695
    %v1216 = vpow.pop %v1215
    %v1217 = vmul.f32 %v1210, 1.442695
    %v1218 = vpow.pop %v1217
    %v1219 = vmul.f32 %v1211, 1.442695
    %v1220 = vpow.pop %v1219
    %v1221 = vmul.f32 %v1212, 1.442695
    %v1222 = vpow.pop %v1221
    %v1223 = vmul.f32 %v1213, 1.442695
    %v1224 = vpow.pop %v1223
    %v1225 = vmul.f32 %v1214, 1.442695
    %v1226 = vpow.pop %v1225
    %v1227 = vadd.f32 %v1216, 1.0
    %v1228 = vadd.f32 %v1218, 1.0
    %v1229 = vadd.f32 %v1220, 1.0
    %v1230 = vadd.f32 %v1222, 1.0
    %v1231 = vadd.f32 %v1224, 1.0
    %v1232 = vadd.f32 %v1226, 1.0
    %v1233 = vrcp.pop %v1227
    %v1234 = vmul.f32 1.0, %v1233
    %v1235 = vrcp.pop %v1228
    %v1236 = vmul.f32 1.0, %v1235
    %v1237 = vrcp.pop %v1229
    %v1238 = vmul.f32 1.0, %v1237
    %v1239 = vrcp.pop %v1230
    %v1240 = vmul.f32 1.0, %v1239
    %v1241 = vrcp.pop %v1231
    %v1242 = vmul.f32 1.0, %v1241
    %v1243 = vrcp.pop %v1232
    %v1244 = vmul.f32 1.0, %v1243
    %v1245 = vtanh.pop %v1207
    %v1246 = vtanh.pop %v1208
    %v1247 = vmul.f32 %v1238, 0.0
    %v1248 = vmul.f32 %v1240, 0.0
    %v1249 = vmul.f32 %v1234, %v1245
    %v1250 = vmul.f32 %v1236, %v1246
    %v1251 = vadd.f32 %v1247, %v1249
    %v1252 = vadd.f32 %v1248, %v1250
    %v1253 = vtanh.pop %v1251
    %v1254 = vtanh.pop %v1252
    %v1255 = vmul.f32 %v1242, %v1253
    %v1256 = vmul.f32 %v1244, %v1254
    %1257 = vst [vmem:[#allocation2] sm:$0x3] %v1255
    %v1259 = vrot.slane %v1256, 2
    %1261 = vst [vmem:[#allocation2 + $0x18] sm:$0xc0] %v1259
    %v1262 = vld [vmem:[#allocation5] sm:$0xff]
    %v1263 = vld [vmem:[#allocation5 + $0x8] sm:$0xff]
    %v1264 = vld [vmem:[#allocation5 + $0x10] sm:$0xff]
    %v1265 = vld [vmem:[#allocation5 + $0x18] sm:$0xff]
    %v1266 = vld [vmem:[#allocation5 + $0x20] sm:$0xff]
    %v1267 = vld [vmem:[#allocation5 + $0x28] sm:$0xff]
    %v1268 = vld [vmem:[#allocation5 + $0x30] sm:$0xff]
    %v1269 = vld [vmem:[#allocation5 + $0x38] sm:$0xff]
    %v1270 = vld [vmem:[#allocation5 + $0x40] sm:$0xff]
    %v1271 = vld [vmem:[#allocation5 + $0x48] sm:$0xff]
    %v1272 = vld [vmem:[#allocation5 + $0x50] sm:$0xff]
    %v1273 = vld [vmem:[#allocation5 + $0x58] sm:$0xff]
    %v1274 = vld [vmem:[#allocation5 + $0x60] sm:$0xff]
    %v1275 = vld [vmem:[#allocation5 + $0x68] sm:$0xff]
    %v1276 = vld [vmem:[#allocation5 + $0x70] sm:$0xff]
    %v1277 = vld [vmem:[#allocation5 + $0x78] sm:$0xff]
    %v1278 = vld [vmem:[#allocation5 + $0x80] sm:$0xff]
    %v1279 = vld [vmem:[#allocation5 + $0x88] sm:$0xff]
    %v1280 = vld [vmem:[#allocation5 + $0x90] sm:$0xff]
    %v1281 = vld [vmem:[#allocation5 + $0x98] sm:$0xff]
    %v1282 = vld [vmem:[#allocation5 + $0xa0] sm:$0xff]
    %v1283 = vld [vmem:[#allocation5 + $0xa8] sm:$0xff]
    %v1284 = vld [vmem:[#allocation5 + $0xb0] sm:$0xff]
    %v1285 = vld [vmem:[#allocation5 + $0xb8] sm:$0xff]
    %v1286 = vld [vmem:[#allocation5 + $0xc0] sm:$0xff]
    %v1287 = vld [vmem:[#allocation5 + $0xc8] sm:$0xff]
    %v1288 = vld [vmem:[#allocation5 + $0xd0] sm:$0xff]
    %v1289 = vld [vmem:[#allocation5 + $0xd8] sm:$0xff]
    %v1290 = vld [vmem:[#allocation5 + $0xe0] sm:$0xff]
    %v1291 = vld [vmem:[#allocation5 + $0xe8] sm:$0xff]
    %v1292 = vld [vmem:[#allocation5 + $0xf0] sm:$0xff]
    %v1293 = vld [vmem:[#allocation5 + $0xf8] sm:$0xff]
    %v1294 = vld [vmem:[#allocation5 + $0x100] sm:$0xff]
    %v1295 = vld [vmem:[#allocation5 + $0x108] sm:$0xff]
    %v1296 = vld [vmem:[#allocation5 + $0x110] sm:$0xff]
    %v1297 = vld [vmem:[#allocation5 + $0x118] sm:$0xff]
    %v1298 = vld [vmem:[#allocation5 + $0x120] sm:$0xff]
    %v1299 = vld [vmem:[#allocation5 + $0x128] sm:$0xff]
    %v1300 = vld [vmem:[#allocation5 + $0x130] sm:$0xff]
    %v1301 = vld [vmem:[#allocation5 + $0x138] sm:$0xff]
    %v1302 = vld [vmem:[#allocation5 + $0x140] sm:$0xff]
    %v1303 = vld [vmem:[#allocation5 + $0x148] sm:$0xff]
    %v1304 = vld [vmem:[#allocation5 + $0x150] sm:$0xff]
    %v1305 = vld [vmem:[#allocation5 + $0x158] sm:$0xff]
    %v1306 = vld [vmem:[#allocation5 + $0x160] sm:$0xff]
    %v1307 = vld [vmem:[#allocation5 + $0x168] sm:$0xff]
    %v1308 = vld [vmem:[#allocation5 + $0x170] sm:$0xff]
    %v1309 = vld [vmem:[#allocation5 + $0x178] sm:$0xff]
    %v1310 = vld [vmem:[#allocation5 + $0x180] sm:$0xff]
    %v1311 = vld [vmem:[#allocation5 + $0x188] sm:$0xff]
    %v1312 = vld [vmem:[#allocation5 + $0x190] sm:$0xff]
    %v1313 = vld [vmem:[#allocation5 + $0x198] sm:$0xff]
    %v1314 = vld [vmem:[#allocation5 + $0x1a0] sm:$0xff]
    %v1315 = vld [vmem:[#allocation5 + $0x1a8] sm:$0xff]
    %v1316 = vld [vmem:[#allocation5 + $0x1b0] sm:$0xff]
    %v1317 = vld [vmem:[#allocation5 + $0x1b8] sm:$0xff]
    %v1318 = vld [vmem:[#allocation5 + $0x1c0] sm:$0xff]
    %v1319 = vld [vmem:[#allocation5 + $0x1c8] sm:$0xff]
    %v1320 = vld [vmem:[#allocation5 + $0x1d0] sm:$0xff]
    %v1321 = vld [vmem:[#allocation5 + $0x1d8] sm:$0xff]
    %v1322 = vld [vmem:[#allocation5 + $0x1e0] sm:$0xff]
    %v1323 = vld [vmem:[#allocation5 + $0x1e8] sm:$0xff]
    %v1324 = vld [vmem:[#allocation5 + $0x1f0] sm:$0xff]
    %v1325 = vld [vmem:[#allocation5 + $0x1f8] sm:$0xff]
    %v1326 = vld [vmem:[#allocation5 + $0x200] sm:$0xff]
    %v1327 = vld [vmem:[#allocation5 + $0x208] sm:$0xff]
    %v1328 = vld [vmem:[#allocation5 + $0x210] sm:$0xff]
    %v1329 = vld [vmem:[#allocation5 + $0x218] sm:$0xff]
    %v1330 = vld [vmem:[#allocation5 + $0x220] sm:$0xff]
    %v1331 = vld [vmem:[#allocation5 + $0x228] sm:$0xff]
    %v1332 = vld [vmem:[#allocation5 + $0x230] sm:$0xff]
    %v1333 = vld [vmem:[#allocation5 + $0x238] sm:$0xff]
    %v1334 = vld [vmem:[#allocation5 + $0x240] sm:$0xff]
    %v1335 = vld [vmem:[#allocation5 + $0x248] sm:$0xff]
    %v1336 = vld [vmem:[#allocation5 + $0x250] sm:$0xff]
    %v1337 = vld [vmem:[#allocation5 + $0x258] sm:$0xff]
    %v1338 = vld [vmem:[#allocation5 + $0x260] sm:$0xff]
    %v1339 = vld [vmem:[#allocation5 + $0x268] sm:$0xff]
    %v1340 = vld [vmem:[#allocation5 + $0x270] sm:$0xff]
    %v1341 = vld [vmem:[#allocation5 + $0x278] sm:$0xff]
    %v1342 = vld [vmem:[#allocation5 + $0x280] sm:$0xff]
    %v1343 = vld [vmem:[#allocation5 + $0x288] sm:$0xff]
    %v1344 = vld [vmem:[#allocation5 + $0x290] sm:$0xff]
    %v1345 = vld [vmem:[#allocation5 + $0x298] sm:$0xff]
    %v1346 = vld [vmem:[#allocation5 + $0x2a0] sm:$0xff]
    %v1347 = vld [vmem:[#allocation5 + $0x2a8] sm:$0xff]
    %v1348 = vld [vmem:[#allocation5 + $0x2b0] sm:$0xff]
    %v1349 = vld [vmem:[#allocation5 + $0x2b8] sm:$0xff]
    %v1350 = vld [vmem:[#allocation5 + $0x2c0] sm:$0xff]
    %v1351 = vld [vmem:[#allocation5 + $0x2c8] sm:$0xff]
    %v1352 = vld [vmem:[#allocation5 + $0x2d0] sm:$0xff]
    %v1353 = vld [vmem:[#allocation5 + $0x2d8] sm:$0xff]
    %v1354 = vld [vmem:[#allocation5 + $0x2e0] sm:$0xff]
    %v1355 = vld [vmem:[#allocation5 + $0x2e8] sm:$0xff]
    %v1356 = vld [vmem:[#allocation5 + $0x2f0] sm:$0xff]
    %v1357 = vld [vmem:[#allocation5 + $0x2f8] sm:$0xff]
    %v1358 = vld [vmem:[#allocation5 + $0x300] sm:$0xff]
    %v1359 = vld [vmem:[#allocation5 + $0x308] sm:$0xff]
    %v1360 = vld [vmem:[#allocation5 + $0x310] sm:$0xff]
    %v1361 = vld [vmem:[#allocation5 + $0x318] sm:$0xff]
    %v1362 = vld [vmem:[#allocation5 + $0x320] sm:$0xff]
    %v1363 = vld [vmem:[#allocation5 + $0x328] sm:$0xff]
    %v1364 = vld [vmem:[#allocation5 + $0x330] sm:$0xff]
    %v1365 = vld [vmem:[#allocation5 + $0x338] sm:$0xff]
    %v1366 = vld [vmem:[#allocation5 + $0x340] sm:$0xff]
    %v1367 = vld [vmem:[#allocation5 + $0x348] sm:$0xff]
    %v1368 = vld [vmem:[#allocation5 + $0x350] sm:$0xff]
    %v1369 = vld [vmem:[#allocation5 + $0x358] sm:$0xff]
    %v1370 = vld [vmem:[#allocation5 + $0x360] sm:$0xff]
    %v1371 = vld [vmem:[#allocation5 + $0x368] sm:$0xff]
    %v1372 = vld [vmem:[#allocation5 + $0x370] sm:$0xff]
    %v1373 = vld [vmem:[#allocation5 + $0x378] sm:$0xff]
    %v1374 = vld [vmem:[#allocation5 + $0x380] sm:$0xff]
    %v1375 = vld [vmem:[#allocation5 + $0x388] sm:$0xff]
    %v1376 = vld [vmem:[#allocation5 + $0x390] sm:$0xff]
    %v1377 = vld [vmem:[#allocation5 + $0x398] sm:$0xff]
    %v1378 = vld [vmem:[#allocation5 + $0x3a0] sm:$0xff]
    %v1379 = vld [vmem:[#allocation5 + $0x3a8] sm:$0xff]
    %v1380 = vld [vmem:[#allocation5 + $0x3b0] sm:$0xff]
    %v1381 = vld [vmem:[#allocation5 + $0x3b8] sm:$0xff]
    %v1382 = vld [vmem:[#allocation5 + $0x3c0] sm:$0xff]
    %v1383 = vld [vmem:[#allocation5 + $0x3c8] sm:$0xff]
    %v1384 = vld [vmem:[#allocation5 + $0x3d0] sm:$0xff]
    %v1385 = vld [vmem:[#allocation5 + $0x3d8] sm:$0xff]
    %v1386 = vld [vmem:[#allocation5 + $0x3e0] sm:$0xff]
    %v1387 = vld [vmem:[#allocation5 + $0x3e8] sm:$0xff]
    %v1388 = vld [vmem:[#allocation5 + $0x3f0] sm:$0xff]
    %v1389 = vld [vmem:[#allocation5 + $0x3f8] sm:$0xff]
    %v1390 = vld [vmem:[#allocation5 + $0x400] sm:$0xff]
    %v1391 = vld [vmem:[#allocation5 + $0x408] sm:$0xff]
    %v1392 = vld [vmem:[#allocation5 + $0x410] sm:$0xff]
    %v1393 = vld [vmem:[#allocation5 + $0x418] sm:$0xff]
    %v1394 = vld [vmem:[#allocation5 + $0x420] sm:$0xff]
    %v1395 = vld [vmem:[#allocation5 + $0x428] sm:$0xff]
    %v1396 = vld [vmem:[#allocation5 + $0x430] sm:$0xff]
    %v1397 = vld [vmem:[#allocation5 + $0x438] sm:$0xff]
    %v1398 = vld [vmem:[#allocation5 + $0x440] sm:$0xff]
    %v1399 = vld [vmem:[#allocation5 + $0x448] sm:$0xff]
    %v1400 = vld [vmem:[#allocation5 + $0x450] sm:$0xff]
    %v1401 = vld [vmem:[#allocation5 + $0x458] sm:$0xff]
    %v1402 = vld [vmem:[#allocation5 + $0x460] sm:$0xff]
    %v1403 = vld [vmem:[#allocation5 + $0x468] sm:$0xff]
    %v1404 = vld [vmem:[#allocation5 + $0x470] sm:$0xff]
    %v1405 = vld [vmem:[#allocation5 + $0x478] sm:$0xff]
    %v1406 = vld [vmem:[#allocation5 + $0x480] sm:$0xff]
    %v1407 = vld [vmem:[#allocation5 + $0x488] sm:$0xff]
    %v1408 = vld [vmem:[#allocation5 + $0x490] sm:$0xff]
    %v1409 = vld [vmem:[#allocation5 + $0x498] sm:$0xff]
    %v1410 = vld [vmem:[#allocation5 + $0x4a0] sm:$0xff]
    %v1411 = vld [vmem:[#allocation5 + $0x4a8] sm:$0xff]
    %v1412 = vld [vmem:[#allocation5 + $0x4b0] sm:$0xff]
    %v1413 = vld [vmem:[#allocation5 + $0x4b8] sm:$0xff]
    %v1414 = vld [vmem:[#allocation5 + $0x4c0] sm:$0xff]
    %v1415 = vld [vmem:[#allocation5 + $0x4c8] sm:$0xff]
    %v1416 = vld [vmem:[#allocation5 + $0x4d0] sm:$0xff]
    %v1417 = vld [vmem:[#allocation5 + $0x4d8] sm:$0xff]
    %v1418 = vld [vmem:[#allocation5 + $0x4e0] sm:$0xff]
    %v1419 = vld [vmem:[#allocation5 + $0x4e8] sm:$0xff]
    %v1420 = vld [vmem:[#allocation5 + $0x4f0] sm:$0xff]
    %v1421 = vld [vmem:[#allocation5 + $0x4f8] sm:$0xff]
    %v1422 = vld [vmem:[#allocation5 + $0x500] sm:$0xff]
    %v1423 = vld [vmem:[#allocation5 + $0x508] sm:$0xff]
    %v1424 = vld [vmem:[#allocation5 + $0x510] sm:$0xff]
    %v1425 = vld [vmem:[#allocation5 + $0x518] sm:$0xff]
    %v1426 = vld [vmem:[#allocation5 + $0x520] sm:$0xff]
    %v1427 = vld [vmem:[#allocation5 + $0x528] sm:$0xff]
    %v1428 = vld [vmem:[#allocation5 + $0x530] sm:$0xff]
    %v1429 = vld [vmem:[#allocation5 + $0x538] sm:$0xff]
    %v1430 = vld [vmem:[#allocation5 + $0x540] sm:$0xff]
    %v1431 = vld [vmem:[#allocation5 + $0x548] sm:$0xff]
    %v1432 = vld [vmem:[#allocation5 + $0x550] sm:$0xff]
    %v1433 = vld [vmem:[#allocation5 + $0x558] sm:$0xff]
    %v1434 = vld [vmem:[#allocation5 + $0x560] sm:$0xff]
    %v1435 = vld [vmem:[#allocation5 + $0x568] sm:$0xff]
    %v1436 = vld [vmem:[#allocation5 + $0x570] sm:$0xff]
    %v1437 = vld [vmem:[#allocation5 + $0x578] sm:$0xff]
    %v1438 = vld [vmem:[#allocation5 + $0x580] sm:$0xff]
    %v1439 = vld [vmem:[#allocation5 + $0x588] sm:$0xff]
    %v1440 = vld [vmem:[#allocation5 + $0x590] sm:$0xff]
    %v1441 = vld [vmem:[#allocation5 + $0x598] sm:$0xff]
    %v1442 = vld [vmem:[#allocation5 + $0x5a0] sm:$0xff]
    %v1443 = vld [vmem:[#allocation5 + $0x5a8] sm:$0xff]
    %v1444 = vld [vmem:[#allocation5 + $0x5b0] sm:$0xff]
    %v1445 = vld [vmem:[#allocation5 + $0x5b8] sm:$0xff]
    %v1446 = vld [vmem:[#allocation5 + $0x5c0] sm:$0xff]
    %v1447 = vld [vmem:[#allocation5 + $0x5c8] sm:$0xff]
    %v1448 = vld [vmem:[#allocation5 + $0x5d0] sm:$0xff]
    %v1449 = vld [vmem:[#allocation5 + $0x5d8] sm:$0xff]
    %v1450 = vld [vmem:[#allocation5 + $0x5e0] sm:$0xff]
    %v1451 = vld [vmem:[#allocation5 + $0x5e8] sm:$0xff]
    %v1452 = vld [vmem:[#allocation5 + $0x5f0] sm:$0xff]
    %v1453 = vld [vmem:[#allocation5 + $0x5f8] sm:$0xff]
    %v1454 = vld [vmem:[#allocation5 + $0x600] sm:$0xff]
    %v1455 = vld [vmem:[#allocation5 + $0x608] sm:$0xff]
    %v1456 = vld [vmem:[#allocation5 + $0x610] sm:$0xff]
    %v1457 = vld [vmem:[#allocation5 + $0x618] sm:$0xff]
    %v1458 = vld [vmem:[#allocation5 + $0x620] sm:$0xff]
    %v1459 = vld [vmem:[#allocation5 + $0x628] sm:$0xff]
    %v1460 = vld [vmem:[#allocation5 + $0x630] sm:$0xff]
    %v1461 = vld [vmem:[#allocation5 + $0x638] sm:$0xff]
    %v1462 = vld [vmem:[#allocation5 + $0x640] sm:$0xff]
    %v1463 = vld [vmem:[#allocation5 + $0x648] sm:$0xff]
    %v1464 = vld [vmem:[#allocation5 + $0x650] sm:$0xff]
    %v1465 = vld [vmem:[#allocation5 + $0x658] sm:$0xff]
    %v1466 = vld [vmem:[#allocation5 + $0x660] sm:$0xff]
    %v1467 = vld [vmem:[#allocation5 + $0x668] sm:$0xff]
    %v1468 = vld [vmem:[#allocation5 + $0x670] sm:$0xff]
    %v1469 = vld [vmem:[#allocation5 + $0x678] sm:$0xff]
    %v1470 = vld [vmem:[#allocation5 + $0x680] sm:$0xff]
    %v1471 = vld [vmem:[#allocation5 + $0x688] sm:$0xff]
    %v1472 = vld [vmem:[#allocation5 + $0x690] sm:$0xff]
    %v1473 = vld [vmem:[#allocation5 + $0x698] sm:$0xff]
    %v1474 = vld [vmem:[#allocation5 + $0x6a0] sm:$0xff]
    %v1475 = vld [vmem:[#allocation5 + $0x6a8] sm:$0xff]
    %v1476 = vld [vmem:[#allocation5 + $0x6b0] sm:$0xff]
    %v1477 = vld [vmem:[#allocation5 + $0x6b8] sm:$0xff]
    %v1478 = vld [vmem:[#allocation5 + $0x6c0] sm:$0xff]
    %v1479 = vld [vmem:[#allocation5 + $0x6c8] sm:$0xff]
    %v1480 = vld [vmem:[#allocation5 + $0x6d0] sm:$0xff]
    %v1481 = vld [vmem:[#allocation5 + $0x6d8] sm:$0xff]
    %v1482 = vld [vmem:[#allocation5 + $0x6e0] sm:$0xff]
    %v1483 = vld [vmem:[#allocation5 + $0x6e8] sm:$0xff]
    %v1484 = vld [vmem:[#allocation5 + $0x6f0] sm:$0xff]
    %v1485 = vld [vmem:[#allocation5 + $0x6f8] sm:$0xff]
    %v1486 = vld [vmem:[#allocation5 + $0x700] sm:$0xff]
    %v1487 = vld [vmem:[#allocation5 + $0x708] sm:$0xff]
    %v1488 = vld [vmem:[#allocation5 + $0x710] sm:$0xff]
    %v1489 = vld [vmem:[#allocation5 + $0x718] sm:$0xff]
    %v1490 = vld [vmem:[#allocation5 + $0x720] sm:$0xff]
    %v1491 = vld [vmem:[#allocation5 + $0x728] sm:$0xff]
    %v1492 = vld [vmem:[#allocation5 + $0x730] sm:$0xff]
    %v1493 = vld [vmem:[#allocation5 + $0x738] sm:$0xff]
    %v1494 = vld [vmem:[#allocation5 + $0x740] sm:$0xff]
    %v1495 = vld [vmem:[#allocation5 + $0x748] sm:$0xff]
    %v1496 = vld [vmem:[#allocation5 + $0x750] sm:$0xff]
    %v1497 = vld [vmem:[#allocation5 + $0x758] sm:$0xff]
    %v1498 = vld [vmem:[#allocation5 + $0x760] sm:$0xff]
    %v1499 = vld [vmem:[#allocation5 + $0x768] sm:$0xff]
    %v1500 = vld [vmem:[#allocation5 + $0x770] sm:$0xff]
    %v1501 = vld [vmem:[#allocation5 + $0x778] sm:$0xff]
    %v1502 = vld [vmem:[#allocation5 + $0x780] sm:$0xff]
    %v1503 = vld [vmem:[#allocation5 + $0x788] sm:$0xff]
    %v1504 = vld [vmem:[#allocation5 + $0x790] sm:$0xff]
    %v1505 = vld [vmem:[#allocation5 + $0x798] sm:$0xff]
    %v1506 = vld [vmem:[#allocation5 + $0x7a0] sm:$0xff]
    %v1507 = vld [vmem:[#allocation5 + $0x7a8] sm:$0xff]
    %v1508 = vld [vmem:[#allocation5 + $0x7b0] sm:$0xff]
    %v1509 = vld [vmem:[#allocation5 + $0x7b8] sm:$0xff]
    %v1510 = vld [vmem:[#allocation5 + $0x7c0] sm:$0xff]
    %v1511 = vld [vmem:[#allocation5 + $0x7c8] sm:$0xff]
    %v1512 = vld [vmem:[#allocation5 + $0x7d0] sm:$0xff]
    %v1513 = vld [vmem:[#allocation5 + $0x7d8] sm:$0xff]
    %v1514 = vld [vmem:[#allocation5 + $0x7e0] sm:$0xff]
    %v1515 = vld [vmem:[#allocation5 + $0x7e8] sm:$0xff]
    %v1516 = vld [vmem:[#allocation5 + $0x7f0] sm:$0xff]
    %v1517 = vld [vmem:[#allocation5 + $0x7f8] sm:$0xff]
    %1518 = vmatprep.subr.mxu0 %v1263
    %1519 = vmatpush1.msra.mxu0 %v1262
    %1520 = vmatprep.subr.mxu0 %v1271
    %1521 = vmatpush1.msra.mxu0 %v1270
    %1522 = vmatprep.subr.mxu0 %v1279
    %1523 = vmatpush1.msra.mxu0 %v1278
    %1524 = vmatprep.subr.mxu0 %v1287
    %1525 = vmatpush1.msra.mxu0 %v1286
    %1526 = vmatprep.subr.mxu0 %v1295
    %1527 = vmatpush1.msra.mxu0 %v1294
    %1528 = vmatprep.subr.mxu0 %v1303
    %1529 = vmatpush1.msra.mxu0 %v1302
    %1530 = vmatprep.subr.mxu0 %v1311
    %1531 = vmatpush1.msra.mxu0 %v1310
    %1532 = vmatprep.subr.mxu0 %v1319
    %1533 = vmatpush1.msra.mxu0 %v1318
    %1534 = vmatprep.subr.mxu0 %v1327
    %1535 = vmatpush1.msra.mxu0 %v1326
    %1536 = vmatprep.subr.mxu0 %v1335
    %1537 = vmatpush1.msra.mxu0 %v1334
    %1538 = vmatprep.subr.mxu0 %v1343
    %1539 = vmatpush1.msra.mxu0 %v1342
    %1540 = vmatprep.subr.mxu0 %v1351
    %1541 = vmatpush1.msra.mxu0 %v1350
    %1542 = vmatprep.subr.mxu0 %v1359
    %1543 = vmatpush1.msra.mxu0 %v1358
    %1544 = vmatprep.subr.mxu0 %v1367
    %1545 = vmatpush1.msra.mxu0 %v1366
    %1546 = vmatprep.subr.mxu0 %v1375
    %1547 = vmatpush1.msra.mxu0 %v1374
    %1548 = vmatprep.subr.mxu0 %v1383
    %1549 = vmatpush1.msra.mxu0 %v1382
    %1550 = vmatprep.subr.mxu0 %v1391
    %1551 = vmatpush1.msra.mxu0 %v1390
    %1552 = vmatprep.subr.mxu0 %v1399
    %1553 = vmatpush1.msra.mxu0 %v1398
    %1554 = vmatprep.subr.mxu0 %v1407
    %1555 = vmatpush1.msra.mxu0 %v1406
    %1556 = vmatprep.subr.mxu0 %v1415
    %1557 = vmatpush1.msra.mxu0 %v1414
    %1558 = vmatprep.subr.mxu0 %v1423
    %1559 = vmatpush1.msra.mxu0 %v1422
    %1560 = vmatprep.subr.mxu0 %v1431
    %1561 = vmatpush1.msra.mxu0 %v1430
    %1562 = vmatprep.subr.mxu0 %v1439
    %1563 = vmatpush1.msra.mxu0 %v1438
    %1564 = vmatprep.subr.mxu0 %v1447
    %1565 = vmatpush1.msra.mxu0 %v1446
    %1566 = vmatprep.subr.mxu0 %v1455
    %1567 = vmatpush1.msra.mxu0 %v1454
    %1568 = vmatprep.subr.mxu0 %v1463
    %1569 = vmatpush1.msra.mxu0 %v1462
    %1570 = vmatprep.subr.mxu0 %v1471
    %1571 = vmatpush1.msra.mxu0 %v1470
    %1572 = vmatprep.subr.mxu0 %v1479
    %1573 = vmatpush1.msra.mxu0 %v1478
    %1574 = vmatprep.subr.mxu0 %v1487
    %1575 = vmatpush1.msra.mxu0 %v1486
    %1576 = vmatprep.subr.mxu0 %v1495
    %1577 = vmatpush1.msra.mxu0 %v1494
    %1578 = vmatprep.subr.mxu0 %v1503
    %1579 = vmatpush1.msra.mxu0 %v1502
    %1580 = vmatprep.subr.mxu0 %v1511
    %1581 = vmatpush1.msra.mxu0 %v1510
    %1582 = vmatprep.mubr.f32.mxu0 %v1256
    %1583 = vmatmul.mubr.f32.gmra.mrb[0].mxu0 %v1255
    %v1584 = vpop.f32.mrb[0].mxu0
    %v1585 = vadd.f32 0.0, %v1584
    %v1586 = vpop.f32.mrb[0].mxu0
    %v1587 = vadd.f32 0.0, %v1586
    %1588 = vdwg.mxu0
    %1589 = vmatprep.subr.mxu0 %v1265
    %1590 = vmatpush1.msra.mxu0 %v1264
    %1591 = vmatprep.subr.mxu0 %v1273
    %1592 = vmatpush1.msra.mxu0 %v1272
    %1593 = vmatprep.subr.mxu0 %v1281
    %1594 = vmatpush1.msra.mxu0 %v1280
    %1595 = vmatprep.subr.mxu0 %v1289
    %1596 = vmatpush1.msra.mxu0 %v1288
    %1597 = vmatprep.subr.mxu0 %v1297
    %1598 = vmatpush1.msra.mxu0 %v1296
    %1599 = vmatprep.subr.mxu0 %v1305
    %1600 = vmatpush1.msra.mxu0 %v1304
    %1601 = vmatprep.subr.mxu0 %v1313
    %1602 = vmatpush1.msra.mxu0 %v1312
    %1603 = vmatprep.subr.mxu0 %v1321
    %1604 = vmatpush1.msra.mxu0 %v1320
    %1605 = vmatprep.subr.mxu0 %v1329
    %1606 = vmatpush1.msra.mxu0 %v1328
    %1607 = vmatprep.subr.mxu0 %v1337
    %1608 = vmatpush1.msra.mxu0 %v1336
    %1609 = vmatprep.subr.mxu0 %v1345
    %1610 = vmatpush1.msra.mxu0 %v1344
    %1611 = vmatprep.subr.mxu0 %v1353
    %1612 = vmatpush1.msra.mxu0 %v1352
    %1613 = vmatprep.subr.mxu0 %v1361
    %1614 = vmatpush1.msra.mxu0 %v1360
    %1615 = vmatprep.subr.mxu0 %v1369
    %1616 = vmatpush1.msra.mxu0 %v1368
    %1617 = vmatprep.subr.mxu0 %v1377
    %1618 = vmatpush1.msra.mxu0 %v1376
    %1619 = vmatprep.subr.mxu0 %v1385
    %1620 = vmatpush1.msra.mxu0 %v1384
    %1621 = vmatprep.subr.mxu0 %v1393
    %1622 = vmatpush1.msra.mxu0 %v1392
    %1623 = vmatprep.subr.mxu0 %v1401
    %1624 = vmatpush1.msra.mxu0 %v1400
    %1625 = vmatprep.subr.mxu0 %v1409
    %1626 = vmatpush1.msra.mxu0 %v1408
    %1627 = vmatprep.subr.mxu0 %v1417
    %1628 = vmatpush1.msra.mxu0 %v1416
    %1629 = vmatprep.subr.mxu0 %v1425
    %1630 = vmatpush1.msra.mxu0 %v1424
    %1631 = vmatprep.subr.mxu0 %v1433
    %1632 = vmatpush1.msra.mxu0 %v1432
    %1633 = vmatprep.subr.mxu0 %v1441
    %1634 = vmatpush1.msra.mxu0 %v1440
    %1635 = vmatprep.subr.mxu0 %v1449
    %1636 = vmatpush1.msra.mxu0 %v1448
    %1637 = vmatprep.subr.mxu0 %v1457
    %1638 = vmatpush1.msra.mxu0 %v1456
    %1639 = vmatprep.subr.mxu0 %v1465
    %1640 = vmatpush1.msra.mxu0 %v1464
    %1641 = vmatprep.subr.mxu0 %v1473
    %1642 = vmatpush1.msra.mxu0 %v1472
    %1643 = vmatprep.subr.mxu0 %v1481
    %1644 = vmatpush1.msra.mxu0 %v1480
    %1645 = vmatprep.subr.mxu0 %v1489
    %1646 = vmatpush1.msra.mxu0 %v1488
    %1647 = vmatprep.subr.mxu0 %v1497
    %1648 = vmatpush1.msra.mxu0 %v1496
    %1649 = vmatprep.subr.mxu0 %v1505
    %1650 = vmatpush1.msra.mxu0 %v1504
    %1651 = vmatprep.subr.mxu0 %v1513
    %1652 = vmatpush1.msra.mxu0 %v1512
    %1653 = vmatprep.mubr.f32.mxu0 %v1256
    %1654 = vmatmul.mubr.f32.gmra.mrb[0].mxu0 %v1255
    %v1655 = vpop.f32.mrb[0].mxu0
    %v1656 = vadd.f32 0.0, %v1655
    %v1657 = vpop.f32.mrb[0].mxu0
    %v1658 = vadd.f32 0.0, %v1657
    %1659 = vdwg.mxu0
    %1660 = vmatprep.subr.mxu0 %v1267
    %1661 = vmatpush1.msra.mxu0 %v1266
    %1662 = vmatprep.subr.mxu0 %v1275
    %1663 = vmatpush1.msra.mxu0 %v1274
    %1664 = vmatprep.subr.mxu0 %v1283
    %1665 = vmatpush1.msra.mxu0 %v1282
    %1666 = vmatprep.subr.mxu0 %v1291
    %1667 = vmatpush1.msra.mxu0 %v1290
    %1668 = vmatprep.subr.mxu0 %v1299
    %1669 = vmatpush1.msra.mxu0 %v1298
    %1670 = vmatprep.subr.mxu0 %v1307
    %1671 = vmatpush1.msra.mxu0 %v1306
    %1672 = vmatprep.subr.mxu0 %v1315
    %1673 = vmatpush1.msra.mxu0 %v1314
    %1674 = vmatprep.subr.mxu0 %v1323
    %1675 = vmatpush1.msra.mxu0 %v1322
    %1676 = vmatprep.subr.mxu0 %v1331
    %1677 = vmatpush1.msra.mxu0 %v1330
    %1678 = vmatprep.subr.mxu0 %v1339
    %1679 = vmatpush1.msra.mxu0 %v1338
    %1680 = vmatprep.subr.mxu0 %v1347
    %1681 = vmatpush1.msra.mxu0 %v1346
    %1682 = vmatprep.subr.mxu0 %v1355
    %1683 = vmatpush1.msra.mxu0 %v1354
    %1684 = vmatprep.subr.mxu0 %v1363
    %1685 = vmatpush1.msra.mxu0 %v1362
    %1686 = vmatprep.subr.mxu0 %v1371
    %1687 = vmatpush1.msra.mxu0 %v1370
    %1688 = vmatprep.subr.mxu0 %v1379
    %1689 = vmatpush1.msra.mxu0 %v1378
    %1690 = vmatprep.subr.mxu0 %v1387
    %1691 = vmatpush1.msra.mxu0 %v1386
    %1692 = vmatprep.subr.mxu0 %v1395
    %1693 = vmatpush1.msra.mxu0 %v1394
    %1694 = vmatprep.subr.mxu0 %v1403
    %1695 = vmatpush1.msra.mxu0 %v1402
    %1696 = vmatprep.subr.mxu0 %v1411
    %1697 = vmatpush1.msra.mxu0 %v1410
    %1698 = vmatprep.subr.mxu0 %v1419
    %1699 = vmatpush1.msra.mxu0 %v1418
    %1700 = vmatprep.subr.mxu0 %v1427
    %1701 = vmatpush1.msra.mxu0 %v1426
    %1702 = vmatprep.subr.mxu0 %v1435
    %1703 = vmatpush1.msra.mxu0 %v1434
    %1704 = vmatprep.subr.mxu0 %v1443
    %1705 = vmatpush1.msra.mxu0 %v1442
    %1706 = vmatprep.subr.mxu0 %v1451
    %1707 = vmatpush1.msra.mxu0 %v1450
    %1708 = vmatprep.subr.mxu0 %v1459
    %1709 = vmatpush1.msra.mxu0 %v1458
    %1710 = vmatprep.subr.mxu0 %v1467
    %1711 = vmatpush1.msra.mxu0 %v1466
    %1712 = vmatprep.subr.mxu0 %v1475
    %1713 = vmatpush1.msra.mxu0 %v1474
    %1714 = vmatprep.subr.mxu0 %v1483
    %1715 = vmatpush1.msra.mxu0 %v1482
    %1716 = vmatprep.subr.mxu0 %v1491
    %1717 = vmatpush1.msra.mxu0 %v1490
    %1718 = vmatprep.subr.mxu0 %v1499
    %1719 = vmatpush1.msra.mxu0 %v1498
    %1720 = vmatprep.subr.mxu0 %v1507
    %1721 = vmatpush1.msra.mxu0 %v1506
    %1722 = vmatprep.subr.mxu0 %v1515
    %1723 = vmatpush1.msra.mxu0 %v1514
    %1724 = vmatprep.mubr.f32.mxu0 %v1256
    %1725 = vmatmul.mubr.f32.gmra.mrb[0].mxu0 %v1255
    %v1726 = vpop.f32.mrb[0].mxu0
    %v1727 = vadd.f32 0.0, %v1726
    %v1728 = vpop.f32.mrb[0].mxu0
    %v1729 = vadd.f32 0.0, %v1728
    %1730 = vdwg.mxu0
    %1731 = vmatprep.subr.mxu0 %v1269
    %1732 = vmatpush1.msra.mxu0 %v1268
    %1733 = vmatprep.subr.mxu0 %v1277
    %1734 = vmatpush1.msra.mxu0 %v1276
    %1735 = vmatprep.subr.mxu0 %v1285
    %1736 = vmatpush1.msra.mxu0 %v1284
    %1737 = vmatprep.subr.mxu0 %v1293
    %1738 = vmatpush1.msra.mxu0 %v1292
    %1739 = vmatprep.subr.mxu0 %v1301
    %1740 = vmatpush1.msra.mxu0 %v1300
    %1741 = vmatprep.subr.mxu0 %v1309
    %1742 = vmatpush1.msra.mxu0 %v1308
    %1743 = vmatprep.subr.mxu0 %v1317
    %1744 = vmatpush1.msra.mxu0 %v1316
    %1745 = vmatprep.subr.mxu0 %v1325
    %1746 = vmatpush1.msra.mxu0 %v1324
    %1747 = vmatprep.subr.mxu0 %v1333
    %1748 = vmatpush1.msra.mxu0 %v1332
    %1749 = vmatprep.subr.mxu0 %v1341
    %1750 = vmatpush1.msra.mxu0 %v1340
    %1751 = vmatprep.subr.mxu0 %v1349
    %1752 = vmatpush1.msra.mxu0 %v1348
    %1753 = vmatprep.subr.mxu0 %v1357
    %1754 = vmatpush1.msra.mxu0 %v1356
    %1755 = vmatprep.subr.mxu0 %v1365
    %1756 = vmatpush1.msra.mxu0 %v1364
    %1757 = vmatprep.subr.mxu0 %v1373
    %1758 = vmatpush1.msra.mxu0 %v1372
    %1759 = vmatprep.subr.mxu0 %v1381
    %1760 = vmatpush1.msra.mxu0 %v1380
    %1761 = vmatprep.subr.mxu0 %v1389
    %1762 = vmatpush1.msra.mxu0 %v1388
    %1763 = vmatprep.subr.mxu0 %v1397
    %1764 = vmatpush1.msra.mxu0 %v1396
    %1765 = vmatprep.subr.mxu0 %v1405
    %1766 = vmatpush1.msra.mxu0 %v1404
    %1767 = vmatprep.subr.mxu0 %v1413
    %1768 = vmatpush1.msra.mxu0 %v1412
    %1769 = vmatprep.subr.mxu0 %v1421
    %1770 = vmatpush1.msra.mxu0 %v1420
    %1771 = vmatprep.subr.mxu0 %v1429
    %1772 = vmatpush1.msra.mxu0 %v1428
    %1773 = vmatprep.subr.mxu0 %v1437
    %1774 = vmatpush1.msra.mxu0 %v1436
    %1775 = vmatprep.subr.mxu0 %v1445
    %1776 = vmatpush1.msra.mxu0 %v1444
    %1777 = vmatprep.subr.mxu0 %v1453
    %1778 = vmatpush1.msra.mxu0 %v1452
    %1779 = vmatprep.subr.mxu0 %v1461
    %1780 = vmatpush1.msra.mxu0 %v1460
    %1781 = vmatprep.subr.mxu0 %v1469
    %1782 = vmatpush1.msra.mxu0 %v1468
    %1783 = vmatprep.subr.mxu0 %v1477
    %1784 = vmatpush1.msra.mxu0 %v1476
    %1785 = vmatprep.subr.mxu0 %v1485
    %1786 = vmatpush1.msra.mxu0 %v1484
    %1787 = vmatprep.subr.mxu0 %v1493
    %1788 = vmatpush1.msra.mxu0 %v1492
    %1789 = vmatprep.subr.mxu0 %v1501
    %1790 = vmatpush1.msra.mxu0 %v1500
    %1791 = vmatprep.subr.mxu0 %v1509
    %1792 = vmatpush1.msra.mxu0 %v1508
    %1793 = vmatprep.subr.mxu0 %v1517
    %1794 = vmatpush1.msra.mxu0 %v1516
    %1795 = vmatprep.mubr.f32.mxu0 %v1256
    %1796 = vmatmul.mubr.f32.gmra.mrb[0].mxu0 %v1255
    %v1797 = vpop.f32.mrb[0].mxu0
    %v1798 = vadd.f32 0.0, %v1797
    %v1799 = vpop.f32.mrb[0].mxu0
    %v1800 = vadd.f32 0.0, %v1799
    %1801 = vdwg.mxu0
    %v1810 = vrot.slane %v1585, 6
    %v1811 = vrot.slane %v1587, 6
    %v1812 = vrot.slane %v1656, 6
    %v1813 = vrot.slane %v1658, 6
    %v1814 = vrot.slane %v1727, 6
    %v1815 = vrot.slane %v1729, 6
    %v1816 = vrot.slane %v1798, 6
    %v1817 = vrot.slane %v1800, 6
    %v1826 = vadd.f32 %v420, %v1810
    %v1827 = vadd.f32 %v422, %v1811
    %v1828 = vadd.f32 %v497, %v1812
    %v1829 = vadd.f32 %v499, %v1813
    %v1830 = vadd.f32 %v574, %v1814
    %v1831 = vadd.f32 %v576, %v1815
    %v1832 = vadd.f32 %v651, %v1816
    %v1833 = vadd.f32 %v653, %v1817
    %v1834 = vxor.u32 %v1826, 2147483648
    %v1835 = vxor.u32 %v1827, 2147483648
    %v1836 = vxor.u32 %v1828, 2147483648
    %v1837 = vxor.u32 %v1829, 2147483648
    %v1838 = vxor.u32 %v1830, 2147483648
    %v1839 = vxor.u32 %v1831, 2147483648
    %v1840 = vmul.f32 %v1834, 1.442695
    %v1841 = vpow.pop %v1840
    %v1842 = vmul.f32 %v1835, 1.442695
    %v1843 = vpow.pop %v1842
    %v1844 = vmul.f32 %v1836, 1.442695
    %v1845 = vpow.pop %v1844
    %v1846 = vmul.f32 %v1837, 1.442695
    %v1847 = vpow.pop %v1846
    %v1848 = vmul.f32 %v1838, 1.442695
    %v1849 = vpow.pop %v1848
    %v1850 = vmul.f32 %v1839, 1.442695
    %v1851 = vpow.pop %v1850
    %v1852 = vadd.f32 %v1841, 1.0
    %v1853 = vadd.f32 %v1843, 1.0
    %v1854 = vadd.f32 %v1845, 1.0
    %v1855 = vadd.f32 %v1847, 1.0
    %v1856 = vadd.f32 %v1849, 1.0
    %v1857 = vadd.f32 %v1851, 1.0
    %v1858 = vrcp.pop %v1852
    %v1859 = vmul.f32 1.0, %v1858
    %v1860 = vrcp.pop %v1853
    %v1861 = vmul.f32 1.0, %v1860
    %v1862 = vrcp.pop %v1854
    %v1863 = vmul.f32 1.0, %v1862
    %v1864 = vrcp.pop %v1855
    %v1865 = vmul.f32 1.0, %v1864
    %v1866 = vrcp.pop %v1856
    %v1867 = vmul.f32 1.0, %v1866
    %v1868 = vrcp.pop %v1857
    %v1869 = vmul.f32 1.0, %v1868
    %v1870 = vtanh.pop %v1832
    %v1871 = vtanh.pop %v1833
    %v1874 = vrot.slane %v1251, 6
    %v1875 = vrot.slane %v1252, 6
    %v1878 = vmul.f32 %v1863, %v1874
    %v1879 = vmul.f32 %v1865, %v1875
    %v1880 = vmul.f32 %v1859, %v1870
    %v1881 = vmul.f32 %v1861, %v1871
    %v1882 = vadd.f32 %v1878, %v1880
    %v1883 = vadd.f32 %v1879, %v1881
    %v1884 = vtanh.pop %v1882
    %v1885 = vtanh.pop %v1883
    %v1886 = vmul.f32 %v1867, %v1884
    %v1887 = vmul.f32 %v1869, %v1885
    %1888 = vst [vmem:[#allocation2] sm:$0xc] %v1886
    %v1890 = vrot.slane %v1887, 6
    %1892 = vst [vmem:[#allocation2 + $0x18] sm:$0x30] %v1890
    %v1893 = vld [vmem:[#allocation5] sm:$0xff]
    %v1894 = vld [vmem:[#allocation5 + $0x8] sm:$0xff]
    %v1895 = vld [vmem:[#allocation5 + $0x10] sm:$0xff]
    %v1896 = vld [vmem:[#allocation5 + $0x18] sm:$0xff]
    %v1897 = vld [vmem:[#allocation5 + $0x20] sm:$0xff]
    %v1898 = vld [vmem:[#allocation5 + $0x28] sm:$0xff]
    %v1899 = vld [vmem:[#allocation5 + $0x30] sm:$0xff]
    %v1900 = vld [vmem:[#allocation5 + $0x38] sm:$0xff]
    %v1901 = vld [vmem:[#allocation5 + $0x40] sm:$0xff]
    %v1902 = vld [vmem:[#allocation5 + $0x48] sm:$0xff]
    %v1903 = vld [vmem:[#allocation5 + $0x50] sm:$0xff]
    %v1904 = vld [vmem:[#allocation5 + $0x58] sm:$0xff]
    %v1905 = vld [vmem:[#allocation5 + $0x60] sm:$0xff]
    %v1906 = vld [vmem:[#allocation5 + $0x68] sm:$0xff]
    %v1907 = vld [vmem:[#allocation5 + $0x70] sm:$0xff]
    %v1908 = vld [vmem:[#allocation5 + $0x78] sm:$0xff]
    %v1909 = vld [vmem:[#allocation5 + $0x80] sm:$0xff]
    %v1910 = vld [vmem:[#allocation5 + $0x88] sm:$0xff]
    %v1911 = vld [vmem:[#allocation5 + $0x90] sm:$0xff]
    %v1912 = vld [vmem:[#allocation5 + $0x98] sm:$0xff]
    %v1913 = vld [vmem:[#allocation5 + $0xa0] sm:$0xff]
    %v1914 = vld [vmem:[#allocation5 + $0xa8] sm:$0xff]
    %v1915 = vld [vmem:[#allocation5 + $0xb0] sm:$0xff]
    %v1916 = vld [vmem:[#allocation5 + $0xb8] sm:$0xff]
    %v1917 = vld [vmem:[#allocation5 + $0xc0] sm:$0xff]
    %v1918 = vld [vmem:[#allocation5 + $0xc8] sm:$0xff]
    %v1919 = vld [vmem:[#allocation5 + $0xd0] sm:$0xff]
    %v1920 = vld [vmem:[#allocation5 + $0xd8] sm:$0xff]
    %v1921 = vld [vmem:[#allocation5 + $0xe0] sm:$0xff]
    %v1922 = vld [vmem:[#allocation5 + $0xe8] sm:$0xff]
    %v1923 = vld [vmem:[#allocation5 + $0xf0] sm:$0xff]
    %v1924 = vld [vmem:[#allocation5 + $0xf8] sm:$0xff]
    %v1925 = vld [vmem:[#allocation5 + $0x100] sm:$0xff]
    %v1926 = vld [vmem:[#allocation5 + $0x108] sm:$0xff]
    %v1927 = vld [vmem:[#allocation5 + $0x110] sm:$0xff]
    %v1928 = vld [vmem:[#allocation5 + $0x118] sm:$0xff]
    %v1929 = vld [vmem:[#allocation5 + $0x120] sm:$0xff]
    %v1930 = vld [vmem:[#allocation5 + $0x128] sm:$0xff]
    %v1931 = vld [vmem:[#allocation5 + $0x130] sm:$0xff]
    %v1932 = vld [vmem:[#allocation5 + $0x138] sm:$0xff]
    %v1933 = vld [vmem:[#allocation5 + $0x140] sm:$0xff]
    %v1934 = vld [vmem:[#allocation5 + $0x148] sm:$0xff]
    %v1935 = vld [vmem:[#allocation5 + $0x150] sm:$0xff]
    %v1936 = vld [vmem:[#allocation5 + $0x158] sm:$0xff]
    %v1937 = vld [vmem:[#allocation5 + $0x160] sm:$0xff]
    %v1938 = vld [vmem:[#allocation5 + $0x168] sm:$0xff]
    %v1939 = vld [vmem:[#allocation5 + $0x170] sm:$0xff]
    %v1940 = vld [vmem:[#allocation5 + $0x178] sm:$0xff]
    %v1941 = vld [vmem:[#allocation5 + $0x180] sm:$0xff]
    %v1942 = vld [vmem:[#allocation5 + $0x188] sm:$0xff]
    %v1943 = vld [vmem:[#allocation5 + $0x190] sm:$0xff]
    %v1944 = vld [vmem:[#allocation5 + $0x198] sm:$0xff]
    %v1945 = vld [vmem:[#allocation5 + $0x1a0] sm:$0xff]
    %v1946 = vld [vmem:[#allocation5 + $0x1a8] sm:$0xff]
    %v1947 = vld [vmem:[#allocation5 + $0x1b0] sm:$0xff]
    %v1948 = vld [vmem:[#allocation5 + $0x1b8] sm:$0xff]
    %v1949 = vld [vmem:[#allocation5 + $0x1c0] sm:$0xff]
    %v1950 = vld [vmem:[#allocation5 + $0x1c8] sm:$0xff]
    %v1951 = vld [vmem:[#allocation5 + $0x1d0] sm:$0xff]
    %v1952 = vld [vmem:[#allocation5 + $0x1d8] sm:$0xff]
    %v1953 = vld [vmem:[#allocation5 + $0x1e0] sm:$0xff]
    %v1954 = vld [vmem:[#allocation5 + $0x1e8] sm:$0xff]
    %v1955 = vld [vmem:[#allocation5 + $0x1f0] sm:$0xff]
    %v1956 = vld [vmem:[#allocation5 + $0x1f8] sm:$0xff]
    %v1957 = vld [vmem:[#allocation5 + $0x200] sm:$0xff]
    %v1958 = vld [vmem:[#allocation5 + $0x208] sm:$0xff]
    %v1959 = vld [vmem:[#allocation5 + $0x210] sm:$0xff]
    %v1960 = vld [vmem:[#allocation5 + $0x218] sm:$0xff]
    %v1961 = vld [vmem:[#allocation5 + $0x220] sm:$0xff]
    %v1962 = vld [vmem:[#allocation5 + $0x228] sm:$0xff]
    %v1963 = vld [vmem:[#allocation5 + $0x230] sm:$0xff]
    %v1964 = vld [vmem:[#allocation5 + $0x238] sm:$0xff]
    %v1965 = vld [vmem:[#allocation5 + $0x240] sm:$0xff]
    %v1966 = vld [vmem:[#allocation5 + $0x248] sm:$0xff]
    %v1967 = vld [vmem:[#allocation5 + $0x250] sm:$0xff]
    %v1968 = vld [vmem:[#allocation5 + $0x258] sm:$0xff]
    %v1969 = vld [vmem:[#allocation5 + $0x260] sm:$0xff]
    %v1970 = vld [vmem:[#allocation5 + $0x268] sm:$0xff]
    %v1971 = vld [vmem:[#allocation5 + $0x270] sm:$0xff]
    %v1972 = vld [vmem:[#allocation5 + $0x278] sm:$0xff]
    %v1973 = vld [vmem:[#allocation5 + $0x280] sm:$0xff]
    %v1974 = vld [vmem:[#allocation5 + $0x288] sm:$0xff]
    %v1975 = vld [vmem:[#allocation5 + $0x290] sm:$0xff]
    %v1976 = vld [vmem:[#allocation5 + $0x298] sm:$0xff]
    %v1977 = vld [vmem:[#allocation5 + $0x2a0] sm:$0xff]
    %v1978 = vld [vmem:[#allocation5 + $0x2a8] sm:$0xff]
    %v1979 = vld [vmem:[#allocation5 + $0x2b0] sm:$0xff]
    %v1980 = vld [vmem:[#allocation5 + $0x2b8] sm:$0xff]
    %v1981 = vld [vmem:[#allocation5 + $0x2c0] sm:$0xff]
    %v1982 = vld [vmem:[#allocation5 + $0x2c8] sm:$0xff]
    %v1983 = vld [vmem:[#allocation5 + $0x2d0] sm:$0xff]
    %v1984 = vld [vmem:[#allocation5 + $0x2d8] sm:$0xff]
    %v1985 = vld [vmem:[#allocation5 + $0x2e0] sm:$0xff]
    %v1986 = vld [vmem:[#allocation5 + $0x2e8] sm:$0xff]
    %v1987 = vld [vmem:[#allocation5 + $0x2f0] sm:$0xff]
    %v1988 = vld [vmem:[#allocation5 + $0x2f8] sm:$0xff]
    %v1989 = vld [vmem:[#allocation5 + $0x300] sm:$0xff]
    %v1990 = vld [vmem:[#allocation5 + $0x308] sm:$0xff]
    %v1991 = vld [vmem:[#allocation5 + $0x310] sm:$0xff]
    %v1992 = vld [vmem:[#allocation5 + $0x318] sm:$0xff]
    %v1993 = vld [vmem:[#allocation5 + $0x320] sm:$0xff]
    %v1994 = vld [vmem:[#allocation5 + $0x328] sm:$0xff]
    %v1995 = vld [vmem:[#allocation5 + $0x330] sm:$0xff]
    %v1996 = vld [vmem:[#allocation5 + $0x338] sm:$0xff]
    %v1997 = vld [vmem:[#allocation5 + $0x340] sm:$0xff]
    %v1998 = vld [vmem:[#allocation5 + $0x348] sm:$0xff]
    %v1999 = vld [vmem:[#allocation5 + $0x350] sm:$0xff]
    %v2000 = vld [vmem:[#allocation5 + $0x358] sm:$0xff]
    %v2001 = vld [vmem:[#allocation5 + $0x360] sm:$0xff]
    %v2002 = vld [vmem:[#allocation5 + $0x368] sm:$0xff]
    %v2003 = vld [vmem:[#allocation5 + $0x370] sm:$0xff]
    %v2004 = vld [vmem:[#allocation5 + $0x378] sm:$0xff]
    %v2005 = vld [vmem:[#allocation5 + $0x380] sm:$0xff]
    %v2006 = vld [vmem:[#allocation5 + $0x388] sm:$0xff]
    %v2007 = vld [vmem:[#allocation5 + $0x390] sm:$0xff]
    %v2008 = vld [vmem:[#allocation5 + $0x398] sm:$0xff]
    %v2009 = vld [vmem:[#allocation5 + $0x3a0] sm:$0xff]
    %v2010 = vld [vmem:[#allocation5 + $0x3a8] sm:$0xff]
    %v2011 = vld [vmem:[#allocation5 + $0x3b0] sm:$0xff]
    %v2012 = vld [vmem:[#allocation5 + $0x3b8] sm:$0xff]
    %v2013 = vld [vmem:[#allocation5 + $0x3c0] sm:$0xff]
    %v2014 = vld [vmem:[#allocation5 + $0x3c8] sm:$0xff]
    %v2015 = vld [vmem:[#allocation5 + $0x3d0] sm:$0xff]
    %v2016 = vld [vmem:[#allocation5 + $0x3d8] sm:$0xff]
    %v2017 = vld [vmem:[#allocation5 + $0x3e0] sm:$0xff]
    %v2018 = vld [vmem:[#allocation5 + $0x3e8] sm:$0xff]
    %v2019 = vld [vmem:[#allocation5 + $0x3f0] sm:$0xff]
    %v2020 = vld [vmem:[#allocation5 + $0x3f8] sm:$0xff]
    %v2021 = vld [vmem:[#allocation5 + $0x400] sm:$0xff]
    %v2022 = vld [vmem:[#allocation5 + $0x408] sm:$0xff]
    %v2023 = vld [vmem:[#allocation5 + $0x410] sm:$0xff]
    %v2024 = vld [vmem:[#allocation5 + $0x418] sm:$0xff]
    %v2025 = vld [vmem:[#allocation5 + $0x420] sm:$0xff]
    %v2026 = vld [vmem:[#allocation5 + $0x428] sm:$0xff]
    %v2027 = vld [vmem:[#allocation5 + $0x430] sm:$0xff]
    %v2028 = vld [vmem:[#allocation5 + $0x438] sm:$0xff]
    %v2029 = vld [vmem:[#allocation5 + $0x440] sm:$0xff]
    %v2030 = vld [vmem:[#allocation5 + $0x448] sm:$0xff]
    %v2031 = vld [vmem:[#allocation5 + $0x450] sm:$0xff]
    %v2032 = vld [vmem:[#allocation5 + $0x458] sm:$0xff]
    %v2033 = vld [vmem:[#allocation5 + $0x460] sm:$0xff]
    %v2034 = vld [vmem:[#allocation5 + $0x468] sm:$0xff]
    %v2035 = vld [vmem:[#allocation5 + $0x470] sm:$0xff]
    %v2036 = vld [vmem:[#allocation5 + $0x478] sm:$0xff]
    %v2037 = vld [vmem:[#allocation5 + $0x480] sm:$0xff]
    %v2038 = vld [vmem:[#allocation5 + $0x488] sm:$0xff]
    %v2039 = vld [vmem:[#allocation5 + $0x490] sm:$0xff]
    %v2040 = vld [vmem:[#allocation5 + $0x498] sm:$0xff]
    %v2041 = vld [vmem:[#allocation5 + $0x4a0] sm:$0xff]
    %v2042 = vld [vmem:[#allocation5 + $0x4a8] sm:$0xff]
    %v2043 = vld [vmem:[#allocation5 + $0x4b0] sm:$0xff]
    %v2044 = vld [vmem:[#allocation5 + $0x4b8] sm:$0xff]
    %v2045 = vld [vmem:[#allocation5 + $0x4c0] sm:$0xff]
    %v2046 = vld [vmem:[#allocation5 + $0x4c8] sm:$0xff]
    %v2047 = vld [vmem:[#allocation5 + $0x4d0] sm:$0xff]
    %v2048 = vld [vmem:[#allocation5 + $0x4d8] sm:$0xff]
    %v2049 = vld [vmem:[#allocation5 + $0x4e0] sm:$0xff]
    %v2050 = vld [vmem:[#allocation5 + $0x4e8] sm:$0xff]
    %v2051 = vld [vmem:[#allocation5 + $0x4f0] sm:$0xff]
    %v2052 = vld [vmem:[#allocation5 + $0x4f8] sm:$0xff]
    %v2053 = vld [vmem:[#allocation5 + $0x500] sm:$0xff]
    %v2054 = vld [vmem:[#allocation5 + $0x508] sm:$0xff]
    %v2055 = vld [vmem:[#allocation5 + $0x510] sm:$0xff]
    %v2056 = vld [vmem:[#allocation5 + $0x518] sm:$0xff]
    %v2057 = vld [vmem:[#allocation5 + $0x520] sm:$0xff]
    %v2058 = vld [vmem:[#allocation5 + $0x528] sm:$0xff]
    %v2059 = vld [vmem:[#allocation5 + $0x530] sm:$0xff]
    %v2060 = vld [vmem:[#allocation5 + $0x538] sm:$0xff]
    %v2061 = vld [vmem:[#allocation5 + $0x540] sm:$0xff]
    %v2062 = vld [vmem:[#allocation5 + $0x548] sm:$0xff]
    %v2063 = vld [vmem:[#allocation5 + $0x550] sm:$0xff]
    %v2064 = vld [vmem:[#allocation5 + $0x558] sm:$0xff]
    %v2065 = vld [vmem:[#allocation5 + $0x560] sm:$0xff]
    %v2066 = vld [vmem:[#allocation5 + $0x568] sm:$0xff]
    %v2067 = vld [vmem:[#allocation5 + $0x570] sm:$0xff]
    %v2068 = vld [vmem:[#allocation5 + $0x578] sm:$0xff]
    %v2069 = vld [vmem:[#allocation5 + $0x580] sm:$0xff]
    %v2070 = vld [vmem:[#allocation5 + $0x588] sm:$0xff]
    %v2071 = vld [vmem:[#allocation5 + $0x590] sm:$0xff]
    %v2072 = vld [vmem:[#allocation5 + $0x598] sm:$0xff]
    %v2073 = vld [vmem:[#allocation5 + $0x5a0] sm:$0xff]
    %v2074 = vld [vmem:[#allocation5 + $0x5a8] sm:$0xff]
    %v2075 = vld [vmem:[#allocation5 + $0x5b0] sm:$0xff]
    %v2076 = vld [vmem:[#allocation5 + $0x5b8] sm:$0xff]
    %v2077 = vld [vmem:[#allocation5 + $0x5c0] sm:$0xff]
    %v2078 = vld [vmem:[#allocation5 + $0x5c8] sm:$0xff]
    %v2079 = vld [vmem:[#allocation5 + $0x5d0] sm:$0xff]
    %v2080 = vld [vmem:[#allocation5 + $0x5d8] sm:$0xff]
    %v2081 = vld [vmem:[#allocation5 + $0x5e0] sm:$0xff]
    %v2082 = vld [vmem:[#allocation5 + $0x5e8] sm:$0xff]
    %v2083 = vld [vmem:[#allocation5 + $0x5f0] sm:$0xff]
    %v2084 = vld [vmem:[#allocation5 + $0x5f8] sm:$0xff]
    %v2085 = vld [vmem:[#allocation5 + $0x600] sm:$0xff]
    %v2086 = vld [vmem:[#allocation5 + $0x608] sm:$0xff]
    %v2087 = vld [vmem:[#allocation5 + $0x610] sm:$0xff]
    %v2088 = vld [vmem:[#allocation5 + $0x618] sm:$0xff]
    %v2089 = vld [vmem:[#allocation5 + $0x620] sm:$0xff]
    %v2090 = vld [vmem:[#allocation5 + $0x628] sm:$0xff]
    %v2091 = vld [vmem:[#allocation5 + $0x630] sm:$0xff]
    %v2092 = vld [vmem:[#allocation5 + $0x638] sm:$0xff]
    %v2093 = vld [vmem:[#allocation5 + $0x640] sm:$0xff]
    %v2094 = vld [vmem:[#allocation5 + $0x648] sm:$0xff]
    %v2095 = vld [vmem:[#allocation5 + $0x650] sm:$0xff]
    %v2096 = vld [vmem:[#allocation5 + $0x658] sm:$0xff]
    %v2097 = vld [vmem:[#allocation5 + $0x660] sm:$0xff]
    %v2098 = vld [vmem:[#allocation5 + $0x668] sm:$0xff]
    %v2099 = vld [vmem:[#allocation5 + $0x670] sm:$0xff]
    %v2100 = vld [vmem:[#allocation5 + $0x678] sm:$0xff]
    %v2101 = vld [vmem:[#allocation5 + $0x680] sm:$0xff]
    %v2102 = vld [vmem:[#allocation5 + $0x688] sm:$0xff]
    %v2103 = vld [vmem:[#allocation5 + $0x690] sm:$0xff]
    %v2104 = vld [vmem:[#allocation5 + $0x698] sm:$0xff]
    %v2105 = vld [vmem:[#allocation5 + $0x6a0] sm:$0xff]
    %v2106 = vld [vmem:[#allocation5 + $0x6a8] sm:$0xff]
    %v2107 = vld [vmem:[#allocation5 + $0x6b0] sm:$0xff]
    %v2108 = vld [vmem:[#allocation5 + $0x6b8] sm:$0xff]
    %v2109 = vld [vmem:[#allocation5 + $0x6c0] sm:$0xff]
    %v2110 = vld [vmem:[#allocation5 + $0x6c8] sm:$0xff]
    %v2111 = vld [vmem:[#allocation5 + $0x6d0] sm:$0xff]
    %v2112 = vld [vmem:[#allocation5 + $0x6d8] sm:$0xff]
    %v2113 = vld [vmem:[#allocation5 + $0x6e0] sm:$0xff]
    %v2114 = vld [vmem:[#allocation5 + $0x6e8] sm:$0xff]
    %v2115 = vld [vmem:[#allocation5 + $0x6f0] sm:$0xff]
    %v2116 = vld [vmem:[#allocation5 + $0x6f8] sm:$0xff]
    %v2117 = vld [vmem:[#allocation5 + $0x700] sm:$0xff]
    %v2118 = vld [vmem:[#allocation5 + $0x708] sm:$0xff]
    %v2119 = vld [vmem:[#allocation5 + $0x710] sm:$0xff]
    %v2120 = vld [vmem:[#allocation5 + $0x718] sm:$0xff]
    %v2121 = vld [vmem:[#allocation5 + $0x720] sm:$0xff]
    %v2122 = vld [vmem:[#allocation5 + $0x728] sm:$0xff]
    %v2123 = vld [vmem:[#allocation5 + $0x730] sm:$0xff]
    %v2124 = vld [vmem:[#allocation5 + $0x738] sm:$0xff]
    %v2125 = vld [vmem:[#allocation5 + $0x740] sm:$0xff]
    %v2126 = vld [vmem:[#allocation5 + $0x748] sm:$0xff]
    %v2127 = vld [vmem:[#allocation5 + $0x750] sm:$0xff]
    %v2128 = vld [vmem:[#allocation5 + $0x758] sm:$0xff]
    %v2129 = vld [vmem:[#allocation5 + $0x760] sm:$0xff]
    %v2130 = vld [vmem:[#allocation5 + $0x768] sm:$0xff]
    %v2131 = vld [vmem:[#allocation5 + $0x770] sm:$0xff]
    %v2132 = vld [vmem:[#allocation5 + $0x778] sm:$0xff]
    %v2133 = vld [vmem:[#allocation5 + $0x780] sm:$0xff]
    %v2134 = vld [vmem:[#allocation5 + $0x788] sm:$0xff]
    %v2135 = vld [vmem:[#allocation5 + $0x790] sm:$0xff]
    %v2136 = vld [vmem:[#allocation5 + $0x798] sm:$0xff]
    %v2137 = vld [vmem:[#allocation5 + $0x7a0] sm:$0xff]
    %v2138 = vld [vmem:[#allocation5 + $0x7a8] sm:$0xff]
    %v2139 = vld [vmem:[#allocation5 + $0x7b0] sm:$0xff]
    %v2140 = vld [vmem:[#allocation5 + $0x7b8] sm:$0xff]
    %v2141 = vld [vmem:[#allocation5 + $0x7c0] sm:$0xff]
    %v2142 = vld [vmem:[#allocation5 + $0x7c8] sm:$0xff]
    %v2143 = vld [vmem:[#allocation5 + $0x7d0] sm:$0xff]
    %v2144 = vld [vmem:[#allocation5 + $0x7d8] sm:$0xff]
    %v2145 = vld [vmem:[#allocation5 + $0x7e0] sm:$0xff]
    %v2146 = vld [vmem:[#allocation5 + $0x7e8] sm:$0xff]
    %v2147 = vld [vmem:[#allocation5 + $0x7f0] sm:$0xff]
    %v2148 = vld [vmem:[#allocation5 + $0x7f8] sm:$0xff]
    %v2150 = vrot.slane %v1886, 2
    %v2151 = vrot.slane %v1887, 2
    %2154 = vmatprep.subr.mxu0 %v1894
    %2155 = vmatpush1.msra.mxu0 %v1893
    %2156 = vmatprep.subr.mxu0 %v1902
    %2157 = vmatpush1.msra.mxu0 %v1901
    %2158 = vmatprep.subr.mxu0 %v1910
    %2159 = vmatpush1.msra.mxu0 %v1909
    %2160 = vmatprep.subr.mxu0 %v1918
    %2161 = vmatpush1.msra.mxu0 %v1917
    %2162 = vmatprep.subr.mxu0 %v1926
    %2163 = vmatpush1.msra.mxu0 %v1925
    %2164 = vmatprep.subr.mxu0 %v1934
    %2165 = vmatpush1.msra.mxu0 %v1933
    %2166 = vmatprep.subr.mxu0 %v1942
    %2167 = vmatpush1.msra.mxu0 %v1941
    %2168 = vmatprep.subr.mxu0 %v1950
    %2169 = vmatpush1.msra.mxu0 %v1949
    %2170 = vmatprep.subr.mxu0 %v1958
    %2171 = vmatpush1.msra.mxu0 %v1957
    %2172 = vmatprep.subr.mxu0 %v1966
    %2173 = vmatpush1.msra.mxu0 %v1965
    %2174 = vmatprep.subr.mxu0 %v1974
    %2175 = vmatpush1.msra.mxu0 %v1973
    %2176 = vmatprep.subr.mxu0 %v1982
    %2177 = vmatpush1.msra.mxu0 %v1981
    %2178 = vmatprep.subr.mxu0 %v1990
    %2179 = vmatpush1.msra.mxu0 %v1989
    %2180 = vmatprep.subr.mxu0 %v1998
    %2181 = vmatpush1.msra.mxu0 %v1997
    %2182 = vmatprep.subr.mxu0 %v2006
    %2183 = vmatpush1.msra.mxu0 %v2005
    %2184 = vmatprep.subr.mxu0 %v2014
    %2185 = vmatpush1.msra.mxu0 %v2013
    %2186 = vmatprep.subr.mxu0 %v2022
    %2187 = vmatpush1.msra.mxu0 %v2021
    %2188 = vmatprep.subr.mxu0 %v2030
    %2189 = vmatpush1.msra.mxu0 %v2029
    %2190 = vmatprep.subr.mxu0 %v2038
    %2191 = vmatpush1.msra.mxu0 %v2037
    %2192 = vmatprep.subr.mxu0 %v2046
    %2193 = vmatpush1.msra.mxu0 %v2045
    %2194 = vmatprep.subr.mxu0 %v2054
    %2195 = vmatpush1.msra.mxu0 %v2053
    %2196 = vmatprep.subr.mxu0 %v2062
    %2197 = vmatpush1.msra.mxu0 %v2061
    %2198 = vmatprep.subr.mxu0 %v2070
    %2199 = vmatpush1.msra.mxu0 %v2069
    %2200 = vmatprep.subr.mxu0 %v2078
    %2201 = vmatpush1.msra.mxu0 %v2077
    %2202 = vmatprep.subr.mxu0 %v2086
    %2203 = vmatpush1.msra.mxu0 %v2085
    %2204 = vmatprep.subr.mxu0 %v2094
    %2205 = vmatpush1.msra.mxu0 %v2093
    %2206 = vmatprep.subr.mxu0 %v2102
    %2207 = vmatpush1.msra.mxu0 %v2101
    %2208 = vmatprep.subr.mxu0 %v2110
    %2209 = vmatpush1.msra.mxu0 %v2109
    %2210 = vmatprep.subr.mxu0 %v2118
    %2211 = vmatpush1.msra.mxu0 %v2117
    %2212 = vmatprep.subr.mxu0 %v2126
    %2213 = vmatpush1.msra.mxu0 %v2125
    %2214 = vmatprep.subr.mxu0 %v2134
    %2215 = vmatpush1.msra.mxu0 %v2133
    %2216 = vmatprep.subr.mxu0 %v2142
    %2217 = vmatpush1.msra.mxu0 %v2141
    %2218 = vmatprep.mubr.f32.mxu0 %v2151
    %2219 = vmatmul.mubr.f32.gmra.mrb[0].mxu0 %v2150
    %v2220 = vpop.f32.mrb[0].mxu0
    %v2221 = vadd.f32 0.0, %v2220
    %v2222 = vpop.f32.mrb[0].mxu0
    %v2223 = vadd.f32 0.0, %v2222
    %2224 = vdwg.mxu0
    %2225 = vmatprep.subr.mxu0 %v1896
    %2226 = vmatpush1.msra.mxu0 %v1895
    %2227 = vmatprep.subr.mxu0 %v1904
    %2228 = vmatpush1.msra.mxu0 %v1903
    %2229 = vmatprep.subr.mxu0 %v1912
    %2230 = vmatpush1.msra.mxu0 %v1911
    %2231 = vmatprep.subr.mxu0 %v1920
    %2232 = vmatpush1.msra.mxu0 %v1919
    %2233 = vmatprep.subr.mxu0 %v1928
    %2234 = vmatpush1.msra.mxu0 %v1927
    %2235 = vmatprep.subr.mxu0 %v1936
    %2236 = vmatpush1.msra.mxu0 %v1935
    %2237 = vmatprep.subr.mxu0 %v1944
    %2238 = vmatpush1.msra.mxu0 %v1943
    %2239 = vmatprep.subr.mxu0 %v1952
    %2240 = vmatpush1.msra.mxu0 %v1951
    %2241 = vmatprep.subr.mxu0 %v1960
    %2242 = vmatpush1.msra.mxu0 %v1959
    %2243 = vmatprep.subr.mxu0 %v1968
    %2244 = vmatpush1.msra.mxu0 %v1967
    %2245 = vmatprep.subr.mxu0 %v1976
    %2246 = vmatpush1.msra.mxu0 %v1975
    %2247 = vmatprep.subr.mxu0 %v1984
    %2248 = vmatpush1.msra.mxu0 %v1983
    %2249 = vmatprep.subr.mxu0 %v1992
    %2250 = vmatpush1.msra.mxu0 %v1991
    %2251 = vmatprep.subr.mxu0 %v2000
    %2252 = vmatpush1.msra.mxu0 %v1999
    %2253 = vmatprep.subr.mxu0 %v2008
    %2254 = vmatpush1.msra.mxu0 %v2007
    %2255 = vmatprep.subr.mxu0 %v2016
    %2256 = vmatpush1.msra.mxu0 %v2015
    %2257 = vmatprep.subr.mxu0 %v2024
    %2258 = vmatpush1.msra.mxu0 %v2023
    %2259 = vmatprep.subr.mxu0 %v2032
    %2260 = vmatpush1.msra.mxu0 %v2031
    %2261 = vmatprep.subr.mxu0 %v2040
    %2262 = vmatpush1.msra.mxu0 %v2039
    %2263 = vmatprep.subr.mxu0 %v2048
    %2264 = vmatpush1.msra.mxu0 %v2047
    %2265 = vmatprep.subr.mxu0 %v2056
    %2266 = vmatpush1.msra.mxu0 %v2055
    %2267 = vmatprep.subr.mxu0 %v2064
    %2268 = vmatpush1.msra.mxu0 %v2063
    %2269 = vmatprep.subr.mxu0 %v2072
    %2270 = vmatpush1.msra.mxu0 %v2071
    %2271 = vmatprep.subr.mxu0 %v2080
    %2272 = vmatpush1.msra.mxu0 %v2079
    %2273 = vmatprep.subr.mxu0 %v2088
    %2274 = vmatpush1.msra.mxu0 %v2087
    %2275 = vmatprep.subr.mxu0 %v2096
    %2276 = vmatpush1.msra.mxu0 %v2095
    %2277 = vmatprep.subr.mxu0 %v2104
    %2278 = vmatpush1.msra.mxu0 %v2103
    %2279 = vmatprep.subr.mxu0 %v2112
    %2280 = vmatpush1.msra.mxu0 %v2111
    %2281 = vmatprep.subr.mxu0 %v2120
    %2282 = vmatpush1.msra.mxu0 %v2119
    %2283 = vmatprep.subr.mxu0 %v2128
    %2284 = vmatpush1.msra.mxu0 %v2127
    %2285 = vmatprep.subr.mxu0 %v2136
    %2286 = vmatpush1.msra.mxu0 %v2135
    %2287 = vmatprep.subr.mxu0 %v2144
    %2288 = vmatpush1.msra.mxu0 %v2143
    %2289 = vmatprep.mubr.f32.mxu0 %v2151
    %2290 = vmatmul.mubr.f32.gmra.mrb[0].mxu0 %v2150
    %v2291 = vpop.f32.mrb[0].mxu0
    %v2292 = vadd.f32 0.0, %v2291
    %v2293 = vpop.f32.mrb[0].mxu0
    %v2294 = vadd.f32 0.0, %v2293
    %2295 = vdwg.mxu0
    %2296 = vmatprep.subr.mxu0 %v1898
    %2297 = vmatpush1.msra.mxu0 %v1897
    %2298 = vmatprep.subr.mxu0 %v1906
    %2299 = vmatpush1.msra.mxu0 %v1905
    %2300 = vmatprep.subr.mxu0 %v1914
    %2301 = vmatpush1.msra.mxu0 %v1913
    %2302 = vmatprep.subr.mxu0 %v1922
    %2303 = vmatpush1.msra.mxu0 %v1921
    %2304 = vmatprep.subr.mxu0 %v1930
    %2305 = vmatpush1.msra.mxu0 %v1929
    %2306 = vmatprep.subr.mxu0 %v1938
    %2307 = vmatpush1.msra.mxu0 %v1937
    %2308 = vmatprep.subr.mxu0 %v1946
    %2309 = vmatpush1.msra.mxu0 %v1945
    %2310 = vmatprep.subr.mxu0 %v1954
    %2311 = vmatpush1.msra.mxu0 %v1953
    %2312 = vmatprep.subr.mxu0 %v1962
    %2313 = vmatpush1.msra.mxu0 %v1961
    %2314 = vmatprep.subr.mxu0 %v1970
    %2315 = vmatpush1.msra.mxu0 %v1969
    %2316 = vmatprep.subr.mxu0 %v1978
    %2317 = vmatpush1.msra.mxu0 %v1977
    %2318 = vmatprep.subr.mxu0 %v1986
    %2319 = vmatpush1.msra.mxu0 %v1985
    %2320 = vmatprep.subr.mxu0 %v1994
    %2321 = vmatpush1.msra.mxu0 %v1993
    %2322 = vmatprep.subr.mxu0 %v2002
    %2323 = vmatpush1.msra.mxu0 %v2001
    %2324 = vmatprep.subr.mxu0 %v2010
    %2325 = vmatpush1.msra.mxu0 %v2009
    %2326 = vmatprep.subr.mxu0 %v2018
    %2327 = vmatpush1.msra.mxu0 %v2017
    %2328 = vmatprep.subr.mxu0 %v2026
    %2329 = vmatpush1.msra.mxu0 %v2025
    %2330 = vmatprep.subr.mxu0 %v2034
    %2331 = vmatpush1.msra.mxu0 %v2033
    %2332 = vmatprep.subr.mxu0 %v2042
    %2333 = vmatpush1.msra.mxu0 %v2041
    %2334 = vmatprep.subr.mxu0 %v2050
    %2335 = vmatpush1.msra.mxu0 %v2049
    %2336 = vmatprep.subr.mxu0 %v2058
    %2337 = vmatpush1.msra.mxu0 %v2057
    %2338 = vmatprep.subr.mxu0 %v2066
    %2339 = vmatpush1.msra.mxu0 %v2065
    %2340 = vmatprep.subr.mxu0 %v2074
    %2341 = vmatpush1.msra.mxu0 %v2073
    %2342 = vmatprep.subr.mxu0 %v2082
    %2343 = vmatpush1.msra.mxu0 %v2081
    %2344 = vmatprep.subr.mxu0 %v2090
    %2345 = vmatpush1.msra.mxu0 %v2089
    %2346 = vmatprep.subr.mxu0 %v2098
    %2347 = vmatpush1.msra.mxu0 %v2097
    %2348 = vmatprep.subr.mxu0 %v2106
    %2349 = vmatpush1.msra.mxu0 %v2105
    %2350 = vmatprep.subr.mxu0 %v2114
    %2351 = vmatpush1.msra.mxu0 %v2113
    %2352 = vmatprep.subr.mxu0 %v2122
    %2353 = vmatpush1.msra.mxu0 %v2121
    %2354 = vmatprep.subr.mxu0 %v2130
    %2355 = vmatpush1.msra.mxu0 %v2129
    %2356 = vmatprep.subr.mxu0 %v2138
    %2357 = vmatpush1.msra.mxu0 %v2137
    %2358 = vmatprep.subr.mxu0 %v2146
    %2359 = vmatpush1.msra.mxu0 %v2145
    %2360 = vmatprep.mubr.f32.mxu0 %v2151
    %2361 = vmatmul.mubr.f32.gmra.mrb[0].mxu0 %v2150
    %v2362 = vpop.f32.mrb[0].mxu0
    %v2363 = vadd.f32 0.0, %v2362
    %v2364 = vpop.f32.mrb[0].mxu0
    %v2365 = vadd.f32 0.0, %v2364
    %2366 = vdwg.mxu0
    %2367 = vmatprep.subr.mxu0 %v1900
    %2368 = vmatpush1.msra.mxu0 %v1899
    %2369 = vmatprep.subr.mxu0 %v1908
    %2370 = vmatpush1.msra.mxu0 %v1907
    %2371 = vmatprep.subr.mxu0 %v1916
    %2372 = vmatpush1.msra.mxu0 %v1915
    %2373 = vmatprep.subr.mxu0 %v1924
    %2374 = vmatpush1.msra.mxu0 %v1923
    %2375 = vmatprep.subr.mxu0 %v1932
    %2376 = vmatpush1.msra.mxu0 %v1931
    %2377 = vmatprep.subr.mxu0 %v1940
    %2378 = vmatpush1.msra.mxu0 %v1939
    %2379 = vmatprep.subr.mxu0 %v1948
    %2380 = vmatpush1.msra.mxu0 %v1947
    %2381 = vmatprep.subr.mxu0 %v1956
    %2382 = vmatpush1.msra.mxu0 %v1955
    %2383 = vmatprep.subr.mxu0 %v1964
    %2384 = vmatpush1.msra.mxu0 %v1963
    %2385 = vmatprep.subr.mxu0 %v1972
    %2386 = vmatpush1.msra.mxu0 %v1971
    %2387 = vmatprep.subr.mxu0 %v1980
    %2388 = vmatpush1.msra.mxu0 %v1979
    %2389 = vmatprep.subr.mxu0 %v1988
    %2390 = vmatpush1.msra.mxu0 %v1987
    %2391 = vmatprep.subr.mxu0 %v1996
    %2392 = vmatpush1.msra.mxu0 %v1995
    %2393 = vmatprep.subr.mxu0 %v2004
    %2394 = vmatpush1.msra.mxu0 %v2003
    %2395 = vmatprep.subr.mxu0 %v2012
    %2396 = vmatpush1.msra.mxu0 %v2011
    %2397 = vmatprep.subr.mxu0 %v2020
    %2398 = vmatpush1.msra.mxu0 %v2019
    %2399 = vmatprep.subr.mxu0 %v2028
    %2400 = vmatpush1.msra.mxu0 %v2027
    %2401 = vmatprep.subr.mxu0 %v2036
    %2402 = vmatpush1.msra.mxu0 %v2035
    %2403 = vmatprep.subr.mxu0 %v2044
    %2404 = vmatpush1.msra.mxu0 %v2043
    %2405 = vmatprep.subr.mxu0 %v2052
    %2406 = vmatpush1.msra.mxu0 %v2051
    %2407 = vmatprep.subr.mxu0 %v2060
    %2408 = vmatpush1.msra.mxu0 %v2059
    %2409 = vmatprep.subr.mxu0 %v2068
    %2410 = vmatpush1.msra.mxu0 %v2067
    %2411 = vmatprep.subr.mxu0 %v2076
    %2412 = vmatpush1.msra.mxu0 %v2075
    %2413 = vmatprep.subr.mxu0 %v2084
    %2414 = vmatpush1.msra.mxu0 %v2083
    %2415 = vmatprep.subr.mxu0 %v2092
    %2416 = vmatpush1.msra.mxu0 %v2091
    %2417 = vmatprep.subr.mxu0 %v2100
    %2418 = vmatpush1.msra.mxu0 %v2099
    %2419 = vmatprep.subr.mxu0 %v2108
    %2420 = vmatpush1.msra.mxu0 %v2107
    %2421 = vmatprep.subr.mxu0 %v2116
    %2422 = vmatpush1.msra.mxu0 %v2115
    %2423 = vmatprep.subr.mxu0 %v2124
    %2424 = vmatpush1.msra.mxu0 %v2123
    %2425 = vmatprep.subr.mxu0 %v2132
    %2426 = vmatpush1.msra.mxu0 %v2131
    %2427 = vmatprep.subr.mxu0 %v2140
    %2428 = vmatpush1.msra.mxu0 %v2139
    %2429 = vmatprep.subr.mxu0 %v2148
    %2430 = vmatpush1.msra.mxu0 %v2147
    %2431 = vmatprep.mubr.f32.mxu0 %v2151
    %2432 = vmatmul.mubr.f32.gmra.mrb[0].mxu0 %v2150
    %v2433 = vpop.f32.mrb[0].mxu0
    %v2434 = vadd.f32 0.0, %v2433
    %v2435 = vpop.f32.mrb[0].mxu0
    %v2436 = vadd.f32 0.0, %v2435
    %2437 = vdwg.mxu0
    %v2446 = vrot.slane %v2221, 4
    %v2447 = vrot.slane %v2223, 4
    %v2448 = vrot.slane %v2292, 4
    %v2449 = vrot.slane %v2294, 4
    %v2450 = vrot.slane %v2363, 4
    %v2451 = vrot.slane %v2365, 4
    %v2452 = vrot.slane %v2434, 4
    %v2453 = vrot.slane %v2436, 4
    %v2462 = vadd.f32 %v420, %v2446
    %v2463 = vadd.f32 %v422, %v2447
    %v2464 = vadd.f32 %v497, %v2448
    %v2465 = vadd.f32 %v499, %v2449
    %v2466 = vadd.f32 %v574, %v2450
    %v2467 = vadd.f32 %v576, %v2451
    %v2468 = vadd.f32 %v651, %v2452
    %v2469 = vadd.f32 %v653, %v2453
    %v2470 = vxor.u32 %v2462, 2147483648
    %v2471 = vxor.u32 %v2463, 2147483648
    %v2472 = vxor.u32 %v2464, 2147483648
    %v2473 = vxor.u32 %v2465, 2147483648
    %v2474 = vxor.u32 %v2466, 2147483648
    %v2475 = vxor.u32 %v2467, 2147483648
    %v2476 = vmul.f32 %v2470, 1.442695
    %v2477 = vpow.pop %v2476
    %v2478 = vmul.f32 %v2471, 1.442695
    %v2479 = vpow.pop %v2478
    %v2480 = vmul.f32 %v2472, 1.442695
    %v2481 = vpow.pop %v2480
    %v2482 = vmul.f32 %v2473, 1.442695
    %v2483 = vpow.pop %v2482
    %v2484 = vmul.f32 %v2474, 1.442695
    %v2485 = vpow.pop %v2484
    %v2486 = vmul.f32 %v2475, 1.442695
    %v2487 = vpow.pop %v2486
    %v2488 = vadd.f32 %v2477, 1.0
    %v2489 = vadd.f32 %v2479, 1.0
    %v2490 = vadd.f32 %v2481, 1.0
    %v2491 = vadd.f32 %v2483, 1.0
    %v2492 = vadd.f32 %v2485, 1.0
    %v2493 = vadd.f32 %v2487, 1.0
    %v2494 = vrcp.pop %v2488
    %v2495 = vmul.f32 1.0, %v2494
    %v2496 = vrcp.pop %v2489
    %v2497 = vmul.f32 1.0, %v2496
    %v2498 = vrcp.pop %v2490
    %v2499 = vmul.f32 1.0, %v2498
    %v2500 = vrcp.pop %v2491
    %v2501 = vmul.f32 1.0, %v2500
    %v2502 = vrcp.pop %v2492
    %v2503 = vmul.f32 1.0, %v2502
    %v2504 = vrcp.pop %v2493
    %v2505 = vmul.f32 1.0, %v2504
    %v2506 = vtanh.pop %v2468
    %v2507 = vtanh.pop %v2469
    %v2510 = vrot.slane %v1882, 6
    %v2511 = vrot.slane %v1883, 6
    %v2514 = vmul.f32 %v2499, %v2510
    %v2515 = vmul.f32 %v2501, %v2511
    %v2516 = vmul.f32 %v2495, %v2506
    %v2517 = vmul.f32 %v2497, %v2507
    %v2518 = vadd.f32 %v2514, %v2516
    %v2519 = vadd.f32 %v2515, %v2517
    %v2520 = vtanh.pop %v2518
    %v2521 = vtanh.pop %v2519
    %v2522 = vmul.f32 %v2503, %v2520
    %v2523 = vmul.f32 %v2505, %v2521
    %2524 = vst [vmem:[#allocation2] sm:$0x30] %v2522
    %v2526 = vrot.slane %v2523, 2
    %2528 = vst [vmem:[#allocation2 + $0x18] sm:$0xc] %v2526
    %v2529 = vld [vmem:[#allocation5] sm:$0xff]
    %v2530 = vld [vmem:[#allocation5 + $0x8] sm:$0xff]
    %v2531 = vld [vmem:[#allocation5 + $0x10] sm:$0xff]
    %v2532 = vld [vmem:[#allocation5 + $0x18] sm:$0xff]
    %v2533 = vld [vmem:[#allocation5 + $0x20] sm:$0xff]
    %v2534 = vld [vmem:[#allocation5 + $0x28] sm:$0xff]
    %v2535 = vld [vmem:[#allocation5 + $0x30] sm:$0xff]
    %v2536 = vld [vmem:[#allocation5 + $0x38] sm:$0xff]
    %v2537 = vld [vmem:[#allocation5 + $0x40] sm:$0xff]
    %v2538 = vld [vmem:[#allocation5 + $0x48] sm:$0xff]
    %v2539 = vld [vmem:[#allocation5 + $0x50] sm:$0xff]
    %v2540 = vld [vmem:[#allocation5 + $0x58] sm:$0xff]
    %v2541 = vld [vmem:[#allocation5 + $0x60] sm:$0xff]
    %v2542 = vld [vmem:[#allocation5 + $0x68] sm:$0xff]
    %v2543 = vld [vmem:[#allocation5 + $0x70] sm:$0xff]
    %v2544 = vld [vmem:[#allocation5 + $0x78] sm:$0xff]
    %v2545 = vld [vmem:[#allocation5 + $0x80] sm:$0xff]
    %v2546 = vld [vmem:[#allocation5 + $0x88] sm:$0xff]
    %v2547 = vld [vmem:[#allocation5 + $0x90] sm:$0xff]
    %v2548 = vld [vmem:[#allocation5 + $0x98] sm:$0xff]
    %v2549 = vld [vmem:[#allocation5 + $0xa0] sm:$0xff]
    %v2550 = vld [vmem:[#allocation5 + $0xa8] sm:$0xff]
    %v2551 = vld [vmem:[#allocation5 + $0xb0] sm:$0xff]
    %v2552 = vld [vmem:[#allocation5 + $0xb8] sm:$0xff]
    %v2553 = vld [vmem:[#allocation5 + $0xc0] sm:$0xff]
    %v2554 = vld [vmem:[#allocation5 + $0xc8] sm:$0xff]
    %v2555 = vld [vmem:[#allocation5 + $0xd0] sm:$0xff]
    %v2556 = vld [vmem:[#allocation5 + $0xd8] sm:$0xff]
    %v2557 = vld [vmem:[#allocation5 + $0xe0] sm:$0xff]
    %v2558 = vld [vmem:[#allocation5 + $0xe8] sm:$0xff]
    %v2559 = vld [vmem:[#allocation5 + $0xf0] sm:$0xff]
    %v2560 = vld [vmem:[#allocation5 + $0xf8] sm:$0xff]
    %v2561 = vld [vmem:[#allocation5 + $0x100] sm:$0xff]
    %v2562 = vld [vmem:[#allocation5 + $0x108] sm:$0xff]
    %v2563 = vld [vmem:[#allocation5 + $0x110] sm:$0xff]
    %v2564 = vld [vmem:[#allocation5 + $0x118] sm:$0xff]
    %v2565 = vld [vmem:[#allocation5 + $0x120] sm:$0xff]
    %v2566 = vld [vmem:[#allocation5 + $0x128] sm:$0xff]
    %v2567 = vld [vmem:[#allocation5 + $0x130] sm:$0xff]
    %v2568 = vld [vmem:[#allocation5 + $0x138] sm:$0xff]
    %v2569 = vld [vmem:[#allocation5 + $0x140] sm:$0xff]
    %v2570 = vld [vmem:[#allocation5 + $0x148] sm:$0xff]
    %v2571 = vld [vmem:[#allocation5 + $0x150] sm:$0xff]
    %v2572 = vld [vmem:[#allocation5 + $0x158] sm:$0xff]
    %v2573 = vld [vmem:[#allocation5 + $0x160] sm:$0xff]
    %v2574 = vld [vmem:[#allocation5 + $0x168] sm:$0xff]
    %v2575 = vld [vmem:[#allocation5 + $0x170] sm:$0xff]
    %v2576 = vld [vmem:[#allocation5 + $0x178] sm:$0xff]
    %v2577 = vld [vmem:[#allocation5 + $0x180] sm:$0xff]
    %v2578 = vld [vmem:[#allocation5 + $0x188] sm:$0xff]
    %v2579 = vld [vmem:[#allocation5 + $0x190] sm:$0xff]
    %v2580 = vld [vmem:[#allocation5 + $0x198] sm:$0xff]
    %v2581 = vld [vmem:[#allocation5 + $0x1a0] sm:$0xff]
    %v2582 = vld [vmem:[#allocation5 + $0x1a8] sm:$0xff]
    %v2583 = vld [vmem:[#allocation5 + $0x1b0] sm:$0xff]
    %v2584 = vld [vmem:[#allocation5 + $0x1b8] sm:$0xff]
    %v2585 = vld [vmem:[#allocation5 + $0x1c0] sm:$0xff]
    %v2586 = vld [vmem:[#allocation5 + $0x1c8] sm:$0xff]
    %v2587 = vld [vmem:[#allocation5 + $0x1d0] sm:$0xff]
    %v2588 = vld [vmem:[#allocation5 + $0x1d8] sm:$0xff]
    %v2589 = vld [vmem:[#allocation5 + $0x1e0] sm:$0xff]
    %v2590 = vld [vmem:[#allocation5 + $0x1e8] sm:$0xff]
    %v2591 = vld [vmem:[#allocation5 + $0x1f0] sm:$0xff]
    %v2592 = vld [vmem:[#allocation5 + $0x1f8] sm:$0xff]
    %v2593 = vld [vmem:[#allocation5 + $0x200] sm:$0xff]
    %v2594 = vld [vmem:[#allocation5 + $0x208] sm:$0xff]
    %v2595 = vld [vmem:[#allocation5 + $0x210] sm:$0xff]
    %v2596 = vld [vmem:[#allocation5 + $0x218] sm:$0xff]
    %v2597 = vld [vmem:[#allocation5 + $0x220] sm:$0xff]
    %v2598 = vld [vmem:[#allocation5 + $0x228] sm:$0xff]
    %v2599 = vld [vmem:[#allocation5 + $0x230] sm:$0xff]
    %v2600 = vld [vmem:[#allocation5 + $0x238] sm:$0xff]
    %v2601 = vld [vmem:[#allocation5 + $0x240] sm:$0xff]
    %v2602 = vld [vmem:[#allocation5 + $0x248] sm:$0xff]
    %v2603 = vld [vmem:[#allocation5 + $0x250] sm:$0xff]
    %v2604 = vld [vmem:[#allocation5 + $0x258] sm:$0xff]
    %v2605 = vld [vmem:[#allocation5 + $0x260] sm:$0xff]
    %v2606 = vld [vmem:[#allocation5 + $0x268] sm:$0xff]
    %v2607 = vld [vmem:[#allocation5 + $0x270] sm:$0xff]
    %v2608 = vld [vmem:[#allocation5 + $0x278] sm:$0xff]
    %v2609 = vld [vmem:[#allocation5 + $0x280] sm:$0xff]
    %v2610 = vld [vmem:[#allocation5 + $0x288] sm:$0xff]
    %v2611 = vld [vmem:[#allocation5 + $0x290] sm:$0xff]
    %v2612 = vld [vmem:[#allocation5 + $0x298] sm:$0xff]
    %v2613 = vld [vmem:[#allocation5 + $0x2a0] sm:$0xff]
    %v2614 = vld [vmem:[#allocation5 + $0x2a8] sm:$0xff]
    %v2615 = vld [vmem:[#allocation5 + $0x2b0] sm:$0xff]
    %v2616 = vld [vmem:[#allocation5 + $0x2b8] sm:$0xff]
    %v2617 = vld [vmem:[#allocation5 + $0x2c0] sm:$0xff]
    %v2618 = vld [vmem:[#allocation5 + $0x2c8] sm:$0xff]
    %v2619 = vld [vmem:[#allocation5 + $0x2d0] sm:$0xff]
    %v2620 = vld [vmem:[#allocation5 + $0x2d8] sm:$0xff]
    %v2621 = vld [vmem:[#allocation5 + $0x2e0] sm:$0xff]
    %v2622 = vld [vmem:[#allocation5 + $0x2e8] sm:$0xff]
    %v2623 = vld [vmem:[#allocation5 + $0x2f0] sm:$0xff]
    %v2624 = vld [vmem:[#allocation5 + $0x2f8] sm:$0xff]
    %v2625 = vld [vmem:[#allocation5 + $0x300] sm:$0xff]
    %v2626 = vld [vmem:[#allocation5 + $0x308] sm:$0xff]
    %v2627 = vld [vmem:[#allocation5 + $0x310] sm:$0xff]
    %v2628 = vld [vmem:[#allocation5 + $0x318] sm:$0xff]
    %v2629 = vld [vmem:[#allocation5 + $0x320] sm:$0xff]
    %v2630 = vld [vmem:[#allocation5 + $0x328] sm:$0xff]
    %v2631 = vld [vmem:[#allocation5 + $0x330] sm:$0xff]
    %v2632 = vld [vmem:[#allocation5 + $0x338] sm:$0xff]
    %v2633 = vld [vmem:[#allocation5 + $0x340] sm:$0xff]
    %v2634 = vld [vmem:[#allocation5 + $0x348] sm:$0xff]
    %v2635 = vld [vmem:[#allocation5 + $0x350] sm:$0xff]
    %v2636 = vld [vmem:[#allocation5 + $0x358] sm:$0xff]
    %v2637 = vld [vmem:[#allocation5 + $0x360] sm:$0xff]
    %v2638 = vld [vmem:[#allocation5 + $0x368] sm:$0xff]
    %v2639 = vld [vmem:[#allocation5 + $0x370] sm:$0xff]
    %v2640 = vld [vmem:[#allocation5 + $0x378] sm:$0xff]
    %v2641 = vld [vmem:[#allocation5 + $0x380] sm:$0xff]
    %v2642 = vld [vmem:[#allocation5 + $0x388] sm:$0xff]
    %v2643 = vld [vmem:[#allocation5 + $0x390] sm:$0xff]
    %v2644 = vld [vmem:[#allocation5 + $0x398] sm:$0xff]
    %v2645 = vld [vmem:[#allocation5 + $0x3a0] sm:$0xff]
    %v2646 = vld [vmem:[#allocation5 + $0x3a8] sm:$0xff]
    %v2647 = vld [vmem:[#allocation5 + $0x3b0] sm:$0xff]
    %v2648 = vld [vmem:[#allocation5 + $0x3b8] sm:$0xff]
    %v2649 = vld [vmem:[#allocation5 + $0x3c0] sm:$0xff]
    %v2650 = vld [vmem:[#allocation5 + $0x3c8] sm:$0xff]
    %v2651 = vld [vmem:[#allocation5 + $0x3d0] sm:$0xff]
    %v2652 = vld [vmem:[#allocation5 + $0x3d8] sm:$0xff]
    %v2653 = vld [vmem:[#allocation5 + $0x3e0] sm:$0xff]
    %v2654 = vld [vmem:[#allocation5 + $0x3e8] sm:$0xff]
    %v2655 = vld [vmem:[#allocation5 + $0x3f0] sm:$0xff]
    %v2656 = vld [vmem:[#allocation5 + $0x3f8] sm:$0xff]
    %v2657 = vld [vmem:[#allocation5 + $0x400] sm:$0xff]
    %v2658 = vld [vmem:[#allocation5 + $0x408] sm:$0xff]
    %v2659 = vld [vmem:[#allocation5 + $0x410] sm:$0xff]
    %v2660 = vld [vmem:[#allocation5 + $0x418] sm:$0xff]
    %v2661 = vld [vmem:[#allocation5 + $0x420] sm:$0xff]
    %v2662 = vld [vmem:[#allocation5 + $0x428] sm:$0xff]
    %v2663 = vld [vmem:[#allocation5 + $0x430] sm:$0xff]
    %v2664 = vld [vmem:[#allocation5 + $0x438] sm:$0xff]
    %v2665 = vld [vmem:[#allocation5 + $0x440] sm:$0xff]
    %v2666 = vld [vmem:[#allocation5 + $0x448] sm:$0xff]
    %v2667 = vld [vmem:[#allocation5 + $0x450] sm:$0xff]
    %v2668 = vld [vmem:[#allocation5 + $0x458] sm:$0xff]
    %v2669 = vld [vmem:[#allocation5 + $0x460] sm:$0xff]
    %v2670 = vld [vmem:[#allocation5 + $0x468] sm:$0xff]
    %v2671 = vld [vmem:[#allocation5 + $0x470] sm:$0xff]
    %v2672 = vld [vmem:[#allocation5 + $0x478] sm:$0xff]
    %v2673 = vld [vmem:[#allocation5 + $0x480] sm:$0xff]
    %v2674 = vld [vmem:[#allocation5 + $0x488] sm:$0xff]
    %v2675 = vld [vmem:[#allocation5 + $0x490] sm:$0xff]
    %v2676 = vld [vmem:[#allocation5 + $0x498] sm:$0xff]
    %v2677 = vld [vmem:[#allocation5 + $0x4a0] sm:$0xff]
    %v2678 = vld [vmem:[#allocation5 + $0x4a8] sm:$0xff]
    %v2679 = vld [vmem:[#allocation5 + $0x4b0] sm:$0xff]
    %v2680 = vld [vmem:[#allocation5 + $0x4b8] sm:$0xff]
    %v2681 = vld [vmem:[#allocation5 + $0x4c0] sm:$0xff]
    %v2682 = vld [vmem:[#allocation5 + $0x4c8] sm:$0xff]
    %v2683 = vld [vmem:[#allocation5 + $0x4d0] sm:$0xff]
    %v2684 = vld [vmem:[#allocation5 + $0x4d8] sm:$0xff]
    %v2685 = vld [vmem:[#allocation5 + $0x4e0] sm:$0xff]
    %v2686 = vld [vmem:[#allocation5 + $0x4e8] sm:$0xff]
    %v2687 = vld [vmem:[#allocation5 + $0x4f0] sm:$0xff]
    %v2688 = vld [vmem:[#allocation5 + $0x4f8] sm:$0xff]
    %v2689 = vld [vmem:[#allocation5 + $0x500] sm:$0xff]
    %v2690 = vld [vmem:[#allocation5 + $0x508] sm:$0xff]
    %v2691 = vld [vmem:[#allocation5 + $0x510] sm:$0xff]
    %v2692 = vld [vmem:[#allocation5 + $0x518] sm:$0xff]
    %v2693 = vld [vmem:[#allocation5 + $0x520] sm:$0xff]
    %v2694 = vld [vmem:[#allocation5 + $0x528] sm:$0xff]
    %v2695 = vld [vmem:[#allocation5 + $0x530] sm:$0xff]
    %v2696 = vld [vmem:[#allocation5 + $0x538] sm:$0xff]
    %v2697 = vld [vmem:[#allocation5 + $0x540] sm:$0xff]
    %v2698 = vld [vmem:[#allocation5 + $0x548] sm:$0xff]
    %v2699 = vld [vmem:[#allocation5 + $0x550] sm:$0xff]
    %v2700 = vld [vmem:[#allocation5 + $0x558] sm:$0xff]
    %v2701 = vld [vmem:[#allocation5 + $0x560] sm:$0xff]
    %v2702 = vld [vmem:[#allocation5 + $0x568] sm:$0xff]
    %v2703 = vld [vmem:[#allocation5 + $0x570] sm:$0xff]
    %v2704 = vld [vmem:[#allocation5 + $0x578] sm:$0xff]
    %v2705 = vld [vmem:[#allocation5 + $0x580] sm:$0xff]
    %v2706 = vld [vmem:[#allocation5 + $0x588] sm:$0xff]
    %v2707 = vld [vmem:[#allocation5 + $0x590] sm:$0xff]
    %v2708 = vld [vmem:[#allocation5 + $0x598] sm:$0xff]
    %v2709 = vld [vmem:[#allocation5 + $0x5a0] sm:$0xff]
    %v2710 = vld [vmem:[#allocation5 + $0x5a8] sm:$0xff]
    %v2711 = vld [vmem:[#allocation5 + $0x5b0] sm:$0xff]
    %v2712 = vld [vmem:[#allocation5 + $0x5b8] sm:$0xff]
    %v2713 = vld [vmem:[#allocation5 + $0x5c0] sm:$0xff]
    %v2714 = vld [vmem:[#allocation5 + $0x5c8] sm:$0xff]
    %v2715 = vld [vmem:[#allocation5 + $0x5d0] sm:$0xff]
    %v2716 = vld [vmem:[#allocation5 + $0x5d8] sm:$0xff]
    %v2717 = vld [vmem:[#allocation5 + $0x5e0] sm:$0xff]
    %v2718 = vld [vmem:[#allocation5 + $0x5e8] sm:$0xff]
    %v2719 = vld [vmem:[#allocation5 + $0x5f0] sm:$0xff]
    %v2720 = vld [vmem:[#allocation5 + $0x5f8] sm:$0xff]
    %v2721 = vld [vmem:[#allocation5 + $0x600] sm:$0xff]
    %v2722 = vld [vmem:[#allocation5 + $0x608] sm:$0xff]
    %v2723 = vld [vmem:[#allocation5 + $0x610] sm:$0xff]
    %v2724 = vld [vmem:[#allocation5 + $0x618] sm:$0xff]
    %v2725 = vld [vmem:[#allocation5 + $0x620] sm:$0xff]
    %v2726 = vld [vmem:[#allocation5 + $0x628] sm:$0xff]
    %v2727 = vld [vmem:[#allocation5 + $0x630] sm:$0xff]
    %v2728 = vld [vmem:[#allocation5 + $0x638] sm:$0xff]
    %v2729 = vld [vmem:[#allocation5 + $0x640] sm:$0xff]
    %v2730 = vld [vmem:[#allocation5 + $0x648] sm:$0xff]
    %v2731 = vld [vmem:[#allocation5 + $0x650] sm:$0xff]
    %v2732 = vld [vmem:[#allocation5 + $0x658] sm:$0xff]
    %v2733 = vld [vmem:[#allocation5 + $0x660] sm:$0xff]
    %v2734 = vld [vmem:[#allocation5 + $0x668] sm:$0xff]
    %v2735 = vld [vmem:[#allocation5 + $0x670] sm:$0xff]
    %v2736 = vld [vmem:[#allocation5 + $0x678] sm:$0xff]
    %v2737 = vld [vmem:[#allocation5 + $0x680] sm:$0xff]
    %v2738 = vld [vmem:[#allocation5 + $0x688] sm:$0xff]
    %v2739 = vld [vmem:[#allocation5 + $0x690] sm:$0xff]
    %v2740 = vld [vmem:[#allocation5 + $0x698] sm:$0xff]
    %v2741 = vld [vmem:[#allocation5 + $0x6a0] sm:$0xff]
    %v2742 = vld [vmem:[#allocation5 + $0x6a8] sm:$0xff]
    %v2743 = vld [vmem:[#allocation5 + $0x6b0] sm:$0xff]
    %v2744 = vld [vmem:[#allocation5 + $0x6b8] sm:$0xff]
    %v2745 = vld [vmem:[#allocation5 + $0x6c0] sm:$0xff]
    %v2746 = vld [vmem:[#allocation5 + $0x6c8] sm:$0xff]
    %v2747 = vld [vmem:[#allocation5 + $0x6d0] sm:$0xff]
    %v2748 = vld [vmem:[#allocation5 + $0x6d8] sm:$0xff]
    %v2749 = vld [vmem:[#allocation5 + $0x6e0] sm:$0xff]
    %v2750 = vld [vmem:[#allocation5 + $0x6e8] sm:$0xff]
    %v2751 = vld [vmem:[#allocation5 + $0x6f0] sm:$0xff]
    %v2752 = vld [vmem:[#allocation5 + $0x6f8] sm:$0xff]
    %v2753 = vld [vmem:[#allocation5 + $0x700] sm:$0xff]
    %v2754 = vld [vmem:[#allocation5 + $0x708] sm:$0xff]
    %v2755 = vld [vmem:[#allocation5 + $0x710] sm:$0xff]
    %v2756 = vld [vmem:[#allocation5 + $0x718] sm:$0xff]
    %v2757 = vld [vmem:[#allocation5 + $0x720] sm:$0xff]
    %v2758 = vld [vmem:[#allocation5 + $0x728] sm:$0xff]
    %v2759 = vld [vmem:[#allocation5 + $0x730] sm:$0xff]
    %v2760 = vld [vmem:[#allocation5 + $0x738] sm:$0xff]
    %v2761 = vld [vmem:[#allocation5 + $0x740] sm:$0xff]
    %v2762 = vld [vmem:[#allocation5 + $0x748] sm:$0xff]
    %v2763 = vld [vmem:[#allocation5 + $0x750] sm:$0xff]
    %v2764 = vld [vmem:[#allocation5 + $0x758] sm:$0xff]
    %v2765 = vld [vmem:[#allocation5 + $0x760] sm:$0xff]
    %v2766 = vld [vmem:[#allocation5 + $0x768] sm:$0xff]
    %v2767 = vld [vmem:[#allocation5 + $0x770] sm:$0xff]
    %v2768 = vld [vmem:[#allocation5 + $0x778] sm:$0xff]
    %v2769 = vld [vmem:[#allocation5 + $0x780] sm:$0xff]
    %v2770 = vld [vmem:[#allocation5 + $0x788] sm:$0xff]
    %v2771 = vld [vmem:[#allocation5 + $0x790] sm:$0xff]
    %v2772 = vld [vmem:[#allocation5 + $0x798] sm:$0xff]
    %v2773 = vld [vmem:[#allocation5 + $0x7a0] sm:$0xff]
    %v2774 = vld [vmem:[#allocation5 + $0x7a8] sm:$0xff]
    %v2775 = vld [vmem:[#allocation5 + $0x7b0] sm:$0xff]
    %v2776 = vld [vmem:[#allocation5 + $0x7b8] sm:$0xff]
    %v2777 = vld [vmem:[#allocation5 + $0x7c0] sm:$0xff]
    %v2778 = vld [vmem:[#allocation5 + $0x7c8] sm:$0xff]
    %v2779 = vld [vmem:[#allocation5 + $0x7d0] sm:$0xff]
    %v2780 = vld [vmem:[#allocation5 + $0x7d8] sm:$0xff]
    %v2781 = vld [vmem:[#allocation5 + $0x7e0] sm:$0xff]
    %v2782 = vld [vmem:[#allocation5 + $0x7e8] sm:$0xff]
    %v2783 = vld [vmem:[#allocation5 + $0x7f0] sm:$0xff]
    %v2784 = vld [vmem:[#allocation5 + $0x7f8] sm:$0xff]
    %v2786 = vrot.slane %v2522, 4
    %v2787 = vrot.slane %v2523, 4
    %2790 = vmatprep.subr.mxu0 %v2530
    %2791 = vmatpush1.msra.mxu0 %v2529
    %2792 = vmatprep.subr.mxu0 %v2538
    %2793 = vmatpush1.msra.mxu0 %v2537
    %2794 = vmatprep.subr.mxu0 %v2546
    %2795 = vmatpush1.msra.mxu0 %v2545
    %2796 = vmatprep.subr.mxu0 %v2554
    %2797 = vmatpush1.msra.mxu0 %v2553
    %2798 = vmatprep.subr.mxu0 %v2562
    %2799 = vmatpush1.msra.mxu0 %v2561
    %2800 = vmatprep.subr.mxu0 %v2570
    %2801 = vmatpush1.msra.mxu0 %v2569
    %2802 = vmatprep.subr.mxu0 %v2578
    %2803 = vmatpush1.msra.mxu0 %v2577
    %2804 = vmatprep.subr.mxu0 %v2586
    %2805 = vmatpush1.msra.mxu0 %v2585
    %2806 = vmatprep.subr.mxu0 %v2594
    %2807 = vmatpush1.msra.mxu0 %v2593
    %2808 = vmatprep.subr.mxu0 %v2602
    %2809 = vmatpush1.msra.mxu0 %v2601
    %2810 = vmatprep.subr.mxu0 %v2610
    %2811 = vmatpush1.msra.mxu0 %v2609
    %2812 = vmatprep.subr.mxu0 %v2618
    %2813 = vmatpush1.msra.mxu0 %v2617
    %2814 = vmatprep.subr.mxu0 %v2626
    %2815 = vmatpush1.msra.mxu0 %v2625
    %2816 = vmatprep.subr.mxu0 %v2634
    %2817 = vmatpush1.msra.mxu0 %v2633
    %2818 = vmatprep.subr.mxu0 %v2642
    %2819 = vmatpush1.msra.mxu0 %v2641
    %2820 = vmatprep.subr.mxu0 %v2650
    %2821 = vmatpush1.msra.mxu0 %v2649
    %2822 = vmatprep.subr.mxu0 %v2658
    %2823 = vmatpush1.msra.mxu0 %v2657
    %2824 = vmatprep.subr.mxu0 %v2666
    %2825 = vmatpush1.msra.mxu0 %v2665
    %2826 = vmatprep.subr.mxu0 %v2674
    %2827 = vmatpush1.msra.mxu0 %v2673
    %2828 = vmatprep.subr.mxu0 %v2682
    %2829 = vmatpush1.msra.mxu0 %v2681
    %2830 = vmatprep.subr.mxu0 %v2690
    %2831 = vmatpush1.msra.mxu0 %v2689
    %2832 = vmatprep.subr.mxu0 %v2698
    %2833 = vmatpush1.msra.mxu0 %v2697
    %2834 = vmatprep.subr.mxu0 %v2706
    %2835 = vmatpush1.msra.mxu0 %v2705
    %2836 = vmatprep.subr.mxu0 %v2714
    %2837 = vmatpush1.msra.mxu0 %v2713
    %2838 = vmatprep.subr.mxu0 %v2722
    %2839 = vmatpush1.msra.mxu0 %v2721
    %2840 = vmatprep.subr.mxu0 %v2730
    %2841 = vmatpush1.msra.mxu0 %v2729
    %2842 = vmatprep.subr.mxu0 %v2738
    %2843 = vmatpush1.msra.mxu0 %v2737
    %2844 = vmatprep.subr.mxu0 %v2746
    %2845 = vmatpush1.msra.mxu0 %v2745
    %2846 = vmatprep.subr.mxu0 %v2754
    %2847 = vmatpush1.msra.mxu0 %v2753
    %2848 = vmatprep.subr.mxu0 %v2762
    %2849 = vmatpush1.msra.mxu0 %v2761
    %2850 = vmatprep.subr.mxu0 %v2770
    %2851 = vmatpush1.msra.mxu0 %v2769
    %2852 = vmatprep.subr.mxu0 %v2778
    %2853 = vmatpush1.msra.mxu0 %v2777
    %2854 = vmatprep.mubr.f32.mxu0 %v2787
    %2855 = vmatmul.mubr.f32.gmra.mrb[0].mxu0 %v2786
    %v2856 = vpop.f32.mrb[0].mxu0
    %v2857 = vadd.f32 0.0, %v2856
    %v2858 = vpop.f32.mrb[0].mxu0
    %v2859 = vadd.f32 0.0, %v2858
    %2860 = vdwg.mxu0
    %2861 = vmatprep.subr.mxu0 %v2532
    %2862 = vmatpush1.msra.mxu0 %v2531
    %2863 = vmatprep.subr.mxu0 %v2540
    %2864 = vmatpush1.msra.mxu0 %v2539
    %2865 = vmatprep.subr.mxu0 %v2548
    %2866 = vmatpush1.msra.mxu0 %v2547
    %2867 = vmatprep.subr.mxu0 %v2556
    %2868 = vmatpush1.msra.mxu0 %v2555
    %2869 = vmatprep.subr.mxu0 %v2564
    %2870 = vmatpush1.msra.mxu0 %v2563
    %2871 = vmatprep.subr.mxu0 %v2572
    %2872 = vmatpush1.msra.mxu0 %v2571
    %2873 = vmatprep.subr.mxu0 %v2580
    %2874 = vmatpush1.msra.mxu0 %v2579
    %2875 = vmatprep.subr.mxu0 %v2588
    %2876 = vmatpush1.msra.mxu0 %v2587
    %2877 = vmatprep.subr.mxu0 %v2596
    %2878 = vmatpush1.msra.mxu0 %v2595
    %2879 = vmatprep.subr.mxu0 %v2604
    %2880 = vmatpush1.msra.mxu0 %v2603
    %2881 = vmatprep.subr.mxu0 %v2612
    %2882 = vmatpush1.msra.mxu0 %v2611
    %2883 = vmatprep.subr.mxu0 %v2620
    %2884 = vmatpush1.msra.mxu0 %v2619
    %2885 = vmatprep.subr.mxu0 %v2628
    %2886 = vmatpush1.msra.mxu0 %v2627
    %2887 = vmatprep.subr.mxu0 %v2636
    %2888 = vmatpush1.msra.mxu0 %v2635
    %2889 = vmatprep.subr.mxu0 %v2644
    %2890 = vmatpush1.msra.mxu0 %v2643
    %2891 = vmatprep.subr.mxu0 %v2652
    %2892 = vmatpush1.msra.mxu0 %v2651
    %2893 = vmatprep.subr.mxu0 %v2660
    %2894 = vmatpush1.msra.mxu0 %v2659
    %2895 = vmatprep.subr.mxu0 %v2668
    %2896 = vmatpush1.msra.mxu0 %v2667
    %2897 = vmatprep.subr.mxu0 %v2676
    %2898 = vmatpush1.msra.mxu0 %v2675
    %2899 = vmatprep.subr.mxu0 %v2684
    %2900 = vmatpush1.msra.mxu0 %v2683
    %2901 = vmatprep.subr.mxu0 %v2692
    %2902 = vmatpush1.msra.mxu0 %v2691
    %2903 = vmatprep.subr.mxu0 %v2700
    %2904 = vmatpush1.msra.mxu0 %v2699
    %2905 = vmatprep.subr.mxu0 %v2708
    %2906 = vmatpush1.msra.mxu0 %v2707
    %2907 = vmatprep.subr.mxu0 %v2716
    %2908 = vmatpush1.msra.mxu0 %v2715
    %2909 = vmatprep.subr.mxu0 %v2724
    %2910 = vmatpush1.msra.mxu0 %v2723
    %2911 = vmatprep.subr.mxu0 %v2732
    %2912 = vmatpush1.msra.mxu0 %v2731
    %2913 = vmatprep.subr.mxu0 %v2740
    %2914 = vmatpush1.msra.mxu0 %v2739
    %2915 = vmatprep.subr.mxu0 %v2748
    %2916 = vmatpush1.msra.mxu0 %v2747
    %2917 = vmatprep.subr.mxu0 %v2756
    %2918 = vmatpush1.msra.mxu0 %v2755
    %2919 = vmatprep.subr.mxu0 %v2764
    %2920 = vmatpush1.msra.mxu0 %v2763
    %2921 = vmatprep.subr.mxu0 %v2772
    %2922 = vmatpush1.msra.mxu0 %v2771
    %2923 = vmatprep.subr.mxu0 %v2780
    %2924 = vmatpush1.msra.mxu0 %v2779
    %2925 = vmatprep.mubr.f32.mxu0 %v2787
    %2926 = vmatmul.mubr.f32.gmra.mrb[0].mxu0 %v2786
    %v2927 = vpop.f32.mrb[0].mxu0
    %v2928 = vadd.f32 0.0, %v2927
    %v2929 = vpop.f32.mrb[0].mxu0
    %v2930 = vadd.f32 0.0, %v2929
    %2931 = vdwg.mxu0
    %2932 = vmatprep.subr.mxu0 %v2534
    %2933 = vmatpush1.msra.mxu0 %v2533
    %2934 = vmatprep.subr.mxu0 %v2542
    %2935 = vmatpush1.msra.mxu0 %v2541
    %2936 = vmatprep.subr.mxu0 %v2550
    %2937 = vmatpush1.msra.mxu0 %v2549
    %2938 = vmatprep.subr.mxu0 %v2558
    %2939 = vmatpush1.msra.mxu0 %v2557
    %2940 = vmatprep.subr.mxu0 %v2566
    %2941 = vmatpush1.msra.mxu0 %v2565
    %2942 = vmatprep.subr.mxu0 %v2574
    %2943 = vmatpush1.msra.mxu0 %v2573
    %2944 = vmatprep.subr.mxu0 %v2582
    %2945 = vmatpush1.msra.mxu0 %v2581
    %2946 = vmatprep.subr.mxu0 %v2590
    %2947 = vmatpush1.msra.mxu0 %v2589
    %2948 = vmatprep.subr.mxu0 %v2598
    %2949 = vmatpush1.msra.mxu0 %v2597
    %2950 = vmatprep.subr.mxu0 %v2606
    %2951 = vmatpush1.msra.mxu0 %v2605
    %2952 = vmatprep.subr.mxu0 %v2614
    %2953 = vmatpush1.msra.mxu0 %v2613
    %2954 = vmatprep.subr.mxu0 %v2622
    %2955 = vmatpush1.msra.mxu0 %v2621
    %2956 = vmatprep.subr.mxu0 %v2630
    %2957 = vmatpush1.msra.mxu0 %v2629
    %2958 = vmatprep.subr.mxu0 %v2638
    %2959 = vmatpush1.msra.mxu0 %v2637
    %2960 = vmatprep.subr.mxu0 %v2646
    %2961 = vmatpush1.msra.mxu0 %v2645
    %2962 = vmatprep.subr.mxu0 %v2654
    %2963 = vmatpush1.msra.mxu0 %v2653
    %2964 = vmatprep.subr.mxu0 %v2662
    %2965 = vmatpush1.msra.mxu0 %v2661
    %2966 = vmatprep.subr.mxu0 %v2670
    %2967 = vmatpush1.msra.mxu0 %v2669
    %2968 = vmatprep.subr.mxu0 %v2678
    %2969 = vmatpush1.msra.mxu0 %v2677
    %2970 = vmatprep.subr.mxu0 %v2686
    %2971 = vmatpush1.msra.mxu0 %v2685
    %2972 = vmatprep.subr.mxu0 %v2694
    %2973 = vmatpush1.msra.mxu0 %v2693
    %2974 = vmatprep.subr.mxu0 %v2702
    %2975 = vmatpush1.msra.mxu0 %v2701
    %2976 = vmatprep.subr.mxu0 %v2710
    %2977 = vmatpush1.msra.mxu0 %v2709
    %2978 = vmatprep.subr.mxu0 %v2718
    %2979 = vmatpush1.msra.mxu0 %v2717
    %2980 = vmatprep.subr.mxu0 %v2726
    %2981 = vmatpush1.msra.mxu0 %v2725
    %2982 = vmatprep.subr.mxu0 %v2734
    %2983 = vmatpush1.msra.mxu0 %v2733
    %2984 = vmatprep.subr.mxu0 %v2742
    %2985 = vmatpush1.msra.mxu0 %v2741
    %2986 = vmatprep.subr.mxu0 %v2750
    %2987 = vmatpush1.msra.mxu0 %v2749
    %2988 = vmatprep.subr.mxu0 %v2758
    %2989 = vmatpush1.msra.mxu0 %v2757
    %2990 = vmatprep.subr.mxu0 %v2766
    %2991 = vmatpush1.msra.mxu0 %v2765
    %2992 = vmatprep.subr.mxu0 %v2774
    %2993 = vmatpush1.msra.mxu0 %v2773
    %2994 = vmatprep.subr.mxu0 %v2782
    %2995 = vmatpush1.msra.mxu0 %v2781
    %2996 = vmatprep.mubr.f32.mxu0 %v2787
    %2997 = vmatmul.mubr.f32.gmra.mrb[0].mxu0 %v2786
    %v2998 = vpop.f32.mrb[0].mxu0
    %v2999 = vadd.f32 0.0, %v2998
    %v3000 = vpop.f32.mrb[0].mxu0
    %v3001 = vadd.f32 0.0, %v3000
    %3002 = vdwg.mxu0
    %3003 = vmatprep.subr.mxu0 %v2536
    %3004 = vmatpush1.msra.mxu0 %v2535
    %3005 = vmatprep.subr.mxu0 %v2544
    %3006 = vmatpush1.msra.mxu0 %v2543
    %3007 = vmatprep.subr.mxu0 %v2552
    %3008 = vmatpush1.msra.mxu0 %v2551
    %3009 = vmatprep.subr.mxu0 %v2560
    %3010 = vmatpush1.msra.mxu0 %v2559
    %3011 = vmatprep.subr.mxu0 %v2568
    %3012 = vmatpush1.msra.mxu0 %v2567
    %3013 = vmatprep.subr.mxu0 %v2576
    %3014 = vmatpush1.msra.mxu0 %v2575
    %3015 = vmatprep.subr.mxu0 %v2584
    %3016 = vmatpush1.msra.mxu0 %v2583
    %3017 = vmatprep.subr.mxu0 %v2592
    %3018 = vmatpush1.msra.mxu0 %v2591
    %3019 = vmatprep.subr.mxu0 %v2600
    %3020 = vmatpush1.msra.mxu0 %v2599
    %3021 = vmatprep.subr.mxu0 %v2608
    %3022 = vmatpush1.msra.mxu0 %v2607
    %3023 = vmatprep.subr.mxu0 %v2616
    %3024 = vmatpush1.msra.mxu0 %v2615
    %3025 = vmatprep.subr.mxu0 %v2624
    %3026 = vmatpush1.msra.mxu0 %v2623
    %3027 = vmatprep.subr.mxu0 %v2632
    %3028 = vmatpush1.msra.mxu0 %v2631
    %3029 = vmatprep.subr.mxu0 %v2640
    %3030 = vmatpush1.msra.mxu0 %v2639
    %3031 = vmatprep.subr.mxu0 %v2648
    %3032 = vmatpush1.msra.mxu0 %v2647
    %3033 = vmatprep.subr.mxu0 %v2656
    %3034 = vmatpush1.msra.mxu0 %v2655
    %3035 = vmatprep.subr.mxu0 %v2664
    %3036 = vmatpush1.msra.mxu0 %v2663
    %3037 = vmatprep.subr.mxu0 %v2672
    %3038 = vmatpush1.msra.mxu0 %v2671
    %3039 = vmatprep.subr.mxu0 %v2680
    %3040 = vmatpush1.msra.mxu0 %v2679
    %3041 = vmatprep.subr.mxu0 %v2688
    %3042 = vmatpush1.msra.mxu0 %v2687
    %3043 = vmatprep.subr.mxu0 %v2696
    %3044 = vmatpush1.msra.mxu0 %v2695
    %3045 = vmatprep.subr.mxu0 %v2704
    %3046 = vmatpush1.msra.mxu0 %v2703
    %3047 = vmatprep.subr.mxu0 %v2712
    %3048 = vmatpush1.msra.mxu0 %v2711
    %3049 = vmatprep.subr.mxu0 %v2720
    %3050 = vmatpush1.msra.mxu0 %v2719
    %3051 = vmatprep.subr.mxu0 %v2728
    %3052 = vmatpush1.msra.mxu0 %v2727
    %3053 = vmatprep.subr.mxu0 %v2736
    %3054 = vmatpush1.msra.mxu0 %v2735
    %3055 = vmatprep.subr.mxu0 %v2744
    %3056 = vmatpush1.msra.mxu0 %v2743
    %3057 = vmatprep.subr.mxu0 %v2752
    %3058 = vmatpush1.msra.mxu0 %v2751
    %3059 = vmatprep.subr.mxu0 %v2760
    %3060 = vmatpush1.msra.mxu0 %v2759
    %3061 = vmatprep.subr.mxu0 %v2768
    %3062 = vmatpush1.msra.mxu0 %v2767
    %3063 = vmatprep.subr.mxu0 %v2776
    %3064 = vmatpush1.msra.mxu0 %v2775
    %3065 = vmatprep.subr.mxu0 %v2784
    %3066 = vmatpush1.msra.mxu0 %v2783
    %3067 = vmatprep.mubr.f32.mxu0 %v2787
    %3068 = vmatmul.mubr.f32.gmra.mrb[0].mxu0 %v2786
    %v3069 = vpop.f32.mrb[0].mxu0
    %v3070 = vadd.f32 0.0, %v3069
    %v3071 = vpop.f32.mrb[0].mxu0
    %v3072 = vadd.f32 0.0, %v3071
    %3073 = vdwg.mxu0
    %v3082 = vrot.slane %v2857, 2
    %v3083 = vrot.slane %v2859, 2
    %v3084 = vrot.slane %v2928, 2
    %v3085 = vrot.slane %v2930, 2
    %v3086 = vrot.slane %v2999, 2
    %v3087 = vrot.slane %v3001, 2
    %v3088 = vrot.slane %v3070, 2
    %v3089 = vrot.slane %v3072, 2
    %v3098 = vadd.f32 %v420, %v3082
    %v3099 = vadd.f32 %v422, %v3083
    %v3100 = vadd.f32 %v497, %v3084
    %v3101 = vadd.f32 %v499, %v3085
    %v3102 = vadd.f32 %v574, %v3086
    %v3103 = vadd.f32 %v576, %v3087
    %v3104 = vadd.f32 %v651, %v3088
    %v3105 = vadd.f32 %v653, %v3089
    %v3106 = vxor.u32 %v3098, 2147483648
    %v3107 = vxor.u32 %v3099, 2147483648
    %v3108 = vxor.u32 %v3100, 2147483648
    %v3109 = vxor.u32 %v3101, 2147483648
    %v3110 = vxor.u32 %v3102, 2147483648
    %v3111 = vxor.u32 %v3103, 2147483648
    %v3112 = vmul.f32 %v3106, 1.442695
    %v3113 = vpow.pop %v3112
    %v3114 = vmul.f32 %v3107, 1.442695
    %v3115 = vpow.pop %v3114
    %v3116 = vmul.f32 %v3108, 1.442695
    %v3117 = vpow.pop %v3116
    %v3118 = vmul.f32 %v3109, 1.442695
    %v3119 = vpow.pop %v3118
    %v3120 = vmul.f32 %v3110, 1.442695
    %v3121 = vpow.pop %v3120
    %v3122 = vmul.f32 %v3111, 1.442695
    %v3123 = vpow.pop %v3122
    %v3124 = vadd.f32 %v3113, 1.0
    %v3125 = vadd.f32 %v3115, 1.0
    %v3126 = vadd.f32 %v3117, 1.0
    %v3127 = vadd.f32 %v3119, 1.0
    %v3128 = vadd.f32 %v3121, 1.0
    %v3129 = vadd.f32 %v3123, 1.0
    %v3130 = vrcp.pop %v3124
    %v3131 = vmul.f32 1.0, %v3130
    %v3132 = vrcp.pop %v3125
    %v3133 = vmul.f32 1.0, %v3132
    %v3134 = vrcp.pop %v3126
    %v3135 = vmul.f32 1.0, %v3134
    %v3136 = vrcp.pop %v3127
    %v3137 = vmul.f32 1.0, %v3136
    %v3138 = vrcp.pop %v3128
    %v3139 = vmul.f32 1.0, %v3138
    %v3140 = vrcp.pop %v3129
    %v3141 = vmul.f32 1.0, %v3140
    %v3142 = vtanh.pop %v3104
    %v3143 = vtanh.pop %v3105
    %v3146 = vrot.slane %v2518, 6
    %v3147 = vrot.slane %v2519, 6
    %v3150 = vmul.f32 %v3135, %v3146
    %v3151 = vmul.f32 %v3137, %v3147
    %v3152 = vmul.f32 %v3131, %v3142
    %v3153 = vmul.f32 %v3133, %v3143
    %v3154 = vadd.f32 %v3150, %v3152
    %v3155 = vadd.f32 %v3151, %v3153
    %v3156 = vtanh.pop %v3154
    %v3157 = vtanh.pop %v3155
    %v3158 = vmul.f32 %v3139, %v3156
    %v3159 = vmul.f32 %v3141, %v3157
    %3160 = vst [vmem:[#allocation2] sm:$0xc0] %v3158
    %v3162 = vrot.slane %v3159, 6
    %3164 = vst [vmem:[#allocation2 + $0x18] sm:$0x3] %v3162
    %v3165 = vld [vmem:[#allocation5] sm:$0xff]
    %v3166 = vld [vmem:[#allocation5 + $0x8] sm:$0xff]
    %v3167 = vld [vmem:[#allocation5 + $0x10] sm:$0xff]
    %v3168 = vld [vmem:[#allocation5 + $0x18] sm:$0xff]
    %v3169 = vld [vmem:[#allocation5 + $0x20] sm:$0xff]
    %v3170 = vld [vmem:[#allocation5 + $0x28] sm:$0xff]
    %v3171 = vld [vmem:[#allocation5 + $0x30] sm:$0xff]
    %v3172 = vld [vmem:[#allocation5 + $0x38] sm:$0xff]
    %v3173 = vld [vmem:[#allocation5 + $0x40] sm:$0xff]
    %v3174 = vld [vmem:[#allocation5 + $0x48] sm:$0xff]
    %v3175 = vld [vmem:[#allocation5 + $0x50] sm:$0xff]
    %v3176 = vld [vmem:[#allocation5 + $0x58] sm:$0xff]
    %v3177 = vld [vmem:[#allocation5 + $0x60] sm:$0xff]
    %v3178 = vld [vmem:[#allocation5 + $0x68] sm:$0xff]
    %v3179 = vld [vmem:[#allocation5 + $0x70] sm:$0xff]
    %v3180 = vld [vmem:[#allocation5 + $0x78] sm:$0xff]
    %v3181 = vld [vmem:[#allocation5 + $0x80] sm:$0xff]
    %v3182 = vld [vmem:[#allocation5 + $0x88] sm:$0xff]
    %v3183 = vld [vmem:[#allocation5 + $0x90] sm:$0xff]
    %v3184 = vld [vmem:[#allocation5 + $0x98] sm:$0xff]
    %v3185 = vld [vmem:[#allocation5 + $0xa0] sm:$0xff]
    %v3186 = vld [vmem:[#allocation5 + $0xa8] sm:$0xff]
    %v3187 = vld [vmem:[#allocation5 + $0xb0] sm:$0xff]
    %v3188 = vld [vmem:[#allocation5 + $0xb8] sm:$0xff]
    %v3189 = vld [vmem:[#allocation5 + $0xc0] sm:$0xff]
    %v3190 = vld [vmem:[#allocation5 + $0xc8] sm:$0xff]
    %v3191 = vld [vmem:[#allocation5 + $0xd0] sm:$0xff]
    %v3192 = vld [vmem:[#allocation5 + $0xd8] sm:$0xff]
    %v3193 = vld [vmem:[#allocation5 + $0xe0] sm:$0xff]
    %v3194 = vld [vmem:[#allocation5 + $0xe8] sm:$0xff]
    %v3195 = vld [vmem:[#allocation5 + $0xf0] sm:$0xff]
    %v3196 = vld [vmem:[#allocation5 + $0xf8] sm:$0xff]
    %v3197 = vld [vmem:[#allocation5 + $0x100] sm:$0xff]
    %v3198 = vld [vmem:[#allocation5 + $0x108] sm:$0xff]
    %v3199 = vld [vmem:[#allocation5 + $0x110] sm:$0xff]
    %v3200 = vld [vmem:[#allocation5 + $0x118] sm:$0xff]
    %v3201 = vld [vmem:[#allocation5 + $0x120] sm:$0xff]
    %v3202 = vld [vmem:[#allocation5 + $0x128] sm:$0xff]
    %v3203 = vld [vmem:[#allocation5 + $0x130] sm:$0xff]
    %v3204 = vld [vmem:[#allocation5 + $0x138] sm:$0xff]
    %v3205 = vld [vmem:[#allocation5 + $0x140] sm:$0xff]
    %v3206 = vld [vmem:[#allocation5 + $0x148] sm:$0xff]
    %v3207 = vld [vmem:[#allocation5 + $0x150] sm:$0xff]
    %v3208 = vld [vmem:[#allocation5 + $0x158] sm:$0xff]
    %v3209 = vld [vmem:[#allocation5 + $0x160] sm:$0xff]
    %v3210 = vld [vmem:[#allocation5 + $0x168] sm:$0xff]
    %v3211 = vld [vmem:[#allocation5 + $0x170] sm:$0xff]
    %v3212 = vld [vmem:[#allocation5 + $0x178] sm:$0xff]
    %v3213 = vld [vmem:[#allocation5 + $0x180] sm:$0xff]
    %v3214 = vld [vmem:[#allocation5 + $0x188] sm:$0xff]
    %v3215 = vld [vmem:[#allocation5 + $0x190] sm:$0xff]
    %v3216 = vld [vmem:[#allocation5 + $0x198] sm:$0xff]
    %v3217 = vld [vmem:[#allocation5 + $0x1a0] sm:$0xff]
    %v3218 = vld [vmem:[#allocation5 + $0x1a8] sm:$0xff]
    %v3219 = vld [vmem:[#allocation5 + $0x1b0] sm:$0xff]
    %v3220 = vld [vmem:[#allocation5 + $0x1b8] sm:$0xff]
    %v3221 = vld [vmem:[#allocation5 + $0x1c0] sm:$0xff]
    %v3222 = vld [vmem:[#allocation5 + $0x1c8] sm:$0xff]
    %v3223 = vld [vmem:[#allocation5 + $0x1d0] sm:$0xff]
    %v3224 = vld [vmem:[#allocation5 + $0x1d8] sm:$0xff]
    %v3225 = vld [vmem:[#allocation5 + $0x1e0] sm:$0xff]
    %v3226 = vld [vmem:[#allocation5 + $0x1e8] sm:$0xff]
    %v3227 = vld [vmem:[#allocation5 + $0x1f0] sm:$0xff]
    %v3228 = vld [vmem:[#allocation5 + $0x1f8] sm:$0xff]
    %v3229 = vld [vmem:[#allocation5 + $0x200] sm:$0xff]
    %v3230 = vld [vmem:[#allocation5 + $0x208] sm:$0xff]
    %v3231 = vld [vmem:[#allocation5 + $0x210] sm:$0xff]
    %v3232 = vld [vmem:[#allocation5 + $0x218] sm:$0xff]
    %v3233 = vld [vmem:[#allocation5 + $0x220] sm:$0xff]
    %v3234 = vld [vmem:[#allocation5 + $0x228] sm:$0xff]
    %v3235 = vld [vmem:[#allocation5 + $0x230] sm:$0xff]
    %v3236 = vld [vmem:[#allocation5 + $0x238] sm:$0xff]
    %v3237 = vld [vmem:[#allocation5 + $0x240] sm:$0xff]
    %v3238 = vld [vmem:[#allocation5 + $0x248] sm:$0xff]
    %v3239 = vld [vmem:[#allocation5 + $0x250] sm:$0xff]
    %v3240 = vld [vmem:[#allocation5 + $0x258] sm:$0xff]
    %v3241 = vld [vmem:[#allocation5 + $0x260] sm:$0xff]
    %v3242 = vld [vmem:[#allocation5 + $0x268] sm:$0xff]
    %v3243 = vld [vmem:[#allocation5 + $0x270] sm:$0xff]
    %v3244 = vld [vmem:[#allocation5 + $0x278] sm:$0xff]
    %v3245 = vld [vmem:[#allocation5 + $0x280] sm:$0xff]
    %v3246 = vld [vmem:[#allocation5 + $0x288] sm:$0xff]
    %v3247 = vld [vmem:[#allocation5 + $0x290] sm:$0xff]
    %v3248 = vld [vmem:[#allocation5 + $0x298] sm:$0xff]
    %v3249 = vld [vmem:[#allocation5 + $0x2a0] sm:$0xff]
    %v3250 = vld [vmem:[#allocation5 + $0x2a8] sm:$0xff]
    %v3251 = vld [vmem:[#allocation5 + $0x2b0] sm:$0xff]
    %v3252 = vld [vmem:[#allocation5 + $0x2b8] sm:$0xff]
    %v3253 = vld [vmem:[#allocation5 + $0x2c0] sm:$0xff]
    %v3254 = vld [vmem:[#allocation5 + $0x2c8] sm:$0xff]
    %v3255 = vld [vmem:[#allocation5 + $0x2d0] sm:$0xff]
    %v3256 = vld [vmem:[#allocation5 + $0x2d8] sm:$0xff]
    %v3257 = vld [vmem:[#allocation5 + $0x2e0] sm:$0xff]
    %v3258 = vld [vmem:[#allocation5 + $0x2e8] sm:$0xff]
    %v3259 = vld [vmem:[#allocation5 + $0x2f0] sm:$0xff]
    %v3260 = vld [vmem:[#allocation5 + $0x2f8] sm:$0xff]
    %v3261 = vld [vmem:[#allocation5 + $0x300] sm:$0xff]
    %v3262 = vld [vmem:[#allocation5 + $0x308] sm:$0xff]
    %v3263 = vld [vmem:[#allocation5 + $0x310] sm:$0xff]
    %v3264 = vld [vmem:[#allocation5 + $0x318] sm:$0xff]
    %v3265 = vld [vmem:[#allocation5 + $0x320] sm:$0xff]
    %v3266 = vld [vmem:[#allocation5 + $0x328] sm:$0xff]
    %v3267 = vld [vmem:[#allocation5 + $0x330] sm:$0xff]
    %v3268 = vld [vmem:[#allocation5 + $0x338] sm:$0xff]
    %v3269 = vld [vmem:[#allocation5 + $0x340] sm:$0xff]
    %v3270 = vld [vmem:[#allocation5 + $0x348] sm:$0xff]
    %v3271 = vld [vmem:[#allocation5 + $0x350] sm:$0xff]
    %v3272 = vld [vmem:[#allocation5 + $0x358] sm:$0xff]
    %v3273 = vld [vmem:[#allocation5 + $0x360] sm:$0xff]
    %v3274 = vld [vmem:[#allocation5 + $0x368] sm:$0xff]
    %v3275 = vld [vmem:[#allocation5 + $0x370] sm:$0xff]
    %v3276 = vld [vmem:[#allocation5 + $0x378] sm:$0xff]
    %v3277 = vld [vmem:[#allocation5 + $0x380] sm:$0xff]
    %v3278 = vld [vmem:[#allocation5 + $0x388] sm:$0xff]
    %v3279 = vld [vmem:[#allocation5 + $0x390] sm:$0xff]
    %v3280 = vld [vmem:[#allocation5 + $0x398] sm:$0xff]
    %v3281 = vld [vmem:[#allocation5 + $0x3a0] sm:$0xff]
    %v3282 = vld [vmem:[#allocation5 + $0x3a8] sm:$0xff]
    %v3283 = vld [vmem:[#allocation5 + $0x3b0] sm:$0xff]
    %v3284 = vld [vmem:[#allocation5 + $0x3b8] sm:$0xff]
    %v3285 = vld [vmem:[#allocation5 + $0x3c0] sm:$0xff]
    %v3286 = vld [vmem:[#allocation5 + $0x3c8] sm:$0xff]
    %v3287 = vld [vmem:[#allocation5 + $0x3d0] sm:$0xff]
    %v3288 = vld [vmem:[#allocation5 + $0x3d8] sm:$0xff]
    %v3289 = vld [vmem:[#allocation5 + $0x3e0] sm:$0xff]
    %v3290 = vld [vmem:[#allocation5 + $0x3e8] sm:$0xff]
    %v3291 = vld [vmem:[#allocation5 + $0x3f0] sm:$0xff]
    %v3292 = vld [vmem:[#allocation5 + $0x3f8] sm:$0xff]
    %v3293 = vld [vmem:[#allocation5 + $0x400] sm:$0xff]
    %v3294 = vld [vmem:[#allocation5 + $0x408] sm:$0xff]
    %v3295 = vld [vmem:[#allocation5 + $0x410] sm:$0xff]
    %v3296 = vld [vmem:[#allocation5 + $0x418] sm:$0xff]
    %v3297 = vld [vmem:[#allocation5 + $0x420] sm:$0xff]
    %v3298 = vld [vmem:[#allocation5 + $0x428] sm:$0xff]
    %v3299 = vld [vmem:[#allocation5 + $0x430] sm:$0xff]
    %v3300 = vld [vmem:[#allocation5 + $0x438] sm:$0xff]
    %v3301 = vld [vmem:[#allocation5 + $0x440] sm:$0xff]
    %v3302 = vld [vmem:[#allocation5 + $0x448] sm:$0xff]
    %v3303 = vld [vmem:[#allocation5 + $0x450] sm:$0xff]
    %v3304 = vld [vmem:[#allocation5 + $0x458] sm:$0xff]
    %v3305 = vld [vmem:[#allocation5 + $0x460] sm:$0xff]
    %v3306 = vld [vmem:[#allocation5 + $0x468] sm:$0xff]
    %v3307 = vld [vmem:[#allocation5 + $0x470] sm:$0xff]
    %v3308 = vld [vmem:[#allocation5 + $0x478] sm:$0xff]
    %v3309 = vld [vmem:[#allocation5 + $0x480] sm:$0xff]
    %v3310 = vld [vmem:[#allocation5 + $0x488] sm:$0xff]
    %v3311 = vld [vmem:[#allocation5 + $0x490] sm:$0xff]
    %v3312 = vld [vmem:[#allocation5 + $0x498] sm:$0xff]
    %v3313 = vld [vmem:[#allocation5 + $0x4a0] sm:$0xff]
    %v3314 = vld [vmem:[#allocation5 + $0x4a8] sm:$0xff]
    %v3315 = vld [vmem:[#allocation5 + $0x4b0] sm:$0xff]
    %v3316 = vld [vmem:[#allocation5 + $0x4b8] sm:$0xff]
    %v3317 = vld [vmem:[#allocation5 + $0x4c0] sm:$0xff]
    %v3318 = vld [vmem:[#allocation5 + $0x4c8] sm:$0xff]
    %v3319 = vld [vmem:[#allocation5 + $0x4d0] sm:$0xff]
    %v3320 = vld [vmem:[#allocation5 + $0x4d8] sm:$0xff]
    %v3321 = vld [vmem:[#allocation5 + $0x4e0] sm:$0xff]
    %v3322 = vld [vmem:[#allocation5 + $0x4e8] sm:$0xff]
    %v3323 = vld [vmem:[#allocation5 + $0x4f0] sm:$0xff]
    %v3324 = vld [vmem:[#allocation5 + $0x4f8] sm:$0xff]
    %v3325 = vld [vmem:[#allocation5 + $0x500] sm:$0xff]
    %v3326 = vld [vmem:[#allocation5 + $0x508] sm:$0xff]
    %v3327 = vld [vmem:[#allocation5 + $0x510] sm:$0xff]
    %v3328 = vld [vmem:[#allocation5 + $0x518] sm:$0xff]
    %v3329 = vld [vmem:[#allocation5 + $0x520] sm:$0xff]
    %v3330 = vld [vmem:[#allocation5 + $0x528] sm:$0xff]
    %v3331 = vld [vmem:[#allocation5 + $0x530] sm:$0xff]
    %v3332 = vld [vmem:[#allocation5 + $0x538] sm:$0xff]
    %v3333 = vld [vmem:[#allocation5 + $0x540] sm:$0xff]
    %v3334 = vld [vmem:[#allocation5 + $0x548] sm:$0xff]
    %v3335 = vld [vmem:[#allocation5 + $0x550] sm:$0xff]
    %v3336 = vld [vmem:[#allocation5 + $0x558] sm:$0xff]
    %v3337 = vld [vmem:[#allocation5 + $0x560] sm:$0xff]
    %v3338 = vld [vmem:[#allocation5 + $0x568] sm:$0xff]
    %v3339 = vld [vmem:[#allocation5 + $0x570] sm:$0xff]
    %v3340 = vld [vmem:[#allocation5 + $0x578] sm:$0xff]
    %v3341 = vld [vmem:[#allocation5 + $0x580] sm:$0xff]
    %v3342 = vld [vmem:[#allocation5 + $0x588] sm:$0xff]
    %v3343 = vld [vmem:[#allocation5 + $0x590] sm:$0xff]
    %v3344 = vld [vmem:[#allocation5 + $0x598] sm:$0xff]
    %v3345 = vld [vmem:[#allocation5 + $0x5a0] sm:$0xff]
    %v3346 = vld [vmem:[#allocation5 + $0x5a8] sm:$0xff]
    %v3347 = vld [vmem:[#allocation5 + $0x5b0] sm:$0xff]
    %v3348 = vld [vmem:[#allocation5 + $0x5b8] sm:$0xff]
    %v3349 = vld [vmem:[#allocation5 + $0x5c0] sm:$0xff]
    %v3350 = vld [vmem:[#allocation5 + $0x5c8] sm:$0xff]
    %v3351 = vld [vmem:[#allocation5 + $0x5d0] sm:$0xff]
    %v3352 = vld [vmem:[#allocation5 + $0x5d8] sm:$0xff]
    %v3353 = vld [vmem:[#allocation5 + $0x5e0] sm:$0xff]
    %v3354 = vld [vmem:[#allocation5 + $0x5e8] sm:$0xff]
    %v3355 = vld [vmem:[#allocation5 + $0x5f0] sm:$0xff]
    %v3356 = vld [vmem:[#allocation5 + $0x5f8] sm:$0xff]
    %v3357 = vld [vmem:[#allocation5 + $0x600] sm:$0xff]
    %v3358 = vld [vmem:[#allocation5 + $0x608] sm:$0xff]
    %v3359 = vld [vmem:[#allocation5 + $0x610] sm:$0xff]
    %v3360 = vld [vmem:[#allocation5 + $0x618] sm:$0xff]
    %v3361 = vld [vmem:[#allocation5 + $0x620] sm:$0xff]
    %v3362 = vld [vmem:[#allocation5 + $0x628] sm:$0xff]
    %v3363 = vld [vmem:[#allocation5 + $0x630] sm:$0xff]
    %v3364 = vld [vmem:[#allocation5 + $0x638] sm:$0xff]
    %v3365 = vld [vmem:[#allocation5 + $0x640] sm:$0xff]
    %v3366 = vld [vmem:[#allocation5 + $0x648] sm:$0xff]
    %v3367 = vld [vmem:[#allocation5 + $0x650] sm:$0xff]
    %v3368 = vld [vmem:[#allocation5 + $0x658] sm:$0xff]
    %v3369 = vld [vmem:[#allocation5 + $0x660] sm:$0xff]
    %v3370 = vld [vmem:[#allocation5 + $0x668] sm:$0xff]
    %v3371 = vld [vmem:[#allocation5 + $0x670] sm:$0xff]
    %v3372 = vld [vmem:[#allocation5 + $0x678] sm:$0xff]
    %v3373 = vld [vmem:[#allocation5 + $0x680] sm:$0xff]
    %v3374 = vld [vmem:[#allocation5 + $0x688] sm:$0xff]
    %v3375 = vld [vmem:[#allocation5 + $0x690] sm:$0xff]
    %v3376 = vld [vmem:[#allocation5 + $0x698] sm:$0xff]
    %v3377 = vld [vmem:[#allocation5 + $0x6a0] sm:$0xff]
    %v3378 = vld [vmem:[#allocation5 + $0x6a8] sm:$0xff]
    %v3379 = vld [vmem:[#allocation5 + $0x6b0] sm:$0xff]
    %v3380 = vld [vmem:[#allocation5 + $0x6b8] sm:$0xff]
    %v3381 = vld [vmem:[#allocation5 + $0x6c0] sm:$0xff]
    %v3382 = vld [vmem:[#allocation5 + $0x6c8] sm:$0xff]
    %v3383 = vld [vmem:[#allocation5 + $0x6d0] sm:$0xff]
    %v3384 = vld [vmem:[#allocation5 + $0x6d8] sm:$0xff]
    %v3385 = vld [vmem:[#allocation5 + $0x6e0] sm:$0xff]
    %v3386 = vld [vmem:[#allocation5 + $0x6e8] sm:$0xff]
    %v3387 = vld [vmem:[#allocation5 + $0x6f0] sm:$0xff]
    %v3388 = vld [vmem:[#allocation5 + $0x6f8] sm:$0xff]
    %v3389 = vld [vmem:[#allocation5 + $0x700] sm:$0xff]
    %v3390 = vld [vmem:[#allocation5 + $0x708] sm:$0xff]
    %v3391 = vld [vmem:[#allocation5 + $0x710] sm:$0xff]
    %v3392 = vld [vmem:[#allocation5 + $0x718] sm:$0xff]
    %v3393 = vld [vmem:[#allocation5 + $0x720] sm:$0xff]
    %v3394 = vld [vmem:[#allocation5 + $0x728] sm:$0xff]
    %v3395 = vld [vmem:[#allocation5 + $0x730] sm:$0xff]
    %v3396 = vld [vmem:[#allocation5 + $0x738] sm:$0xff]
    %v3397 = vld [vmem:[#allocation5 + $0x740] sm:$0xff]
    %v3398 = vld [vmem:[#allocation5 + $0x748] sm:$0xff]
    %v3399 = vld [vmem:[#allocation5 + $0x750] sm:$0xff]
    %v3400 = vld [vmem:[#allocation5 + $0x758] sm:$0xff]
    %v3401 = vld [vmem:[#allocation5 + $0x760] sm:$0xff]
    %v3402 = vld [vmem:[#allocation5 + $0x768] sm:$0xff]
    %v3403 = vld [vmem:[#allocation5 + $0x770] sm:$0xff]
    %v3404 = vld [vmem:[#allocation5 + $0x778] sm:$0xff]
    %v3405 = vld [vmem:[#allocation5 + $0x780] sm:$0xff]
    %v3406 = vld [vmem:[#allocation5 + $0x788] sm:$0xff]
    %v3407 = vld [vmem:[#allocation5 + $0x790] sm:$0xff]
    %v3408 = vld [vmem:[#allocation5 + $0x798] sm:$0xff]
    %v3409 = vld [vmem:[#allocation5 + $0x7a0] sm:$0xff]
    %v3410 = vld [vmem:[#allocation5 + $0x7a8] sm:$0xff]
    %v3411 = vld [vmem:[#allocation5 + $0x7b0] sm:$0xff]
    %v3412 = vld [vmem:[#allocation5 + $0x7b8] sm:$0xff]
    %v3413 = vld [vmem:[#allocation5 + $0x7c0] sm:$0xff]
    %v3414 = vld [vmem:[#allocation5 + $0x7c8] sm:$0xff]
    %v3415 = vld [vmem:[#allocation5 + $0x7d0] sm:$0xff]
    %v3416 = vld [vmem:[#allocation5 + $0x7d8] sm:$0xff]
    %v3417 = vld [vmem:[#allocation5 + $0x7e0] sm:$0xff]
    %v3418 = vld [vmem:[#allocation5 + $0x7e8] sm:$0xff]
    %v3419 = vld [vmem:[#allocation5 + $0x7f0] sm:$0xff]
    %v3420 = vld [vmem:[#allocation5 + $0x7f8] sm:$0xff]
    %v3422 = vrot.slane %v3158, 6
    %3424 = vmatprep.subr.mxu0 %v3166
    %3425 = vmatpush1.msra.mxu0 %v3165
    %3426 = vmatprep.subr.mxu0 %v3174
    %3427 = vmatpush1.msra.mxu0 %v3173
    %3428 = vmatprep.subr.mxu0 %v3182
    %3429 = vmatpush1.msra.mxu0 %v3181
    %3430 = vmatprep.subr.mxu0 %v3190
    %3431 = vmatpush1.msra.mxu0 %v3189
    %3432 = vmatprep.subr.mxu0 %v3198
    %3433 = vmatpush1.msra.mxu0 %v3197
    %3434 = vmatprep.subr.mxu0 %v3206
    %3435 = vmatpush1.msra.mxu0 %v3205
    %3436 = vmatprep.subr.mxu0 %v3214
    %3437 = vmatpush1.msra.mxu0 %v3213
    %3438 = vmatprep.subr.mxu0 %v3222
    %3439 = vmatpush1.msra.mxu0 %v3221
    %3440 = vmatprep.subr.mxu0 %v3230
    %3441 = vmatpush1.msra.mxu0 %v3229
    %3442 = vmatprep.subr.mxu0 %v3238
    %3443 = vmatpush1.msra.mxu0 %v3237
    %3444 = vmatprep.subr.mxu0 %v3246
    %3445 = vmatpush1.msra.mxu0 %v3245
    %3446 = vmatprep.subr.mxu0 %v3254
    %3447 = vmatpush1.msra.mxu0 %v3253
    %3448 = vmatprep.subr.mxu0 %v3262
    %3449 = vmatpush1.msra.mxu0 %v3261
    %3450 = vmatprep.subr.mxu0 %v3270
    %3451 = vmatpush1.msra.mxu0 %v3269
    %3452 = vmatprep.subr.mxu0 %v3278
    %3453 = vmatpush1.msra.mxu0 %v3277
    %3454 = vmatprep.subr.mxu0 %v3286
    %3455 = vmatpush1.msra.mxu0 %v3285
    %3456 = vmatprep.subr.mxu0 %v3294
    %3457 = vmatpush1.msra.mxu0 %v3293
    %3458 = vmatprep.subr.mxu0 %v3302
    %3459 = vmatpush1.msra.mxu0 %v3301
    %3460 = vmatprep.subr.mxu0 %v3310
    %3461 = vmatpush1.msra.mxu0 %v3309
    %3462 = vmatprep.subr.mxu0 %v3318
    %3463 = vmatpush1.msra.mxu0 %v3317
    %3464 = vmatprep.subr.mxu0 %v3326
    %3465 = vmatpush1.msra.mxu0 %v3325
    %3466 = vmatprep.subr.mxu0 %v3334
    %3467 = vmatpush1.msra.mxu0 %v3333
    %3468 = vmatprep.subr.mxu0 %v3342
    %3469 = vmatpush1.msra.mxu0 %v3341
    %3470 = vmatprep.subr.mxu0 %v3350
    %3471 = vmatpush1.msra.mxu0 %v3349
    %3472 = vmatprep.subr.mxu0 %v3358
    %3473 = vmatpush1.msra.mxu0 %v3357
    %3474 = vmatprep.subr.mxu0 %v3366
    %3475 = vmatpush1.msra.mxu0 %v3365
    %3476 = vmatprep.subr.mxu0 %v3374
    %3477 = vmatpush1.msra.mxu0 %v3373
    %3478 = vmatprep.subr.mxu0 %v3382
    %3479 = vmatpush1.msra.mxu0 %v3381
    %3480 = vmatprep.subr.mxu0 %v3390
    %3481 = vmatpush1.msra.mxu0 %v3389
    %3482 = vmatprep.subr.mxu0 %v3398
    %3483 = vmatpush1.msra.mxu0 %v3397
    %3484 = vmatprep.subr.mxu0 %v3406
    %3485 = vmatpush1.msra.mxu0 %v3405
    %3486 = vmatprep.subr.mxu0 %v3414
    %3487 = vmatpush1.msra.mxu0 %v3413
    %3488 = vmatprep.mubr.f32.mxu0 %v3162
    %3489 = vmatmul.mubr.f32.gmra.mrb[0].mxu0 %v3422
    %v3490 = vpop.f32.mrb[0].mxu0
    %v3491 = vadd.f32 0.0, %v3490
    %v3492 = vpop.f32.mrb[0].mxu0
    %v3493 = vadd.f32 0.0, %v3492
    %3494 = vdwg.mxu0
    %3495 = vmatprep.subr.mxu0 %v3168
    %3496 = vmatpush1.msra.mxu0 %v3167
    %3497 = vmatprep.subr.mxu0 %v3176
    %3498 = vmatpush1.msra.mxu0 %v3175
    %3499 = vmatprep.subr.mxu0 %v3184
    %3500 = vmatpush1.msra.mxu0 %v3183
    %3501 = vmatprep.subr.mxu0 %v3192
    %3502 = vmatpush1.msra.mxu0 %v3191
    %3503 = vmatprep.subr.mxu0 %v3200
    %3504 = vmatpush1.msra.mxu0 %v3199
    %3505 = vmatprep.subr.mxu0 %v3208
    %3506 = vmatpush1.msra.mxu0 %v3207
    %3507 = vmatprep.subr.mxu0 %v3216
    %3508 = vmatpush1.msra.mxu0 %v3215
    %3509 = vmatprep.subr.mxu0 %v3224
    %3510 = vmatpush1.msra.mxu0 %v3223
    %3511 = vmatprep.subr.mxu0 %v3232
    %3512 = vmatpush1.msra.mxu0 %v3231
    %3513 = vmatprep.subr.mxu0 %v3240
    %3514 = vmatpush1.msra.mxu0 %v3239
    %3515 = vmatprep.subr.mxu0 %v3248
    %3516 = vmatpush1.msra.mxu0 %v3247
    %3517 = vmatprep.subr.mxu0 %v3256
    %3518 = vmatpush1.msra.mxu0 %v3255
    %3519 = vmatprep.subr.mxu0 %v3264
    %3520 = vmatpush1.msra.mxu0 %v3263
    %3521 = vmatprep.subr.mxu0 %v3272
    %3522 = vmatpush1.msra.mxu0 %v3271
    %3523 = vmatprep.subr.mxu0 %v3280
    %3524 = vmatpush1.msra.mxu0 %v3279
    %3525 = vmatprep.subr.mxu0 %v3288
    %3526 = vmatpush1.msra.mxu0 %v3287
    %3527 = vmatprep.subr.mxu0 %v3296
    %3528 = vmatpush1.msra.mxu0 %v3295
    %3529 = vmatprep.subr.mxu0 %v3304
    %3530 = vmatpush1.msra.mxu0 %v3303
    %3531 = vmatprep.subr.mxu0 %v3312
    %3532 = vmatpush1.msra.mxu0 %v3311
    %3533 = vmatprep.subr.mxu0 %v3320
    %3534 = vmatpush1.msra.mxu0 %v3319
    %3535 = vmatprep.subr.mxu0 %v3328
    %3536 = vmatpush1.msra.mxu0 %v3327
    %3537 = vmatprep.subr.mxu0 %v3336
    %3538 = vmatpush1.msra.mxu0 %v3335
    %3539 = vmatprep.subr.mxu0 %v3344
    %3540 = vmatpush1.msra.mxu0 %v3343
    %3541 = vmatprep.subr.mxu0 %v3352
    %3542 = vmatpush1.msra.mxu0 %v3351
    %3543 = vmatprep.subr.mxu0 %v3360
    %3544 = vmatpush1.msra.mxu0 %v3359
    %3545 = vmatprep.subr.mxu0 %v3368
    %3546 = vmatpush1.msra.mxu0 %v3367
    %3547 = vmatprep.subr.mxu0 %v3376
    %3548 = vmatpush1.msra.mxu0 %v3375
    %3549 = vmatprep.subr.mxu0 %v3384
    %3550 = vmatpush1.msra.mxu0 %v3383
    %3551 = vmatprep.subr.mxu0 %v3392
    %3552 = vmatpush1.msra.mxu0 %v3391
    %3553 = vmatprep.subr.mxu0 %v3400
    %3554 = vmatpush1.msra.mxu0 %v3399
    %3555 = vmatprep.subr.mxu0 %v3408
    %3556 = vmatpush1.msra.mxu0 %v3407
    %3557 = vmatprep.subr.mxu0 %v3416
    %3558 = vmatpush1.msra.mxu0 %v3415
    %3559 = vmatprep.mubr.f32.mxu0 %v3162
    %3560 = vmatmul.mubr.f32.gmra.mrb[0].mxu0 %v3422
    %v3561 = vpop.f32.mrb[0].mxu0
    %v3562 = vadd.f32 0.0, %v3561
    %v3563 = vpop.f32.mrb[0].mxu0
    %v3564 = vadd.f32 0.0, %v3563
    %3565 = vdwg.mxu0
    %3566 = vmatprep.subr.mxu0 %v3170
    %3567 = vmatpush1.msra.mxu0 %v3169
    %3568 = vmatprep.subr.mxu0 %v3178
    %3569 = vmatpush1.msra.mxu0 %v3177
    %3570 = vmatprep.subr.mxu0 %v3186
    %3571 = vmatpush1.msra.mxu0 %v3185
    %3572 = vmatprep.subr.mxu0 %v3194
    %3573 = vmatpush1.msra.mxu0 %v3193
    %3574 = vmatprep.subr.mxu0 %v3202
    %3575 = vmatpush1.msra.mxu0 %v3201
    %3576 = vmatprep.subr.mxu0 %v3210
    %3577 = vmatpush1.msra.mxu0 %v3209
    %3578 = vmatprep.subr.mxu0 %v3218
    %3579 = vmatpush1.msra.mxu0 %v3217
    %3580 = vmatprep.subr.mxu0 %v3226
    %3581 = vmatpush1.msra.mxu0 %v3225
    %3582 = vmatprep.subr.mxu0 %v3234
    %3583 = vmatpush1.msra.mxu0 %v3233
    %3584 = vmatprep.subr.mxu0 %v3242
    %3585 = vmatpush1.msra.mxu0 %v3241
    %3586 = vmatprep.subr.mxu0 %v3250
    %3587 = vmatpush1.msra.mxu0 %v3249
    %3588 = vmatprep.subr.mxu0 %v3258
    %3589 = vmatpush1.msra.mxu0 %v3257
    %3590 = vmatprep.subr.mxu0 %v3266
    %3591 = vmatpush1.msra.mxu0 %v3265
    %3592 = vmatprep.subr.mxu0 %v3274
    %3593 = vmatpush1.msra.mxu0 %v3273
    %3594 = vmatprep.subr.mxu0 %v3282
    %3595 = vmatpush1.msra.mxu0 %v3281
    %3596 = vmatprep.subr.mxu0 %v3290
    %3597 = vmatpush1.msra.mxu0 %v3289
    %3598 = vmatprep.subr.mxu0 %v3298
    %3599 = vmatpush1.msra.mxu0 %v3297
    %3600 = vmatprep.subr.mxu0 %v3306
    %3601 = vmatpush1.msra.mxu0 %v3305
    %3602 = vmatprep.subr.mxu0 %v3314
    %3603 = vmatpush1.msra.mxu0 %v3313
    %3604 = vmatprep.subr.mxu0 %v3322
    %3605 = vmatpush1.msra.mxu0 %v3321
    %3606 = vmatprep.subr.mxu0 %v3330
    %3607 = vmatpush1.msra.mxu0 %v3329
    %3608 = vmatprep.subr.mxu0 %v3338
    %3609 = vmatpush1.msra.mxu0 %v3337
    %3610 = vmatprep.subr.mxu0 %v3346
    %3611 = vmatpush1.msra.mxu0 %v3345
    %3612 = vmatprep.subr.mxu0 %v3354
    %3613 = vmatpush1.msra.mxu0 %v3353
    %3614 = vmatprep.subr.mxu0 %v3362
    %3615 = vmatpush1.msra.mxu0 %v3361
    %3616 = vmatprep.subr.mxu0 %v3370
    %3617 = vmatpush1.msra.mxu0 %v3369
    %3618 = vmatprep.subr.mxu0 %v3378
    %3619 = vmatpush1.msra.mxu0 %v3377
    %3620 = vmatprep.subr.mxu0 %v3386
    %3621 = vmatpush1.msra.mxu0 %v3385
    %3622 = vmatprep.subr.mxu0 %v3394
    %3623 = vmatpush1.msra.mxu0 %v3393
    %3624 = vmatprep.subr.mxu0 %v3402
    %3625 = vmatpush1.msra.mxu0 %v3401
    %3626 = vmatprep.subr.mxu0 %v3410
    %3627 = vmatpush1.msra.mxu0 %v3409
    %3628 = vmatprep.subr.mxu0 %v3418
    %3629 = vmatpush1.msra.mxu0 %v3417
    %3630 = vmatprep.mubr.f32.mxu0 %v3162
    %3631 = vmatmul.mubr.f32.gmra.mrb[0].mxu0 %v3422
    %v3632 = vpop.f32.mrb[0].mxu0
    %v3633 = vadd.f32 0.0, %v3632
    %v3634 = vpop.f32.mrb[0].mxu0
    %v3635 = vadd.f32 0.0, %v3634
    %3636 = vdwg.mxu0
    %3637 = vmatprep.subr.mxu0 %v3172
    %3638 = vmatpush1.msra.mxu0 %v3171
    %3639 = vmatprep.subr.mxu0 %v3180
    %3640 = vmatpush1.msra.mxu0 %v3179
    %3641 = vmatprep.subr.mxu0 %v3188
    %3642 = vmatpush1.msra.mxu0 %v3187
    %3643 = vmatprep.subr.mxu0 %v3196
    %3644 = vmatpush1.msra.mxu0 %v3195
    %3645 = vmatprep.subr.mxu0 %v3204
    %3646 = vmatpush1.msra.mxu0 %v3203
    %3647 = vmatprep.subr.mxu0 %v3212
    %3648 = vmatpush1.msra.mxu0 %v3211
    %3649 = vmatprep.subr.mxu0 %v3220
    %3650 = vmatpush1.msra.mxu0 %v3219
    %3651 = vmatprep.subr.mxu0 %v3228
    %3652 = vmatpush1.msra.mxu0 %v3227
    %3653 = vmatprep.subr.mxu0 %v3236
    %3654 = vmatpush1.msra.mxu0 %v3235
    %3655 = vmatprep.subr.mxu0 %v3244
    %3656 = vmatpush1.msra.mxu0 %v3243
    %3657 = vmatprep.subr.mxu0 %v3252
    %3658 = vmatpush1.msra.mxu0 %v3251
    %3659 = vmatprep.subr.mxu0 %v3260
    %3660 = vmatpush1.msra.mxu0 %v3259
    %3661 = vmatprep.subr.mxu0 %v3268
    %3662 = vmatpush1.msra.mxu0 %v3267
    %3663 = vmatprep.subr.mxu0 %v3276
    %3664 = vmatpush1.msra.mxu0 %v3275
    %3665 = vmatprep.subr.mxu0 %v3284
    %3666 = vmatpush1.msra.mxu0 %v3283
    %3667 = vmatprep.subr.mxu0 %v3292
    %3668 = vmatpush1.msra.mxu0 %v3291
    %3669 = vmatprep.subr.mxu0 %v3300
    %3670 = vmatpush1.msra.mxu0 %v3299
    %3671 = vmatprep.subr.mxu0 %v3308
    %3672 = vmatpush1.msra.mxu0 %v3307
    %3673 = vmatprep.subr.mxu0 %v3316
    %3674 = vmatpush1.msra.mxu0 %v3315
    %3675 = vmatprep.subr.mxu0 %v3324
    %3676 = vmatpush1.msra.mxu0 %v3323
    %3677 = vmatprep.subr.mxu0 %v3332
    %3678 = vmatpush1.msra.mxu0 %v3331
    %3679 = vmatprep.subr.mxu0 %v3340
    %3680 = vmatpush1.msra.mxu0 %v3339
    %3681 = vmatprep.subr.mxu0 %v3348
    %3682 = vmatpush1.msra.mxu0 %v3347
    %3683 = vmatprep.subr.mxu0 %v3356
    %3684 = vmatpush1.msra.mxu0 %v3355
    %3685 = vmatprep.subr.mxu0 %v3364
    %3686 = vmatpush1.msra.mxu0 %v3363
    %3687 = vmatprep.subr.mxu0 %v3372
    %3688 = vmatpush1.msra.mxu0 %v3371
    %3689 = vmatprep.subr.mxu0 %v3380
    %3690 = vmatpush1.msra.mxu0 %v3379
    %3691 = vmatprep.subr.mxu0 %v3388
    %3692 = vmatpush1.msra.mxu0 %v3387
    %3693 = vmatprep.subr.mxu0 %v3396
    %3694 = vmatpush1.msra.mxu0 %v3395
    %3695 = vmatprep.subr.mxu0 %v3404
    %3696 = vmatpush1.msra.mxu0 %v3403
    %3697 = vmatprep.subr.mxu0 %v3412
    %3698 = vmatpush1.msra.mxu0 %v3411
    %3699 = vmatprep.subr.mxu0 %v3420
    %3700 = vmatpush1.msra.mxu0 %v3419
    %3701 = vmatprep.mubr.f32.mxu0 %v3162
    %3702 = vmatmul.mubr.f32.gmra.mrb[0].mxu0 %v3422
    %v3703 = vpop.f32.mrb[0].mxu0
    %v3704 = vadd.f32 0.0, %v3703
    %v3705 = vpop.f32.mrb[0].mxu0
    %v3706 = vadd.f32 0.0, %v3705
    %3707 = vdwg.mxu0
    %v3708 = vadd.f32 %v426, %v3491
    %v3709 = vadd.f32 %v428, %v3493
    %v3710 = vadd.f32 %v503, %v3562
    %v3711 = vadd.f32 %v505, %v3564
    %v3712 = vadd.f32 %v580, %v3633
    %v3713 = vadd.f32 %v582, %v3635
    %v3714 = vadd.f32 %v657, %v3704
    %v3715 = vadd.f32 %v659, %v3706
    %v3716 = vxor.u32 %v3708, 2147483648
    %v3717 = vxor.u32 %v3709, 2147483648
    %v3718 = vxor.u32 %v3710, 2147483648
    %v3719 = vxor.u32 %v3711, 2147483648
    %v3720 = vxor.u32 %v3712, 2147483648
    %v3721 = vxor.u32 %v3713, 2147483648
    %v3722 = vmul.f32 %v3716, 1.442695
    %v3723 = vpow.pop %v3722
    %v3724 = vmul.f32 %v3717, 1.442695
    %v3725 = vpow.pop %v3724
    %v3726 = vmul.f32 %v3718, 1.442695
    %v3727 = vpow.pop %v3726
    %v3728 = vmul.f32 %v3719, 1.442695
    %v3729 = vpow.pop %v3728
    %v3730 = vmul.f32 %v3720, 1.442695
    %v3731 = vpow.pop %v3730
    %v3732 = vmul.f32 %v3721, 1.442695
    %v3733 = vpow.pop %v3732
    %v3734 = vadd.f32 %v3723, 1.0
    %v3735 = vadd.f32 %v3725, 1.0
    %v3736 = vadd.f32 %v3727, 1.0
    %v3737 = vadd.f32 %v3729, 1.0
    %v3738 = vadd.f32 %v3731, 1.0
    %v3739 = vadd.f32 %v3733, 1.0
    %v3740 = vrcp.pop %v3734
    %v3741 = vmul.f32 1.0, %v3740
    %v3742 = vrcp.pop %v3735
    %v3743 = vmul.f32 1.0, %v3742
    %v3744 = vrcp.pop %v3736
    %v3745 = vmul.f32 1.0, %v3744
    %v3746 = vrcp.pop %v3737
    %v3747 = vmul.f32 1.0, %v3746
    %v3748 = vrcp.pop %v3738
    %v3749 = vmul.f32 1.0, %v3748
    %v3750 = vrcp.pop %v3739
    %v3751 = vmul.f32 1.0, %v3750
    %v3752 = vtanh.pop %v3714
    %v3753 = vtanh.pop %v3715
    %v3756 = vrot.slane %v3154, 6
    %v3757 = vrot.slane %v3155, 6
    %v3760 = vmul.f32 %v3745, %v3756
    %v3761 = vmul.f32 %v3747, %v3757
    %v3762 = vmul.f32 %v3741, %v3752
    %v3763 = vmul.f32 %v3743, %v3753
    %v3764 = vadd.f32 %v3760, %v3762
    %v3765 = vadd.f32 %v3761, %v3763
    %v3766 = vtanh.pop %v3764
    %v3767 = vtanh.pop %v3765
    %v3768 = vmul.f32 %v3749, %v3766
    %v3769 = vmul.f32 %v3751, %v3767
    %3770 = vst [vmem:[#allocation2 + $0x10] sm:$0x3] %v3768
    %v3772 = vrot.slane %v3769, 2
    %3774 = vst [vmem:[#allocation2 + $0x8] sm:$0xc0] %v3772
    %v3775 = vld [vmem:[#allocation5] sm:$0xff]
    %v3776 = vld [vmem:[#allocation5 + $0x8] sm:$0xff]
    %v3777 = vld [vmem:[#allocation5 + $0x10] sm:$0xff]
    %v3778 = vld [vmem:[#allocation5 + $0x18] sm:$0xff]
    %v3779 = vld [vmem:[#allocation5 + $0x20] sm:$0xff]
    %v3780 = vld [vmem:[#allocation5 + $0x28] sm:$0xff]
    %v3781 = vld [vmem:[#allocation5 + $0x30] sm:$0xff]
    %v3782 = vld [vmem:[#allocation5 + $0x38] sm:$0xff]
    %v3783 = vld [vmem:[#allocation5 + $0x40] sm:$0xff]
    %v3784 = vld [vmem:[#allocation5 + $0x48] sm:$0xff]
    %v3785 = vld [vmem:[#allocation5 + $0x50] sm:$0xff]
    %v3786 = vld [vmem:[#allocation5 + $0x58] sm:$0xff]
    %v3787 = vld [vmem:[#allocation5 + $0x60] sm:$0xff]
    %v3788 = vld [vmem:[#allocation5 + $0x68] sm:$0xff]
    %v3789 = vld [vmem:[#allocation5 + $0x70] sm:$0xff]
    %v3790 = vld [vmem:[#allocation5 + $0x78] sm:$0xff]
    %v3791 = vld [vmem:[#allocation5 + $0x80] sm:$0xff]
    %v3792 = vld [vmem:[#allocation5 + $0x88] sm:$0xff]
    %v3793 = vld [vmem:[#allocation5 + $0x90] sm:$0xff]
    %v3794 = vld [vmem:[#allocation5 + $0x98] sm:$0xff]
    %v3795 = vld [vmem:[#allocation5 + $0xa0] sm:$0xff]
    %v3796 = vld [vmem:[#allocation5 + $0xa8] sm:$0xff]
    %v3797 = vld [vmem:[#allocation5 + $0xb0] sm:$0xff]
    %v3798 = vld [vmem:[#allocation5 + $0xb8] sm:$0xff]
    %v3799 = vld [vmem:[#allocation5 + $0xc0] sm:$0xff]
    %v3800 = vld [vmem:[#allocation5 + $0xc8] sm:$0xff]
    %v3801 = vld [vmem:[#allocation5 + $0xd0] sm:$0xff]
    %v3802 = vld [vmem:[#allocation5 + $0xd8] sm:$0xff]
    %v3803 = vld [vmem:[#allocation5 + $0xe0] sm:$0xff]
    %v3804 = vld [vmem:[#allocation5 + $0xe8] sm:$0xff]
    %v3805 = vld [vmem:[#allocation5 + $0xf0] sm:$0xff]
    %v3806 = vld [vmem:[#allocation5 + $0xf8] sm:$0xff]
    %v3807 = vld [vmem:[#allocation5 + $0x100] sm:$0xff]
    %v3808 = vld [vmem:[#allocation5 + $0x108] sm:$0xff]
    %v3809 = vld [vmem:[#allocation5 + $0x110] sm:$0xff]
    %v3810 = vld [vmem:[#allocation5 + $0x118] sm:$0xff]
    %v3811 = vld [vmem:[#allocation5 + $0x120] sm:$0xff]
    %v3812 = vld [vmem:[#allocation5 + $0x128] sm:$0xff]
    %v3813 = vld [vmem:[#allocation5 + $0x130] sm:$0xff]
    %v3814 = vld [vmem:[#allocation5 + $0x138] sm:$0xff]
    %v3815 = vld [vmem:[#allocation5 + $0x140] sm:$0xff]
    %v3816 = vld [vmem:[#allocation5 + $0x148] sm:$0xff]
    %v3817 = vld [vmem:[#allocation5 + $0x150] sm:$0xff]
    %v3818 = vld [vmem:[#allocation5 + $0x158] sm:$0xff]
    %v3819 = vld [vmem:[#allocation5 + $0x160] sm:$0xff]
    %v3820 = vld [vmem:[#allocation5 + $0x168] sm:$0xff]
    %v3821 = vld [vmem:[#allocation5 + $0x170] sm:$0xff]
    %v3822 = vld [vmem:[#allocation5 + $0x178] sm:$0xff]
    %v3823 = vld [vmem:[#allocation5 + $0x180] sm:$0xff]
    %v3824 = vld [vmem:[#allocation5 + $0x188] sm:$0xff]
    %v3825 = vld [vmem:[#allocation5 + $0x190] sm:$0xff]
    %v3826 = vld [vmem:[#allocation5 + $0x198] sm:$0xff]
    %v3827 = vld [vmem:[#allocation5 + $0x1a0] sm:$0xff]
    %v3828 = vld [vmem:[#allocation5 + $0x1a8] sm:$0xff]
    %v3829 = vld [vmem:[#allocation5 + $0x1b0] sm:$0xff]
    %v3830 = vld [vmem:[#allocation5 + $0x1b8] sm:$0xff]
    %v3831 = vld [vmem:[#allocation5 + $0x1c0] sm:$0xff]
    %v3832 = vld [vmem:[#allocation5 + $0x1c8] sm:$0xff]
    %v3833 = vld [vmem:[#allocation5 + $0x1d0] sm:$0xff]
    %v3834 = vld [vmem:[#allocation5 + $0x1d8] sm:$0xff]
    %v3835 = vld [vmem:[#allocation5 + $0x1e0] sm:$0xff]
    %v3836 = vld [vmem:[#allocation5 + $0x1e8] sm:$0xff]
    %v3837 = vld [vmem:[#allocation5 + $0x1f0] sm:$0xff]
    %v3838 = vld [vmem:[#allocation5 + $0x1f8] sm:$0xff]
    %v3839 = vld [vmem:[#allocation5 + $0x200] sm:$0xff]
    %v3840 = vld [vmem:[#allocation5 + $0x208] sm:$0xff]
    %v3841 = vld [vmem:[#allocation5 + $0x210] sm:$0xff]
    %v3842 = vld [vmem:[#allocation5 + $0x218] sm:$0xff]
    %v3843 = vld [vmem:[#allocation5 + $0x220] sm:$0xff]
    %v3844 = vld [vmem:[#allocation5 + $0x228] sm:$0xff]
    %v3845 = vld [vmem:[#allocation5 + $0x230] sm:$0xff]
    %v3846 = vld [vmem:[#allocation5 + $0x238] sm:$0xff]
    %v3847 = vld [vmem:[#allocation5 + $0x240] sm:$0xff]
    %v3848 = vld [vmem:[#allocation5 + $0x248] sm:$0xff]
    %v3849 = vld [vmem:[#allocation5 + $0x250] sm:$0xff]
    %v3850 = vld [vmem:[#allocation5 + $0x258] sm:$0xff]
    %v3851 = vld [vmem:[#allocation5 + $0x260] sm:$0xff]
    %v3852 = vld [vmem:[#allocation5 + $0x268] sm:$0xff]
    %v3853 = vld [vmem:[#allocation5 + $0x270] sm:$0xff]
    %v3854 = vld [vmem:[#allocation5 + $0x278] sm:$0xff]
    %v3855 = vld [vmem:[#allocation5 + $0x280] sm:$0xff]
    %v3856 = vld [vmem:[#allocation5 + $0x288] sm:$0xff]
    %v3857 = vld [vmem:[#allocation5 + $0x290] sm:$0xff]
    %v3858 = vld [vmem:[#allocation5 + $0x298] sm:$0xff]
    %v3859 = vld [vmem:[#allocation5 + $0x2a0] sm:$0xff]
    %v3860 = vld [vmem:[#allocation5 + $0x2a8] sm:$0xff]
    %v3861 = vld [vmem:[#allocation5 + $0x2b0] sm:$0xff]
    %v3862 = vld [vmem:[#allocation5 + $0x2b8] sm:$0xff]
    %v3863 = vld [vmem:[#allocation5 + $0x2c0] sm:$0xff]
    %v3864 = vld [vmem:[#allocation5 + $0x2c8] sm:$0xff]
    %v3865 = vld [vmem:[#allocation5 + $0x2d0] sm:$0xff]
    %v3866 = vld [vmem:[#allocation5 + $0x2d8] sm:$0xff]
    %v3867 = vld [vmem:[#allocation5 + $0x2e0] sm:$0xff]
    %v3868 = vld [vmem:[#allocation5 + $0x2e8] sm:$0xff]
    %v3869 = vld [vmem:[#allocation5 + $0x2f0] sm:$0xff]
    %v3870 = vld [vmem:[#allocation5 + $0x2f8] sm:$0xff]
    %v3871 = vld [vmem:[#allocation5 + $0x300] sm:$0xff]
    %v3872 = vld [vmem:[#allocation5 + $0x308] sm:$0xff]
    %v3873 = vld [vmem:[#allocation5 + $0x310] sm:$0xff]
    %v3874 = vld [vmem:[#allocation5 + $0x318] sm:$0xff]
    %v3875 = vld [vmem:[#allocation5 + $0x320] sm:$0xff]
    %v3876 = vld [vmem:[#allocation5 + $0x328] sm:$0xff]
    %v3877 = vld [vmem:[#allocation5 + $0x330] sm:$0xff]
    %v3878 = vld [vmem:[#allocation5 + $0x338] sm:$0xff]
    %v3879 = vld [vmem:[#allocation5 + $0x340] sm:$0xff]
    %v3880 = vld [vmem:[#allocation5 + $0x348] sm:$0xff]
    %v3881 = vld [vmem:[#allocation5 + $0x350] sm:$0xff]
    %v3882 = vld [vmem:[#allocation5 + $0x358] sm:$0xff]
    %v3883 = vld [vmem:[#allocation5 + $0x360] sm:$0xff]
    %v3884 = vld [vmem:[#allocation5 + $0x368] sm:$0xff]
    %v3885 = vld [vmem:[#allocation5 + $0x370] sm:$0xff]
    %v3886 = vld [vmem:[#allocation5 + $0x378] sm:$0xff]
    %v3887 = vld [vmem:[#allocation5 + $0x380] sm:$0xff]
    %v3888 = vld [vmem:[#allocation5 + $0x388] sm:$0xff]
    %v3889 = vld [vmem:[#allocation5 + $0x390] sm:$0xff]
    %v3890 = vld [vmem:[#allocation5 + $0x398] sm:$0xff]
    %v3891 = vld [vmem:[#allocation5 + $0x3a0] sm:$0xff]
    %v3892 = vld [vmem:[#allocation5 + $0x3a8] sm:$0xff]
    %v3893 = vld [vmem:[#allocation5 + $0x3b0] sm:$0xff]
    %v3894 = vld [vmem:[#allocation5 + $0x3b8] sm:$0xff]
    %v3895 = vld [vmem:[#allocation5 + $0x3c0] sm:$0xff]
    %v3896 = vld [vmem:[#allocation5 + $0x3c8] sm:$0xff]
    %v3897 = vld [vmem:[#allocation5 + $0x3d0] sm:$0xff]
    %v3898 = vld [vmem:[#allocation5 + $0x3d8] sm:$0xff]
    %v3899 = vld [vmem:[#allocation5 + $0x3e0] sm:$0xff]
    %v3900 = vld [vmem:[#allocation5 + $0x3e8] sm:$0xff]
    %v3901 = vld [vmem:[#allocation5 + $0x3f0] sm:$0xff]
    %v3902 = vld [vmem:[#allocation5 + $0x3f8] sm:$0xff]
    %v3903 = vld [vmem:[#allocation5 + $0x400] sm:$0xff]
    %v3904 = vld [vmem:[#allocation5 + $0x408] sm:$0xff]
    %v3905 = vld [vmem:[#allocation5 + $0x410] sm:$0xff]
    %v3906 = vld [vmem:[#allocation5 + $0x418] sm:$0xff]
    %v3907 = vld [vmem:[#allocation5 + $0x420] sm:$0xff]
    %v3908 = vld [vmem:[#allocation5 + $0x428] sm:$0xff]
    %v3909 = vld [vmem:[#allocation5 + $0x430] sm:$0xff]
    %v3910 = vld [vmem:[#allocation5 + $0x438] sm:$0xff]
    %v3911 = vld [vmem:[#allocation5 + $0x440] sm:$0xff]
    %v3912 = vld [vmem:[#allocation5 + $0x448] sm:$0xff]
    %v3913 = vld [vmem:[#allocation5 + $0x450] sm:$0xff]
    %v3914 = vld [vmem:[#allocation5 + $0x458] sm:$0xff]
    %v3915 = vld [vmem:[#allocation5 + $0x460] sm:$0xff]
    %v3916 = vld [vmem:[#allocation5 + $0x468] sm:$0xff]
    %v3917 = vld [vmem:[#allocation5 + $0x470] sm:$0xff]
    %v3918 = vld [vmem:[#allocation5 + $0x478] sm:$0xff]
    %v3919 = vld [vmem:[#allocation5 + $0x480] sm:$0xff]
    %v3920 = vld [vmem:[#allocation5 + $0x488] sm:$0xff]
    %v3921 = vld [vmem:[#allocation5 + $0x490] sm:$0xff]
    %v3922 = vld [vmem:[#allocation5 + $0x498] sm:$0xff]
    %v3923 = vld [vmem:[#allocation5 + $0x4a0] sm:$0xff]
    %v3924 = vld [vmem:[#allocation5 + $0x4a8] sm:$0xff]
    %v3925 = vld [vmem:[#allocation5 + $0x4b0] sm:$0xff]
    %v3926 = vld [vmem:[#allocation5 + $0x4b8] sm:$0xff]
    %v3927 = vld [vmem:[#allocation5 + $0x4c0] sm:$0xff]
    %v3928 = vld [vmem:[#allocation5 + $0x4c8] sm:$0xff]
    %v3929 = vld [vmem:[#allocation5 + $0x4d0] sm:$0xff]
    %v3930 = vld [vmem:[#allocation5 + $0x4d8] sm:$0xff]
    %v3931 = vld [vmem:[#allocation5 + $0x4e0] sm:$0xff]
    %v3932 = vld [vmem:[#allocation5 + $0x4e8] sm:$0xff]
    %v3933 = vld [vmem:[#allocation5 + $0x4f0] sm:$0xff]
    %v3934 = vld [vmem:[#allocation5 + $0x4f8] sm:$0xff]
    %v3935 = vld [vmem:[#allocation5 + $0x500] sm:$0xff]
    %v3936 = vld [vmem:[#allocation5 + $0x508] sm:$0xff]
    %v3937 = vld [vmem:[#allocation5 + $0x510] sm:$0xff]
    %v3938 = vld [vmem:[#allocation5 + $0x518] sm:$0xff]
    %v3939 = vld [vmem:[#allocation5 + $0x520] sm:$0xff]
    %v3940 = vld [vmem:[#allocation5 + $0x528] sm:$0xff]
    %v3941 = vld [vmem:[#allocation5 + $0x530] sm:$0xff]
    %v3942 = vld [vmem:[#allocation5 + $0x538] sm:$0xff]
    %v3943 = vld [vmem:[#allocation5 + $0x540] sm:$0xff]
    %v3944 = vld [vmem:[#allocation5 + $0x548] sm:$0xff]
    %v3945 = vld [vmem:[#allocation5 + $0x550] sm:$0xff]
    %v3946 = vld [vmem:[#allocation5 + $0x558] sm:$0xff]
    %v3947 = vld [vmem:[#allocation5 + $0x560] sm:$0xff]
    %v3948 = vld [vmem:[#allocation5 + $0x568] sm:$0xff]
    %v3949 = vld [vmem:[#allocation5 + $0x570] sm:$0xff]
    %v3950 = vld [vmem:[#allocation5 + $0x578] sm:$0xff]
    %v3951 = vld [vmem:[#allocation5 + $0x580] sm:$0xff]
    %v3952 = vld [vmem:[#allocation5 + $0x588] sm:$0xff]
    %v3953 = vld [vmem:[#allocation5 + $0x590] sm:$0xff]
    %v3954 = vld [vmem:[#allocation5 + $0x598] sm:$0xff]
    %v3955 = vld [vmem:[#allocation5 + $0x5a0] sm:$0xff]
    %v3956 = vld [vmem:[#allocation5 + $0x5a8] sm:$0xff]
    %v3957 = vld [vmem:[#allocation5 + $0x5b0] sm:$0xff]
    %v3958 = vld [vmem:[#allocation5 + $0x5b8] sm:$0xff]
    %v3959 = vld [vmem:[#allocation5 + $0x5c0] sm:$0xff]
    %v3960 = vld [vmem:[#allocation5 + $0x5c8] sm:$0xff]
    %v3961 = vld [vmem:[#allocation5 + $0x5d0] sm:$0xff]
    %v3962 = vld [vmem:[#allocation5 + $0x5d8] sm:$0xff]
    %v3963 = vld [vmem:[#allocation5 + $0x5e0] sm:$0xff]
    %v3964 = vld [vmem:[#allocation5 + $0x5e8] sm:$0xff]
    %v3965 = vld [vmem:[#allocation5 + $0x5f0] sm:$0xff]
    %v3966 = vld [vmem:[#allocation5 + $0x5f8] sm:$0xff]
    %v3967 = vld [vmem:[#allocation5 + $0x600] sm:$0xff]
    %v3968 = vld [vmem:[#allocation5 + $0x608] sm:$0xff]
    %v3969 = vld [vmem:[#allocation5 + $0x610] sm:$0xff]
    %v3970 = vld [vmem:[#allocation5 + $0x618] sm:$0xff]
    %v3971 = vld [vmem:[#allocation5 + $0x620] sm:$0xff]
    %v3972 = vld [vmem:[#allocation5 + $0x628] sm:$0xff]
    %v3973 = vld [vmem:[#allocation5 + $0x630] sm:$0xff]
    %v3974 = vld [vmem:[#allocation5 + $0x638] sm:$0xff]
    %v3975 = vld [vmem:[#allocation5 + $0x640] sm:$0xff]
    %v3976 = vld [vmem:[#allocation5 + $0x648] sm:$0xff]
    %v3977 = vld [vmem:[#allocation5 + $0x650] sm:$0xff]
    %v3978 = vld [vmem:[#allocation5 + $0x658] sm:$0xff]
    %v3979 = vld [vmem:[#allocation5 + $0x660] sm:$0xff]
    %v3980 = vld [vmem:[#allocation5 + $0x668] sm:$0xff]
    %v3981 = vld [vmem:[#allocation5 + $0x670] sm:$0xff]
    %v3982 = vld [vmem:[#allocation5 + $0x678] sm:$0xff]
    %v3983 = vld [vmem:[#allocation5 + $0x680] sm:$0xff]
    %v3984 = vld [vmem:[#allocation5 + $0x688] sm:$0xff]
    %v3985 = vld [vmem:[#allocation5 + $0x690] sm:$0xff]
    %v3986 = vld [vmem:[#allocation5 + $0x698] sm:$0xff]
    %v3987 = vld [vmem:[#allocation5 + $0x6a0] sm:$0xff]
    %v3988 = vld [vmem:[#allocation5 + $0x6a8] sm:$0xff]
    %v3989 = vld [vmem:[#allocation5 + $0x6b0] sm:$0xff]
    %v3990 = vld [vmem:[#allocation5 + $0x6b8] sm:$0xff]
    %v3991 = vld [vmem:[#allocation5 + $0x6c0] sm:$0xff]
    %v3992 = vld [vmem:[#allocation5 + $0x6c8] sm:$0xff]
    %v3993 = vld [vmem:[#allocation5 + $0x6d0] sm:$0xff]
    %v3994 = vld [vmem:[#allocation5 + $0x6d8] sm:$0xff]
    %v3995 = vld [vmem:[#allocation5 + $0x6e0] sm:$0xff]
    %v3996 = vld [vmem:[#allocation5 + $0x6e8] sm:$0xff]
    %v3997 = vld [vmem:[#allocation5 + $0x6f0] sm:$0xff]
    %v3998 = vld [vmem:[#allocation5 + $0x6f8] sm:$0xff]
    %v3999 = vld [vmem:[#allocation5 + $0x700] sm:$0xff]
    %v4000 = vld [vmem:[#allocation5 + $0x708] sm:$0xff]
    %v4001 = vld [vmem:[#allocation5 + $0x710] sm:$0xff]
    %v4002 = vld [vmem:[#allocation5 + $0x718] sm:$0xff]
    %v4003 = vld [vmem:[#allocation5 + $0x720] sm:$0xff]
    %v4004 = vld [vmem:[#allocation5 + $0x728] sm:$0xff]
    %v4005 = vld [vmem:[#allocation5 + $0x730] sm:$0xff]
    %v4006 = vld [vmem:[#allocation5 + $0x738] sm:$0xff]
    %v4007 = vld [vmem:[#allocation5 + $0x740] sm:$0xff]
    %v4008 = vld [vmem:[#allocation5 + $0x748] sm:$0xff]
    %v4009 = vld [vmem:[#allocation5 + $0x750] sm:$0xff]
    %v4010 = vld [vmem:[#allocation5 + $0x758] sm:$0xff]
    %v4011 = vld [vmem:[#allocation5 + $0x760] sm:$0xff]
    %v4012 = vld [vmem:[#allocation5 + $0x768] sm:$0xff]
    %v4013 = vld [vmem:[#allocation5 + $0x770] sm:$0xff]
    %v4014 = vld [vmem:[#allocation5 + $0x778] sm:$0xff]
    %v4015 = vld [vmem:[#allocation5 + $0x780] sm:$0xff]
    %v4016 = vld [vmem:[#allocation5 + $0x788] sm:$0xff]
    %v4017 = vld [vmem:[#allocation5 + $0x790] sm:$0xff]
    %v4018 = vld [vmem:[#allocation5 + $0x798] sm:$0xff]
    %v4019 = vld [vmem:[#allocation5 + $0x7a0] sm:$0xff]
    %v4020 = vld [vmem:[#allocation5 + $0x7a8] sm:$0xff]
    %v4021 = vld [vmem:[#allocation5 + $0x7b0] sm:$0xff]
    %v4022 = vld [vmem:[#allocation5 + $0x7b8] sm:$0xff]
    %v4023 = vld [vmem:[#allocation5 + $0x7c0] sm:$0xff]
    %v4024 = vld [vmem:[#allocation5 + $0x7c8] sm:$0xff]
    %v4025 = vld [vmem:[#allocation5 + $0x7d0] sm:$0xff]
    %v4026 = vld [vmem:[#allocation5 + $0x7d8] sm:$0xff]
    %v4027 = vld [vmem:[#allocation5 + $0x7e0] sm:$0xff]
    %v4028 = vld [vmem:[#allocation5 + $0x7e8] sm:$0xff]
    %v4029 = vld [vmem:[#allocation5 + $0x7f0] sm:$0xff]
    %v4030 = vld [vmem:[#allocation5 + $0x7f8] sm:$0xff]
    %4031 = vmatprep.subr.mxu0 %v3776
    %4032 = vmatpush1.msra.mxu0 %v3775
    %4033 = vmatprep.subr.mxu0 %v3784
    %4034 = vmatpush1.msra.mxu0 %v3783
    %4035 = vmatprep.subr.mxu0 %v3792
    %4036 = vmatpush1.msra.mxu0 %v3791
    %4037 = vmatprep.subr.mxu0 %v3800
    %4038 = vmatpush1.msra.mxu0 %v3799
    %4039 = vmatprep.subr.mxu0 %v3808
    %4040 = vmatpush1.msra.mxu0 %v3807
    %4041 = vmatprep.subr.mxu0 %v3816
    %4042 = vmatpush1.msra.mxu0 %v3815
    %4043 = vmatprep.subr.mxu0 %v3824
    %4044 = vmatpush1.msra.mxu0 %v3823
    %4045 = vmatprep.subr.mxu0 %v3832
    %4046 = vmatpush1.msra.mxu0 %v3831
    %4047 = vmatprep.subr.mxu0 %v3840
    %4048 = vmatpush1.msra.mxu0 %v3839
    %4049 = vmatprep.subr.mxu0 %v3848
    %4050 = vmatpush1.msra.mxu0 %v3847
    %4051 = vmatprep.subr.mxu0 %v3856
    %4052 = vmatpush1.msra.mxu0 %v3855
    %4053 = vmatprep.subr.mxu0 %v3864
    %4054 = vmatpush1.msra.mxu0 %v3863
    %4055 = vmatprep.subr.mxu0 %v3872
    %4056 = vmatpush1.msra.mxu0 %v3871
    %4057 = vmatprep.subr.mxu0 %v3880
    %4058 = vmatpush1.msra.mxu0 %v3879
    %4059 = vmatprep.subr.mxu0 %v3888
    %4060 = vmatpush1.msra.mxu0 %v3887
    %4061 = vmatprep.subr.mxu0 %v3896
    %4062 = vmatpush1.msra.mxu0 %v3895
    %4063 = vmatprep.subr.mxu0 %v3904
    %4064 = vmatpush1.msra.mxu0 %v3903
    %4065 = vmatprep.subr.mxu0 %v3912
    %4066 = vmatpush1.msra.mxu0 %v3911
    %4067 = vmatprep.subr.mxu0 %v3920
    %4068 = vmatpush1.msra.mxu0 %v3919
    %4069 = vmatprep.subr.mxu0 %v3928
    %4070 = vmatpush1.msra.mxu0 %v3927
    %4071 = vmatprep.subr.mxu0 %v3936
    %4072 = vmatpush1.msra.mxu0 %v3935
    %4073 = vmatprep.subr.mxu0 %v3944
    %4074 = vmatpush1.msra.mxu0 %v3943
    %4075 = vmatprep.subr.mxu0 %v3952
    %4076 = vmatpush1.msra.mxu0 %v3951
    %4077 = vmatprep.subr.mxu0 %v3960
    %4078 = vmatpush1.msra.mxu0 %v3959
    %4079 = vmatprep.subr.mxu0 %v3968
    %4080 = vmatpush1.msra.mxu0 %v3967
    %4081 = vmatprep.subr.mxu0 %v3976
    %4082 = vmatpush1.msra.mxu0 %v3975
    %4083 = vmatprep.subr.mxu0 %v3984
    %4084 = vmatpush1.msra.mxu0 %v3983
    %4085 = vmatprep.subr.mxu0 %v3992
    %4086 = vmatpush1.msra.mxu0 %v3991
    %4087 = vmatprep.subr.mxu0 %v4000
    %4088 = vmatpush1.msra.mxu0 %v3999
    %4089 = vmatprep.subr.mxu0 %v4008
    %4090 = vmatpush1.msra.mxu0 %v4007
    %4091 = vmatprep.subr.mxu0 %v4016
    %4092 = vmatpush1.msra.mxu0 %v4015
    %4093 = vmatprep.subr.mxu0 %v4024
    %4094 = vmatpush1.msra.mxu0 %v4023
    %4095 = vmatprep.mubr.f32.mxu0 %v3769
    %4096 = vmatmul.mubr.f32.gmra.mrb[0].mxu0 %v3768
    %v4097 = vpop.f32.mrb[0].mxu0
    %v4098 = vadd.f32 0.0, %v4097
    %v4099 = vpop.f32.mrb[0].mxu0
    %v4100 = vadd.f32 0.0, %v4099
    %4101 = vdwg.mxu0
    %4102 = vmatprep.subr.mxu0 %v3778
    %4103 = vmatpush1.msra.mxu0 %v3777
    %4104 = vmatprep.subr.mxu0 %v3786
    %4105 = vmatpush1.msra.mxu0 %v3785
    %4106 = vmatprep.subr.mxu0 %v3794
    %4107 = vmatpush1.msra.mxu0 %v3793
    %4108 = vmatprep.subr.mxu0 %v3802
    %4109 = vmatpush1.msra.mxu0 %v3801
    %4110 = vmatprep.subr.mxu0 %v3810
    %4111 = vmatpush1.msra.mxu0 %v3809
    %4112 = vmatprep.subr.mxu0 %v3818
    %4113 = vmatpush1.msra.mxu0 %v3817
    %4114 = vmatprep.subr.mxu0 %v3826
    %4115 = vmatpush1.msra.mxu0 %v3825
    %4116 = vmatprep.subr.mxu0 %v3834
    %4117 = vmatpush1.msra.mxu0 %v3833
    %4118 = vmatprep.subr.mxu0 %v3842
    %4119 = vmatpush1.msra.mxu0 %v3841
    %4120 = vmatprep.subr.mxu0 %v3850
    %4121 = vmatpush1.msra.mxu0 %v3849
    %4122 = vmatprep.subr.mxu0 %v3858
    %4123 = vmatpush1.msra.mxu0 %v3857
    %4124 = vmatprep.subr.mxu0 %v3866
    %4125 = vmatpush1.msra.mxu0 %v3865
    %4126 = vmatprep.subr.mxu0 %v3874
    %4127 = vmatpush1.msra.mxu0 %v3873
    %4128 = vmatprep.subr.mxu0 %v3882
    %4129 = vmatpush1.msra.mxu0 %v3881
    %4130 = vmatprep.subr.mxu0 %v3890
    %4131 = vmatpush1.msra.mxu0 %v3889
    %4132 = vmatprep.subr.mxu0 %v3898
    %4133 = vmatpush1.msra.mxu0 %v3897
    %4134 = vmatprep.subr.mxu0 %v3906
    %4135 = vmatpush1.msra.mxu0 %v3905
    %4136 = vmatprep.subr.mxu0 %v3914
    %4137 = vmatpush1.msra.mxu0 %v3913
    %4138 = vmatprep.subr.mxu0 %v3922
    %4139 = vmatpush1.msra.mxu0 %v3921
    %4140 = vmatprep.subr.mxu0 %v3930
    %4141 = vmatpush1.msra.mxu0 %v3929
    %4142 = vmatprep.subr.mxu0 %v3938
    %4143 = vmatpush1.msra.mxu0 %v3937
    %4144 = vmatprep.subr.mxu0 %v3946
    %4145 = vmatpush1.msra.mxu0 %v3945
    %4146 = vmatprep.subr.mxu0 %v3954
    %4147 = vmatpush1.msra.mxu0 %v3953
    %4148 = vmatprep.subr.mxu0 %v3962
    %4149 = vmatpush1.msra.mxu0 %v3961
    %4150 = vmatprep.subr.mxu0 %v3970
    %4151 = vmatpush1.msra.mxu0 %v3969
    %4152 = vmatprep.subr.mxu0 %v3978
    %4153 = vmatpush1.msra.mxu0 %v3977
    %4154 = vmatprep.subr.mxu0 %v3986
    %4155 = vmatpush1.msra.mxu0 %v3985
    %4156 = vmatprep.subr.mxu0 %v3994
    %4157 = vmatpush1.msra.mxu0 %v3993
    %4158 = vmatprep.subr.mxu0 %v4002
    %4159 = vmatpush1.msra.mxu0 %v4001
    %4160 = vmatprep.subr.mxu0 %v4010
    %4161 = vmatpush1.msra.mxu0 %v4009
    %4162 = vmatprep.subr.mxu0 %v4018
    %4163 = vmatpush1.msra.mxu0 %v4017
    %4164 = vmatprep.subr.mxu0 %v4026
    %4165 = vmatpush1.msra.mxu0 %v4025
    %4166 = vmatprep.mubr.f32.mxu0 %v3769
    %4167 = vmatmul.mubr.f32.gmra.mrb[0].mxu0 %v3768
    %v4168 = vpop.f32.mrb[0].mxu0
    %v4169 = vadd.f32 0.0, %v4168
    %v4170 = vpop.f32.mrb[0].mxu0
    %v4171 = vadd.f32 0.0, %v4170
    %4172 = vdwg.mxu0
    %4173 = vmatprep.subr.mxu0 %v3780
    %4174 = vmatpush1.msra.mxu0 %v3779
    %4175 = vmatprep.subr.mxu0 %v3788
    %4176 = vmatpush1.msra.mxu0 %v3787
    %4177 = vmatprep.subr.mxu0 %v3796
    %4178 = vmatpush1.msra.mxu0 %v3795
    %4179 = vmatprep.subr.mxu0 %v3804
    %4180 = vmatpush1.msra.mxu0 %v3803
    %4181 = vmatprep.subr.mxu0 %v3812
    %4182 = vmatpush1.msra.mxu0 %v3811
    %4183 = vmatprep.subr.mxu0 %v3820
    %4184 = vmatpush1.msra.mxu0 %v3819
    %4185 = vmatprep.subr.mxu0 %v3828
    %4186 = vmatpush1.msra.mxu0 %v3827
    %4187 = vmatprep.subr.mxu0 %v3836
    %4188 = vmatpush1.msra.mxu0 %v3835
    %4189 = vmatprep.subr.mxu0 %v3844
    %4190 = vmatpush1.msra.mxu0 %v3843
    %4191 = vmatprep.subr.mxu0 %v3852
    %4192 = vmatpush1.msra.mxu0 %v3851
    %4193 = vmatprep.subr.mxu0 %v3860
    %4194 = vmatpush1.msra.mxu0 %v3859
    %4195 = vmatprep.subr.mxu0 %v3868
    %4196 = vmatpush1.msra.mxu0 %v3867
    %4197 = vmatprep.subr.mxu0 %v3876
    %4198 = vmatpush1.msra.mxu0 %v3875
    %4199 = vmatprep.subr.mxu0 %v3884
    %4200 = vmatpush1.msra.mxu0 %v3883
    %4201 = vmatprep.subr.mxu0 %v3892
    %4202 = vmatpush1.msra.mxu0 %v3891
    %4203 = vmatprep.subr.mxu0 %v3900
    %4204 = vmatpush1.msra.mxu0 %v3899
    %4205 = vmatprep.subr.mxu0 %v3908
    %4206 = vmatpush1.msra.mxu0 %v3907
    %4207 = vmatprep.subr.mxu0 %v3916
    %4208 = vmatpush1.msra.mxu0 %v3915
    %4209 = vmatprep.subr.mxu0 %v3924
    %4210 = vmatpush1.msra.mxu0 %v3923
    %4211 = vmatprep.subr.mxu0 %v3932
    %4212 = vmatpush1.msra.mxu0 %v3931
    %4213 = vmatprep.subr.mxu0 %v3940
    %4214 = vmatpush1.msra.mxu0 %v3939
    %4215 = vmatprep.subr.mxu0 %v3948
    %4216 = vmatpush1.msra.mxu0 %v3947
    %4217 = vmatprep.subr.mxu0 %v3956
    %4218 = vmatpush1.msra.mxu0 %v3955
    %4219 = vmatprep.subr.mxu0 %v3964
    %4220 = vmatpush1.msra.mxu0 %v3963
    %4221 = vmatprep.subr.mxu0 %v3972
    %4222 = vmatpush1.msra.mxu0 %v3971
    %4223 = vmatprep.subr.mxu0 %v3980
    %4224 = vmatpush1.msra.mxu0 %v3979
    %4225 = vmatprep.subr.mxu0 %v3988
    %4226 = vmatpush1.msra.mxu0 %v3987
    %4227 = vmatprep.subr.mxu0 %v3996
    %4228 = vmatpush1.msra.mxu0 %v3995
    %4229 = vmatprep.subr.mxu0 %v4004
    %4230 = vmatpush1.msra.mxu0 %v4003
    %4231 = vmatprep.subr.mxu0 %v4012
    %4232 = vmatpush1.msra.mxu0 %v4011
    %4233 = vmatprep.subr.mxu0 %v4020
    %4234 = vmatpush1.msra.mxu0 %v4019
    %4235 = vmatprep.subr.mxu0 %v4028
    %4236 = vmatpush1.msra.mxu0 %v4027
    %4237 = vmatprep.mubr.f32.mxu0 %v3769
    %4238 = vmatmul.mubr.f32.gmra.mrb[0].mxu0 %v3768
    %v4239 = vpop.f32.mrb[0].mxu0
    %v4240 = vadd.f32 0.0, %v4239
    %v4241 = vpop.f32.mrb[0].mxu0
    %v4242 = vadd.f32 0.0, %v4241
    %4243 = vdwg.mxu0
    %4244 = vmatprep.subr.mxu0 %v3782
    %4245 = vmatpush1.msra.mxu0 %v3781
    %4246 = vmatprep.subr.mxu0 %v3790
    %4247 = vmatpush1.msra.mxu0 %v3789
    %4248 = vmatprep.subr.mxu0 %v3798
    %4249 = vmatpush1.msra.mxu0 %v3797
    %4250 = vmatprep.subr.mxu0 %v3806
    %4251 = vmatpush1.msra.mxu0 %v3805
    %4252 = vmatprep.subr.mxu0 %v3814
    %4253 = vmatpush1.msra.mxu0 %v3813
    %4254 = vmatprep.subr.mxu0 %v3822
    %4255 = vmatpush1.msra.mxu0 %v3821
    %4256 = vmatprep.subr.mxu0 %v3830
    %4257 = vmatpush1.msra.mxu0 %v3829
    %4258 = vmatprep.subr.mxu0 %v3838
    %4259 = vmatpush1.msra.mxu0 %v3837
    %4260 = vmatprep.subr.mxu0 %v3846
    %4261 = vmatpush1.msra.mxu0 %v3845
    %4262 = vmatprep.subr.mxu0 %v3854
    %4263 = vmatpush1.msra.mxu0 %v3853
    %4264 = vmatprep.subr.mxu0 %v3862
    %4265 = vmatpush1.msra.mxu0 %v3861
    %4266 = vmatprep.subr.mxu0 %v3870
    %4267 = vmatpush1.msra.mxu0 %v3869
    %4268 = vmatprep.subr.mxu0 %v3878
    %4269 = vmatpush1.msra.mxu0 %v3877
    %4270 = vmatprep.subr.mxu0 %v3886
    %4271 = vmatpush1.msra.mxu0 %v3885
    %4272 = vmatprep.subr.mxu0 %v3894
    %4273 = vmatpush1.msra.mxu0 %v3893
    %4274 = vmatprep.subr.mxu0 %v3902
    %4275 = vmatpush1.msra.mxu0 %v3901
    %4276 = vmatprep.subr.mxu0 %v3910
    %4277 = vmatpush1.msra.mxu0 %v3909
    %4278 = vmatprep.subr.mxu0 %v3918
    %4279 = vmatpush1.msra.mxu0 %v3917
    %4280 = vmatprep.subr.mxu0 %v3926
    %4281 = vmatpush1.msra.mxu0 %v3925
    %4282 = vmatprep.subr.mxu0 %v3934
    %4283 = vmatpush1.msra.mxu0 %v3933
    %4284 = vmatprep.subr.mxu0 %v3942
    %4285 = vmatpush1.msra.mxu0 %v3941
    %4286 = vmatprep.subr.mxu0 %v3950
    %4287 = vmatpush1.msra.mxu0 %v3949
    %4288 = vmatprep.subr.mxu0 %v3958
    %4289 = vmatpush1.msra.mxu0 %v3957
    %4290 = vmatprep.subr.mxu0 %v3966
    %4291 = vmatpush1.msra.mxu0 %v3965
    %4292 = vmatprep.subr.mxu0 %v3974
    %4293 = vmatpush1.msra.mxu0 %v3973
    %4294 = vmatprep.subr.mxu0 %v3982
    %4295 = vmatpush1.msra.mxu0 %v3981
    %4296 = vmatprep.subr.mxu0 %v3990
    %4297 = vmatpush1.msra.mxu0 %v3989
    %4298 = vmatprep.subr.mxu0 %v3998
    %4299 = vmatpush1.msra.mxu0 %v3997
    %4300 = vmatprep.subr.mxu0 %v4006
    %4301 = vmatpush1.msra.mxu0 %v4005
    %4302 = vmatprep.subr.mxu0 %v4014
    %4303 = vmatpush1.msra.mxu0 %v4013
    %4304 = vmatprep.subr.mxu0 %v4022
    %4305 = vmatpush1.msra.mxu0 %v4021
    %4306 = vmatprep.subr.mxu0 %v4030
    %4307 = vmatpush1.msra.mxu0 %v4029
    %4308 = vmatprep.mubr.f32.mxu0 %v3769
    %4309 = vmatmul.mubr.f32.gmra.mrb[0].mxu0 %v3768
    %v4310 = vpop.f32.mrb[0].mxu0
    %v4311 = vadd.f32 0.0, %v4310
    %v4312 = vpop.f32.mrb[0].mxu0
    %v4313 = vadd.f32 0.0, %v4312
    %4314 = vdwg.mxu0
    %v4323 = vrot.slane %v4098, 6
    %v4324 = vrot.slane %v4100, 6
    %v4325 = vrot.slane %v4169, 6
    %v4326 = vrot.slane %v4171, 6
    %v4327 = vrot.slane %v4240, 6
    %v4328 = vrot.slane %v4242, 6
    %v4329 = vrot.slane %v4311, 6
    %v4330 = vrot.slane %v4313, 6
    %v4339 = vadd.f32 %v426, %v4323
    %v4340 = vadd.f32 %v428, %v4324
    %v4341 = vadd.f32 %v503, %v4325
    %v4342 = vadd.f32 %v505, %v4326
    %v4343 = vadd.f32 %v580, %v4327
    %v4344 = vadd.f32 %v582, %v4328
    %v4345 = vadd.f32 %v657, %v4329
    %v4346 = vadd.f32 %v659, %v4330
    %v4347 = vxor.u32 %v4339, 2147483648
    %v4348 = vxor.u32 %v4340, 2147483648
    %v4349 = vxor.u32 %v4341, 2147483648
    %v4350 = vxor.u32 %v4342, 2147483648
    %v4351 = vxor.u32 %v4343, 2147483648
    %v4352 = vxor.u32 %v4344, 2147483648
    %v4353 = vmul.f32 %v4347, 1.442695
    %v4354 = vpow.pop %v4353
    %v4355 = vmul.f32 %v4348, 1.442695
    %v4356 = vpow.pop %v4355
    %v4357 = vmul.f32 %v4349, 1.442695
    %v4358 = vpow.pop %v4357
    %v4359 = vmul.f32 %v4350, 1.442695
    %v4360 = vpow.pop %v4359
    %v4361 = vmul.f32 %v4351, 1.442695
    %v4362 = vpow.pop %v4361
    %v4363 = vmul.f32 %v4352, 1.442695
    %v4364 = vpow.pop %v4363
    %v4365 = vadd.f32 %v4354, 1.0
    %v4366 = vadd.f32 %v4356, 1.0
    %v4367 = vadd.f32 %v4358, 1.0
    %v4368 = vadd.f32 %v4360, 1.0
    %v4369 = vadd.f32 %v4362, 1.0
    %v4370 = vadd.f32 %v4364, 1.0
    %v4371 = vrcp.pop %v4365
    %v4372 = vmul.f32 1.0, %v4371
    %v4373 = vrcp.pop %v4366
    %v4374 = vmul.f32 1.0, %v4373
    %v4375 = vrcp.pop %v4367
    %v4376 = vmul.f32 1.0, %v4375
    %v4377 = vrcp.pop %v4368
    %v4378 = vmul.f32 1.0, %v4377
    %v4379 = vrcp.pop %v4369
    %v4380 = vmul.f32 1.0, %v4379
    %v4381 = vrcp.pop %v4370
    %v4382 = vmul.f32 1.0, %v4381
    %v4383 = vtanh.pop %v4345
    %v4384 = vtanh.pop %v4346
    %v4387 = vrot.slane %v3764, 6
    %v4388 = vrot.slane %v3765, 6
    %v4391 = vmul.f32 %v4376, %v4387
    %v4392 = vmul.f32 %v4378, %v4388
    %v4393 = vmul.f32 %v4372, %v4383
    %v4394 = vmul.f32 %v4374, %v4384
    %v4395 = vadd.f32 %v4391, %v4393
    %v4396 = vadd.f32 %v4392, %v4394
    %v4397 = vtanh.pop %v4395
    %v4398 = vtanh.pop %v4396
    %v4399 = vmul.f32 %v4380, %v4397
    %v4400 = vmul.f32 %v4382, %v4398
    %4401 = vst [vmem:[#allocation2 + $0x10] sm:$0xc] %v4399
    %v4403 = vrot.slane %v4400, 6
    %4405 = vst [vmem:[#allocation2 + $0x8] sm:$0x30] %v4403
    %v4406 = vld [vmem:[#allocation5] sm:$0xff]
    %v4407 = vld [vmem:[#allocation5 + $0x8] sm:$0xff]
    %v4408 = vld [vmem:[#allocation5 + $0x10] sm:$0xff]
    %v4409 = vld [vmem:[#allocation5 + $0x18] sm:$0xff]
    %v4410 = vld [vmem:[#allocation5 + $0x20] sm:$0xff]
    %v4411 = vld [vmem:[#allocation5 + $0x28] sm:$0xff]
    %v4412 = vld [vmem:[#allocation5 + $0x30] sm:$0xff]
    %v4413 = vld [vmem:[#allocation5 + $0x38] sm:$0xff]
    %v4414 = vld [vmem:[#allocation5 + $0x40] sm:$0xff]
    %v4415 = vld [vmem:[#allocation5 + $0x48] sm:$0xff]
    %v4416 = vld [vmem:[#allocation5 + $0x50] sm:$0xff]
    %v4417 = vld [vmem:[#allocation5 + $0x58] sm:$0xff]
    %v4418 = vld [vmem:[#allocation5 + $0x60] sm:$0xff]
    %v4419 = vld [vmem:[#allocation5 + $0x68] sm:$0xff]
    %v4420 = vld [vmem:[#allocation5 + $0x70] sm:$0xff]
    %v4421 = vld [vmem:[#allocation5 + $0x78] sm:$0xff]
    %v4422 = vld [vmem:[#allocation5 + $0x80] sm:$0xff]
    %v4423 = vld [vmem:[#allocation5 + $0x88] sm:$0xff]
    %v4424 = vld [vmem:[#allocation5 + $0x90] sm:$0xff]
    %v4425 = vld [vmem:[#allocation5 + $0x98] sm:$0xff]
    %v4426 = vld [vmem:[#allocation5 + $0xa0] sm:$0xff]
    %v4427 = vld [vmem:[#allocation5 + $0xa8] sm:$0xff]
    %v4428 = vld [vmem:[#allocation5 + $0xb0] sm:$0xff]
    %v4429 = vld [vmem:[#allocation5 + $0xb8] sm:$0xff]
    %v4430 = vld [vmem:[#allocation5 + $0xc0] sm:$0xff]
    %v4431 = vld [vmem:[#allocation5 + $0xc8] sm:$0xff]
    %v4432 = vld [vmem:[#allocation5 + $0xd0] sm:$0xff]
    %v4433 = vld [vmem:[#allocation5 + $0xd8] sm:$0xff]
    %v4434 = vld [vmem:[#allocation5 + $0xe0] sm:$0xff]
    %v4435 = vld [vmem:[#allocation5 + $0xe8] sm:$0xff]
    %v4436 = vld [vmem:[#allocation5 + $0xf0] sm:$0xff]
    %v4437 = vld [vmem:[#allocation5 + $0xf8] sm:$0xff]
    %v4438 = vld [vmem:[#allocation5 + $0x100] sm:$0xff]
    %v4439 = vld [vmem:[#allocation5 + $0x108] sm:$0xff]
    %v4440 = vld [vmem:[#allocation5 + $0x110] sm:$0xff]
    %v4441 = vld [vmem:[#allocation5 + $0x118] sm:$0xff]
    %v4442 = vld [vmem:[#allocation5 + $0x120] sm:$0xff]
    %v4443 = vld [vmem:[#allocation5 + $0x128] sm:$0xff]
    %v4444 = vld [vmem:[#allocation5 + $0x130] sm:$0xff]
    %v4445 = vld [vmem:[#allocation5 + $0x138] sm:$0xff]
    %v4446 = vld [vmem:[#allocation5 + $0x140] sm:$0xff]
    %v4447 = vld [vmem:[#allocation5 + $0x148] sm:$0xff]
    %v4448 = vld [vmem:[#allocation5 + $0x150] sm:$0xff]
    %v4449 = vld [vmem:[#allocation5 + $0x158] sm:$0xff]
    %v4450 = vld [vmem:[#allocation5 + $0x160] sm:$0xff]
    %v4451 = vld [vmem:[#allocation5 + $0x168] sm:$0xff]
    %v4452 = vld [vmem:[#allocation5 + $0x170] sm:$0xff]
    %v4453 = vld [vmem:[#allocation5 + $0x178] sm:$0xff]
    %v4454 = vld [vmem:[#allocation5 + $0x180] sm:$0xff]
    %v4455 = vld [vmem:[#allocation5 + $0x188] sm:$0xff]
    %v4456 = vld [vmem:[#allocation5 + $0x190] sm:$0xff]
    %v4457 = vld [vmem:[#allocation5 + $0x198] sm:$0xff]
    %v4458 = vld [vmem:[#allocation5 + $0x1a0] sm:$0xff]
    %v4459 = vld [vmem:[#allocation5 + $0x1a8] sm:$0xff]
    %v4460 = vld [vmem:[#allocation5 + $0x1b0] sm:$0xff]
    %v4461 = vld [vmem:[#allocation5 + $0x1b8] sm:$0xff]
    %v4462 = vld [vmem:[#allocation5 + $0x1c0] sm:$0xff]
    %v4463 = vld [vmem:[#allocation5 + $0x1c8] sm:$0xff]
    %v4464 = vld [vmem:[#allocation5 + $0x1d0] sm:$0xff]
    %v4465 = vld [vmem:[#allocation5 + $0x1d8] sm:$0xff]
    %v4466 = vld [vmem:[#allocation5 + $0x1e0] sm:$0xff]
    %v4467 = vld [vmem:[#allocation5 + $0x1e8] sm:$0xff]
    %v4468 = vld [vmem:[#allocation5 + $0x1f0] sm:$0xff]
    %v4469 = vld [vmem:[#allocation5 + $0x1f8] sm:$0xff]
    %v4470 = vld [vmem:[#allocation5 + $0x200] sm:$0xff]
    %v4471 = vld [vmem:[#allocation5 + $0x208] sm:$0xff]
    %v4472 = vld [vmem:[#allocation5 + $0x210] sm:$0xff]
    %v4473 = vld [vmem:[#allocation5 + $0x218] sm:$0xff]
    %v4474 = vld [vmem:[#allocation5 + $0x220] sm:$0xff]
    %v4475 = vld [vmem:[#allocation5 + $0x228] sm:$0xff]
    %v4476 = vld [vmem:[#allocation5 + $0x230] sm:$0xff]
    %v4477 = vld [vmem:[#allocation5 + $0x238] sm:$0xff]
    %v4478 = vld [vmem:[#allocation5 + $0x240] sm:$0xff]
    %v4479 = vld [vmem:[#allocation5 + $0x248] sm:$0xff]
    %v4480 = vld [vmem:[#allocation5 + $0x250] sm:$0xff]
    %v4481 = vld [vmem:[#allocation5 + $0x258] sm:$0xff]
    %v4482 = vld [vmem:[#allocation5 + $0x260] sm:$0xff]
    %v4483 = vld [vmem:[#allocation5 + $0x268] sm:$0xff]
    %v4484 = vld [vmem:[#allocation5 + $0x270] sm:$0xff]
    %v4485 = vld [vmem:[#allocation5 + $0x278] sm:$0xff]
    %v4486 = vld [vmem:[#allocation5 + $0x280] sm:$0xff]
    %v4487 = vld [vmem:[#allocation5 + $0x288] sm:$0xff]
    %v4488 = vld [vmem:[#allocation5 + $0x290] sm:$0xff]
    %v4489 = vld [vmem:[#allocation5 + $0x298] sm:$0xff]
    %v4490 = vld [vmem:[#allocation5 + $0x2a0] sm:$0xff]
    %v4491 = vld [vmem:[#allocation5 + $0x2a8] sm:$0xff]
    %v4492 = vld [vmem:[#allocation5 + $0x2b0] sm:$0xff]
    %v4493 = vld [vmem:[#allocation5 + $0x2b8] sm:$0xff]
    %v4494 = vld [vmem:[#allocation5 + $0x2c0] sm:$0xff]
    %v4495 = vld [vmem:[#allocation5 + $0x2c8] sm:$0xff]
    %v4496 = vld [vmem:[#allocation5 + $0x2d0] sm:$0xff]
    %v4497 = vld [vmem:[#allocation5 + $0x2d8] sm:$0xff]
    %v4498 = vld [vmem:[#allocation5 + $0x2e0] sm:$0xff]
    %v4499 = vld [vmem:[#allocation5 + $0x2e8] sm:$0xff]
    %v4500 = vld [vmem:[#allocation5 + $0x2f0] sm:$0xff]
    %v4501 = vld [vmem:[#allocation5 + $0x2f8] sm:$0xff]
    %v4502 = vld [vmem:[#allocation5 + $0x300] sm:$0xff]
    %v4503 = vld [vmem:[#allocation5 + $0x308] sm:$0xff]
    %v4504 = vld [vmem:[#allocation5 + $0x310] sm:$0xff]
    %v4505 = vld [vmem:[#allocation5 + $0x318] sm:$0xff]
    %v4506 = vld [vmem:[#allocation5 + $0x320] sm:$0xff]
    %v4507 = vld [vmem:[#allocation5 + $0x328] sm:$0xff]
    %v4508 = vld [vmem:[#allocation5 + $0x330] sm:$0xff]
    %v4509 = vld [vmem:[#allocation5 + $0x338] sm:$0xff]
    %v4510 = vld [vmem:[#allocation5 + $0x340] sm:$0xff]
    %v4511 = vld [vmem:[#allocation5 + $0x348] sm:$0xff]
    %v4512 = vld [vmem:[#allocation5 + $0x350] sm:$0xff]
    %v4513 = vld [vmem:[#allocation5 + $0x358] sm:$0xff]
    %v4514 = vld [vmem:[#allocation5 + $0x360] sm:$0xff]
    %v4515 = vld [vmem:[#allocation5 + $0x368] sm:$0xff]
    %v4516 = vld [vmem:[#allocation5 + $0x370] sm:$0xff]
    %v4517 = vld [vmem:[#allocation5 + $0x378] sm:$0xff]
    %v4518 = vld [vmem:[#allocation5 + $0x380] sm:$0xff]
    %v4519 = vld [vmem:[#allocation5 + $0x388] sm:$0xff]
    %v4520 = vld [vmem:[#allocation5 + $0x390] sm:$0xff]
    %v4521 = vld [vmem:[#allocation5 + $0x398] sm:$0xff]
    %v4522 = vld [vmem:[#allocation5 + $0x3a0] sm:$0xff]
    %v4523 = vld [vmem:[#allocation5 + $0x3a8] sm:$0xff]
    %v4524 = vld [vmem:[#allocation5 + $0x3b0] sm:$0xff]
    %v4525 = vld [vmem:[#allocation5 + $0x3b8] sm:$0xff]
    %v4526 = vld [vmem:[#allocation5 + $0x3c0] sm:$0xff]
    %v4527 = vld [vmem:[#allocation5 + $0x3c8] sm:$0xff]
    %v4528 = vld [vmem:[#allocation5 + $0x3d0] sm:$0xff]
    %v4529 = vld [vmem:[#allocation5 + $0x3d8] sm:$0xff]
    %v4530 = vld [vmem:[#allocation5 + $0x3e0] sm:$0xff]
    %v4531 = vld [vmem:[#allocation5 + $0x3e8] sm:$0xff]
    %v4532 = vld [vmem:[#allocation5 + $0x3f0] sm:$0xff]
    %v4533 = vld [vmem:[#allocation5 + $0x3f8] sm:$0xff]
    %v4534 = vld [vmem:[#allocation5 + $0x400] sm:$0xff]
    %v4535 = vld [vmem:[#allocation5 + $0x408] sm:$0xff]
    %v4536 = vld [vmem:[#allocation5 + $0x410] sm:$0xff]
    %v4537 = vld [vmem:[#allocation5 + $0x418] sm:$0xff]
    %v4538 = vld [vmem:[#allocation5 + $0x420] sm:$0xff]
    %v4539 = vld [vmem:[#allocation5 + $0x428] sm:$0xff]
    %v4540 = vld [vmem:[#allocation5 + $0x430] sm:$0xff]
    %v4541 = vld [vmem:[#allocation5 + $0x438] sm:$0xff]
    %v4542 = vld [vmem:[#allocation5 + $0x440] sm:$0xff]
    %v4543 = vld [vmem:[#allocation5 + $0x448] sm:$0xff]
    %v4544 = vld [vmem:[#allocation5 + $0x450] sm:$0xff]
    %v4545 = vld [vmem:[#allocation5 + $0x458] sm:$0xff]
    %v4546 = vld [vmem:[#allocation5 + $0x460] sm:$0xff]
    %v4547 = vld [vmem:[#allocation5 + $0x468] sm:$0xff]
    %v4548 = vld [vmem:[#allocation5 + $0x470] sm:$0xff]
    %v4549 = vld [vmem:[#allocation5 + $0x478] sm:$0xff]
    %v4550 = vld [vmem:[#allocation5 + $0x480] sm:$0xff]
    %v4551 = vld [vmem:[#allocation5 + $0x488] sm:$0xff]
    %v4552 = vld [vmem:[#allocation5 + $0x490] sm:$0xff]
    %v4553 = vld [vmem:[#allocation5 + $0x498] sm:$0xff]
    %v4554 = vld [vmem:[#allocation5 + $0x4a0] sm:$0xff]
    %v4555 = vld [vmem:[#allocation5 + $0x4a8] sm:$0xff]
    %v4556 = vld [vmem:[#allocation5 + $0x4b0] sm:$0xff]
    %v4557 = vld [vmem:[#allocation5 + $0x4b8] sm:$0xff]
    %v4558 = vld [vmem:[#allocation5 + $0x4c0] sm:$0xff]
    %v4559 = vld [vmem:[#allocation5 + $0x4c8] sm:$0xff]
    %v4560 = vld [vmem:[#allocation5 + $0x4d0] sm:$0xff]
    %v4561 = vld [vmem:[#allocation5 + $0x4d8] sm:$0xff]
    %v4562 = vld [vmem:[#allocation5 + $0x4e0] sm:$0xff]
    %v4563 = vld [vmem:[#allocation5 + $0x4e8] sm:$0xff]
    %v4564 = vld [vmem:[#allocation5 + $0x4f0] sm:$0xff]
    %v4565 = vld [vmem:[#allocation5 + $0x4f8] sm:$0xff]
    %v4566 = vld [vmem:[#allocation5 + $0x500] sm:$0xff]
    %v4567 = vld [vmem:[#allocation5 + $0x508] sm:$0xff]
    %v4568 = vld [vmem:[#allocation5 + $0x510] sm:$0xff]
    %v4569 = vld [vmem:[#allocation5 + $0x518] sm:$0xff]
    %v4570 = vld [vmem:[#allocation5 + $0x520] sm:$0xff]
    %v4571 = vld [vmem:[#allocation5 + $0x528] sm:$0xff]
    %v4572 = vld [vmem:[#allocation5 + $0x530] sm:$0xff]
    %v4573 = vld [vmem:[#allocation5 + $0x538] sm:$0xff]
    %v4574 = vld [vmem:[#allocation5 + $0x540] sm:$0xff]
    %v4575 = vld [vmem:[#allocation5 + $0x548] sm:$0xff]
    %v4576 = vld [vmem:[#allocation5 + $0x550] sm:$0xff]
    %v4577 = vld [vmem:[#allocation5 + $0x558] sm:$0xff]
    %v4578 = vld [vmem:[#allocation5 + $0x560] sm:$0xff]
    %v4579 = vld [vmem:[#allocation5 + $0x568] sm:$0xff]
    %v4580 = vld [vmem:[#allocation5 + $0x570] sm:$0xff]
    %v4581 = vld [vmem:[#allocation5 + $0x578] sm:$0xff]
    %v4582 = vld [vmem:[#allocation5 + $0x580] sm:$0xff]
    %v4583 = vld [vmem:[#allocation5 + $0x588] sm:$0xff]
    %v4584 = vld [vmem:[#allocation5 + $0x590] sm:$0xff]
    %v4585 = vld [vmem:[#allocation5 + $0x598] sm:$0xff]
    %v4586 = vld [vmem:[#allocation5 + $0x5a0] sm:$0xff]
    %v4587 = vld [vmem:[#allocation5 + $0x5a8] sm:$0xff]
    %v4588 = vld [vmem:[#allocation5 + $0x5b0] sm:$0xff]
    %v4589 = vld [vmem:[#allocation5 + $0x5b8] sm:$0xff]
    %v4590 = vld [vmem:[#allocation5 + $0x5c0] sm:$0xff]
    %v4591 = vld [vmem:[#allocation5 + $0x5c8] sm:$0xff]
    %v4592 = vld [vmem:[#allocation5 + $0x5d0] sm:$0xff]
    %v4593 = vld [vmem:[#allocation5 + $0x5d8] sm:$0xff]
    %v4594 = vld [vmem:[#allocation5 + $0x5e0] sm:$0xff]
    %v4595 = vld [vmem:[#allocation5 + $0x5e8] sm:$0xff]
    %v4596 = vld [vmem:[#allocation5 + $0x5f0] sm:$0xff]
    %v4597 = vld [vmem:[#allocation5 + $0x5f8] sm:$0xff]
    %v4598 = vld [vmem:[#allocation5 + $0x600] sm:$0xff]
    %v4599 = vld [vmem:[#allocation5 + $0x608] sm:$0xff]
    %v4600 = vld [vmem:[#allocation5 + $0x610] sm:$0xff]
    %v4601 = vld [vmem:[#allocation5 + $0x618] sm:$0xff]
    %v4602 = vld [vmem:[#allocation5 + $0x620] sm:$0xff]
    %v4603 = vld [vmem:[#allocation5 + $0x628] sm:$0xff]
    %v4604 = vld [vmem:[#allocation5 + $0x630] sm:$0xff]
    %v4605 = vld [vmem:[#allocation5 + $0x638] sm:$0xff]
    %v4606 = vld [vmem:[#allocation5 + $0x640] sm:$0xff]
    %v4607 = vld [vmem:[#allocation5 + $0x648] sm:$0xff]
    %v4608 = vld [vmem:[#allocation5 + $0x650] sm:$0xff]
    %v4609 = vld [vmem:[#allocation5 + $0x658] sm:$0xff]
    %v4610 = vld [vmem:[#allocation5 + $0x660] sm:$0xff]
    %v4611 = vld [vmem:[#allocation5 + $0x668] sm:$0xff]
    %v4612 = vld [vmem:[#allocation5 + $0x670] sm:$0xff]
    %v4613 = vld [vmem:[#allocation5 + $0x678] sm:$0xff]
    %v4614 = vld [vmem:[#allocation5 + $0x680] sm:$0xff]
    %v4615 = vld [vmem:[#allocation5 + $0x688] sm:$0xff]
    %v4616 = vld [vmem:[#allocation5 + $0x690] sm:$0xff]
    %v4617 = vld [vmem:[#allocation5 + $0x698] sm:$0xff]
    %v4618 = vld [vmem:[#allocation5 + $0x6a0] sm:$0xff]
    %v4619 = vld [vmem:[#allocation5 + $0x6a8] sm:$0xff]
    %v4620 = vld [vmem:[#allocation5 + $0x6b0] sm:$0xff]
    %v4621 = vld [vmem:[#allocation5 + $0x6b8] sm:$0xff]
    %v4622 = vld [vmem:[#allocation5 + $0x6c0] sm:$0xff]
    %v4623 = vld [vmem:[#allocation5 + $0x6c8] sm:$0xff]
    %v4624 = vld [vmem:[#allocation5 + $0x6d0] sm:$0xff]
    %v4625 = vld [vmem:[#allocation5 + $0x6d8] sm:$0xff]
    %v4626 = vld [vmem:[#allocation5 + $0x6e0] sm:$0xff]
    %v4627 = vld [vmem:[#allocation5 + $0x6e8] sm:$0xff]
    %v4628 = vld [vmem:[#allocation5 + $0x6f0] sm:$0xff]
    %v4629 = vld [vmem:[#allocation5 + $0x6f8] sm:$0xff]
    %v4630 = vld [vmem:[#allocation5 + $0x700] sm:$0xff]
    %v4631 = vld [vmem:[#allocation5 + $0x708] sm:$0xff]
    %v4632 = vld [vmem:[#allocation5 + $0x710] sm:$0xff]
    %v4633 = vld [vmem:[#allocation5 + $0x718] sm:$0xff]
    %v4634 = vld [vmem:[#allocation5 + $0x720] sm:$0xff]
    %v4635 = vld [vmem:[#allocation5 + $0x728] sm:$0xff]
    %v4636 = vld [vmem:[#allocation5 + $0x730] sm:$0xff]
    %v4637 = vld [vmem:[#allocation5 + $0x738] sm:$0xff]
    %v4638 = vld [vmem:[#allocation5 + $0x740] sm:$0xff]
    %v4639 = vld [vmem:[#allocation5 + $0x748] sm:$0xff]
    %v4640 = vld [vmem:[#allocation5 + $0x750] sm:$0xff]
    %v4641 = vld [vmem:[#allocation5 + $0x758] sm:$0xff]
    %v4642 = vld [vmem:[#allocation5 + $0x760] sm:$0xff]
    %v4643 = vld [vmem:[#allocation5 + $0x768] sm:$0xff]
    %v4644 = vld [vmem:[#allocation5 + $0x770] sm:$0xff]
    %v4645 = vld [vmem:[#allocation5 + $0x778] sm:$0xff]
    %v4646 = vld [vmem:[#allocation5 + $0x780] sm:$0xff]
    %v4647 = vld [vmem:[#allocation5 + $0x788] sm:$0xff]
    %v4648 = vld [vmem:[#allocation5 + $0x790] sm:$0xff]
    %v4649 = vld [vmem:[#allocation5 + $0x798] sm:$0xff]
    %v4650 = vld [vmem:[#allocation5 + $0x7a0] sm:$0xff]
    %v4651 = vld [vmem:[#allocation5 + $0x7a8] sm:$0xff]
    %v4652 = vld [vmem:[#allocation5 + $0x7b0] sm:$0xff]
    %v4653 = vld [vmem:[#allocation5 + $0x7b8] sm:$0xff]
    %v4654 = vld [vmem:[#allocation5 + $0x7c0] sm:$0xff]
    %v4655 = vld [vmem:[#allocation5 + $0x7c8] sm:$0xff]
    %v4656 = vld [vmem:[#allocation5 + $0x7d0] sm:$0xff]
    %v4657 = vld [vmem:[#allocation5 + $0x7d8] sm:$0xff]
    %v4658 = vld [vmem:[#allocation5 + $0x7e0] sm:$0xff]
    %v4659 = vld [vmem:[#allocation5 + $0x7e8] sm:$0xff]
    %v4660 = vld [vmem:[#allocation5 + $0x7f0] sm:$0xff]
    %v4661 = vld [vmem:[#allocation5 + $0x7f8] sm:$0xff]
    %v4663 = vrot.slane %v4399, 2
    %v4664 = vrot.slane %v4400, 2
    %4667 = vmatprep.subr.mxu0 %v4407
    %4668 = vmatpush1.msra.mxu0 %v4406
    %4669 = vmatprep.subr.mxu0 %v4415
    %4670 = vmatpush1.msra.mxu0 %v4414
    %4671 = vmatprep.subr.mxu0 %v4423
    %4672 = vmatpush1.msra.mxu0 %v4422
    %4673 = vmatprep.subr.mxu0 %v4431
    %4674 = vmatpush1.msra.mxu0 %v4430
    %4675 = vmatprep.subr.mxu0 %v4439
    %4676 = vmatpush1.msra.mxu0 %v4438
    %4677 = vmatprep.subr.mxu0 %v4447
    %4678 = vmatpush1.msra.mxu0 %v4446
    %4679 = vmatprep.subr.mxu0 %v4455
    %4680 = vmatpush1.msra.mxu0 %v4454
    %4681 = vmatprep.subr.mxu0 %v4463
    %4682 = vmatpush1.msra.mxu0 %v4462
    %4683 = vmatprep.subr.mxu0 %v4471
    %4684 = vmatpush1.msra.mxu0 %v4470
    %4685 = vmatprep.subr.mxu0 %v4479
    %4686 = vmatpush1.msra.mxu0 %v4478
    %4687 = vmatprep.subr.mxu0 %v4487
    %4688 = vmatpush1.msra.mxu0 %v4486
    %4689 = vmatprep.subr.mxu0 %v4495
    %4690 = vmatpush1.msra.mxu0 %v4494
    %4691 = vmatprep.subr.mxu0 %v4503
    %4692 = vmatpush1.msra.mxu0 %v4502
    %4693 = vmatprep.subr.mxu0 %v4511
    %4694 = vmatpush1.msra.mxu0 %v4510
    %4695 = vmatprep.subr.mxu0 %v4519
    %4696 = vmatpush1.msra.mxu0 %v4518
    %4697 = vmatprep.subr.mxu0 %v4527
    %4698 = vmatpush1.msra.mxu0 %v4526
    %4699 = vmatprep.subr.mxu0 %v4535
    %4700 = vmatpush1.msra.mxu0 %v4534
    %4701 = vmatprep.subr.mxu0 %v4543
    %4702 = vmatpush1.msra.mxu0 %v4542
    %4703 = vmatprep.subr.mxu0 %v4551
    %4704 = vmatpush1.msra.mxu0 %v4550
    %4705 = vmatprep.subr.mxu0 %v4559
    %4706 = vmatpush1.msra.mxu0 %v4558
    %4707 = vmatprep.subr.mxu0 %v4567
    %4708 = vmatpush1.msra.mxu0 %v4566
    %4709 = vmatprep.subr.mxu0 %v4575
    %4710 = vmatpush1.msra.mxu0 %v4574
    %4711 = vmatprep.subr.mxu0 %v4583
    %4712 = vmatpush1.msra.mxu0 %v4582
    %4713 = vmatprep.subr.mxu0 %v4591
    %4714 = vmatpush1.msra.mxu0 %v4590
    %4715 = vmatprep.subr.mxu0 %v4599
    %4716 = vmatpush1.msra.mxu0 %v4598
    %4717 = vmatprep.subr.mxu0 %v4607
    %4718 = vmatpush1.msra.mxu0 %v4606
    %4719 = vmatprep.subr.mxu0 %v4615
    %4720 = vmatpush1.msra.mxu0 %v4614
    %4721 = vmatprep.subr.mxu0 %v4623
    %4722 = vmatpush1.msra.mxu0 %v4622
    %4723 = vmatprep.subr.mxu0 %v4631
    %4724 = vmatpush1.msra.mxu0 %v4630
    %4725 = vmatprep.subr.mxu0 %v4639
    %4726 = vmatpush1.msra.mxu0 %v4638
    %4727 = vmatprep.subr.mxu0 %v4647
    %4728 = vmatpush1.msra.mxu0 %v4646
    %4729 = vmatprep.subr.mxu0 %v4655
    %4730 = vmatpush1.msra.mxu0 %v4654
    %4731 = vmatprep.mubr.f32.mxu0 %v4664
    %4732 = vmatmul.mubr.f32.gmra.mrb[0].mxu0 %v4663
    %v4733 = vpop.f32.mrb[0].mxu0
    %v4734 = vadd.f32 0.0, %v4733
    %v4735 = vpop.f32.mrb[0].mxu0
    %v4736 = vadd.f32 0.0, %v4735
    %4737 = vdwg.mxu0
    %4738 = vmatprep.subr.mxu0 %v4409
    %4739 = vmatpush1.msra.mxu0 %v4408
    %4740 = vmatprep.subr.mxu0 %v4417
    %4741 = vmatpush1.msra.mxu0 %v4416
    %4742 = vmatprep.subr.mxu0 %v4425
    %4743 = vmatpush1.msra.mxu0 %v4424
    %4744 = vmatprep.subr.mxu0 %v4433
    %4745 = vmatpush1.msra.mxu0 %v4432
    %4746 = vmatprep.subr.mxu0 %v4441
    %4747 = vmatpush1.msra.mxu0 %v4440
    %4748 = vmatprep.subr.mxu0 %v4449
    %4749 = vmatpush1.msra.mxu0 %v4448
    %4750 = vmatprep.subr.mxu0 %v4457
    %4751 = vmatpush1.msra.mxu0 %v4456
    %4752 = vmatprep.subr.mxu0 %v4465
    %4753 = vmatpush1.msra.mxu0 %v4464
    %4754 = vmatprep.subr.mxu0 %v4473
    %4755 = vmatpush1.msra.mxu0 %v4472
    %4756 = vmatprep.subr.mxu0 %v4481
    %4757 = vmatpush1.msra.mxu0 %v4480
    %4758 = vmatprep.subr.mxu0 %v4489
    %4759 = vmatpush1.msra.mxu0 %v4488
    %4760 = vmatprep.subr.mxu0 %v4497
    %4761 = vmatpush1.msra.mxu0 %v4496
    %4762 = vmatprep.subr.mxu0 %v4505
    %4763 = vmatpush1.msra.mxu0 %v4504
    %4764 = vmatprep.subr.mxu0 %v4513
    %4765 = vmatpush1.msra.mxu0 %v4512
    %4766 = vmatprep.subr.mxu0 %v4521
    %4767 = vmatpush1.msra.mxu0 %v4520
    %4768 = vmatprep.subr.mxu0 %v4529
    %4769 = vmatpush1.msra.mxu0 %v4528
    %4770 = vmatprep.subr.mxu0 %v4537
    %4771 = vmatpush1.msra.mxu0 %v4536
    %4772 = vmatprep.subr.mxu0 %v4545
    %4773 = vmatpush1.msra.mxu0 %v4544
    %4774 = vmatprep.subr.mxu0 %v4553
    %4775 = vmatpush1.msra.mxu0 %v4552
    %4776 = vmatprep.subr.mxu0 %v4561
    %4777 = vmatpush1.msra.mxu0 %v4560
    %4778 = vmatprep.subr.mxu0 %v4569
    %4779 = vmatpush1.msra.mxu0 %v4568
    %4780 = vmatprep.subr.mxu0 %v4577
    %4781 = vmatpush1.msra.mxu0 %v4576
    %4782 = vmatprep.subr.mxu0 %v4585
    %4783 = vmatpush1.msra.mxu0 %v4584
    %4784 = vmatprep.subr.mxu0 %v4593
    %4785 = vmatpush1.msra.mxu0 %v4592
    %4786 = vmatprep.subr.mxu0 %v4601
    %4787 = vmatpush1.msra.mxu0 %v4600
    %4788 = vmatprep.subr.mxu0 %v4609
    %4789 = vmatpush1.msra.mxu0 %v4608
    %4790 = vmatprep.subr.mxu0 %v4617
    %4791 = vmatpush1.msra.mxu0 %v4616
    %4792 = vmatprep.subr.mxu0 %v4625
    %4793 = vmatpush1.msra.mxu0 %v4624
    %4794 = vmatprep.subr.mxu0 %v4633
    %4795 = vmatpush1.msra.mxu0 %v4632
    %4796 = vmatprep.subr.mxu0 %v4641
    %4797 = vmatpush1.msra.mxu0 %v4640
    %4798 = vmatprep.subr.mxu0 %v4649
    %4799 = vmatpush1.msra.mxu0 %v4648
    %4800 = vmatprep.subr.mxu0 %v4657
    %4801 = vmatpush1.msra.mxu0 %v4656
    %4802 = vmatprep.mubr.f32.mxu0 %v4664
    %4803 = vmatmul.mubr.f32.gmra.mrb[0].mxu0 %v4663
    %v4804 = vpop.f32.mrb[0].mxu0
    %v4805 = vadd.f32 0.0, %v4804
    %v4806 = vpop.f32.mrb[0].mxu0
    %v4807 = vadd.f32 0.0, %v4806
    %4808 = vdwg.mxu0
    %4809 = vmatprep.subr.mxu0 %v4411
    %4810 = vmatpush1.msra.mxu0 %v4410
    %4811 = vmatprep.subr.mxu0 %v4419
    %4812 = vmatpush1.msra.mxu0 %v4418
    %4813 = vmatprep.subr.mxu0 %v4427
    %4814 = vmatpush1.msra.mxu0 %v4426
    %4815 = vmatprep.subr.mxu0 %v4435
    %4816 = vmatpush1.msra.mxu0 %v4434
    %4817 = vmatprep.subr.mxu0 %v4443
    %4818 = vmatpush1.msra.mxu0 %v4442
    %4819 = vmatprep.subr.mxu0 %v4451
    %4820 = vmatpush1.msra.mxu0 %v4450
    %4821 = vmatprep.subr.mxu0 %v4459
    %4822 = vmatpush1.msra.mxu0 %v4458
    %4823 = vmatprep.subr.mxu0 %v4467
    %4824 = vmatpush1.msra.mxu0 %v4466
    %4825 = vmatprep.subr.mxu0 %v4475
    %4826 = vmatpush1.msra.mxu0 %v4474
    %4827 = vmatprep.subr.mxu0 %v4483
    %4828 = vmatpush1.msra.mxu0 %v4482
    %4829 = vmatprep.subr.mxu0 %v4491
    %4830 = vmatpush1.msra.mxu0 %v4490
    %4831 = vmatprep.subr.mxu0 %v4499
    %4832 = vmatpush1.msra.mxu0 %v4498
    %4833 = vmatprep.subr.mxu0 %v4507
    %4834 = vmatpush1.msra.mxu0 %v4506
    %4835 = vmatprep.subr.mxu0 %v4515
    %4836 = vmatpush1.msra.mxu0 %v4514
    %4837 = vmatprep.subr.mxu0 %v4523
    %4838 = vmatpush1.msra.mxu0 %v4522
    %4839 = vmatprep.subr.mxu0 %v4531
    %4840 = vmatpush1.msra.mxu0 %v4530
    %4841 = vmatprep.subr.mxu0 %v4539
    %4842 = vmatpush1.msra.mxu0 %v4538
    %4843 = vmatprep.subr.mxu0 %v4547
    %4844 = vmatpush1.msra.mxu0 %v4546
    %4845 = vmatprep.subr.mxu0 %v4555
    %4846 = vmatpush1.msra.mxu0 %v4554
    %4847 = vmatprep.subr.mxu0 %v4563
    %4848 = vmatpush1.msra.mxu0 %v4562
    %4849 = vmatprep.subr.mxu0 %v4571
    %4850 = vmatpush1.msra.mxu0 %v4570
    %4851 = vmatprep.subr.mxu0 %v4579
    %4852 = vmatpush1.msra.mxu0 %v4578
    %4853 = vmatprep.subr.mxu0 %v4587
    %4854 = vmatpush1.msra.mxu0 %v4586
    %4855 = vmatprep.subr.mxu0 %v4595
    %4856 = vmatpush1.msra.mxu0 %v4594
    %4857 = vmatprep.subr.mxu0 %v4603
    %4858 = vmatpush1.msra.mxu0 %v4602
    %4859 = vmatprep.subr.mxu0 %v4611
    %4860 = vmatpush1.msra.mxu0 %v4610
    %4861 = vmatprep.subr.mxu0 %v4619
    %4862 = vmatpush1.msra.mxu0 %v4618
    %4863 = vmatprep.subr.mxu0 %v4627
    %4864 = vmatpush1.msra.mxu0 %v4626
    %4865 = vmatprep.subr.mxu0 %v4635
    %4866 = vmatpush1.msra.mxu0 %v4634
    %4867 = vmatprep.subr.mxu0 %v4643
    %4868 = vmatpush1.msra.mxu0 %v4642
    %4869 = vmatprep.subr.mxu0 %v4651
    %4870 = vmatpush1.msra.mxu0 %v4650
    %4871 = vmatprep.subr.mxu0 %v4659
    %4872 = vmatpush1.msra.mxu0 %v4658
    %4873 = vmatprep.mubr.f32.mxu0 %v4664
    %4874 = vmatmul.mubr.f32.gmra.mrb[0].mxu0 %v4663
    %v4875 = vpop.f32.mrb[0].mxu0
    %v4876 = vadd.f32 0.0, %v4875
    %v4877 = vpop.f32.mrb[0].mxu0
    %v4878 = vadd.f32 0.0, %v4877
    %4879 = vdwg.mxu0
    %4880 = vmatprep.subr.mxu0 %v4413
    %4881 = vmatpush1.msra.mxu0 %v4412
    %4882 = vmatprep.subr.mxu0 %v4421
    %4883 = vmatpush1.msra.mxu0 %v4420
    %4884 = vmatprep.subr.mxu0 %v4429
    %4885 = vmatpush1.msra.mxu0 %v4428
    %4886 = vmatprep.subr.mxu0 %v4437
    %4887 = vmatpush1.msra.mxu0 %v4436
    %4888 = vmatprep.subr.mxu0 %v4445
    %4889 = vmatpush1.msra.mxu0 %v4444
    %4890 = vmatprep.subr.mxu0 %v4453
    %4891 = vmatpush1.msra.mxu0 %v4452
    %4892 = vmatprep.subr.mxu0 %v4461
    %4893 = vmatpush1.msra.mxu0 %v4460
    %4894 = vmatprep.subr.mxu0 %v4469
    %4895 = vmatpush1.msra.mxu0 %v4468
    %4896 = vmatprep.subr.mxu0 %v4477
    %4897 = vmatpush1.msra.mxu0 %v4476
    %4898 = vmatprep.subr.mxu0 %v4485
    %4899 = vmatpush1.msra.mxu0 %v4484
    %4900 = vmatprep.subr.mxu0 %v4493
    %4901 = vmatpush1.msra.mxu0 %v4492
    %4902 = vmatprep.subr.mxu0 %v4501
    %4903 = vmatpush1.msra.mxu0 %v4500
    %4904 = vmatprep.subr.mxu0 %v4509
    %4905 = vmatpush1.msra.mxu0 %v4508
    %4906 = vmatprep.subr.mxu0 %v4517
    %4907 = vmatpush1.msra.mxu0 %v4516
    %4908 = vmatprep.subr.mxu0 %v4525
    %4909 = vmatpush1.msra.mxu0 %v4524
    %4910 = vmatprep.subr.mxu0 %v4533
    %4911 = vmatpush1.msra.mxu0 %v4532
    %4912 = vmatprep.subr.mxu0 %v4541
    %4913 = vmatpush1.msra.mxu0 %v4540
    %4914 = vmatprep.subr.mxu0 %v4549
    %4915 = vmatpush1.msra.mxu0 %v4548
    %4916 = vmatprep.subr.mxu0 %v4557
    %4917 = vmatpush1.msra.mxu0 %v4556
    %4918 = vmatprep.subr.mxu0 %v4565
    %4919 = vmatpush1.msra.mxu0 %v4564
    %4920 = vmatprep.subr.mxu0 %v4573
    %4921 = vmatpush1.msra.mxu0 %v4572
    %4922 = vmatprep.subr.mxu0 %v4581
    %4923 = vmatpush1.msra.mxu0 %v4580
    %4924 = vmatprep.subr.mxu0 %v4589
    %4925 = vmatpush1.msra.mxu0 %v4588
    %4926 = vmatprep.subr.mxu0 %v4597
    %4927 = vmatpush1.msra.mxu0 %v4596
    %4928 = vmatprep.subr.mxu0 %v4605
    %4929 = vmatpush1.msra.mxu0 %v4604
    %4930 = vmatprep.subr.mxu0 %v4613
    %4931 = vmatpush1.msra.mxu0 %v4612
    %4932 = vmatprep.subr.mxu0 %v4621
    %4933 = vmatpush1.msra.mxu0 %v4620
    %4934 = vmatprep.subr.mxu0 %v4629
    %4935 = vmatpush1.msra.mxu0 %v4628
    %4936 = vmatprep.subr.mxu0 %v4637
    %4937 = vmatpush1.msra.mxu0 %v4636
    %4938 = vmatprep.subr.mxu0 %v4645
    %4939 = vmatpush1.msra.mxu0 %v4644
    %4940 = vmatprep.subr.mxu0 %v4653
    %4941 = vmatpush1.msra.mxu0 %v4652
    %4942 = vmatprep.subr.mxu0 %v4661
    %4943 = vmatpush1.msra.mxu0 %v4660
    %4944 = vmatprep.mubr.f32.mxu0 %v4664
    %4945 = vmatmul.mubr.f32.gmra.mrb[0].mxu0 %v4663
    %v4946 = vpop.f32.mrb[0].mxu0
    %v4947 = vadd.f32 0.0, %v4946
    %v4948 = vpop.f32.mrb[0].mxu0
    %v4949 = vadd.f32 0.0, %v4948
    %4950 = vdwg.mxu0
    %v4959 = vrot.slane %v4734, 4
    %v4960 = vrot.slane %v4736, 4
    %v4961 = vrot.slane %v4805, 4
    %v4962 = vrot.slane %v4807, 4
    %v4963 = vrot.slane %v4876, 4
    %v4964 = vrot.slane %v4878, 4
    %v4965 = vrot.slane %v4947, 4
    %v4966 = vrot.slane %v4949, 4
    %v4975 = vadd.f32 %v426, %v4959
    %v4976 = vadd.f32 %v428, %v4960
    %v4977 = vadd.f32 %v503, %v4961
    %v4978 = vadd.f32 %v505, %v4962
    %v4979 = vadd.f32 %v580, %v4963
    %v4980 = vadd.f32 %v582, %v4964
    %v4981 = vadd.f32 %v657, %v4965
    %v4982 = vadd.f32 %v659, %v4966
    %v4983 = vxor.u32 %v4975, 2147483648
    %v4984 = vxor.u32 %v4976, 2147483648
    %v4985 = vxor.u32 %v4977, 2147483648
    %v4986 = vxor.u32 %v4978, 2147483648
    %v4987 = vxor.u32 %v4979, 2147483648
    %v4988 = vxor.u32 %v4980, 2147483648
    %v4989 = vmul.f32 %v4983, 1.442695
    %v4990 = vpow.pop %v4989
    %v4991 = vmul.f32 %v4984, 1.442695
    %v4992 = vpow.pop %v4991
    %v4993 = vmul.f32 %v4985, 1.442695
    %v4994 = vpow.pop %v4993
    %v4995 = vmul.f32 %v4986, 1.442695
    %v4996 = vpow.pop %v4995
    %v4997 = vmul.f32 %v4987, 1.442695
    %v4998 = vpow.pop %v4997
    %v4999 = vmul.f32 %v4988, 1.442695
    %v5000 = vpow.pop %v4999
    %v5001 = vadd.f32 %v4990, 1.0
    %v5002 = vadd.f32 %v4992, 1.0
    %v5003 = vadd.f32 %v4994, 1.0
    %v5004 = vadd.f32 %v4996, 1.0
    %v5005 = vadd.f32 %v4998, 1.0
    %v5006 = vadd.f32 %v5000, 1.0
    %v5007 = vrcp.pop %v5001
    %v5008 = vmul.f32 1.0, %v5007
    %v5009 = vrcp.pop %v5002
    %v5010 = vmul.f32 1.0, %v5009
    %v5011 = vrcp.pop %v5003
    %v5012 = vmul.f32 1.0, %v5011
    %v5013 = vrcp.pop %v5004
    %v5014 = vmul.f32 1.0, %v5013
    %v5015 = vrcp.pop %v5005
    %v5016 = vmul.f32 1.0, %v5015
    %v5017 = vrcp.pop %v5006
    %v5018 = vmul.f32 1.0, %v5017
    %v5019 = vtanh.pop %v4981
    %v5020 = vtanh.pop %v4982
    %v5023 = vrot.slane %v4395, 6
    %v5024 = vrot.slane %v4396, 6
    %v5027 = vmul.f32 %v5012, %v5023
    %v5028 = vmul.f32 %v5014, %v5024
    %v5029 = vmul.f32 %v5008, %v5019
    %v5030 = vmul.f32 %v5010, %v5020
    %v5031 = vadd.f32 %v5027, %v5029
    %v5032 = vadd.f32 %v5028, %v5030
    %v5033 = vtanh.pop %v5031
    %v5034 = vtanh.pop %v5032
    %v5035 = vmul.f32 %v5016, %v5033
    %v5036 = vmul.f32 %v5018, %v5034
    %5037 = vst [vmem:[#allocation2 + $0x10] sm:$0x30] %v5035
    %v5039 = vrot.slane %v5036, 2
    %5041 = vst [vmem:[#allocation2 + $0x8] sm:$0xc] %v5039
    %v5042 = vld [vmem:[#allocation5] sm:$0xff]
    %v5043 = vld [vmem:[#allocation5 + $0x8] sm:$0xff]
    %v5044 = vld [vmem:[#allocation5 + $0x10] sm:$0xff]
    %v5045 = vld [vmem:[#allocation5 + $0x18] sm:$0xff]
    %v5046 = vld [vmem:[#allocation5 + $0x20] sm:$0xff]
    %v5047 = vld [vmem:[#allocation5 + $0x28] sm:$0xff]
    %v5048 = vld [vmem:[#allocation5 + $0x30] sm:$0xff]
    %v5049 = vld [vmem:[#allocation5 + $0x38] sm:$0xff]
    %v5050 = vld [vmem:[#allocation5 + $0x40] sm:$0xff]
    %v5051 = vld [vmem:[#allocation5 + $0x48] sm:$0xff]
    %v5052 = vld [vmem:[#allocation5 + $0x50] sm:$0xff]
    %v5053 = vld [vmem:[#allocation5 + $0x58] sm:$0xff]
    %v5054 = vld [vmem:[#allocation5 + $0x60] sm:$0xff]
    %v5055 = vld [vmem:[#allocation5 + $0x68] sm:$0xff]
    %v5056 = vld [vmem:[#allocation5 + $0x70] sm:$0xff]
    %v5057 = vld [vmem:[#allocation5 + $0x78] sm:$0xff]
    %v5058 = vld [vmem:[#allocation5 + $0x80] sm:$0xff]
    %v5059 = vld [vmem:[#allocation5 + $0x88] sm:$0xff]
    %v5060 = vld [vmem:[#allocation5 + $0x90] sm:$0xff]
    %v5061 = vld [vmem:[#allocation5 + $0x98] sm:$0xff]
    %v5062 = vld [vmem:[#allocation5 + $0xa0] sm:$0xff]
    %v5063 = vld [vmem:[#allocation5 + $0xa8] sm:$0xff]
    %v5064 = vld [vmem:[#allocation5 + $0xb0] sm:$0xff]
    %v5065 = vld [vmem:[#allocation5 + $0xb8] sm:$0xff]
    %v5066 = vld [vmem:[#allocation5 + $0xc0] sm:$0xff]
    %v5067 = vld [vmem:[#allocation5 + $0xc8] sm:$0xff]
    %v5068 = vld [vmem:[#allocation5 + $0xd0] sm:$0xff]
    %v5069 = vld [vmem:[#allocation5 + $0xd8] sm:$0xff]
    %v5070 = vld [vmem:[#allocation5 + $0xe0] sm:$0xff]
    %v5071 = vld [vmem:[#allocation5 + $0xe8] sm:$0xff]
    %v5072 = vld [vmem:[#allocation5 + $0xf0] sm:$0xff]
    %v5073 = vld [vmem:[#allocation5 + $0xf8] sm:$0xff]
    %v5074 = vld [vmem:[#allocation5 + $0x100] sm:$0xff]
    %v5075 = vld [vmem:[#allocation5 + $0x108] sm:$0xff]
    %v5076 = vld [vmem:[#allocation5 + $0x110] sm:$0xff]
    %v5077 = vld [vmem:[#allocation5 + $0x118] sm:$0xff]
    %v5078 = vld [vmem:[#allocation5 + $0x120] sm:$0xff]
    %v5079 = vld [vmem:[#allocation5 + $0x128] sm:$0xff]
    %v5080 = vld [vmem:[#allocation5 + $0x130] sm:$0xff]
    %v5081 = vld [vmem:[#allocation5 + $0x138] sm:$0xff]
    %v5082 = vld [vmem:[#allocation5 + $0x140] sm:$0xff]
    %v5083 = vld [vmem:[#allocation5 + $0x148] sm:$0xff]
    %v5084 = vld [vmem:[#allocation5 + $0x150] sm:$0xff]
    %v5085 = vld [vmem:[#allocation5 + $0x158] sm:$0xff]
    %v5086 = vld [vmem:[#allocation5 + $0x160] sm:$0xff]
    %v5087 = vld [vmem:[#allocation5 + $0x168] sm:$0xff]
    %v5088 = vld [vmem:[#allocation5 + $0x170] sm:$0xff]
    %v5089 = vld [vmem:[#allocation5 + $0x178] sm:$0xff]
    %v5090 = vld [vmem:[#allocation5 + $0x180] sm:$0xff]
    %v5091 = vld [vmem:[#allocation5 + $0x188] sm:$0xff]
    %v5092 = vld [vmem:[#allocation5 + $0x190] sm:$0xff]
    %v5093 = vld [vmem:[#allocation5 + $0x198] sm:$0xff]
    %v5094 = vld [vmem:[#allocation5 + $0x1a0] sm:$0xff]
    %v5095 = vld [vmem:[#allocation5 + $0x1a8] sm:$0xff]
    %v5096 = vld [vmem:[#allocation5 + $0x1b0] sm:$0xff]
    %v5097 = vld [vmem:[#allocation5 + $0x1b8] sm:$0xff]
    %v5098 = vld [vmem:[#allocation5 + $0x1c0] sm:$0xff]
    %v5099 = vld [vmem:[#allocation5 + $0x1c8] sm:$0xff]
    %v5100 = vld [vmem:[#allocation5 + $0x1d0] sm:$0xff]
    %v5101 = vld [vmem:[#allocation5 + $0x1d8] sm:$0xff]
    %v5102 = vld [vmem:[#allocation5 + $0x1e0] sm:$0xff]
    %v5103 = vld [vmem:[#allocation5 + $0x1e8] sm:$0xff]
    %v5104 = vld [vmem:[#allocation5 + $0x1f0] sm:$0xff]
    %v5105 = vld [vmem:[#allocation5 + $0x1f8] sm:$0xff]
    %v5106 = vld [vmem:[#allocation5 + $0x200] sm:$0xff]
    %v5107 = vld [vmem:[#allocation5 + $0x208] sm:$0xff]
    %v5108 = vld [vmem:[#allocation5 + $0x210] sm:$0xff]
    %v5109 = vld [vmem:[#allocation5 + $0x218] sm:$0xff]
    %v5110 = vld [vmem:[#allocation5 + $0x220] sm:$0xff]
    %v5111 = vld [vmem:[#allocation5 + $0x228] sm:$0xff]
    %v5112 = vld [vmem:[#allocation5 + $0x230] sm:$0xff]
    %v5113 = vld [vmem:[#allocation5 + $0x238] sm:$0xff]
    %v5114 = vld [vmem:[#allocation5 + $0x240] sm:$0xff]
    %v5115 = vld [vmem:[#allocation5 + $0x248] sm:$0xff]
    %v5116 = vld [vmem:[#allocation5 + $0x250] sm:$0xff]
    %v5117 = vld [vmem:[#allocation5 + $0x258] sm:$0xff]
    %v5118 = vld [vmem:[#allocation5 + $0x260] sm:$0xff]
    %v5119 = vld [vmem:[#allocation5 + $0x268] sm:$0xff]
    %v5120 = vld [vmem:[#allocation5 + $0x270] sm:$0xff]
    %v5121 = vld [vmem:[#allocation5 + $0x278] sm:$0xff]
    %v5122 = vld [vmem:[#allocation5 + $0x280] sm:$0xff]
    %v5123 = vld [vmem:[#allocation5 + $0x288] sm:$0xff]
    %v5124 = vld [vmem:[#allocation5 + $0x290] sm:$0xff]
    %v5125 = vld [vmem:[#allocation5 + $0x298] sm:$0xff]
    %v5126 = vld [vmem:[#allocation5 + $0x2a0] sm:$0xff]
    %v5127 = vld [vmem:[#allocation5 + $0x2a8] sm:$0xff]
    %v5128 = vld [vmem:[#allocation5 + $0x2b0] sm:$0xff]
    %v5129 = vld [vmem:[#allocation5 + $0x2b8] sm:$0xff]
    %v5130 = vld [vmem:[#allocation5 + $0x2c0] sm:$0xff]
    %v5131 = vld [vmem:[#allocation5 + $0x2c8] sm:$0xff]
    %v5132 = vld [vmem:[#allocation5 + $0x2d0] sm:$0xff]
    %v5133 = vld [vmem:[#allocation5 + $0x2d8] sm:$0xff]
    %v5134 = vld [vmem:[#allocation5 + $0x2e0] sm:$0xff]
    %v5135 = vld [vmem:[#allocation5 + $0x2e8] sm:$0xff]
    %v5136 = vld [vmem:[#allocation5 + $0x2f0] sm:$0xff]
    %v5137 = vld [vmem:[#allocation5 + $0x2f8] sm:$0xff]
    %v5138 = vld [vmem:[#allocation5 + $0x300] sm:$0xff]
    %v5139 = vld [vmem:[#allocation5 + $0x308] sm:$0xff]
    %v5140 = vld [vmem:[#allocation5 + $0x310] sm:$0xff]
    %v5141 = vld [vmem:[#allocation5 + $0x318] sm:$0xff]
    %v5142 = vld [vmem:[#allocation5 + $0x320] sm:$0xff]
    %v5143 = vld [vmem:[#allocation5 + $0x328] sm:$0xff]
    %v5144 = vld [vmem:[#allocation5 + $0x330] sm:$0xff]
    %v5145 = vld [vmem:[#allocation5 + $0x338] sm:$0xff]
    %v5146 = vld [vmem:[#allocation5 + $0x340] sm:$0xff]
    %v5147 = vld [vmem:[#allocation5 + $0x348] sm:$0xff]
    %v5148 = vld [vmem:[#allocation5 + $0x350] sm:$0xff]
    %v5149 = vld [vmem:[#allocation5 + $0x358] sm:$0xff]
    %v5150 = vld [vmem:[#allocation5 + $0x360] sm:$0xff]
    %v5151 = vld [vmem:[#allocation5 + $0x368] sm:$0xff]
    %v5152 = vld [vmem:[#allocation5 + $0x370] sm:$0xff]
    %v5153 = vld [vmem:[#allocation5 + $0x378] sm:$0xff]
    %v5154 = vld [vmem:[#allocation5 + $0x380] sm:$0xff]
    %v5155 = vld [vmem:[#allocation5 + $0x388] sm:$0xff]
    %v5156 = vld [vmem:[#allocation5 + $0x390] sm:$0xff]
    %v5157 = vld [vmem:[#allocation5 + $0x398] sm:$0xff]
    %v5158 = vld [vmem:[#allocation5 + $0x3a0] sm:$0xff]
    %v5159 = vld [vmem:[#allocation5 + $0x3a8] sm:$0xff]
    %v5160 = vld [vmem:[#allocation5 + $0x3b0] sm:$0xff]
    %v5161 = vld [vmem:[#allocation5 + $0x3b8] sm:$0xff]
    %v5162 = vld [vmem:[#allocation5 + $0x3c0] sm:$0xff]
    %v5163 = vld [vmem:[#allocation5 + $0x3c8] sm:$0xff]
    %v5164 = vld [vmem:[#allocation5 + $0x3d0] sm:$0xff]
    %v5165 = vld [vmem:[#allocation5 + $0x3d8] sm:$0xff]
    %v5166 = vld [vmem:[#allocation5 + $0x3e0] sm:$0xff]
    %v5167 = vld [vmem:[#allocation5 + $0x3e8] sm:$0xff]
    %v5168 = vld [vmem:[#allocation5 + $0x3f0] sm:$0xff]
    %v5169 = vld [vmem:[#allocation5 + $0x3f8] sm:$0xff]
    %v5170 = vld [vmem:[#allocation5 + $0x400] sm:$0xff]
    %v5171 = vld [vmem:[#allocation5 + $0x408] sm:$0xff]
    %v5172 = vld [vmem:[#allocation5 + $0x410] sm:$0xff]
    %v5173 = vld [vmem:[#allocation5 + $0x418] sm:$0xff]
    %v5174 = vld [vmem:[#allocation5 + $0x420] sm:$0xff]
    %v5175 = vld [vmem:[#allocation5 + $0x428] sm:$0xff]
    %v5176 = vld [vmem:[#allocation5 + $0x430] sm:$0xff]
    %v5177 = vld [vmem:[#allocation5 + $0x438] sm:$0xff]
    %v5178 = vld [vmem:[#allocation5 + $0x440] sm:$0xff]
    %v5179 = vld [vmem:[#allocation5 + $0x448] sm:$0xff]
    %v5180 = vld [vmem:[#allocation5 + $0x450] sm:$0xff]
    %v5181 = vld [vmem:[#allocation5 + $0x458] sm:$0xff]
    %v5182 = vld [vmem:[#allocation5 + $0x460] sm:$0xff]
    %v5183 = vld [vmem:[#allocation5 + $0x468] sm:$0xff]
    %v5184 = vld [vmem:[#allocation5 + $0x470] sm:$0xff]
    %v5185 = vld [vmem:[#allocation5 + $0x478] sm:$0xff]
    %v5186 = vld [vmem:[#allocation5 + $0x480] sm:$0xff]
    %v5187 = vld [vmem:[#allocation5 + $0x488] sm:$0xff]
    %v5188 = vld [vmem:[#allocation5 + $0x490] sm:$0xff]
    %v5189 = vld [vmem:[#allocation5 + $0x498] sm:$0xff]
    %v5190 = vld [vmem:[#allocation5 + $0x4a0] sm:$0xff]
    %v5191 = vld [vmem:[#allocation5 + $0x4a8] sm:$0xff]
    %v5192 = vld [vmem:[#allocation5 + $0x4b0] sm:$0xff]
    %v5193 = vld [vmem:[#allocation5 + $0x4b8] sm:$0xff]
    %v5194 = vld [vmem:[#allocation5 + $0x4c0] sm:$0xff]
    %v5195 = vld [vmem:[#allocation5 + $0x4c8] sm:$0xff]
    %v5196 = vld [vmem:[#allocation5 + $0x4d0] sm:$0xff]
    %v5197 = vld [vmem:[#allocation5 + $0x4d8] sm:$0xff]
    %v5198 = vld [vmem:[#allocation5 + $0x4e0] sm:$0xff]
    %v5199 = vld [vmem:[#allocation5 + $0x4e8] sm:$0xff]
    %v5200 = vld [vmem:[#allocation5 + $0x4f0] sm:$0xff]
    %v5201 = vld [vmem:[#allocation5 + $0x4f8] sm:$0xff]
    %v5202 = vld [vmem:[#allocation5 + $0x500] sm:$0xff]
    %v5203 = vld [vmem:[#allocation5 + $0x508] sm:$0xff]
    %v5204 = vld [vmem:[#allocation5 + $0x510] sm:$0xff]
    %v5205 = vld [vmem:[#allocation5 + $0x518] sm:$0xff]
    %v5206 = vld [vmem:[#allocation5 + $0x520] sm:$0xff]
    %v5207 = vld [vmem:[#allocation5 + $0x528] sm:$0xff]
    %v5208 = vld [vmem:[#allocation5 + $0x530] sm:$0xff]
    %v5209 = vld [vmem:[#allocation5 + $0x538] sm:$0xff]
    %v5210 = vld [vmem:[#allocation5 + $0x540] sm:$0xff]
    %v5211 = vld [vmem:[#allocation5 + $0x548] sm:$0xff]
    %v5212 = vld [vmem:[#allocation5 + $0x550] sm:$0xff]
    %v5213 = vld [vmem:[#allocation5 + $0x558] sm:$0xff]
    %v5214 = vld [vmem:[#allocation5 + $0x560] sm:$0xff]
    %v5215 = vld [vmem:[#allocation5 + $0x568] sm:$0xff]
    %v5216 = vld [vmem:[#allocation5 + $0x570] sm:$0xff]
    %v5217 = vld [vmem:[#allocation5 + $0x578] sm:$0xff]
    %v5218 = vld [vmem:[#allocation5 + $0x580] sm:$0xff]
    %v5219 = vld [vmem:[#allocation5 + $0x588] sm:$0xff]
    %v5220 = vld [vmem:[#allocation5 + $0x590] sm:$0xff]
    %v5221 = vld [vmem:[#allocation5 + $0x598] sm:$0xff]
    %v5222 = vld [vmem:[#allocation5 + $0x5a0] sm:$0xff]
    %v5223 = vld [vmem:[#allocation5 + $0x5a8] sm:$0xff]
    %v5224 = vld [vmem:[#allocation5 + $0x5b0] sm:$0xff]
    %v5225 = vld [vmem:[#allocation5 + $0x5b8] sm:$0xff]
    %v5226 = vld [vmem:[#allocation5 + $0x5c0] sm:$0xff]
    %v5227 = vld [vmem:[#allocation5 + $0x5c8] sm:$0xff]
    %v5228 = vld [vmem:[#allocation5 + $0x5d0] sm:$0xff]
    %v5229 = vld [vmem:[#allocation5 + $0x5d8] sm:$0xff]
    %v5230 = vld [vmem:[#allocation5 + $0x5e0] sm:$0xff]
    %v5231 = vld [vmem:[#allocation5 + $0x5e8] sm:$0xff]
    %v5232 = vld [vmem:[#allocation5 + $0x5f0] sm:$0xff]
    %v5233 = vld [vmem:[#allocation5 + $0x5f8] sm:$0xff]
    %v5234 = vld [vmem:[#allocation5 + $0x600] sm:$0xff]
    %v5235 = vld [vmem:[#allocation5 + $0x608] sm:$0xff]
    %v5236 = vld [vmem:[#allocation5 + $0x610] sm:$0xff]
    %v5237 = vld [vmem:[#allocation5 + $0x618] sm:$0xff]
    %v5238 = vld [vmem:[#allocation5 + $0x620] sm:$0xff]
    %v5239 = vld [vmem:[#allocation5 + $0x628] sm:$0xff]
    %v5240 = vld [vmem:[#allocation5 + $0x630] sm:$0xff]
    %v5241 = vld [vmem:[#allocation5 + $0x638] sm:$0xff]
    %v5242 = vld [vmem:[#allocation5 + $0x640] sm:$0xff]
    %v5243 = vld [vmem:[#allocation5 + $0x648] sm:$0xff]
    %v5244 = vld [vmem:[#allocation5 + $0x650] sm:$0xff]
    %v5245 = vld [vmem:[#allocation5 + $0x658] sm:$0xff]
    %v5246 = vld [vmem:[#allocation5 + $0x660] sm:$0xff]
    %v5247 = vld [vmem:[#allocation5 + $0x668] sm:$0xff]
    %v5248 = vld [vmem:[#allocation5 + $0x670] sm:$0xff]
    %v5249 = vld [vmem:[#allocation5 + $0x678] sm:$0xff]
    %v5250 = vld [vmem:[#allocation5 + $0x680] sm:$0xff]
    %v5251 = vld [vmem:[#allocation5 + $0x688] sm:$0xff]
    %v5252 = vld [vmem:[#allocation5 + $0x690] sm:$0xff]
    %v5253 = vld [vmem:[#allocation5 + $0x698] sm:$0xff]
    %v5254 = vld [vmem:[#allocation5 + $0x6a0] sm:$0xff]
    %v5255 = vld [vmem:[#allocation5 + $0x6a8] sm:$0xff]
    %v5256 = vld [vmem:[#allocation5 + $0x6b0] sm:$0xff]
    %v5257 = vld [vmem:[#allocation5 + $0x6b8] sm:$0xff]
    %v5258 = vld [vmem:[#allocation5 + $0x6c0] sm:$0xff]
    %v5259 = vld [vmem:[#allocation5 + $0x6c8] sm:$0xff]
    %v5260 = vld [vmem:[#allocation5 + $0x6d0] sm:$0xff]
    %v5261 = vld [vmem:[#allocation5 + $0x6d8] sm:$0xff]
    %v5262 = vld [vmem:[#allocation5 + $0x6e0] sm:$0xff]
    %v5263 = vld [vmem:[#allocation5 + $0x6e8] sm:$0xff]
    %v5264 = vld [vmem:[#allocation5 + $0x6f0] sm:$0xff]
    %v5265 = vld [vmem:[#allocation5 + $0x6f8] sm:$0xff]
    %v5266 = vld [vmem:[#allocation5 + $0x700] sm:$0xff]
    %v5267 = vld [vmem:[#allocation5 + $0x708] sm:$0xff]
    %v5268 = vld [vmem:[#allocation5 + $0x710] sm:$0xff]
    %v5269 = vld [vmem:[#allocation5 + $0x718] sm:$0xff]
    %v5270 = vld [vmem:[#allocation5 + $0x720] sm:$0xff]
    %v5271 = vld [vmem:[#allocation5 + $0x728] sm:$0xff]
    %v5272 = vld [vmem:[#allocation5 + $0x730] sm:$0xff]
    %v5273 = vld [vmem:[#allocation5 + $0x738] sm:$0xff]
    %v5274 = vld [vmem:[#allocation5 + $0x740] sm:$0xff]
    %v5275 = vld [vmem:[#allocation5 + $0x748] sm:$0xff]
    %v5276 = vld [vmem:[#allocation5 + $0x750] sm:$0xff]
    %v5277 = vld [vmem:[#allocation5 + $0x758] sm:$0xff]
    %v5278 = vld [vmem:[#allocation5 + $0x760] sm:$0xff]
    %v5279 = vld [vmem:[#allocation5 + $0x768] sm:$0xff]
    %v5280 = vld [vmem:[#allocation5 + $0x770] sm:$0xff]
    %v5281 = vld [vmem:[#allocation5 + $0x778] sm:$0xff]
    %v5282 = vld [vmem:[#allocation5 + $0x780] sm:$0xff]
    %v5283 = vld [vmem:[#allocation5 + $0x788] sm:$0xff]
    %v5284 = vld [vmem:[#allocation5 + $0x790] sm:$0xff]
    %v5285 = vld [vmem:[#allocation5 + $0x798] sm:$0xff]
    %v5286 = vld [vmem:[#allocation5 + $0x7a0] sm:$0xff]
    %v5287 = vld [vmem:[#allocation5 + $0x7a8] sm:$0xff]
    %v5288 = vld [vmem:[#allocation5 + $0x7b0] sm:$0xff]
    %v5289 = vld [vmem:[#allocation5 + $0x7b8] sm:$0xff]
    %v5290 = vld [vmem:[#allocation5 + $0x7c0] sm:$0xff]
    %v5291 = vld [vmem:[#allocation5 + $0x7c8] sm:$0xff]
    %v5292 = vld [vmem:[#allocation5 + $0x7d0] sm:$0xff]
    %v5293 = vld [vmem:[#allocation5 + $0x7d8] sm:$0xff]
    %v5294 = vld [vmem:[#allocation5 + $0x7e0] sm:$0xff]
    %v5295 = vld [vmem:[#allocation5 + $0x7e8] sm:$0xff]
    %v5296 = vld [vmem:[#allocation5 + $0x7f0] sm:$0xff]
    %v5297 = vld [vmem:[#allocation5 + $0x7f8] sm:$0xff]
    %v5299 = vrot.slane %v5035, 4
    %v5300 = vrot.slane %v5036, 4
    %5303 = vmatprep.subr.mxu0 %v5043
    %5304 = vmatpush1.msra.mxu0 %v5042
    %5305 = vmatprep.subr.mxu0 %v5051
    %5306 = vmatpush1.msra.mxu0 %v5050
    %5307 = vmatprep.subr.mxu0 %v5059
    %5308 = vmatpush1.msra.mxu0 %v5058
    %5309 = vmatprep.subr.mxu0 %v5067
    %5310 = vmatpush1.msra.mxu0 %v5066
    %5311 = vmatprep.subr.mxu0 %v5075
    %5312 = vmatpush1.msra.mxu0 %v5074
    %5313 = vmatprep.subr.mxu0 %v5083
    %5314 = vmatpush1.msra.mxu0 %v5082
    %5315 = vmatprep.subr.mxu0 %v5091
    %5316 = vmatpush1.msra.mxu0 %v5090
    %5317 = vmatprep.subr.mxu0 %v5099
    %5318 = vmatpush1.msra.mxu0 %v5098
    %5319 = vmatprep.subr.mxu0 %v5107
    %5320 = vmatpush1.msra.mxu0 %v5106
    %5321 = vmatprep.subr.mxu0 %v5115
    %5322 = vmatpush1.msra.mxu0 %v5114
    %5323 = vmatprep.subr.mxu0 %v5123
    %5324 = vmatpush1.msra.mxu0 %v5122
    %5325 = vmatprep.subr.mxu0 %v5131
    %5326 = vmatpush1.msra.mxu0 %v5130
    %5327 = vmatprep.subr.mxu0 %v5139
    %5328 = vmatpush1.msra.mxu0 %v5138
    %5329 = vmatprep.subr.mxu0 %v5147
    %5330 = vmatpush1.msra.mxu0 %v5146
    %5331 = vmatprep.subr.mxu0 %v5155
    %5332 = vmatpush1.msra.mxu0 %v5154
    %5333 = vmatprep.subr.mxu0 %v5163
    %5334 = vmatpush1.msra.mxu0 %v5162
    %5335 = vmatprep.subr.mxu0 %v5171
    %5336 = vmatpush1.msra.mxu0 %v5170
    %5337 = vmatprep.subr.mxu0 %v5179
    %5338 = vmatpush1.msra.mxu0 %v5178
    %5339 = vmatprep.subr.mxu0 %v5187
    %5340 = vmatpush1.msra.mxu0 %v5186
    %5341 = vmatprep.subr.mxu0 %v5195
    %5342 = vmatpush1.msra.mxu0 %v5194
    %5343 = vmatprep.subr.mxu0 %v5203
    %5344 = vmatpush1.msra.mxu0 %v5202
    %5345 = vmatprep.subr.mxu0 %v5211
    %5346 = vmatpush1.msra.mxu0 %v5210
    %5347 = vmatprep.subr.mxu0 %v5219
    %5348 = vmatpush1.msra.mxu0 %v5218
    %5349 = vmatprep.subr.mxu0 %v5227
    %5350 = vmatpush1.msra.mxu0 %v5226
    %5351 = vmatprep.subr.mxu0 %v5235
    %5352 = vmatpush1.msra.mxu0 %v5234
    %5353 = vmatprep.subr.mxu0 %v5243
    %5354 = vmatpush1.msra.mxu0 %v5242
    %5355 = vmatprep.subr.mxu0 %v5251
    %5356 = vmatpush1.msra.mxu0 %v5250
    %5357 = vmatprep.subr.mxu0 %v5259
    %5358 = vmatpush1.msra.mxu0 %v5258
    %5359 = vmatprep.subr.mxu0 %v5267
    %5360 = vmatpush1.msra.mxu0 %v5266
    %5361 = vmatprep.subr.mxu0 %v5275
    %5362 = vmatpush1.msra.mxu0 %v5274
    %5363 = vmatprep.subr.mxu0 %v5283
    %5364 = vmatpush1.msra.mxu0 %v5282
    %5365 = vmatprep.subr.mxu0 %v5291
    %5366 = vmatpush1.msra.mxu0 %v5290
    %5367 = vmatprep.mubr.f32.mxu0 %v5300
    %5368 = vmatmul.mubr.f32.gmra.mrb[0].mxu0 %v5299
    %v5369 = vpop.f32.mrb[0].mxu0
    %v5370 = vadd.f32 0.0, %v5369
    %v5371 = vpop.f32.mrb[0].mxu0
    %v5372 = vadd.f32 0.0, %v5371
    %5373 = vdwg.mxu0
    %5374 = vmatprep.subr.mxu0 %v5045
    %5375 = vmatpush1.msra.mxu0 %v5044
    %5376 = vmatprep.subr.mxu0 %v5053
    %5377 = vmatpush1.msra.mxu0 %v5052
    %5378 = vmatprep.subr.mxu0 %v5061
    %5379 = vmatpush1.msra.mxu0 %v5060
    %5380 = vmatprep.subr.mxu0 %v5069
    %5381 = vmatpush1.msra.mxu0 %v5068
    %5382 = vmatprep.subr.mxu0 %v5077
    %5383 = vmatpush1.msra.mxu0 %v5076
    %5384 = vmatprep.subr.mxu0 %v5085
    %5385 = vmatpush1.msra.mxu0 %v5084
    %5386 = vmatprep.subr.mxu0 %v5093
    %5387 = vmatpush1.msra.mxu0 %v5092
    %5388 = vmatprep.subr.mxu0 %v5101
    %5389 = vmatpush1.msra.mxu0 %v5100
    %5390 = vmatprep.subr.mxu0 %v5109
    %5391 = vmatpush1.msra.mxu0 %v5108
    %5392 = vmatprep.subr.mxu0 %v5117
    %5393 = vmatpush1.msra.mxu0 %v5116
    %5394 = vmatprep.subr.mxu0 %v5125
    %5395 = vmatpush1.msra.mxu0 %v5124
    %5396 = vmatprep.subr.mxu0 %v5133
    %5397 = vmatpush1.msra.mxu0 %v5132
    %5398 = vmatprep.subr.mxu0 %v5141
    %5399 = vmatpush1.msra.mxu0 %v5140
    %5400 = vmatprep.subr.mxu0 %v5149
    %5401 = vmatpush1.msra.mxu0 %v5148
    %5402 = vmatprep.subr.mxu0 %v5157
    %5403 = vmatpush1.msra.mxu0 %v5156
    %5404 = vmatprep.subr.mxu0 %v5165
    %5405 = vmatpush1.msra.mxu0 %v5164
    %5406 = vmatprep.subr.mxu0 %v5173
    %5407 = vmatpush1.msra.mxu0 %v5172
    %5408 = vmatprep.subr.mxu0 %v5181
    %5409 = vmatpush1.msra.mxu0 %v5180
    %5410 = vmatprep.subr.mxu0 %v5189
    %5411 = vmatpush1.msra.mxu0 %v5188
    %5412 = vmatprep.subr.mxu0 %v5197
    %5413 = vmatpush1.msra.mxu0 %v5196
    %5414 = vmatprep.subr.mxu0 %v5205
    %5415 = vmatpush1.msra.mxu0 %v5204
    %5416 = vmatprep.subr.mxu0 %v5213
    %5417 = vmatpush1.msra.mxu0 %v5212
    %5418 = vmatprep.subr.mxu0 %v5221
    %5419 = vmatpush1.msra.mxu0 %v5220
    %5420 = vmatprep.subr.mxu0 %v5229
    %5421 = vmatpush1.msra.mxu0 %v5228
    %5422 = vmatprep.subr.mxu0 %v5237
    %5423 = vmatpush1.msra.mxu0 %v5236
    %5424 = vmatprep.subr.mxu0 %v5245
    %5425 = vmatpush1.msra.mxu0 %v5244
    %5426 = vmatprep.subr.mxu0 %v5253
    %5427 = vmatpush1.msra.mxu0 %v5252
    %5428 = vmatprep.subr.mxu0 %v5261
    %5429 = vmatpush1.msra.mxu0 %v5260
    %5430 = vmatprep.subr.mxu0 %v5269
    %5431 = vmatpush1.msra.mxu0 %v5268
    %5432 = vmatprep.subr.mxu0 %v5277
    %5433 = vmatpush1.msra.mxu0 %v5276
    %5434 = vmatprep.subr.mxu0 %v5285
    %5435 = vmatpush1.msra.mxu0 %v5284
    %5436 = vmatprep.subr.mxu0 %v5293
    %5437 = vmatpush1.msra.mxu0 %v5292
    %5438 = vmatprep.mubr.f32.mxu0 %v5300
    %5439 = vmatmul.mubr.f32.gmra.mrb[0].mxu0 %v5299
    %v5440 = vpop.f32.mrb[0].mxu0
    %v5441 = vadd.f32 0.0, %v5440
    %v5442 = vpop.f32.mrb[0].mxu0
    %v5443 = vadd.f32 0.0, %v5442
    %5444 = vdwg.mxu0
    %5445 = vmatprep.subr.mxu0 %v5047
    %5446 = vmatpush1.msra.mxu0 %v5046
    %5447 = vmatprep.subr.mxu0 %v5055
    %5448 = vmatpush1.msra.mxu0 %v5054
    %5449 = vmatprep.subr.mxu0 %v5063
    %5450 = vmatpush1.msra.mxu0 %v5062
    %5451 = vmatprep.subr.mxu0 %v5071
    %5452 = vmatpush1.msra.mxu0 %v5070
    %5453 = vmatprep.subr.mxu0 %v5079
    %5454 = vmatpush1.msra.mxu0 %v5078
    %5455 = vmatprep.subr.mxu0 %v5087
    %5456 = vmatpush1.msra.mxu0 %v5086
    %5457 = vmatprep.subr.mxu0 %v5095
    %5458 = vmatpush1.msra.mxu0 %v5094
    %5459 = vmatprep.subr.mxu0 %v5103
    %5460 = vmatpush1.msra.mxu0 %v5102
    %5461 = vmatprep.subr.mxu0 %v5111
    %5462 = vmatpush1.msra.mxu0 %v5110
    %5463 = vmatprep.subr.mxu0 %v5119
    %5464 = vmatpush1.msra.mxu0 %v5118
    %5465 = vmatprep.subr.mxu0 %v5127
    %5466 = vmatpush1.msra.mxu0 %v5126
    %5467 = vmatprep.subr.mxu0 %v5135
    %5468 = vmatpush1.msra.mxu0 %v5134
    %5469 = vmatprep.subr.mxu0 %v5143
    %5470 = vmatpush1.msra.mxu0 %v5142
    %5471 = vmatprep.subr.mxu0 %v5151
    %5472 = vmatpush1.msra.mxu0 %v5150
    %5473 = vmatprep.subr.mxu0 %v5159
    %5474 = vmatpush1.msra.mxu0 %v5158
    %5475 = vmatprep.subr.mxu0 %v5167
    %5476 = vmatpush1.msra.mxu0 %v5166
    %5477 = vmatprep.subr.mxu0 %v5175
    %5478 = vmatpush1.msra.mxu0 %v5174
    %5479 = vmatprep.subr.mxu0 %v5183
    %5480 = vmatpush1.msra.mxu0 %v5182
    %5481 = vmatprep.subr.mxu0 %v5191
    %5482 = vmatpush1.msra.mxu0 %v5190
    %5483 = vmatprep.subr.mxu0 %v5199
    %5484 = vmatpush1.msra.mxu0 %v5198
    %5485 = vmatprep.subr.mxu0 %v5207
    %5486 = vmatpush1.msra.mxu0 %v5206
    %5487 = vmatprep.subr.mxu0 %v5215
    %5488 = vmatpush1.msra.mxu0 %v5214
    %5489 = vmatprep.subr.mxu0 %v5223
    %5490 = vmatpush1.msra.mxu0 %v5222
    %5491 = vmatprep.subr.mxu0 %v5231
    %5492 = vmatpush1.msra.mxu0 %v5230
    %5493 = vmatprep.subr.mxu0 %v5239
    %5494 = vmatpush1.msra.mxu0 %v5238
    %5495 = vmatprep.subr.mxu0 %v5247
    %5496 = vmatpush1.msra.mxu0 %v5246
    %5497 = vmatprep.subr.mxu0 %v5255
    %5498 = vmatpush1.msra.mxu0 %v5254
    %5499 = vmatprep.subr.mxu0 %v5263
    %5500 = vmatpush1.msra.mxu0 %v5262
    %5501 = vmatprep.subr.mxu0 %v5271
    %5502 = vmatpush1.msra.mxu0 %v5270
    %5503 = vmatprep.subr.mxu0 %v5279
    %5504 = vmatpush1.msra.mxu0 %v5278
    %5505 = vmatprep.subr.mxu0 %v5287
    %5506 = vmatpush1.msra.mxu0 %v5286
    %5507 = vmatprep.subr.mxu0 %v5295
    %5508 = vmatpush1.msra.mxu0 %v5294
    %5509 = vmatprep.mubr.f32.mxu0 %v5300
    %5510 = vmatmul.mubr.f32.gmra.mrb[0].mxu0 %v5299
    %v5511 = vpop.f32.mrb[0].mxu0
    %v5512 = vadd.f32 0.0, %v5511
    %v5513 = vpop.f32.mrb[0].mxu0
    %v5514 = vadd.f32 0.0, %v5513
    %5515 = vdwg.mxu0
    %5516 = vmatprep.subr.mxu0 %v5049
    %5517 = vmatpush1.msra.mxu0 %v5048
    %5518 = vmatprep.subr.mxu0 %v5057
    %5519 = vmatpush1.msra.mxu0 %v5056
    %5520 = vmatprep.subr.mxu0 %v5065
    %5521 = vmatpush1.msra.mxu0 %v5064
    %5522 = vmatprep.subr.mxu0 %v5073
    %5523 = vmatpush1.msra.mxu0 %v5072
    %5524 = vmatprep.subr.mxu0 %v5081
    %5525 = vmatpush1.msra.mxu0 %v5080
    %5526 = vmatprep.subr.mxu0 %v5089
    %5527 = vmatpush1.msra.mxu0 %v5088
    %5528 = vmatprep.subr.mxu0 %v5097
    %5529 = vmatpush1.msra.mxu0 %v5096
    %5530 = vmatprep.subr.mxu0 %v5105
    %5531 = vmatpush1.msra.mxu0 %v5104
    %5532 = vmatprep.subr.mxu0 %v5113
    %5533 = vmatpush1.msra.mxu0 %v5112
    %5534 = vmatprep.subr.mxu0 %v5121
    %5535 = vmatpush1.msra.mxu0 %v5120
    %5536 = vmatprep.subr.mxu0 %v5129
    %5537 = vmatpush1.msra.mxu0 %v5128
    %5538 = vmatprep.subr.mxu0 %v5137
    %5539 = vmatpush1.msra.mxu0 %v5136
    %5540 = vmatprep.subr.mxu0 %v5145
    %5541 = vmatpush1.msra.mxu0 %v5144
    %5542 = vmatprep.subr.mxu0 %v5153
    %5543 = vmatpush1.msra.mxu0 %v5152
    %5544 = vmatprep.subr.mxu0 %v5161
    %5545 = vmatpush1.msra.mxu0 %v5160
    %5546 = vmatprep.subr.mxu0 %v5169
    %5547 = vmatpush1.msra.mxu0 %v5168
    %5548 = vmatprep.subr.mxu0 %v5177
    %5549 = vmatpush1.msra.mxu0 %v5176
    %5550 = vmatprep.subr.mxu0 %v5185
    %5551 = vmatpush1.msra.mxu0 %v5184
    %5552 = vmatprep.subr.mxu0 %v5193
    %5553 = vmatpush1.msra.mxu0 %v5192
    %5554 = vmatprep.subr.mxu0 %v5201
    %5555 = vmatpush1.msra.mxu0 %v5200
    %5556 = vmatprep.subr.mxu0 %v5209
    %5557 = vmatpush1.msra.mxu0 %v5208
    %5558 = vmatprep.subr.mxu0 %v5217
    %5559 = vmatpush1.msra.mxu0 %v5216
    %5560 = vmatprep.subr.mxu0 %v5225
    %5561 = vmatpush1.msra.mxu0 %v5224
    %5562 = vmatprep.subr.mxu0 %v5233
    %5563 = vmatpush1.msra.mxu0 %v5232
    %5564 = vmatprep.subr.mxu0 %v5241
    %5565 = vmatpush1.msra.mxu0 %v5240
    %5566 = vmatprep.subr.mxu0 %v5249
    %5567 = vmatpush1.msra.mxu0 %v5248
    %5568 = vmatprep.subr.mxu0 %v5257
    %5569 = vmatpush1.msra.mxu0 %v5256
    %5570 = vmatprep.subr.mxu0 %v5265
    %5571 = vmatpush1.msra.mxu0 %v5264
    %5572 = vmatprep.subr.mxu0 %v5273
    %5573 = vmatpush1.msra.mxu0 %v5272
    %5574 = vmatprep.subr.mxu0 %v5281
    %5575 = vmatpush1.msra.mxu0 %v5280
    %5576 = vmatprep.subr.mxu0 %v5289
    %5577 = vmatpush1.msra.mxu0 %v5288
    %5578 = vmatprep.subr.mxu0 %v5297
    %5579 = vmatpush1.msra.mxu0 %v5296
    %5580 = vmatprep.mubr.f32.mxu0 %v5300
    %5581 = vmatmul.mubr.f32.gmra.mrb[0].mxu0 %v5299
    %v5582 = vpop.f32.mrb[0].mxu0
    %v5583 = vadd.f32 0.0, %v5582
    %v5584 = vpop.f32.mrb[0].mxu0
    %v5585 = vadd.f32 0.0, %v5584
    %5586 = vdwg.mxu0
    %v5595 = vrot.slane %v5370, 2
    %v5596 = vrot.slane %v5372, 2
    %v5597 = vrot.slane %v5441, 2
    %v5598 = vrot.slane %v5443, 2
    %v5599 = vrot.slane %v5512, 2
    %v5600 = vrot.slane %v5514, 2
    %v5601 = vrot.slane %v5583, 2
    %v5602 = vrot.slane %v5585, 2
    %v5611 = vadd.f32 %v426, %v5595
    %v5612 = vadd.f32 %v428, %v5596
    %v5613 = vadd.f32 %v503, %v5597
    %v5614 = vadd.f32 %v505, %v5598
    %v5615 = vadd.f32 %v580, %v5599
    %v5616 = vadd.f32 %v582, %v5600
    %v5617 = vadd.f32 %v657, %v5601
    %v5618 = vadd.f32 %v659, %v5602
    %v5619 = vxor.u32 %v5611, 2147483648
    %v5620 = vxor.u32 %v5612, 2147483648
    %v5621 = vxor.u32 %v5613, 2147483648
    %v5622 = vxor.u32 %v5614, 2147483648
    %v5623 = vxor.u32 %v5615, 2147483648
    %v5624 = vxor.u32 %v5616, 2147483648
    %v5625 = vmul.f32 %v5619, 1.442695
    %v5626 = vpow.pop %v5625
    %v5627 = vmul.f32 %v5620, 1.442695
    %v5628 = vpow.pop %v5627
    %v5629 = vmul.f32 %v5621, 1.442695
    %v5630 = vpow.pop %v5629
    %v5631 = vmul.f32 %v5622, 1.442695
    %v5632 = vpow.pop %v5631
    %v5633 = vmul.f32 %v5623, 1.442695
    %v5634 = vpow.pop %v5633
    %v5635 = vmul.f32 %v5624, 1.442695
    %v5636 = vpow.pop %v5635
    %v5637 = vadd.f32 %v5626, 1.0
    %v5638 = vadd.f32 %v5628, 1.0
    %v5639 = vadd.f32 %v5630, 1.0
    %v5640 = vadd.f32 %v5632, 1.0
    %v5641 = vadd.f32 %v5634, 1.0
    %v5642 = vadd.f32 %v5636, 1.0
    %v5643 = vrcp.pop %v5637
    %v5644 = vmul.f32 1.0, %v5643
    %v5645 = vrcp.pop %v5638
    %v5646 = vmul.f32 1.0, %v5645
    %v5647 = vrcp.pop %v5639
    %v5648 = vmul.f32 1.0, %v5647
    %v5649 = vrcp.pop %v5640
    %v5650 = vmul.f32 1.0, %v5649
    %v5651 = vrcp.pop %v5641
    %v5652 = vmul.f32 1.0, %v5651
    %v5653 = vrcp.pop %v5642
    %v5654 = vmul.f32 1.0, %v5653
    %v5655 = vtanh.pop %v5617
    %v5656 = vtanh.pop %v5618
    %v5659 = vrot.slane %v5031, 6
    %v5660 = vrot.slane %v5032, 6
    %v5663 = vmul.f32 %v5648, %v5659
    %v5664 = vmul.f32 %v5650, %v5660
    %v5665 = vmul.f32 %v5644, %v5655
    %v5666 = vmul.f32 %v5646, %v5656
    %v5667 = vadd.f32 %v5663, %v5665
    %v5668 = vadd.f32 %v5664, %v5666
    %v5669 = vtanh.pop %v5667
    %v5670 = vtanh.pop %v5668
    %v5671 = vmul.f32 %v5652, %v5669
    %v5672 = vmul.f32 %v5654, %v5670
    %5673 = vst [vmem:[#allocation2 + $0x10] sm:$0xc0] %v5671
    %v5675 = vrot.slane %v5672, 6
    %5677 = vst [vmem:[#allocation2 + $0x8] sm:$0x3] %v5675
    %v5678 = vld [vmem:[#allocation2] sm:$0xff]
    %v5679 = vld [vmem:[#allocation2 + $0x8] sm:$0xff]
    %v5680 = vld [vmem:[#allocation2 + $0x10] sm:$0xff]
    %v5681 = vld [vmem:[#allocation2 + $0x18] sm:$0xff]
    %v5682 = vld [vmem:[%s4] sm:$0xff]
    %v5683 = vld [vmem:[%s4 + $0x8] sm:$0xff]
    %v5684 = vld [vmem:[%s4 + $0x10] sm:$0xff]
    %v5685 = vld [vmem:[%s4 + $0x18] sm:$0xff]
    %v5686 = vld [vmem:[%s4 + $0x20] sm:$0xff]
    %v5687 = vld [vmem:[%s4 + $0x28] sm:$0xff]
    %v5688 = vld [vmem:[%s4 + $0x30] sm:$0xff]
    %v5689 = vld [vmem:[%s4 + $0x38] sm:$0xff]
    %v5690 = vld [vmem:[%s4 + $0x40] sm:$0xff]
    %v5691 = vld [vmem:[%s4 + $0x48] sm:$0xff]
    %v5692 = vld [vmem:[%s4 + $0x50] sm:$0xff]
    %v5693 = vld [vmem:[%s4 + $0x58] sm:$0xff]
    %v5694 = vld [vmem:[%s4 + $0x60] sm:$0xff]
    %v5695 = vld [vmem:[%s4 + $0x68] sm:$0xff]
    %v5696 = vld [vmem:[%s4 + $0x70] sm:$0xff]
    %v5697 = vld [vmem:[%s4 + $0x78] sm:$0xff]
    %v5698 = vld [vmem:[%s4 + $0x80] sm:$0xff]
    %v5699 = vld [vmem:[%s4 + $0x88] sm:$0xff]
    %v5700 = vld [vmem:[%s4 + $0x90] sm:$0xff]
    %v5701 = vld [vmem:[%s4 + $0x98] sm:$0xff]
    %v5702 = vld [vmem:[%s4 + $0xa0] sm:$0xff]
    %v5703 = vld [vmem:[%s4 + $0xa8] sm:$0xff]
    %v5704 = vld [vmem:[%s4 + $0xb0] sm:$0xff]
    %v5705 = vld [vmem:[%s4 + $0xb8] sm:$0xff]
    %v5706 = vld [vmem:[%s4 + $0xc0] sm:$0xff]
    %v5707 = vld [vmem:[%s4 + $0xc8] sm:$0xff]
    %v5708 = vld [vmem:[%s4 + $0xd0] sm:$0xff]
    %v5709 = vld [vmem:[%s4 + $0xd8] sm:$0xff]
    %v5710 = vld [vmem:[%s4 + $0xe0] sm:$0xff]
    %v5711 = vld [vmem:[%s4 + $0xe8] sm:$0xff]
    %v5712 = vld [vmem:[%s4 + $0xf0] sm:$0xff]
    %v5713 = vld [vmem:[%s4 + $0xf8] sm:$0xff]
    %v5714 = vld [vmem:[%s5] sm:$0x1]
    %v5716 = vlaneseq
    %v5717 = vshrl.u32 %v5716, 7
    %v5718 = vsub.s32 0, %v5717
    %v5719 = vrot.slane %v5714, %v5718
    %5721 = vmatprep.subr.mxu0 0.0
    %5722 = vmatpush1.msra.mxu0 %v5682
    %5723 = vmatprep.subr.mxu0 0.0
    %5724 = vmatpush1.msra.mxu0 %v5683
    %5725 = vmatprep.subr.mxu0 0.0
    %5726 = vmatpush1.msra.mxu0 %v5684
    %5727 = vmatprep.subr.mxu0 0.0
    %5728 = vmatpush1.msra.mxu0 %v5685
    %5729 = vmatprep.subr.mxu0 0.0
    %5730 = vmatpush1.msra.mxu0 %v5686
    %5731 = vmatprep.subr.mxu0 0.0
    %5732 = vmatpush1.msra.mxu0 %v5687
    %5733 = vmatprep.subr.mxu0 0.0
    %5734 = vmatpush1.msra.mxu0 %v5688
    %5735 = vmatprep.subr.mxu0 0.0
    %5736 = vmatpush1.msra.mxu0 %v5689
    %5737 = vmatprep.subr.mxu0 0.0
    %5738 = vmatpush1.msra.mxu0 %v5690
    %5739 = vmatprep.subr.mxu0 0.0
    %5740 = vmatpush1.msra.mxu0 %v5691
    %5741 = vmatprep.subr.mxu0 0.0
    %5742 = vmatpush1.msra.mxu0 %v5692
    %5743 = vmatprep.subr.mxu0 0.0
    %5744 = vmatpush1.msra.mxu0 %v5693
    %5745 = vmatprep.subr.mxu0 0.0
    %5746 = vmatpush1.msra.mxu0 %v5694
    %5747 = vmatprep.subr.mxu0 0.0
    %5748 = vmatpush1.msra.mxu0 %v5695
    %5749 = vmatprep.subr.mxu0 0.0
    %5750 = vmatpush1.msra.mxu0 %v5696
    %5751 = vmatprep.subr.mxu0 0.0
    %5752 = vmatpush1.msra.mxu0 %v5697
    %5753 = vmatprep.subr.mxu0 0.0
    %5754 = vmatpush1.msra.mxu0 %v5698
    %5755 = vmatprep.subr.mxu0 0.0
    %5756 = vmatpush1.msra.mxu0 %v5699
    %5757 = vmatprep.subr.mxu0 0.0
    %5758 = vmatpush1.msra.mxu0 %v5700
    %5759 = vmatprep.subr.mxu0 0.0
    %5760 = vmatpush1.msra.mxu0 %v5701
    %5761 = vmatprep.subr.mxu0 0.0
    %5762 = vmatpush1.msra.mxu0 %v5702
    %5763 = vmatprep.subr.mxu0 0.0
    %5764 = vmatpush1.msra.mxu0 %v5703
    %5765 = vmatprep.subr.mxu0 0.0
    %5766 = vmatpush1.msra.mxu0 %v5704
    %5767 = vmatprep.subr.mxu0 0.0
    %5768 = vmatpush1.msra.mxu0 %v5705
    %5769 = vmatprep.subr.mxu0 0.0
    %5770 = vmatpush1.msra.mxu0 %v5706
    %5771 = vmatprep.subr.mxu0 0.0
    %5772 = vmatpush1.msra.mxu0 %v5707
    %5773 = vmatprep.subr.mxu0 0.0
    %5774 = vmatpush1.msra.mxu0 %v5708
    %5775 = vmatprep.subr.mxu0 0.0
    %5776 = vmatpush1.msra.mxu0 %v5709
    %5777 = vmatprep.subr.mxu0 0.0
    %5778 = vmatpush1.msra.mxu0 %v5710
    %5779 = vmatprep.subr.mxu0 0.0
    %5780 = vmatpush1.msra.mxu0 %v5711
    %5781 = vmatprep.subr.mxu0 0.0
    %5782 = vmatpush1.msra.mxu0 %v5712
    %5783 = vmatprep.subr.mxu0 0.0
    %5784 = vmatpush1.msra.mxu0 %v5713
    %5785 = vmatprep.mubr.f32.mxu0 %v5679
    %5786 = vmatmul.mubr.f32.gmra.mrb[0].mxu0 %v5678
    %v5787 = vpop.f32.mrb[0].mxu0
    %v5788 = vadd.f32 %v5719, %v5787
    %v5789 = vpop.f32.mrb[0].mxu0
    %5790 = vmatprep.mubr.f32.mxu0 %v5681
    %5791 = vmatmul.mubr.f32.gmra.mrb[0].mxu0 %v5680
    %v5792 = vpop.f32.mrb[0].mxu0
    %v5793 = vadd.f32 %v5719, %v5792
    %v5794 = vpop.f32.mrb[0].mxu0
    %5795 = vdwg.mxu0
    %v5798 = vcombine.high %v5788, %v5788
    %v5800 = vunpack.c.l.s4 1983009808
    %v5801 = vunpack.c.0.s8 %v5800
    %v5802 = vlaneseq
    %v5803 = vshrl.u32 %v5802, 7
    %v5804 = vsub.s32 %v5801, %v5803
    %v5805 = vrot.slane %v5788, %v5804
    %v5807 = vunpack.c.l.s4 1983009808
    %v5808 = vunpack.c.0.s8 %v5807
    %v5809 = vlaneseq
    %v5810 = vshrl.u32 %v5809, 7
    %v5811 = vsub.s32 %v5808, %v5810
    %v5812 = vrot.slane %v5798, %v5811
    %v5813 = vcombine.high %v5805, %v5805
    %v5814 = vcombine.high %v5812, %v5812
    %v5815 = vcombine.high %v5793, %v5793
    %v5817 = vunpack.c.l.s4 1983009808
    %v5818 = vunpack.c.0.s8 %v5817
    %v5819 = vlaneseq
    %v5820 = vshrl.u32 %v5819, 7
    %v5821 = vsub.s32 %v5818, %v5820
    %v5822 = vrot.slane %v5793, %v5821
    %v5824 = vunpack.c.l.s4 1983009808
    %v5825 = vunpack.c.0.s8 %v5824
    %v5826 = vlaneseq
    %v5827 = vshrl.u32 %v5826, 7
    %v5828 = vsub.s32 %v5825, %v5827
    %v5829 = vrot.slane %v5815, %v5828
    %v5830 = vcombine.high %v5822, %v5822
    %v5831 = vcombine.high %v5829, %v5829
    %vm5840 = vcmask 1041408
    %v5841 = vsel %vm5840, %v5805, -inf
    %v5842 = vsel %vm5840, %v5813, -inf
    %v5843 = vsel %vm5840, %v5812, -inf
    %v5844 = vsel %vm5840, %v5814, -inf
    %v5845 = vsel %vm5840, %v5822, -inf
    %v5846 = vmax.f32 %v5841, %v5845
    %v5847 = vsel %vm5840, %v5830, -inf
    %v5848 = vmax.f32 %v5842, %v5847
    %v5849 = vsel %vm5840, %v5829, -inf
    %v5850 = vmax.f32 %v5843, %v5849
    %v5851 = vsel %vm5840, %v5831, -inf
    %v5852 = vmax.f32 %v5844, %v5851
    %v5853 = vmax.f32 %v5846, %v5848
    %v5854 = vmax.f32 %v5850, %v5852
    %v5855 = vmax.f32 %v5853, %v5854
    %v5856 = vsub.f32 %v5805, %v5855
    %v5857 = vsub.f32 %v5813, %v5855
    %v5858 = vsub.f32 %v5812, %v5855
    %v5859 = vsub.f32 %v5814, %v5855
    %v5860 = vsub.f32 %v5822, %v5855
    %v5861 = vsub.f32 %v5830, %v5855
    %v5862 = vsub.f32 %v5829, %v5855
    %v5863 = vsub.f32 %v5831, %v5855
    %v5864 = vmul.f32 %v5856, 1.442695
    %v5865 = vpow.pop %v5864
    %v5866 = vmul.f32 %v5857, 1.442695
    %v5867 = vpow.pop %v5866
    %v5868 = vmul.f32 %v5858, 1.442695
    %v5869 = vpow.pop %v5868
    %v5870 = vmul.f32 %v5859, 1.442695
    %v5871 = vpow.pop %v5870
    %v5872 = vmul.f32 %v5860, 1.442695
    %v5873 = vpow.pop %v5872
    %v5874 = vmul.f32 %v5861, 1.442695
    %v5875 = vpow.pop %v5874
    %v5876 = vmul.f32 %v5862, 1.442695
    %v5877 = vpow.pop %v5876
    %v5878 = vmul.f32 %v5863, 1.442695
    %v5879 = vpow.pop %v5878
    %v5880 = vsel %vm5840, %v5865, 0.0
    %v5881 = vsel %vm5840, %v5867, 0.0
    %v5882 = vadd.f32 %v5880, %v5881
    %v5883 = vsel %vm5840, %v5869, 0.0
    %v5884 = vadd.f32 %v5882, %v5883
    %v5885 = vsel %vm5840, %v5871, 0.0
    %v5886 = vadd.f32 %v5884, %v5885
    %v5887 = vsel %vm5840, %v5873, 0.0
    %v5888 = vadd.f32 %v5886, %v5887
    %v5889 = vsel %vm5840, %v5875, 0.0
    %v5890 = vadd.f32 %v5888, %v5889
    %v5891 = vsel %vm5840, %v5877, 0.0
    %v5892 = vadd.f32 %v5890, %v5891
    %v5893 = vsel %vm5840, %v5879, 0.0
    %v5894 = vadd.f32 %v5892, %v5893
    %v5895 = vrcp.pop %v5894
    %v5896 = vmul.f32 %v5865, %v5895
    %v5897 = vmul.f32 %v5867, %v5895
    %v5898 = vmul.f32 %v5869, %v5895
    %v5899 = vmul.f32 %v5871, %v5895
    %v5900 = vmul.f32 %v5873, %v5895
    %v5901 = vmul.f32 %v5875, %v5895
    %v5902 = vmul.f32 %v5877, %v5895
    %v5903 = vmul.f32 %v5879, %v5895
    %5904 = vst [vmem:[%s6] sm:$0x3] %v5896
    %5905 = vst [vmem:[%s6 + $0x2] sm:$0x3] %v5897
    %5906 = vst [vmem:[%s6 + $0x4] sm:$0x3] %v5898
    %5907 = vst [vmem:[%s6 + $0x6] sm:$0x3] %v5899
    %5908 = vst [vmem:[%s6 + $0x8] sm:$0x3] %v5900
    %5909 = vst [vmem:[%s6 + $0xa] sm:$0x3] %v5901
    %5910 = vst [vmem:[%s6 + $0xc] sm:$0x3] %v5902
    %5911 = vst [vmem:[%s6 + $0xe] sm:$0x3] %v5903
    // Predicated region
    $region34: #{bilstm_classifier_forward.1} parent=1 // pred_check
      _
    $region35: #{bilstm_classifier_forward.1} parent=1 // pred_check_branch
      %5913 = sbr.rel (0) target = $region37
    $region36: #{bilstm_classifier_forward.1} parent=1 // pred_region
      _
    $region37: #{bilstm_classifier_forward.1} parent=1 // pred_fallthru
      _
    // Predicated region
    $region38: #{bilstm_classifier_forward.1} parent=1 // pred_check
      _
    $region39: #{bilstm_classifier_forward.1} parent=1 // pred_check_branch
      %5915 = sbr.rel (0) target = $region41
    $region40: #{bilstm_classifier_forward.1} parent=1 // pred_region
      _
    $region41: #{bilstm_classifier_forward.1} parent=1 // pred_fallthru
      _
    %5916 = vsyncpa [#allocation4], 1
    %5917 = vsyncpa [#allocation6], 1

</llo_original>
